<compile_context>
chip_gen: v5e
topology: v5e:2x2
jax: 0.10.0
libtpu: 0.0.40
codegen_flags: <defaults>
</compile_context>

<pallas_src>
import functools
import numpy as np
import jax
import jax.numpy as jnp
from jax import lax
from jax.experimental import pallas as pl
from jax.experimental.pallas import tpu as pltpu

# ----------------------------- small synthetic config -----------------------------
B = 2              # batch
N_MELS = 16        # whisper: 128
T_MEL = 32         # whisper: 3000
N_STATE = 256      # whisper: 1280   (multiple of 128 -> lane-dense)
N_HEAD = 2         # whisper: 20
N_LAYER = 2        # whisper: 32
T_CTX = T_MEL // 2 # whisper: 1500
POOL_OUT = 8       # whisper TrainableSubmodule: 250
OUT_EMBED = 128    # whisper TrainableSubmodule: 4096
HEAD_DIM = N_STATE // N_HEAD   # 128 here (whisper: 64)
MLP_DIM = 4 * N_STATE
LN_EPS = 1e-5

VMEM_LIMIT = 32 * 1024 * 1024   # conservative scoped-VMEM cap (safe on v5e/v6e/v7x)


# ----------------------------- helpers -----------------------------
def _gelu(x):
    # tanh-approx GELU (EUP tanh slot, nearly free under an MXU-bound GEMM).
    # TODO(synk): PyTorch nn.GELU default is the exact erf form (~1e-3 rel diff).
    c = 0.7978845608028654  # sqrt(2/pi)
    return 0.5 * x * (1.0 + jnp.tanh(c * (x + 0.044715 * x * x * x)))


def _layernorm_f32(x, g, b):
    mean = jnp.mean(x, axis=-1, keepdims=True)
    xc = x - mean
    var = jnp.mean(xc * xc, axis=-1, keepdims=True)
    return xc * lax.rsqrt(var + LN_EPS) * g + b


def _pick_tile(dim, cap, mult):
    """Largest divisor of `dim` that is <= cap, preferring multiples of `mult`."""
    if dim <= cap:
        return dim
    t = (cap // mult) * mult
    while t >= mult:
        if dim % t == 0:
            return t
        t -= mult
    for t in range(cap, 0, -1):            # fallback: any divisor
        if dim % t == 0:
            return t
    return dim


# ----------------------------- LN(stats only) + GEMM (+GELU) -----------------------------
# gamma/beta are folded into (w, b) at prepare_params; the normalized row-tile is cached in
# a VMEM scratch and only recomputed when the N-tile index is 0 (N axis is "arbitrary").
def _ln_matmul_kernel(x_ref, w_ref, b_ref, o_ref, xn_ref, *, activation):
    @pl.when(pl.program_id(1) == 0)
    def _normalize():
        x = x_ref[...].astype(jnp.float32)
        mean = jnp.mean(x, axis=-1, keepdims=True)
        xc = x - mean
        var = jnp.mean(xc * xc, axis=-1, keepdims=True)
        xn_ref[...] = (xc * lax.rsqrt(var + LN_EPS)).astype(xn_ref.dtype)

    acc = jnp.dot(xn_ref[...], w_ref[...], preferred_element_type=jnp.float32)
    acc = acc + b_ref[...]
    if activation == "gelu":
        acc = _gelu(acc)
    o_ref[...] = acc.astype(o_ref.dtype)


def ln_matmul(x, w, b, activation=None, tm_cap=512, tn_cap=512):
    """o = act(LN_stats(x) @ w + b); gamma/beta already folded into w/b."""
    M, K = x.shape
    N = w.shape[1]
    tm = _pick_tile(M, tm_cap, 16)
    tn = _pick_tile(N, tn_cap, 128)
    kernel = functools.partial(_ln_matmul_kernel, activation=activation)
    return pl.pallas_call(
        kernel,
        grid=(M // tm, N // tn),
        in_specs=[
            pl.BlockSpec((tm, K), lambda i, j: (i, 0)),
            pl.BlockSpec((K, tn), lambda i, j: (0, j)),
            pl.BlockSpec((1, tn), lambda i, j: (0, j)),
        ],
        out_specs=pl.BlockSpec((tm, tn), lambda i, j: (i, j)),
        out_shape=jax.ShapeDtypeStruct((M, N), jnp.bfloat16),
        scratch_shapes=[pltpu.VMEM((tm, K), jnp.bfloat16)],
        compiler_params=pltpu.CompilerParams(
            dimension_semantics=("parallel", "arbitrary"),
            vmem_limit_bytes=VMEM_LIMIT),
    )(x, w, b)


# ----------------------------- K-tiled GEMM + bias + residual -----------------------------
def _matmul_res_kernel(x_ref, w_ref, b_ref, r_ref, o_ref, acc_ref, *, activation):
    @pl.when(pl.program_id(2) == 0)
    def _init():
        acc_ref[...] = jnp.zeros_like(acc_ref)

    acc_ref[...] += jnp.dot(x_ref[...], w_ref[...], preferred_element_type=jnp.float32)

    @pl.when(pl.program_id(2) == pl.num_programs(2) - 1)
    def _flush():
        acc = acc_ref[...] + b_ref[...] + r_ref[...].astype(jnp.float32)
        if activation == "gelu":
            acc = _gelu(acc)
        o_ref[...] = acc.astype(o_ref.dtype)


def matmul_residual(x, w, b, residual, activation=None,
                    tm_cap=512, tn_cap=512, tk_cap=512):
    """o = act(x @ w + b + residual)."""
    M, K = x.shape
    N = w.shape[1]
    tm = _pick_tile(M, tm_cap, 16)
    tn = _pick_tile(N, tn_cap, 128)
    tk = _pick_tile(K, tk_cap, 128)
    kernel = functools.partial(_matmul_res_kernel, activation=activation)
    return pl.pallas_call(
        kernel,
        grid=(M // tm, N // tn, K // tk),
        in_specs=[
            pl.BlockSpec((tm, tk), lambda i, j, k: (i, k)),
            pl.BlockSpec((tk, tn), lambda i, j, k: (k, j)),
            pl.BlockSpec((1, tn), lambda i, j, k: (0, j)),
            pl.BlockSpec((tm, tn), lambda i, j, k: (i, j)),
        ],
        out_specs=pl.BlockSpec((tm, tn), lambda i, j, k: (i, j)),
        out_shape=jax.ShapeDtypeStruct((M, N), jnp.bfloat16),
        scratch_shapes=[pltpu.VMEM((tm, tn), jnp.float32)],
        compiler_params=pltpu.CompilerParams(
            dimension_semantics=("parallel", "parallel", "arbitrary"),
            vmem_limit_bytes=VMEM_LIMIT),
    )(x, w, b, residual)


# ----------------------------- flash attention -----------------------------
def _flash_attn_kernel(q_ref, k_ref, v_ref, o_ref, m_ref, l_ref, acc_ref, *, hg, d):
    ki = pl.program_id(3)

    @pl.when(ki == 0)
    def _init():
        m_ref[...] = jnp.full_like(m_ref, -1e30)
        l_ref[...] = jnp.zeros_like(l_ref)
        acc_ref[...] = jnp.zeros_like(acc_ref)

    q = q_ref[...]          # (tq, hg*d) bf16, softmax scale already folded into w_q
    k = k_ref[...]          # (tkv, hg*d)
    v = v_ref[...]
    for hh in range(hg):                      # static unroll over heads in this lane group
        qh = q[:, hh * d:(hh + 1) * d]
        kh = k[:, hh * d:(hh + 1) * d]
        vh = v[:, hh * d:(hh + 1) * d]
        s = lax.dot_general(qh, kh, (((1,), (1,)), ((), ())),
                            preferred_element_type=jnp.float32)   # (tq, tkv)
        m_prev = m_ref[hh]                                        # (tq, 1)
        m_new = jnp.maximum(m_prev, jnp.max(s, axis=-1, keepdims=True))
        alpha = jnp.exp(m_prev - m_new)
        p = jnp.exp(s - m_new)
        l_ref[hh] = alpha * l_ref[hh] + jnp.sum(p, axis=-1, keepdims=True)
        acc_prev = acc_ref[:, pl.ds(hh * d, d)]
        acc_ref[:, pl.ds(hh * d, d)] = alpha * acc_prev + jnp.dot(
            p.astype(jnp.bfloat16), vh, preferred_element_type=jnp.float32)
        m_ref[hh] = m_new

    @pl.when(ki == pl.num_programs(3) - 1)
    def _flush():
        acc = acc_ref[...]
        outs = []
        for hh in range(hg):
            inv = pl.reciprocal(l_ref[hh], approx=True)
            outs.append(acc[:, hh * d:(hh + 1) * d] * inv)
        out = outs[0] if hg == 1 else jnp.concatenate(outs, axis=-1)
        o_ref[...] = out.astype(o_ref.dtype)


def attention(qkv, Bx, T, H, D, tq_cap=256, tkv_cap=512):
    """qkv: (B, T, 3*H*D) bf16 packed [Q | K | V].  Heads grouped so each block is >=128 lanes."""
    C = H * D
    HG = max(1, 128 // D)
    if H % HG != 0:
        HG = 1
    G = H // HG
    hd = HG * D
    tq = _pick_tile(T, tq_cap, 16)
    tkv = _pick_tile(T, tkv_cap, 16)
    kernel = functools.partial(_flash_attn_kernel, hg=HG, d=D)
    return pl.pallas_call(
        kernel,
        grid=(Bx, G, T // tq, T // tkv),
        in_specs=[
            pl.BlockSpec((None, tq, hd), lambda b, g, qi, ki: (b, qi, g)),            # Q group
            pl.BlockSpec((None, tkv, hd), lambda b, g, qi, ki: (b, ki, G + g)),        # K group
            pl.BlockSpec((None, tkv, hd), lambda b, g, qi, ki: (b, ki, 2 * G + g)),    # V group
        ],
        out_specs=pl.BlockSpec((None, tq, hd), lambda b, g, qi, ki: (b, qi, g)),
        out_shape=jax.ShapeDtypeStruct((Bx, T, C), jnp.bfloat16),
        scratch_shapes=[
            pltpu.VMEM((HG, tq, 1), jnp.float32),     # running max
            pltpu.VMEM((HG, tq, 1), jnp.float32),     # running denom
            pltpu.VMEM((tq, hd), jnp.float32),        # running output acc
        ],
        compiler_params=pltpu.CompilerParams(
            dimension_semantics=("parallel", "parallel", "parallel", "arbitrary"),
            vmem_limit_bytes=VMEM_LIMIT),
    )(qkv, qkv, qkv)


# ----------------------------- conv stem (time-tiled, 3 shifted matmuls) -----------------------------
def _conv1_kernel(xm_ref, xh_ref, w_ref, b_ref, o_ref, xbuf_ref, *, tt):
    # stride-1, k=3, pad=1:  y[t] = xp[t]@W0 + xp[t+1]@W1 + xp[t+2]@W2   (xp left-padded by 1)
    xbuf_ref[pl.ds(0, tt), :] = xm_ref[...]          # main tile
    xbuf_ref[pl.ds(tt, 8), :] = xh_ref[...]          # 8-row halo (first 2 rows used)
    acc = jnp.dot(xbuf_ref[pl.ds(0, tt), :], w_ref[0], preferred_element_type=jnp.float32)
    acc += jnp.dot(xbuf_ref[pl.ds(1, tt), :], w_ref[1], preferred_element_type=jnp.float32)
    acc += jnp.dot(xbuf_ref[pl.ds(2, tt), :], w_ref[2], preferred_element_type=jnp.float32)
    o_ref[...] = _gelu(acc + b_ref[...]).astype(o_ref.dtype)


def conv1_gelu(x, wt, b, tt_cap=256):
    """x:(B,T,Cin) bf16, wt:(3,Cin,Cout) bf16, b:(1,Cout) f32 -> (B,T,Cout) bf16."""
    Bx, T, Cin = x.shape
    Cout = wt.shape[2]
    tt = _pick_tile(T, tt_cap, 16)
    assert tt % 8 == 0 and T % tt == 0
    xp = jnp.pad(x, ((0, 0), (1, 7), (0, 0)))        # 1 conv pad left, 7 halo-align pad right
    return pl.pallas_call(
        functools.partial(_conv1_kernel, tt=tt),
        grid=(Bx, T // tt),
        in_specs=[
            pl.BlockSpec((None, tt, Cin), lambda bb, i: (bb, i, 0)),
            pl.BlockSpec((None, 8, Cin), lambda bb, i: (bb, (i + 1) * (tt // 8), 0)),
            pl.BlockSpec((3, Cin, Cout), lambda bb, i: (0, 0, 0)),
            pl.BlockSpec((1, Cout), lambda bb, i: (0, 0)),
        ],
        out_specs=pl.BlockSpec((None, tt, Cout), lambda bb, i: (bb, i, 0)),
        out_shape=jax.ShapeDtypeStruct((Bx, T, Cout), jnp.bfloat16),
        scratch_shapes=[pltpu.VMEM((tt + 8, Cin), jnp.bfloat16)],
        compiler_params=pltpu.CompilerParams(
            dimension_semantics=("parallel", "parallel"),
            vmem_limit_bytes=VMEM_LIMIT),
    )(xp, xp, wt, b)


def _conv2_kernel(xm_ref, xh_ref, w_ref, b_ref, pos_ref, o_ref, xbuf_ref, *, tt, c):
    # stride-2, k=3, pad=1:  y[t] = xq[2t]@W0 + xq[2t+1]@W1 + xq[2t+2]@W2.
    # Input rows are pre-paired along lanes: x2[j] = [xq[2j] | xq[2j+1]]  (free reshape).
    xbuf_ref[pl.ds(0, tt), :] = xm_ref[...]          # (tt, 2C) main
    xbuf_ref[pl.ds(tt, 8), :] = xh_ref[...]          # halo (row 0 used)
    x_ev = xbuf_ref[pl.ds(0, tt), pl.ds(0, c)]       # xq[2t]
    x_od = xbuf_ref[pl.ds(0, tt), pl.ds(c, c)]       # xq[2t+1]
    x_e2 = xbuf_ref[pl.ds(1, tt), pl.ds(0, c)]       # xq[2t+2]
    acc = jnp.dot(x_ev, w_ref[0], preferred_element_type=jnp.float32)
    acc += jnp.dot(x_od, w_ref[1], preferred_element_type=jnp.float32)
    acc += jnp.dot(x_e2, w_ref[2], preferred_element_type=jnp.float32)
    acc = _gelu(acc + b_ref[...]) + pos_ref[...]     # pos-emb fused into the epilogue
    o_ref[...] = acc.astype(o_ref.dtype)


def conv2_gelu_pos(x, wt, b, pos, tt_cap=256):
    """x:(B,T,C) bf16 (T even), wt:(3,C,Cout) bf16, b:(1,Cout) f32, pos:(T//2,Cout) f32."""
    Bx, T, C = x.shape
    Cout = wt.shape[2]
    T2 = T // 2
    tt = _pick_tile(T2, tt_cap, 16)
    assert tt % 8 == 0 and T2 % tt == 0
    # 1 conv pad left + 15 right so the pair-reshape gives (T2+8) rows (full halo blocks).
    xq = jnp.pad(x, ((0, 0), (1, 15), (0, 0)))
    x2 = xq.reshape(Bx, T2 + 8, 2 * C)               # contiguous -> free reshape
    return pl.pallas_call(
        functools.partial(_conv2_kernel, tt=tt, c=C),
        grid=(Bx, T2 // tt),
        in_specs=[
            pl.BlockSpec((None, tt, 2 * C), lambda bb, i: (bb, i, 0)),
            pl.BlockSpec((None, 8, 2 * C), lambda bb, i: (bb, (i + 1) * (tt // 8), 0)),
            pl.BlockSpec((3, C, Cout), lambda bb, i: (0, 0, 0)),
            pl.BlockSpec((1, Cout), lambda bb, i: (0, 0)),
            pl.BlockSpec((tt, Cout), lambda bb, i: (i, 0)),
        ],
        out_specs=pl.BlockSpec((None, tt, Cout), lambda bb, i: (bb, i, 0)),
        out_shape=jax.ShapeDtypeStruct((Bx, T2, Cout), jnp.bfloat16),
        scratch_shapes=[pltpu.VMEM((tt + 8, 2 * C), jnp.bfloat16)],
        compiler_params=pltpu.CompilerParams(
            dimension_semantics=("parallel", "parallel"),
            vmem_limit_bytes=VMEM_LIMIT),
    )(x2, x2, wt, b, pos)


# ----------------------------- fused ln_post + adaptive pool -----------------------------
def _ln_pool_kernel(g_ref, bt_ref, a_ref, x_ref, o_ref):
    x = x_ref[...].astype(jnp.float32)                    # (T, C)
    xn = _layernorm_f32(x, g_ref[...], bt_ref[...])       # ln_post (cannot fold: LN follows)
    o_ref[...] = jnp.dot(a_ref[...], xn, preferred_element_type=jnp.float32).astype(o_ref.dtype)


def ln_pool(x, gamma, beta, pool_mat):
    """x:(B,T,C) bf16 -> pool_mat @ LN(x) : (B,P,C) bf16 (exact AdaptiveAvgPool1d semantics)."""
    Bx, T, C = x.shape
    P = pool_mat.shape[0]
    return pl.pallas_call(
        _ln_pool_kernel,
        grid=(Bx,),
        in_specs=[
            pl.BlockSpec((1, C), lambda bb: (0, 0)),
            pl.BlockSpec((1, C), lambda bb: (0, 0)),
            pl.BlockSpec((P, T), lambda bb: (0, 0)),
            pl.BlockSpec((None, T, C), lambda bb: (bb, 0, 0)),
        ],
        out_specs=pl.BlockSpec((None, P, C), lambda bb: (bb, 0, 0)),
        out_shape=jax.ShapeDtypeStruct((Bx, P, C), jnp.bfloat16),
        compiler_params=pltpu.CompilerParams(
            dimension_semantics=("parallel",), vmem_limit_bytes=VMEM_LIMIT),
    )(gamma, beta, pool_mat, x)


# ----------------------------- model glue -----------------------------
def sinusoids(length, channels, max_timescale=10000.0):
    """whisper.model.sinusoids"""
    half = channels // 2
    log_timescale_increment = np.log(max_timescale) / (half - 1)
    inv_timescales = np.exp(-log_timescale_increment * np.arange(half))
    scaled_time = np.arange(length)[:, None] * inv_timescales[None, :]
    return jnp.asarray(np.concatenate([np.sin(scaled_time), np.cos(scaled_time)], axis=1),
                       dtype=jnp.float32)


def adaptive_pool_matrix(L, P):
    """Matrix reproducing torch.nn.AdaptiveAvgPool1d(P) on length-L input."""
    A = np.zeros((P, L), dtype=np.float32)
    for i in range(P):
        s = (i * L) // P
        e = -((-(i + 1) * L) // P)
        A[i, s:e] = 1.0 / (e - s)
    return jnp.asarray(A)


def residual_block(xf, p, Bx, T):
    """xf: (B*T, C) bf16 -> (B*T, C) bf16."""
    C = xf.shape[-1]
    M = Bx * T
    # self attention: LN folded into fused QKV GEMM -> flash attention -> wo GEMM + residual
    qkv = ln_matmul(xf, p["w_qkv"], p["b_qkv"])                                   # (M, 3C)
    attn = attention(qkv.reshape(Bx, T, 3 * C), Bx, T, N_HEAD, HEAD_DIM).reshape(M, C)
    xf = matmul_residual(attn, p["wo"], p["bo"], residual=xf)
    # MLP: LN folded into W1+GELU, W2 GEMM + residual (K-accumulated)
    h = ln_matmul(xf, p["w1"], p["b1"], activation="gelu")                        # (M, 4C)
    xf = matmul_residual(h, p["w2"], p["b2"], residual=xf)
    return xf


def tunable_whisper_audio_encoder(mels, params):
    """mels: (B, n_mels, T_mel) float32 (NCW, like PyTorch) -> (B, POOL_OUT, OUT_EMBED) float32."""
    x = jnp.transpose(mels, (0, 2, 1)).astype(jnp.bfloat16)                       # (B, T_mel, n_mels)
    x = conv1_gelu(x, params["conv1_wt"], params["conv1_b"])                      # (B, T_mel, C)
    x = conv2_gelu_pos(x, params["conv2_wt"], params["conv2_b"], params["pos_emb"])  # (B, T_ctx, C)
    Bx, T, C = x.shape

    xf = x.reshape(Bx * T, C)
    for lyr in params["layers"]:
        xf = residual_block(xf, lyr, Bx, T)
    x = xf.reshape(Bx, T, C)

    # ln_post fused into adaptive pool; TrainableSubmodule: ln1 folded into bias-free proj.
    pooled = ln_pool(x, params["ln_post_g"], params["ln_post_b"], params["pool_mat"])  # (B, P, C)
    P = pooled.shape[1]
    out = ln_matmul(pooled.reshape(Bx * P, C), params["proj_w"], params["proj_b"])
    return out.reshape(Bx, P, OUT_EMBED).astype(jnp.float32)
    # TODO(synk): LoRA branch (use_lora=True) + dropout omitted; module default is use_lora=False.


# ----------------------------- deterministic parameter init / prep -----------------------------
def init_params(seed=0):
    keys = iter(jax.random.split(jax.random.PRNGKey(seed), 256))

    def rnd(shape, scale=0.02):
        return scale * jax.random.normal(next(keys), shape, dtype=jnp.float32)

    C = N_STATE
    raw = {
        "conv1_w": rnd((C, N_MELS, 3)), "conv1_b": rnd((C,)),
        "conv2_w": rnd((C, C, 3)), "conv2_b": rnd((C,)),
        "ln_post_g": jnp.ones((C,), jnp.float32), "ln_post_b": jnp.zeros((C,), jnp.float32),
        "sub_ln_g": jnp.ones((C,), jnp.float32), "sub_ln_b": jnp.zeros((C,), jnp.float32),
        "proj_w": rnd((C, OUT_EMBED)),
        "layers": [],
    }
    for _ in range(N_LAYER):
        raw["layers"].append({
            "ln1_g": jnp.ones((C,), jnp.float32), "ln1_b": jnp.zeros((C,), jnp.float32),
            "wq": rnd((C, C)), "bq": rnd((C,)),
            "wk": rnd((C, C)),                      # whisper key proj has no bias
            "wv": rnd((C, C)), "bv": rnd((C,)),
            "wo": rnd((C, C)), "bo": rnd((C,)),
            "ln2_g": jnp.ones((C,), jnp.float32), "ln2_b": jnp.zeros((C,), jnp.float32),
            "w1": rnd((C, MLP_DIM)), "b1": rnd((MLP_DIM,)),
            "w2": rnd((MLP_DIM, C)), "b2": rnd((C,)),
        })
    return raw


def prepare_params(raw):
    """One-time repack: bf16 weights; LN gamma/beta (and softmax scale) folded into weights/biases."""
    C = N_STATE
    sm_scale = float(HEAD_DIM) ** -0.5   # whisper scales q,k each by D**-0.25 -> D**-0.5 on scores

    def fold_ln(gamma, beta, w, bias=None, extra_scale=1.0):
        # act(LN(x)) @ w + bias == ((x-mean)*rstd) @ (gamma[:,None]*w) + (beta @ w + bias)
        w32 = w.astype(jnp.float32)
        wf = gamma[:, None] * w32 * extra_scale
        bf = beta @ w32
        if bias is not None:
            bf = bf + bias.astype(jnp.float32)
        return wf, bf * extra_scale

    def row(v):
        return v.reshape(1, -1).astype(jnp.float32)

    p = {
        "conv1_wt": jnp.transpose(raw["conv1_w"], (2, 1, 0)).astype(jnp.bfloat16),  # (3, Cin, Cout)
        "conv1_b": row(raw["conv1_b"]),
        "conv2_wt": jnp.transpose(raw["conv2_w"], (2, 1, 0)).astype(jnp.bfloat16),
        "conv2_b": row(raw["conv2_b"]),
        "pos_emb": sinusoids(T_CTX, C),                        # (T_ctx, C) f32
        "ln_post_g": row(raw["ln_post_g"]), "ln_post_b": row(raw["ln_post_b"]),
        "pool_mat": adaptive_pool_matrix(T_CTX, POOL_OUT),
        "layers": [],
    }
    # TrainableSubmodule (use_lora=False): ln1 folded into the bias-free proj.
    pw, pb = fold_ln(raw["sub_ln_g"], raw["sub_ln_b"], raw["proj_w"])
    p["proj_w"] = pw.astype(jnp.bfloat16)
    p["proj_b"] = pb.reshape(1, -1).astype(jnp.float32)

    for lyr in raw["layers"]:
        wq, bq = fold_ln(lyr["ln1_g"], lyr["ln1_b"], lyr["wq"], lyr["bq"], extra_scale=sm_scale)
        wk, bk = fold_ln(lyr["ln1_g"], lyr["ln1_b"], lyr["wk"])            # K proj: no bias
        wv, bv = fold_ln(lyr["ln1_g"], lyr["ln1_b"], lyr["wv"], lyr["bv"])
        w1, b1 = fold_ln(lyr["ln2_g"], lyr["ln2_b"], lyr["w1"], lyr["b1"])
        p["layers"].append({
            "w_qkv": jnp.concatenate([wq, wk, wv], axis=1).astype(jnp.bfloat16),
            "b_qkv": jnp.concatenate([bq, bk, bv]).reshape(1, -1).astype(jnp.float32),
            "wo": lyr["wo"].astype(jnp.bfloat16), "bo": row(lyr["bo"]),
            "w1": w1.astype(jnp.bfloat16), "b1": b1.reshape(1, -1).astype(jnp.float32),
            "w2": lyr["w2"].astype(jnp.bfloat16), "b2": row(lyr["b2"]),
        })
    return p


if __name__ == "__main__":
    key = jax.random.PRNGKey(0)
    k_param, k_mel = jax.random.split(key)
    params = prepare_params(init_params(0))
    mels = jax.random.normal(k_mel, (B, N_MELS, T_MEL), dtype=jnp.float32)

    encoder = jax.jit(tunable_whisper_audio_encoder)
    out = jax.block_until_ready(encoder(mels, params))

    assert out.shape == (B, POOL_OUT, OUT_EMBED), out.shape
    assert bool(jnp.all(jnp.isfinite(out)))
    print("KERNEL_OK")
</pallas_src>

<mosaic_0001>
module attributes {stable_mosaic.version = 11 : i64} {
  func.func @_conv1_kernel(%arg0: i32, %arg1: i32, %arg2: memref<1x32x16xbf16, #tpu.memory_space<vmem>>, %arg3: memref<1x8x16xbf16, #tpu.memory_space<vmem>>, %arg4: memref<3x16x256xbf16, #tpu.memory_space<vmem>>, %arg5: memref<1x256xf32, #tpu.memory_space<vmem>>, %arg6: memref<1x32x256xbf16, #tpu.memory_space<vmem>>, %arg7: memref<40x16xbf16, #tpu.memory_space<vmem>>) attributes {dimension_semantics = [#tpu.dimension_semantics<parallel>, #tpu.dimension_semantics<parallel>], iteration_bounds = array<i64: 2, 1>, scalar_prefetch = 0 : i64, scratch_operands = 1 : i64, tpu.core_type = #tpu.core_type<tc>, window_params = [{transform_indices = @transform_0, window_bounds = array<i64: 1, 32, 16>}, {transform_indices = @transform_1, window_bounds = array<i64: 1, 8, 16>}, {pipeline_mode = #tpu.pipeline_mode<synchronous>, transform_indices = @transform_2, window_bounds = array<i64: 3, 16, 256>}, {pipeline_mode = #tpu.pipeline_mode<synchronous>, transform_indices = @transform_3, window_bounds = array<i64: 1, 256>}, {transform_indices = @transform_4, window_bounds = array<i64: 1, 32, 256>}]} {
    %c0 = arith.constant 0 : index
    %c0_0 = arith.constant 0 : index
    %c0_1 = arith.constant 0 : index
    %0 = vector.load %arg2[%c0, %c0_0, %c0_1] : memref<1x32x16xbf16, #tpu.memory_space<vmem>>, vector<1x32x16xbf16>
    %1 = vector.shape_cast %0 : vector<1x32x16xbf16> to vector<32x16xbf16>
    %c0_2 = arith.constant 0 : index
    %c0_3 = arith.constant 0 : index
    %2 = vector.load %arg7[%c0_2, %c0_3] : memref<40x16xbf16, #tpu.memory_space<vmem>>, vector<32x16xbf16>
    tpu.vector_store %arg7[%c0_2, %c0_3], %1 {strides = array<i32>} : memref<40x16xbf16, #tpu.memory_space<vmem>>, vector<32x16xbf16>,
    %c0_4 = arith.constant 0 : index
    %c0_5 = arith.constant 0 : index
    %c0_6 = arith.constant 0 : index
    %3 = vector.load %arg3[%c0_4, %c0_5, %c0_6] : memref<1x8x16xbf16, #tpu.memory_space<vmem>>, vector<1x8x16xbf16>
    %4 = vector.shape_cast %3 : vector<1x8x16xbf16> to vector<8x16xbf16>
    %c32 = arith.constant 32 : index
    %c0_7 = arith.constant 0 : index
    %5 = vector.load %arg7[%c32, %c0_7] : memref<40x16xbf16, #tpu.memory_space<vmem>>, vector<8x16xbf16>
    tpu.vector_store %arg7[%c32, %c0_7], %4 {strides = array<i32>} : memref<40x16xbf16, #tpu.memory_space<vmem>>, vector<8x16xbf16>,
    %c0_8 = arith.constant 0 : index
    %c0_9 = arith.constant 0 : index
    %6 = vector.load %arg7[%c0_8, %c0_9] : memref<40x16xbf16, #tpu.memory_space<vmem>>, vector<32x16xbf16>
    %c0_10 = arith.constant 0 : index
    %c0_11 = arith.constant 0 : index
    %c0_12 = arith.constant 0 : index
    %7 = vector.load %arg4[%c0_10, %c0_11, %c0_12] : memref<3x16x256xbf16, #tpu.memory_space<vmem>>, vector<1x16x256xbf16>
    %8 = vector.shape_cast %7 : vector<1x16x256xbf16> to vector<16x256xbf16>
    %cst = arith.constant dense<0.000000e+00> : vector<32x256xf32>
    %9 = tpu.matmul %6, %8, %cst {dimension_numbers = #tpu.dot_dimension_numbers<[1], [0], [0], [1], [0, 0, 1, 1], [], []>} : vector<32x16xbf16>, vector<16x256xbf16>, vector<32x256xf32> -> vector<32x256xf32>
    %c1 = arith.constant 1 : index
    %c0_13 = arith.constant 0 : index
    %10 = vector.load %arg7[%c1, %c0_13] : memref<40x16xbf16, #tpu.memory_space<vmem>>, vector<32x16xbf16>
    %c1_14 = arith.constant 1 : index
    %c0_15 = arith.constant 0 : index
    %c0_16 = arith.constant 0 : index
    %11 = vector.load %arg4[%c1_14, %c0_15, %c0_16] : memref<3x16x256xbf16, #tpu.memory_space<vmem>>, vector<1x16x256xbf16>
    %12 = vector.shape_cast %11 : vector<1x16x256xbf16> to vector<16x256xbf16>
    %cst_17 = arith.constant dense<0.000000e+00> : vector<32x256xf32>
    %13 = tpu.matmul %10, %12, %cst_17 {dimension_numbers = #tpu.dot_dimension_numbers<[1], [0], [0], [1], [0, 0, 1, 1], [], []>} : vector<32x16xbf16>, vector<16x256xbf16>, vector<32x256xf32> -> vector<32x256xf32>
    %14 = arith.addf %9, %13 : vector<32x256xf32>
    %c2 = arith.constant 2 : index
    %c0_18 = arith.constant 0 : index
    %15 = vector.load %arg7[%c2, %c0_18] : memref<40x16xbf16, #tpu.memory_space<vmem>>, vector<32x16xbf16>
    %c2_19 = arith.constant 2 : index
    %c0_20 = arith.constant 0 : index
    %c0_21 = arith.constant 0 : index
    %16 = vector.load %arg4[%c2_19, %c0_20, %c0_21] : memref<3x16x256xbf16, #tpu.memory_space<vmem>>, vector<1x16x256xbf16>
    %17 = vector.shape_cast %16 : vector<1x16x256xbf16> to vector<16x256xbf16>
    %cst_22 = arith.constant dense<0.000000e+00> : vector<32x256xf32>
    %18 = tpu.matmul %15, %17, %cst_22 {dimension_numbers = #tpu.dot_dimension_numbers<[1], [0], [0], [1], [0, 0, 1, 1], [], []>} : vector<32x16xbf16>, vector<16x256xbf16>, vector<32x256xf32> -> vector<32x256xf32>
    %19 = arith.addf %14, %18 : vector<32x256xf32>
    %c0_23 = arith.constant 0 : index
    %c0_24 = arith.constant 0 : index
    %20 = vector.load %arg5[%c0_23, %c0_24] : memref<1x256xf32, #tpu.memory_space<vmem>>, vector<1x256xf32>
    %21 = vector.broadcast %20 : vector<1x256xf32> to vector<32x256xf32>
    %22 = arith.addf %19, %21 : vector<32x256xf32>
    %cst_25 = arith.constant 5.000000e-01 : f32
    %23 = vector.broadcast %cst_25 : f32 to vector<32x256xf32>
    %24 = arith.mulf %23, %22 : vector<32x256xf32>
    %cst_26 = arith.constant 4.471500e-02 : f32
    %25 = vector.broadcast %cst_26 : f32 to vector<32x256xf32>
    %26 = arith.mulf %25, %22 : vector<32x256xf32>
    %27 = arith.mulf %26, %22 : vector<32x256xf32>
    %28 = arith.mulf %27, %22 : vector<32x256xf32>
    %29 = arith.addf %22, %28 : vector<32x256xf32>
    %cst_27 = arith.constant 0.797884583 : f32
    %30 = vector.broadcast %cst_27 : f32 to vector<32x256xf32>
    %31 = arith.mulf %30, %29 : vector<32x256xf32>
    %32 = math.tanh %31 : vector<32x256xf32>
    %cst_28 = arith.constant 1.000000e+00 : f32
    %33 = vector.broadcast %cst_28 : f32 to vector<32x256xf32>
    %34 = arith.addf %33, %32 : vector<32x256xf32>
    %35 = arith.mulf %24, %34 : vector<32x256xf32>
    %36 = arith.truncf %35 : vector<32x256xf32> to vector<32x256xbf16>
    %c0_29 = arith.constant 0 : index
    %c0_30 = arith.constant 0 : index
    %c0_31 = arith.constant 0 : index
    %37 = vector.load %arg6[%c0_29, %c0_30, %c0_31] : memref<1x32x256xbf16, #tpu.memory_space<vmem>>, vector<1x32x256xbf16>
    %38 = vector.shape_cast %37 : vector<1x32x256xbf16> to vector<32x256xbf16>
    %39 = vector.shape_cast %36 : vector<32x256xbf16> to vector<1x32x256xbf16>
    tpu.vector_store %arg6[%c0_29, %c0_30, %c0_31], %39 {strides = array<i32>} : memref<1x32x256xbf16, #tpu.memory_space<vmem>>, vector<1x32x256xbf16>,
    return
  }
  func.func @transform_0(%arg0: i32, %arg1: i32) -> (i32, i32, i32) {
    %c0_i32 = arith.constant 0 : i32
    %c0_i32_0 = arith.constant 0 : i32
    return %arg0, %arg1, %c0_i32 : i32, i32, i32
  }
  func.func @transform_1(%arg0: i32, %arg1: i32) -> (i32, i32, i32) {
    %c1_i32 = arith.constant 1 : i32
    %0 = arith.addi %arg1, %c1_i32 : i32
    %c4_i32 = arith.constant 4 : i32
    %1 = arith.muli %0, %c4_i32 : i32
    %c0_i32 = arith.constant 0 : i32
    %c0_i32_0 = arith.constant 0 : i32
    return %arg0, %1, %c0_i32 : i32, i32, i32
  }
  func.func @transform_2(%arg0: i32, %arg1: i32) -> (i32, i32, i32) {
    %c0_i32 = arith.constant 0 : i32
    %c0_i32_0 = arith.constant 0 : i32
    %c0_i32_1 = arith.constant 0 : i32
    %c0_i32_2 = arith.constant 0 : i32
    return %c0_i32, %c0_i32_0, %c0_i32_1 : i32, i32, i32
  }
  func.func @transform_3(%arg0: i32, %arg1: i32) -> (i32, i32) {
    %c0_i32 = arith.constant 0 : i32
    %c0_i32_0 = arith.constant 0 : i32
    %c0_i32_1 = arith.constant 0 : i32
    return %c0_i32, %c0_i32_0 : i32, i32
  }
  func.func @transform_4(%arg0: i32, %arg1: i32) -> (i32, i32, i32) {
    %c0_i32 = arith.constant 0 : i32
    %c0_i32_0 = arith.constant 0 : i32
    return %arg0, %arg1, %c0_i32 : i32, i32, i32
  }
}

module attributes {stable_mosaic.version = 11 : i64} {
  func.func @_conv2_kernel(%arg0: i32, %arg1: i32, %arg2: memref<1x16x512xbf16, #tpu.memory_space<vmem>>, %arg3: memref<1x8x512xbf16, #tpu.memory_space<vmem>>, %arg4: memref<3x256x256xbf16, #tpu.memory_space<vmem>>, %arg5: memref<1x256xf32, #tpu.memory_space<vmem>>, %arg6: memref<16x256xf32, #tpu.memory_space<vmem>>, %arg7: memref<1x16x256xbf16, #tpu.memory_space<vmem>>, %arg8: memref<24x512xbf16, #tpu.memory_space<vmem>>) attributes {dimension_semantics = [#tpu.dimension_semantics<parallel>, #tpu.dimension_semantics<parallel>], iteration_bounds = array<i64: 2, 1>, scalar_prefetch = 0 : i64, scratch_operands = 1 : i64, tpu.core_type = #tpu.core_type<tc>, window_params = [{transform_indices = @transform_0, window_bounds = array<i64: 1, 16, 512>}, {transform_indices = @transform_1, window_bounds = array<i64: 1, 8, 512>}, {pipeline_mode = #tpu.pipeline_mode<synchronous>, transform_indices = @transform_2, window_bounds = array<i64: 3, 256, 256>}, {pipeline_mode = #tpu.pipeline_mode<synchronous>, transform_indices = @transform_3, window_bounds = array<i64: 1, 256>}, {transform_indices = @transform_4, window_bounds = array<i64: 16, 256>}, {transform_indices = @transform_5, window_bounds = array<i64: 1, 16, 256>}]} {
    %c0 = arith.constant 0 : index
    %c0_0 = arith.constant 0 : index
    %c0_1 = arith.constant 0 : index
    %0 = vector.load %arg2[%c0, %c0_0, %c0_1] : memref<1x16x512xbf16, #tpu.memory_space<vmem>>, vector<1x16x512xbf16>
    %1 = vector.shape_cast %0 : vector<1x16x512xbf16> to vector<16x512xbf16>
    %c0_2 = arith.constant 0 : index
    %c0_3 = arith.constant 0 : index
    %2 = vector.load %arg8[%c0_2, %c0_3] : memref<24x512xbf16, #tpu.memory_space<vmem>>, vector<16x512xbf16>
    tpu.vector_store %arg8[%c0_2, %c0_3], %1 {strides = array<i32>} : memref<24x512xbf16, #tpu.memory_space<vmem>>, vector<16x512xbf16>,
    %c0_4 = arith.constant 0 : index
    %c0_5 = arith.constant 0 : index
    %c0_6 = arith.constant 0 : index
    %3 = vector.load %arg3[%c0_4, %c0_5, %c0_6] : memref<1x8x512xbf16, #tpu.memory_space<vmem>>, vector<1x8x512xbf16>
    %4 = vector.shape_cast %3 : vector<1x8x512xbf16> to vector<8x512xbf16>
    %c16 = arith.constant 16 : index
    %c0_7 = arith.constant 0 : index
    %5 = vector.load %arg8[%c16, %c0_7] : memref<24x512xbf16, #tpu.memory_space<vmem>>, vector<8x512xbf16>
    tpu.vector_store %arg8[%c16, %c0_7], %4 {strides = array<i32>} : memref<24x512xbf16, #tpu.memory_space<vmem>>, vector<8x512xbf16>,
    %c0_8 = arith.constant 0 : index
    %c0_9 = arith.constant 0 : index
    %6 = vector.load %arg8[%c0_8, %c0_9] : memref<24x512xbf16, #tpu.memory_space<vmem>>, vector<16x256xbf16>
    %c0_10 = arith.constant 0 : index
    %c256 = arith.constant 256 : index
    %7 = vector.load %arg8[%c0_10, %c256] : memref<24x512xbf16, #tpu.memory_space<vmem>>, vector<16x256xbf16>
    %c1 = arith.constant 1 : index
    %c0_11 = arith.constant 0 : index
    %8 = vector.load %arg8[%c1, %c0_11] : memref<24x512xbf16, #tpu.memory_space<vmem>>, vector<16x256xbf16>
    %c0_12 = arith.constant 0 : index
    %c0_13 = arith.constant 0 : index
    %c0_14 = arith.constant 0 : index
    %9 = vector.load %arg4[%c0_12, %c0_13, %c0_14] : memref<3x256x256xbf16, #tpu.memory_space<vmem>>, vector<1x256x256xbf16>
    %10 = vector.shape_cast %9 : vector<1x256x256xbf16> to vector<256x256xbf16>
    %cst = arith.constant dense<0.000000e+00> : vector<16x256xf32>
    %11 = tpu.matmul %6, %10, %cst {dimension_numbers = #tpu.dot_dimension_numbers<[1], [0], [0], [1], [0, 0, 1, 1], [], []>} : vector<16x256xbf16>, vector<256x256xbf16>, vector<16x256xf32> -> vector<16x256xf32>
    %c1_15 = arith.constant 1 : index
    %c0_16 = arith.constant 0 : index
    %c0_17 = arith.constant 0 : index
    %12 = vector.load %arg4[%c1_15, %c0_16, %c0_17] : memref<3x256x256xbf16, #tpu.memory_space<vmem>>, vector<1x256x256xbf16>
    %13 = vector.shape_cast %12 : vector<1x256x256xbf16> to vector<256x256xbf16>
    %cst_18 = arith.constant dense<0.000000e+00> : vector<16x256xf32>
    %14 = tpu.matmul %7, %13, %cst_18 {dimension_numbers = #tpu.dot_dimension_numbers<[1], [0], [0], [1], [0, 0, 1, 1], [], []>} : vector<16x256xbf16>, vector<256x256xbf16>, vector<16x256xf32> -> vector<16x256xf32>
    %15 = arith.addf %11, %14 : vector<16x256xf32>
    %c2 = arith.constant 2 : index
    %c0_19 = arith.constant 0 : index
    %c0_20 = arith.constant 0 : index
    %16 = vector.load %arg4[%c2, %c0_19, %c0_20] : memref<3x256x256xbf16, #tpu.memory_space<vmem>>, vector<1x256x256xbf16>
    %17 = vector.shape_cast %16 : vector<1x256x256xbf16> to vector<256x256xbf16>
    %cst_21 = arith.constant dense<0.000000e+00> : vector<16x256xf32>
    %18 = tpu.matmul %8, %17, %cst_21 {dimension_numbers = #tpu.dot_dimension_numbers<[1], [0], [0], [1], [0, 0, 1, 1], [], []>} : vector<16x256xbf16>, vector<256x256xbf16>, vector<16x256xf32> -> vector<16x256xf32>
    %19 = arith.addf %15, %18 : vector<16x256xf32>
    %c0_22 = arith.constant 0 : index
    %c0_23 = arith.constant 0 : index
    %20 = vector.load %arg5[%c0_22, %c0_23] : memref<1x256xf32, #tpu.memory_space<vmem>>, vector<1x256xf32>
    %21 = vector.broadcast %20 : vector<1x256xf32> to vector<16x256xf32>
    %22 = arith.addf %19, %21 : vector<16x256xf32>
    %cst_24 = arith.constant 5.000000e-01 : f32
    %23 = vector.broadcast %cst_24 : f32 to vector<16x256xf32>
    %24 = arith.mulf %23, %22 : vector<16x256xf32>
    %cst_25 = arith.constant 4.471500e-02 : f32
    %25 = vector.broadcast %cst_25 : f32 to vector<16x256xf32>
    %26 = arith.mulf %25, %22 : vector<16x256xf32>
    %27 = arith.mulf %26, %22 : vector<16x256xf32>
    %28 = arith.mulf %27, %22 : vector<16x256xf32>
    %29 = arith.addf %22, %28 : vector<16x256xf32>
    %cst_26 = arith.constant 0.797884583 : f32
    %30 = vector.broadcast %cst_26 : f32 to vector<16x256xf32>
    %31 = arith.mulf %30, %29 : vector<16x256xf32>
    %32 = math.tanh %31 : vector<16x256xf32>
    %cst_27 = arith.constant 1.000000e+00 : f32
    %33 = vector.broadcast %cst_27 : f32 to vector<16x256xf32>
    %34 = arith.addf %33, %32 : vector<16x256xf32>
    %35 = arith.mulf %24, %34 : vector<16x256xf32>
    %c0_28 = arith.constant 0 : index
    %c0_29 = arith.constant 0 : index
    %36 = vector.load %arg6[%c0_28, %c0_29] : memref<16x256xf32, #tpu.memory_space<vmem>>, vector<16x256xf32>
    %37 = arith.addf %35, %36 : vector<16x256xf32>
    %38 = arith.truncf %37 : vector<16x256xf32> to vector<16x256xbf16>
    %c0_30 = arith.constant 0 : index
    %c0_31 = arith.constant 0 : index
    %c0_32 = arith.constant 0 : index
    %39 = vector.load %arg7[%c0_30, %c0_31, %c0_32] : memref<1x16x256xbf16, #tpu.memory_space<vmem>>, vector<1x16x256xbf16>
    %40 = vector.shape_cast %39 : vector<1x16x256xbf16> to vector<16x256xbf16>
    %41 = vector.shape_cast %38 : vector<16x256xbf16> to vector<1x16x256xbf16>
    tpu.vector_store %arg7[%c0_30, %c0_31, %c0_32], %41 {strides = array<i32>} : memref<1x16x256xbf16, #tpu.memory_space<vmem>>, vector<1x16x256xbf16>,
    return
  }
  func.func @transform_0(%arg0: i32, %arg1: i32) -> (i32, i32, i32) {
    %c0_i32 = arith.constant 0 : i32
    %c0_i32_0 = arith.constant 0 : i32
    return %arg0, %arg1, %c0_i32 : i32, i32, i32
  }
  func.func @transform_1(%arg0: i32, %arg1: i32) -> (i32, i32, i32) {
    %c1_i32 = arith.constant 1 : i32
    %0 = arith.addi %arg1, %c1_i32 : i32
    %c2_i32 = arith.constant 2 : i32
    %1 = arith.muli %0, %c2_i32 : i32
    %c0_i32 = arith.constant 0 : i32
    %c0_i32_0 = arith.constant 0 : i32
    return %arg0, %1, %c0_i32 : i32, i32, i32
  }
  func.func @transform_2(%arg0: i32, %arg1: i32) -> (i32, i32, i32) {
    %c0_i32 = arith.constant 0 : i32
    %c0_i32_0 = arith.constant 0 : i32
    %c0_i32_1 = arith.constant 0 : i32
    %c0_i32_2 = arith.constant 0 : i32
    return %c0_i32, %c0_i32_0, %c0_i32_1 : i32, i32, i32
  }
  func.func @transform_3(%arg0: i32, %arg1: i32) -> (i32, i32) {
    %c0_i32 = arith.constant 0 : i32
    %c0_i32_0 = arith.constant 0 : i32
    %c0_i32_1 = arith.constant 0 : i32
    return %c0_i32, %c0_i32_0 : i32, i32
  }
  func.func @transform_4(%arg0: i32, %arg1: i32) -> (i32, i32) {
    %c0_i32 = arith.constant 0 : i32
    %c0_i32_0 = arith.constant 0 : i32
    return %arg1, %c0_i32 : i32, i32
  }
  func.func @transform_5(%arg0: i32, %arg1: i32) -> (i32, i32, i32) {
    %c0_i32 = arith.constant 0 : i32
    %c0_i32_0 = arith.constant 0 : i32
    return %arg0, %arg1, %c0_i32 : i32, i32, i32
  }
}

module attributes {stable_mosaic.version = 11 : i64} {
  func.func @_flash_attn_kernel(%arg0: i32, %arg1: i32, %arg2: i32, %arg3: i32, %arg4: memref<1x16x128xbf16, #tpu.memory_space<vmem>>, %arg5: memref<1x16x128xbf16, #tpu.memory_space<vmem>>, %arg6: memref<1x16x128xbf16, #tpu.memory_space<vmem>>, %arg7: memref<1x16x128xbf16, #tpu.memory_space<vmem>>, %arg8: memref<1x16x1xf32, #tpu.memory_space<vmem>>, %arg9: memref<1x16x1xf32, #tpu.memory_space<vmem>>, %arg10: memref<16x128xf32, #tpu.memory_space<vmem>>) attributes {dimension_semantics = [#tpu.dimension_semantics<parallel>, #tpu.dimension_semantics<parallel>, #tpu.dimension_semantics<parallel>, #tpu.dimension_semantics<arbitrary>], iteration_bounds = array<i64: 2, 2, 1, 1>, scalar_prefetch = 0 : i64, scratch_operands = 3 : i64, tpu.core_type = #tpu.core_type<tc>, window_params = [{transform_indices = @transform_0, window_bounds = array<i64: 1, 16, 128>}, {transform_indices = @transform_1, window_bounds = array<i64: 1, 16, 128>}, {transform_indices = @transform_2, window_bounds = array<i64: 1, 16, 128>}, {transform_indices = @transform_3, window_bounds = array<i64: 1, 16, 128>}]} {
    %c0_i32 = arith.constant 0 : i32
    %0 = arith.cmpi eq, %arg3, %c0_i32 : i32
    %1 = arith.extui %0 : i1 to i32
    %c0_i32_0 = arith.constant 0 : i32
    %2 = arith.cmpi ne, %1, %c0_i32_0 : i32
    scf.if %2 {
      %cst_30 = arith.constant -1.000000e+30 : f32
      %42 = vector.broadcast %cst_30 : f32 to vector<1x16x1xf32>
      %c0_31 = arith.constant 0 : index
      %c0_32 = arith.constant 0 : index
      %c0_33 = arith.constant 0 : index
      %43 = vector.load %arg8[%c0_31, %c0_32, %c0_33] : memref<1x16x1xf32, #tpu.memory_space<vmem>>, vector<1x16x1xf32>
      tpu.vector_store %arg8[%c0_31, %c0_32, %c0_33], %42 {strides = array<i32>} : memref<1x16x1xf32, #tpu.memory_space<vmem>>, vector<1x16x1xf32>,
      %cst_34 = arith.constant 0.000000e+00 : f32
      %44 = vector.broadcast %cst_34 : f32 to vector<1x16x1xf32>
      %c0_35 = arith.constant 0 : index
      %c0_36 = arith.constant 0 : index
      %c0_37 = arith.constant 0 : index
      %45 = vector.load %arg9[%c0_35, %c0_36, %c0_37] : memref<1x16x1xf32, #tpu.memory_space<vmem>>, vector<1x16x1xf32>
      tpu.vector_store %arg9[%c0_35, %c0_36, %c0_37], %44 {strides = array<i32>} : memref<1x16x1xf32, #tpu.memory_space<vmem>>, vector<1x16x1xf32>,
      %cst_38 = arith.constant 0.000000e+00 : f32
      %46 = vector.broadcast %cst_38 : f32 to vector<16x128xf32>
      %c0_39 = arith.constant 0 : index
      %c0_40 = arith.constant 0 : index
      %47 = vector.load %arg10[%c0_39, %c0_40] : memref<16x128xf32, #tpu.memory_space<vmem>>, vector<16x128xf32>
      tpu.vector_store %arg10[%c0_39, %c0_40], %46 {strides = array<i32>} : memref<16x128xf32, #tpu.memory_space<vmem>>, vector<16x128xf32>,
    } else {
    }
    %c0 = arith.constant 0 : index
    %c0_1 = arith.constant 0 : index
    %c0_2 = arith.constant 0 : index
    %3 = vector.load %arg4[%c0, %c0_1, %c0_2] : memref<1x16x128xbf16, #tpu.memory_space<vmem>>, vector<1x16x128xbf16>
    %4 = vector.shape_cast %3 : vector<1x16x128xbf16> to vector<16x128xbf16>
    %c0_3 = arith.constant 0 : index
    %c0_4 = arith.constant 0 : index
    %c0_5 = arith.constant 0 : index
    %5 = vector.load %arg5[%c0_3, %c0_4, %c0_5] : memref<1x16x128xbf16, #tpu.memory_space<vmem>>, vector<1x16x128xbf16>
    %6 = vector.shape_cast %5 : vector<1x16x128xbf16> to vector<16x128xbf16>
    %c0_6 = arith.constant 0 : index
    %c0_7 = arith.constant 0 : index
    %c0_8 = arith.constant 0 : index
    %7 = vector.load %arg6[%c0_6, %c0_7, %c0_8] : memref<1x16x128xbf16, #tpu.memory_space<vmem>>, vector<1x16x128xbf16>
    %8 = vector.shape_cast %7 : vector<1x16x128xbf16> to vector<16x128xbf16>
    %cst = arith.constant dense<0.000000e+00> : vector<16x16xf32>
    %9 = tpu.matmul %4, %6, %cst {dimension_numbers = #tpu.dot_dimension_numbers<[1], [1], [0], [0], [0, 0, 1, 0], [], []>} : vector<16x128xbf16>, vector<16x128xbf16>, vector<16x16xf32> -> vector<16x16xf32>
    %c0_9 = arith.constant 0 : index
    %c0_10 = arith.constant 0 : index
    %c0_11 = arith.constant 0 : index
    %10 = vector.load %arg8[%c0_9, %c0_10, %c0_11] : memref<1x16x1xf32, #tpu.memory_space<vmem>>, vector<1x16x1xf32>
    %11 = vector.shape_cast %10 : vector<1x16x1xf32> to vector<16x1xf32>
    %cst_12 = arith.constant dense<0xFF800000> : vector<16xf32>
    %12 = vector.multi_reduction <maximumf>, %9, %cst_12 [1] : vector<16x16xf32> to vector<16xf32>
    %13 = vector.shape_cast %12 : vector<16xf32> to vector<16x1xf32>
    %14 = arith.maximumf %11, %13 : vector<16x1xf32>
    %15 = arith.subf %11, %14 : vector<16x1xf32>
    %16 = math.exp %15 : vector<16x1xf32>
    %17 = vector.broadcast %14 : vector<16x1xf32> to vector<16x16xf32>
    %18 = arith.subf %9, %17 : vector<16x16xf32>
    %19 = math.exp %18 : vector<16x16xf32>
    %c0_13 = arith.constant 0 : index
    %c0_14 = arith.constant 0 : index
    %c0_15 = arith.constant 0 : index
    %20 = vector.load %arg9[%c0_13, %c0_14, %c0_15] : memref<1x16x1xf32, #tpu.memory_space<vmem>>, vector<1x16x1xf32>
    %21 = vector.shape_cast %20 : vector<1x16x1xf32> to vector<16x1xf32>
    %22 = arith.mulf %16, %21 : vector<16x1xf32>
    %cst_16 = arith.constant dense<0.000000e+00> : vector<16xf32>
    %23 = vector.multi_reduction <add>, %19, %cst_16 [1] : vector<16x16xf32> to vector<16xf32>
    %24 = vector.shape_cast %23 : vector<16xf32> to vector<16x1xf32>
    %25 = arith.addf %22, %24 : vector<16x1xf32>
    %c0_17 = arith.constant 0 : index
    %c0_18 = arith.constant 0 : index
    %c0_19 = arith.constant 0 : index
    %26 = vector.load %arg9[%c0_17, %c0_18, %c0_19] : memref<1x16x1xf32, #tpu.memory_space<vmem>>, vector<1x16x1xf32>
    %27 = vector.shape_cast %26 : vector<1x16x1xf32> to vector<16x1xf32>
    %28 = vector.shape_cast %25 : vector<16x1xf32> to vector<1x16x1xf32>
    tpu.vector_store %arg9[%c0_17, %c0_18, %c0_19], %28 {strides = array<i32>} : memref<1x16x1xf32, #tpu.memory_space<vmem>>, vector<1x16x1xf32>,
    %c0_20 = arith.constant 0 : index
    %c0_21 = arith.constant 0 : index
    %29 = vector.load %arg10[%c0_20, %c0_21] : memref<16x128xf32, #tpu.memory_space<vmem>>, vector<16x128xf32>
    %30 = vector.broadcast %16 : vector<16x1xf32> to vector<16x128xf32>
    %31 = arith.mulf %30, %29 : vector<16x128xf32>
    %32 = arith.truncf %19 : vector<16x16xf32> to vector<16x16xbf16>
    %cst_22 = arith.constant dense<0.000000e+00> : vector<16x128xf32>
    %33 = tpu.matmul %32, %8, %cst_22 {dimension_numbers = #tpu.dot_dimension_numbers<[1], [0], [0], [1], [0, 0, 1, 1], [], []>} : vector<16x16xbf16>, vector<16x128xbf16>, vector<16x128xf32> -> vector<16x128xf32>
    %34 = arith.addf %31, %33 : vector<16x128xf32>
    %c0_23 = arith.constant 0 : index
    %c0_24 = arith.constant 0 : index
    %35 = vector.load %arg10[%c0_23, %c0_24] : memref<16x128xf32, #tpu.memory_space<vmem>>, vector<16x128xf32>
    tpu.vector_store %arg10[%c0_23, %c0_24], %34 {strides = array<i32>} : memref<16x128xf32, #tpu.memory_space<vmem>>, vector<16x128xf32>,
    %c0_25 = arith.constant 0 : index
    %c0_26 = arith.constant 0 : index
    %c0_27 = arith.constant 0 : index
    %36 = vector.load %arg8[%c0_25, %c0_26, %c0_27] : memref<1x16x1xf32, #tpu.memory_space<vmem>>, vector<1x16x1xf32>
    %37 = vector.shape_cast %36 : vector<1x16x1xf32> to vector<16x1xf32>
    %38 = vector.shape_cast %14 : vector<16x1xf32> to vector<1x16x1xf32>
    tpu.vector_store %arg8[%c0_25, %c0_26, %c0_27], %38 {strides = array<i32>} : memref<1x16x1xf32, #tpu.memory_space<vmem>>, vector<1x16x1xf32>,
    %c0_i32_28 = arith.constant 0 : i32
    %39 = arith.cmpi eq, %arg3, %c0_i32_28 : i32
    %40 = arith.extui %39 : i1 to i32
    %c0_i32_29 = arith.constant 0 : i32
    %41 = arith.cmpi ne, %40, %c0_i32_29 : i32
    scf.if %41 {
      %c0_30 = arith.constant 0 : index
      %c0_31 = arith.constant 0 : index
      %42 = vector.load %arg10[%c0_30, %c0_31] : memref<16x128xf32, #tpu.memory_space<vmem>>, vector<16x128xf32>
      %c0_32 = arith.constant 0 : index
      %c0_33 = arith.constant 0 : index
      %c0_34 = arith.constant 0 : index
      %43 = vector.load %arg9[%c0_32, %c0_33, %c0_34] : memref<1x16x1xf32, #tpu.memory_space<vmem>>, vector<1x16x1xf32>
      %44 = vector.shape_cast %43 : vector<1x16x1xf32> to vector<16x1xf32>
      %45 = tpu.reciprocal %44 {approx = true} : vector<16x1xf32> -> vector<16x1xf32>
      %46 = vector.broadcast %45 : vector<16x1xf32> to vector<16x128xf32>
      %47 = arith.mulf %42, %46 : vector<16x128xf32>
      %48 = arith.truncf %47 : vector<16x128xf32> to vector<16x128xbf16>
      %c0_35 = arith.constant 0 : index
      %c0_36 = arith.constant 0 : index
      %c0_37 = arith.constant 0 : index
      %49 = vector.load %arg7[%c0_35, %c0_36, %c0_37] : memref<1x16x128xbf16, #tpu.memory_space<vmem>>, vector<1x16x128xbf16>
      %50 = vector.shape_cast %49 : vector<1x16x128xbf16> to vector<16x128xbf16>
      %51 = vector.shape_cast %48 : vector<16x128xbf16> to vector<1x16x128xbf16>
      tpu.vector_store %arg7[%c0_35, %c0_36, %c0_37], %51 {strides = array<i32>} : memref<1x16x128xbf16, #tpu.memory_space<vmem>>, vector<1x16x128xbf16>,
    } else {
    }
    return
  }
  func.func @transform_0(%arg0: i32, %arg1: i32, %arg2: i32, %arg3: i32) -> (i32, i32, i32) {
    %c0_i32 = arith.constant 0 : i32
    return %arg0, %arg2, %arg1 : i32, i32, i32
  }
  func.func @transform_1(%arg0: i32, %arg1: i32, %arg2: i32, %arg3: i32) -> (i32, i32, i32) {
    %c2_i32 = arith.constant 2 : i32
    %0 = arith.addi %c2_i32, %arg1 : i32
    %c0_i32 = arith.constant 0 : i32
    return %arg0, %arg3, %0 : i32, i32, i32
  }
  func.func @transform_2(%arg0: i32, %arg1: i32, %arg2: i32, %arg3: i32) -> (i32, i32, i32) {
    %c4_i32 = arith.constant 4 : i32
    %0 = arith.addi %c4_i32, %arg1 : i32
    %c0_i32 = arith.constant 0 : i32
    return %arg0, %arg3, %0 : i32, i32, i32
  }
  func.func @transform_3(%arg0: i32, %arg1: i32, %arg2: i32, %arg3: i32) -> (i32, i32, i32) {
    %c0_i32 = arith.constant 0 : i32
    return %arg0, %arg2, %arg1 : i32, i32, i32
  }
}

module attributes {stable_mosaic.version = 11 : i64} {
  func.func @_ln_matmul_kernel(%arg0: i32, %arg1: i32, %arg2: memref<32x256xbf16, #tpu.memory_space<vmem>>, %arg3: memref<256x384xbf16, #tpu.memory_space<vmem>>, %arg4: memref<1x384xf32, #tpu.memory_space<vmem>>, %arg5: memref<32x384xbf16, #tpu.memory_space<vmem>>, %arg6: memref<32x256xbf16, #tpu.memory_space<vmem>>) attributes {dimension_semantics = [#tpu.dimension_semantics<parallel>, #tpu.dimension_semantics<arbitrary>], iteration_bounds = array<i64: 1, 2>, scalar_prefetch = 0 : i64, scratch_operands = 1 : i64, tpu.core_type = #tpu.core_type<tc>, window_params = [{transform_indices = @transform_0, window_bounds = array<i64: 32, 256>}, {transform_indices = @transform_1, window_bounds = array<i64: 256, 384>}, {transform_indices = @transform_2, window_bounds = array<i64: 1, 384>}, {transform_indices = @transform_3, window_bounds = array<i64: 32, 384>}]} {
    %c0_i32 = arith.constant 0 : i32
    %0 = arith.cmpi eq, %arg1, %c0_i32 : i32
    %1 = arith.extui %0 : i1 to i32
    %c0_i32_0 = arith.constant 0 : i32
    %2 = arith.cmpi ne, %1, %c0_i32_0 : i32
    scf.if %2 {
      %c0_8 = arith.constant 0 : index
      %c0_9 = arith.constant 0 : index
      %11 = vector.load %arg2[%c0_8, %c0_9] : memref<32x256xbf16, #tpu.memory_space<vmem>>, vector<32x256xbf16>
      %12 = arith.extf %11 : vector<32x256xbf16> to vector<32x256xf32>
      %cst_10 = arith.constant dense<0.000000e+00> : vector<32xf32>
      %13 = vector.multi_reduction <add>, %12, %cst_10 [1] : vector<32x256xf32> to vector<32xf32>
      %14 = vector.shape_cast %13 : vector<32xf32> to vector<32x1xf32>
      %cst_11 = arith.constant 2.560000e+02 : f32
      %15 = vector.broadcast %cst_11 : f32 to vector<32x1xf32>
      %16 = arith.divf %14, %15 : vector<32x1xf32>
      %17 = vector.broadcast %16 : vector<32x1xf32> to vector<32x256xf32>
      %18 = arith.subf %12, %17 : vector<32x256xf32>
      %19 = arith.mulf %18, %18 : vector<32x256xf32>
      %cst_12 = arith.constant dense<0.000000e+00> : vector<32xf32>
      %20 = vector.multi_reduction <add>, %19, %cst_12 [1] : vector<32x256xf32> to vector<32xf32>
      %21 = vector.shape_cast %20 : vector<32xf32> to vector<32x1xf32>
      %cst_13 = arith.constant 2.560000e+02 : f32
      %22 = vector.broadcast %cst_13 : f32 to vector<32x1xf32>
      %23 = arith.divf %21, %22 : vector<32x1xf32>
      %cst_14 = arith.constant 9.99999974E-6 : f32
      %24 = vector.broadcast %cst_14 : f32 to vector<32x1xf32>
      %25 = arith.addf %23, %24 : vector<32x1xf32>
      %26 = math.rsqrt %25 : vector<32x1xf32>
      %27 = vector.broadcast %26 : vector<32x1xf32> to vector<32x256xf32>
      %28 = arith.mulf %18, %27 : vector<32x256xf32>
      %29 = arith.truncf %28 : vector<32x256xf32> to vector<32x256xbf16>
      %c0_15 = arith.constant 0 : index
      %c0_16 = arith.constant 0 : index
      %30 = vector.load %arg6[%c0_15, %c0_16] : memref<32x256xbf16, #tpu.memory_space<vmem>>, vector<32x256xbf16>
      tpu.vector_store %arg6[%c0_15, %c0_16], %29 {strides = array<i32>} : memref<32x256xbf16, #tpu.memory_space<vmem>>, vector<32x256xbf16>,
    } else {
    }
    %c0 = arith.constant 0 : index
    %c0_1 = arith.constant 0 : index
    %3 = vector.load %arg6[%c0, %c0_1] : memref<32x256xbf16, #tpu.memory_space<vmem>>, vector<32x256xbf16>
    %c0_2 = arith.constant 0 : index
    %c0_3 = arith.constant 0 : index
    %4 = vector.load %arg3[%c0_2, %c0_3] : memref<256x384xbf16, #tpu.memory_space<vmem>>, vector<256x384xbf16>
    %cst = arith.constant dense<0.000000e+00> : vector<32x384xf32>
    %5 = tpu.matmul %3, %4, %cst {dimension_numbers = #tpu.dot_dimension_numbers<[1], [0], [0], [1], [0, 0, 1, 1], [], []>} : vector<32x256xbf16>, vector<256x384xbf16>, vector<32x384xf32> -> vector<32x384xf32>
    %c0_4 = arith.constant 0 : index
    %c0_5 = arith.constant 0 : index
    %6 = vector.load %arg4[%c0_4, %c0_5] : memref<1x384xf32, #tpu.memory_space<vmem>>, vector<1x384xf32>
    %7 = vector.broadcast %6 : vector<1x384xf32> to vector<32x384xf32>
    %8 = arith.addf %5, %7 : vector<32x384xf32>
    %9 = arith.truncf %8 : vector<32x384xf32> to vector<32x384xbf16>
    %c0_6 = arith.constant 0 : index
    %c0_7 = arith.constant 0 : index
    %10 = vector.load %arg5[%c0_6, %c0_7] : memref<32x384xbf16, #tpu.memory_space<vmem>>, vector<32x384xbf16>
    tpu.vector_store %arg5[%c0_6, %c0_7], %9 {strides = array<i32>} : memref<32x384xbf16, #tpu.memory_space<vmem>>, vector<32x384xbf16>,
    return
  }
  func.func @transform_0(%arg0: i32, %arg1: i32) -> (i32, i32) {
    %c0_i32 = arith.constant 0 : i32
    %c0_i32_0 = arith.constant 0 : i32
    return %arg0, %c0_i32 : i32, i32
  }
  func.func @transform_1(%arg0: i32, %arg1: i32) -> (i32, i32) {
    %c0_i32 = arith.constant 0 : i32
    %c0_i32_0 = arith.constant 0 : i32
    return %c0_i32, %arg1 : i32, i32
  }
  func.func @transform_2(%arg0: i32, %arg1: i32) -> (i32, i32) {
    %c0_i32 = arith.constant 0 : i32
    %c0_i32_0 = arith.constant 0 : i32
    return %c0_i32, %arg1 : i32, i32
  }
  func.func @transform_3(%arg0: i32, %arg1: i32) -> (i32, i32) {
    %c0_i32 = arith.constant 0 : i32
    return %arg0, %arg1 : i32, i32
  }
}

module attributes {stable_mosaic.version = 11 : i64} {
  func.func @_matmul_res_kernel(%arg0: i32, %arg1: i32, %arg2: i32, %arg3: memref<32x256xbf16, #tpu.memory_space<vmem>>, %arg4: memref<256x256xbf16, #tpu.memory_space<vmem>>, %arg5: memref<1x256xf32, #tpu.memory_space<vmem>>, %arg6: memref<32x256xbf16, #tpu.memory_space<vmem>>, %arg7: memref<32x256xbf16, #tpu.memory_space<vmem>>, %arg8: memref<32x256xf32, #tpu.memory_space<vmem>>) attributes {dimension_semantics = [#tpu.dimension_semantics<parallel>, #tpu.dimension_semantics<parallel>, #tpu.dimension_semantics<arbitrary>], iteration_bounds = array<i64: 1, 1, 1>, scalar_prefetch = 0 : i64, scratch_operands = 1 : i64, tpu.core_type = #tpu.core_type<tc>, window_params = [{transform_indices = @transform_0, window_bounds = array<i64: 32, 256>}, {transform_indices = @transform_1, window_bounds = array<i64: 256, 256>}, {transform_indices = @transform_2, window_bounds = array<i64: 1, 256>}, {transform_indices = @transform_3, window_bounds = array<i64: 32, 256>}, {transform_indices = @transform_4, window_bounds = array<i64: 32, 256>}]} {
    %c0_i32 = arith.constant 0 : i32
    %0 = arith.cmpi eq, %arg2, %c0_i32 : i32
    %1 = arith.extui %0 : i1 to i32
    %c0_i32_0 = arith.constant 0 : i32
    %2 = arith.cmpi ne, %1, %c0_i32_0 : i32
    scf.if %2 {
      %cst_10 = arith.constant 0.000000e+00 : f32
      %12 = vector.broadcast %cst_10 : f32 to vector<32x256xf32>
      %c0_11 = arith.constant 0 : index
      %c0_12 = arith.constant 0 : index
      %13 = vector.load %arg8[%c0_11, %c0_12] : memref<32x256xf32, #tpu.memory_space<vmem>>, vector<32x256xf32>
      tpu.vector_store %arg8[%c0_11, %c0_12], %12 {strides = array<i32>} : memref<32x256xf32, #tpu.memory_space<vmem>>, vector<32x256xf32>,
    } else {
    }
    %c0 = arith.constant 0 : index
    %c0_1 = arith.constant 0 : index
    %3 = vector.load %arg8[%c0, %c0_1] : memref<32x256xf32, #tpu.memory_space<vmem>>, vector<32x256xf32>
    %c0_2 = arith.constant 0 : index
    %c0_3 = arith.constant 0 : index
    %4 = vector.load %arg3[%c0_2, %c0_3] : memref<32x256xbf16, #tpu.memory_space<vmem>>, vector<32x256xbf16>
    %c0_4 = arith.constant 0 : index
    %c0_5 = arith.constant 0 : index
    %5 = vector.load %arg4[%c0_4, %c0_5] : memref<256x256xbf16, #tpu.memory_space<vmem>>, vector<256x256xbf16>
    %cst = arith.constant dense<0.000000e+00> : vector<32x256xf32>
    %6 = tpu.matmul %4, %5, %cst {dimension_numbers = #tpu.dot_dimension_numbers<[1], [0], [0], [1], [0, 0, 1, 1], [], []>} : vector<32x256xbf16>, vector<256x256xbf16>, vector<32x256xf32> -> vector<32x256xf32>
    %7 = arith.addf %3, %6 : vector<32x256xf32>
    %c0_6 = arith.constant 0 : index
    %c0_7 = arith.constant 0 : index
    %8 = vector.load %arg8[%c0_6, %c0_7] : memref<32x256xf32, #tpu.memory_space<vmem>>, vector<32x256xf32>
    tpu.vector_store %arg8[%c0_6, %c0_7], %7 {strides = array<i32>} : memref<32x256xf32, #tpu.memory_space<vmem>>, vector<32x256xf32>,
    %c0_i32_8 = arith.constant 0 : i32
    %9 = arith.cmpi eq, %arg2, %c0_i32_8 : i32
    %10 = arith.extui %9 : i1 to i32
    %c0_i32_9 = arith.constant 0 : i32
    %11 = arith.cmpi ne, %10, %c0_i32_9 : i32
    scf.if %11 {
      %c0_10 = arith.constant 0 : index
      %c0_11 = arith.constant 0 : index
      %12 = vector.load %arg8[%c0_10, %c0_11] : memref<32x256xf32, #tpu.memory_space<vmem>>, vector<32x256xf32>
      %c0_12 = arith.constant 0 : index
      %c0_13 = arith.constant 0 : index
      %13 = vector.load %arg5[%c0_12, %c0_13] : memref<1x256xf32, #tpu.memory_space<vmem>>, vector<1x256xf32>
      %14 = vector.broadcast %13 : vector<1x256xf32> to vector<32x256xf32>
      %15 = arith.addf %12, %14 : vector<32x256xf32>
      %c0_14 = arith.constant 0 : index
      %c0_15 = arith.constant 0 : index
      %16 = vector.load %arg6[%c0_14, %c0_15] : memref<32x256xbf16, #tpu.memory_space<vmem>>, vector<32x256xbf16>
      %17 = arith.extf %16 : vector<32x256xbf16> to vector<32x256xf32>
      %18 = arith.addf %15, %17 : vector<32x256xf32>
      %19 = arith.truncf %18 : vector<32x256xf32> to vector<32x256xbf16>
      %c0_16 = arith.constant 0 : index
      %c0_17 = arith.constant 0 : index
      %20 = vector.load %arg7[%c0_16, %c0_17] : memref<32x256xbf16, #tpu.memory_space<vmem>>, vector<32x256xbf16>
      tpu.vector_store %arg7[%c0_16, %c0_17], %19 {strides = array<i32>} : memref<32x256xbf16, #tpu.memory_space<vmem>>, vector<32x256xbf16>,
    } else {
    }
    return
  }
  func.func @transform_0(%arg0: i32, %arg1: i32, %arg2: i32) -> (i32, i32) {
    %c0_i32 = arith.constant 0 : i32
    return %arg0, %arg2 : i32, i32
  }
  func.func @transform_1(%arg0: i32, %arg1: i32, %arg2: i32) -> (i32, i32) {
    %c0_i32 = arith.constant 0 : i32
    return %arg2, %arg1 : i32, i32
  }
  func.func @transform_2(%arg0: i32, %arg1: i32, %arg2: i32) -> (i32, i32) {
    %c0_i32 = arith.constant 0 : i32
    %c0_i32_0 = arith.constant 0 : i32
    return %c0_i32, %arg1 : i32, i32
  }
  func.func @transform_3(%arg0: i32, %arg1: i32, %arg2: i32) -> (i32, i32) {
    %c0_i32 = arith.constant 0 : i32
    return %arg0, %arg1 : i32, i32
  }
  func.func @transform_4(%arg0: i32, %arg1: i32, %arg2: i32) -> (i32, i32) {
    %c0_i32 = arith.constant 0 : i32
    return %arg0, %arg1 : i32, i32
  }
}

module attributes {stable_mosaic.version = 11 : i64} {
  func.func @_ln_matmul_kernel(%arg0: i32, %arg1: i32, %arg2: memref<32x256xbf16, #tpu.memory_space<vmem>>, %arg3: memref<256x512xbf16, #tpu.memory_space<vmem>>, %arg4: memref<1x512xf32, #tpu.memory_space<vmem>>, %arg5: memref<32x512xbf16, #tpu.memory_space<vmem>>, %arg6: memref<32x256xbf16, #tpu.memory_space<vmem>>) attributes {dimension_semantics = [#tpu.dimension_semantics<parallel>, #tpu.dimension_semantics<arbitrary>], iteration_bounds = array<i64: 1, 2>, scalar_prefetch = 0 : i64, scratch_operands = 1 : i64, tpu.core_type = #tpu.core_type<tc>, window_params = [{transform_indices = @transform_0, window_bounds = array<i64: 32, 256>}, {transform_indices = @transform_1, window_bounds = array<i64: 256, 512>}, {transform_indices = @transform_2, window_bounds = array<i64: 1, 512>}, {transform_indices = @transform_3, window_bounds = array<i64: 32, 512>}]} {
    %c0_i32 = arith.constant 0 : i32
    %0 = arith.cmpi eq, %arg1, %c0_i32 : i32
    %1 = arith.extui %0 : i1 to i32
    %c0_i32_0 = arith.constant 0 : i32
    %2 = arith.cmpi ne, %1, %c0_i32_0 : i32
    scf.if %2 {
      %c0_12 = arith.constant 0 : index
      %c0_13 = arith.constant 0 : index
      %24 = vector.load %arg2[%c0_12, %c0_13] : memref<32x256xbf16, #tpu.memory_space<vmem>>, vector<32x256xbf16>
      %25 = arith.extf %24 : vector<32x256xbf16> to vector<32x256xf32>
      %cst_14 = arith.constant dense<0.000000e+00> : vector<32xf32>
      %26 = vector.multi_reduction <add>, %25, %cst_14 [1] : vector<32x256xf32> to vector<32xf32>
      %27 = vector.shape_cast %26 : vector<32xf32> to vector<32x1xf32>
      %cst_15 = arith.constant 2.560000e+02 : f32
      %28 = vector.broadcast %cst_15 : f32 to vector<32x1xf32>
      %29 = arith.divf %27, %28 : vector<32x1xf32>
      %30 = vector.broadcast %29 : vector<32x1xf32> to vector<32x256xf32>
      %31 = arith.subf %25, %30 : vector<32x256xf32>
      %32 = arith.mulf %31, %31 : vector<32x256xf32>
      %cst_16 = arith.constant dense<0.000000e+00> : vector<32xf32>
      %33 = vector.multi_reduction <add>, %32, %cst_16 [1] : vector<32x256xf32> to vector<32xf32>
      %34 = vector.shape_cast %33 : vector<32xf32> to vector<32x1xf32>
      %cst_17 = arith.constant 2.560000e+02 : f32
      %35 = vector.broadcast %cst_17 : f32 to vector<32x1xf32>
      %36 = arith.divf %34, %35 : vector<32x1xf32>
      %cst_18 = arith.constant 9.99999974E-6 : f32
      %37 = vector.broadcast %cst_18 : f32 to vector<32x1xf32>
      %38 = arith.addf %36, %37 : vector<32x1xf32>
      %39 = math.rsqrt %38 : vector<32x1xf32>
      %40 = vector.broadcast %39 : vector<32x1xf32> to vector<32x256xf32>
      %41 = arith.mulf %31, %40 : vector<32x256xf32>
      %42 = arith.truncf %41 : vector<32x256xf32> to vector<32x256xbf16>
      %c0_19 = arith.constant 0 : index
      %c0_20 = arith.constant 0 : index
      %43 = vector.load %arg6[%c0_19, %c0_20] : memref<32x256xbf16, #tpu.memory_space<vmem>>, vector<32x256xbf16>
      tpu.vector_store %arg6[%c0_19, %c0_20], %42 {strides = array<i32>} : memref<32x256xbf16, #tpu.memory_space<vmem>>, vector<32x256xbf16>,
    } else {
    }
    %c0 = arith.constant 0 : index
    %c0_1 = arith.constant 0 : index
    %3 = vector.load %arg6[%c0, %c0_1] : memref<32x256xbf16, #tpu.memory_space<vmem>>, vector<32x256xbf16>
    %c0_2 = arith.constant 0 : index
    %c0_3 = arith.constant 0 : index
    %4 = vector.load %arg3[%c0_2, %c0_3] : memref<256x512xbf16, #tpu.memory_space<vmem>>, vector<256x512xbf16>
    %cst = arith.constant dense<0.000000e+00> : vector<32x512xf32>
    %5 = tpu.matmul %3, %4, %cst {dimension_numbers = #tpu.dot_dimension_numbers<[1], [0], [0], [1], [0, 0, 1, 1], [], []>} : vector<32x256xbf16>, vector<256x512xbf16>, vector<32x512xf32> -> vector<32x512xf32>
    %c0_4 = arith.constant 0 : index
    %c0_5 = arith.constant 0 : index
    %6 = vector.load %arg4[%c0_4, %c0_5] : memref<1x512xf32, #tpu.memory_space<vmem>>, vector<1x512xf32>
    %7 = vector.broadcast %6 : vector<1x512xf32> to vector<32x512xf32>
    %8 = arith.addf %5, %7 : vector<32x512xf32>
    %cst_6 = arith.constant 5.000000e-01 : f32
    %9 = vector.broadcast %cst_6 : f32 to vector<32x512xf32>
    %10 = arith.mulf %9, %8 : vector<32x512xf32>
    %cst_7 = arith.constant 4.471500e-02 : f32
    %11 = vector.broadcast %cst_7 : f32 to vector<32x512xf32>
    %12 = arith.mulf %11, %8 : vector<32x512xf32>
    %13 = arith.mulf %12, %8 : vector<32x512xf32>
    %14 = arith.mulf %13, %8 : vector<32x512xf32>
    %15 = arith.addf %8, %14 : vector<32x512xf32>
    %cst_8 = arith.constant 0.797884583 : f32
    %16 = vector.broadcast %cst_8 : f32 to vector<32x512xf32>
    %17 = arith.mulf %16, %15 : vector<32x512xf32>
    %18 = math.tanh %17 : vector<32x512xf32>
    %cst_9 = arith.constant 1.000000e+00 : f32
    %19 = vector.broadcast %cst_9 : f32 to vector<32x512xf32>
    %20 = arith.addf %19, %18 : vector<32x512xf32>
    %21 = arith.mulf %10, %20 : vector<32x512xf32>
    %22 = arith.truncf %21 : vector<32x512xf32> to vector<32x512xbf16>
    %c0_10 = arith.constant 0 : index
    %c0_11 = arith.constant 0 : index
    %23 = vector.load %arg5[%c0_10, %c0_11] : memref<32x512xbf16, #tpu.memory_space<vmem>>, vector<32x512xbf16>
    tpu.vector_store %arg5[%c0_10, %c0_11], %22 {strides = array<i32>} : memref<32x512xbf16, #tpu.memory_space<vmem>>, vector<32x512xbf16>,
    return
  }
  func.func @transform_0(%arg0: i32, %arg1: i32) -> (i32, i32) {
    %c0_i32 = arith.constant 0 : i32
    %c0_i32_0 = arith.constant 0 : i32
    return %arg0, %c0_i32 : i32, i32
  }
  func.func @transform_1(%arg0: i32, %arg1: i32) -> (i32, i32) {
    %c0_i32 = arith.constant 0 : i32
    %c0_i32_0 = arith.constant 0 : i32
    return %c0_i32, %arg1 : i32, i32
  }
  func.func @transform_2(%arg0: i32, %arg1: i32) -> (i32, i32) {
    %c0_i32 = arith.constant 0 : i32
    %c0_i32_0 = arith.constant 0 : i32
    return %c0_i32, %arg1 : i32, i32
  }
  func.func @transform_3(%arg0: i32, %arg1: i32) -> (i32, i32) {
    %c0_i32 = arith.constant 0 : i32
    return %arg0, %arg1 : i32, i32
  }
}

module attributes {stable_mosaic.version = 11 : i64} {
  func.func @_matmul_res_kernel(%arg0: i32, %arg1: i32, %arg2: i32, %arg3: memref<32x512xbf16, #tpu.memory_space<vmem>>, %arg4: memref<512x256xbf16, #tpu.memory_space<vmem>>, %arg5: memref<1x256xf32, #tpu.memory_space<vmem>>, %arg6: memref<32x256xbf16, #tpu.memory_space<vmem>>, %arg7: memref<32x256xbf16, #tpu.memory_space<vmem>>, %arg8: memref<32x256xf32, #tpu.memory_space<vmem>>) attributes {dimension_semantics = [#tpu.dimension_semantics<parallel>, #tpu.dimension_semantics<parallel>, #tpu.dimension_semantics<arbitrary>], iteration_bounds = array<i64: 1, 1, 2>, scalar_prefetch = 0 : i64, scratch_operands = 1 : i64, tpu.core_type = #tpu.core_type<tc>, window_params = [{transform_indices = @transform_0, window_bounds = array<i64: 32, 512>}, {transform_indices = @transform_1, window_bounds = array<i64: 512, 256>}, {transform_indices = @transform_2, window_bounds = array<i64: 1, 256>}, {transform_indices = @transform_3, window_bounds = array<i64: 32, 256>}, {transform_indices = @transform_4, window_bounds = array<i64: 32, 256>}]} {
    %c0_i32 = arith.constant 0 : i32
    %0 = arith.cmpi eq, %arg2, %c0_i32 : i32
    %1 = arith.extui %0 : i1 to i32
    %c0_i32_0 = arith.constant 0 : i32
    %2 = arith.cmpi ne, %1, %c0_i32_0 : i32
    scf.if %2 {
      %cst_9 = arith.constant 0.000000e+00 : f32
      %12 = vector.broadcast %cst_9 : f32 to vector<32x256xf32>
      %c0_10 = arith.constant 0 : index
      %c0_11 = arith.constant 0 : index
      %13 = vector.load %arg8[%c0_10, %c0_11] : memref<32x256xf32, #tpu.memory_space<vmem>>, vector<32x256xf32>
      tpu.vector_store %arg8[%c0_10, %c0_11], %12 {strides = array<i32>} : memref<32x256xf32, #tpu.memory_space<vmem>>, vector<32x256xf32>,
    } else {
    }
    %c0 = arith.constant 0 : index
    %c0_1 = arith.constant 0 : index
    %3 = vector.load %arg8[%c0, %c0_1] : memref<32x256xf32, #tpu.memory_space<vmem>>, vector<32x256xf32>
    %c0_2 = arith.constant 0 : index
    %c0_3 = arith.constant 0 : index
    %4 = vector.load %arg3[%c0_2, %c0_3] : memref<32x512xbf16, #tpu.memory_space<vmem>>, vector<32x512xbf16>
    %c0_4 = arith.constant 0 : index
    %c0_5 = arith.constant 0 : index
    %5 = vector.load %arg4[%c0_4, %c0_5] : memref<512x256xbf16, #tpu.memory_space<vmem>>, vector<512x256xbf16>
    %cst = arith.constant dense<0.000000e+00> : vector<32x256xf32>
    %6 = tpu.matmul %4, %5, %cst {dimension_numbers = #tpu.dot_dimension_numbers<[1], [0], [0], [1], [0, 0, 1, 1], [], []>} : vector<32x512xbf16>, vector<512x256xbf16>, vector<32x256xf32> -> vector<32x256xf32>
    %7 = arith.addf %3, %6 : vector<32x256xf32>
    %c0_6 = arith.constant 0 : index
    %c0_7 = arith.constant 0 : index
    %8 = vector.load %arg8[%c0_6, %c0_7] : memref<32x256xf32, #tpu.memory_space<vmem>>, vector<32x256xf32>
    tpu.vector_store %arg8[%c0_6, %c0_7], %7 {strides = array<i32>} : memref<32x256xf32, #tpu.memory_space<vmem>>, vector<32x256xf32>,
    %c1_i32 = arith.constant 1 : i32
    %9 = arith.cmpi eq, %arg2, %c1_i32 : i32
    %10 = arith.extui %9 : i1 to i32
    %c0_i32_8 = arith.constant 0 : i32
    %11 = arith.cmpi ne, %10, %c0_i32_8 : i32
    scf.if %11 {
      %c0_9 = arith.constant 0 : index
      %c0_10 = arith.constant 0 : index
      %12 = vector.load %arg8[%c0_9, %c0_10] : memref<32x256xf32, #tpu.memory_space<vmem>>, vector<32x256xf32>
      %c0_11 = arith.constant 0 : index
      %c0_12 = arith.constant 0 : index
      %13 = vector.load %arg5[%c0_11, %c0_12] : memref<1x256xf32, #tpu.memory_space<vmem>>, vector<1x256xf32>
      %14 = vector.broadcast %13 : vector<1x256xf32> to vector<32x256xf32>
      %15 = arith.addf %12, %14 : vector<32x256xf32>
      %c0_13 = arith.constant 0 : index
      %c0_14 = arith.constant 0 : index
      %16 = vector.load %arg6[%c0_13, %c0_14] : memref<32x256xbf16, #tpu.memory_space<vmem>>, vector<32x256xbf16>
      %17 = arith.extf %16 : vector<32x256xbf16> to vector<32x256xf32>
      %18 = arith.addf %15, %17 : vector<32x256xf32>
      %19 = arith.truncf %18 : vector<32x256xf32> to vector<32x256xbf16>
      %c0_15 = arith.constant 0 : index
      %c0_16 = arith.constant 0 : index
      %20 = vector.load %arg7[%c0_15, %c0_16] : memref<32x256xbf16, #tpu.memory_space<vmem>>, vector<32x256xbf16>
      tpu.vector_store %arg7[%c0_15, %c0_16], %19 {strides = array<i32>} : memref<32x256xbf16, #tpu.memory_space<vmem>>, vector<32x256xbf16>,
    } else {
    }
    return
  }
  func.func @transform_0(%arg0: i32, %arg1: i32, %arg2: i32) -> (i32, i32) {
    %c0_i32 = arith.constant 0 : i32
    return %arg0, %arg2 : i32, i32
  }
  func.func @transform_1(%arg0: i32, %arg1: i32, %arg2: i32) -> (i32, i32) {
    %c0_i32 = arith.constant 0 : i32
    return %arg2, %arg1 : i32, i32
  }
  func.func @transform_2(%arg0: i32, %arg1: i32, %arg2: i32) -> (i32, i32) {
    %c0_i32 = arith.constant 0 : i32
    %c0_i32_0 = arith.constant 0 : i32
    return %c0_i32, %arg1 : i32, i32
  }
  func.func @transform_3(%arg0: i32, %arg1: i32, %arg2: i32) -> (i32, i32) {
    %c0_i32 = arith.constant 0 : i32
    return %arg0, %arg1 : i32, i32
  }
  func.func @transform_4(%arg0: i32, %arg1: i32, %arg2: i32) -> (i32, i32) {
    %c0_i32 = arith.constant 0 : i32
    return %arg0, %arg1 : i32, i32
  }
}

module attributes {stable_mosaic.version = 11 : i64} {
  func.func @_matmul_res_kernel(%arg0: i32, %arg1: i32, %arg2: i32, %arg3: memref<32x512xbf16, #tpu.memory_space<vmem>>, %arg4: memref<512x256xbf16, #tpu.memory_space<vmem>>, %arg5: memref<1x256xf32, #tpu.memory_space<vmem>>, %arg6: memref<32x256xbf16, #tpu.memory_space<vmem>>, %arg7: memref<32x256xbf16, #tpu.memory_space<vmem>>, %arg8: memref<32x256xf32, #tpu.memory_space<vmem>>) attributes {dimension_semantics = [#tpu.dimension_semantics<parallel>, #tpu.dimension_semantics<parallel>, #tpu.dimension_semantics<arbitrary>], iteration_bounds = array<i64: 1, 1, 2>, scalar_prefetch = 0 : i64, scratch_operands = 1 : i64, tpu.core_type = #tpu.core_type<tc>, window_params = [{transform_indices = @transform_0, window_bounds = array<i64: 32, 512>}, {transform_indices = @transform_1, window_bounds = array<i64: 512, 256>}, {transform_indices = @transform_2, window_bounds = array<i64: 1, 256>}, {transform_indices = @transform_3, window_bounds = array<i64: 32, 256>}, {transform_indices = @transform_4, window_bounds = array<i64: 32, 256>}]} {
    %c0_i32 = arith.constant 0 : i32
    %0 = arith.cmpi eq, %arg2, %c0_i32 : i32
    %1 = arith.extui %0 : i1 to i32
    %c0_i32_0 = arith.constant 0 : i32
    %2 = arith.cmpi ne, %1, %c0_i32_0 : i32
    scf.if %2 {
      %cst_9 = arith.constant 0.000000e+00 : f32
      %12 = vector.broadcast %cst_9 : f32 to vector<32x256xf32>
      %c0_10 = arith.constant 0 : index
      %c0_11 = arith.constant 0 : index
      %13 = vector.load %arg8[%c0_10, %c0_11] : memref<32x256xf32, #tpu.memory_space<vmem>>, vector<32x256xf32>
      tpu.vector_store %arg8[%c0_10, %c0_11], %12 {strides = array<i32>} : memref<32x256xf32, #tpu.memory_space<vmem>>, vector<32x256xf32>,
    } else {
    }
    %c0 = arith.constant 0 : index
    %c0_1 = arith.constant 0 : index
    %3 = vector.load %arg8[%c0, %c0_1] : memref<32x256xf32, #tpu.memory_space<vmem>>, vector<32x256xf32>
    %c0_2 = arith.constant 0 : index
    %c0_3 = arith.constant 0 : index
    %4 = vector.load %arg3[%c0_2, %c0_3] : memref<32x512xbf16, #tpu.memory_space<vmem>>, vector<32x512xbf16>
    %c0_4 = arith.constant 0 : index
    %c0_5 = arith.constant 0 : index
    %5 = vector.load %arg4[%c0_4, %c0_5] : memref<512x256xbf16, #tpu.memory_space<vmem>>, vector<512x256xbf16>
    %cst = arith.constant dense<0.000000e+00> : vector<32x256xf32>
    %6 = tpu.matmul %4, %5, %cst {dimension_numbers = #tpu.dot_dimension_numbers<[1], [0], [0], [1], [0, 0, 1, 1], [], []>} : vector<32x512xbf16>, vector<512x256xbf16>, vector<32x256xf32> -> vector<32x256xf32>
    %7 = arith.addf %3, %6 : vector<32x256xf32>
    %c0_6 = arith.constant 0 : index
    %c0_7 = arith.constant 0 : index
    %8 = vector.load %arg8[%c0_6, %c0_7] : memref<32x256xf32, #tpu.memory_space<vmem>>, vector<32x256xf32>
    tpu.vector_store %arg8[%c0_6, %c0_7], %7 {strides = array<i32>} : memref<32x256xf32, #tpu.memory_space<vmem>>, vector<32x256xf32>,
    %c1_i32 = arith.constant 1 : i32
    %9 = arith.cmpi eq, %arg2, %c1_i32 : i32
    %10 = arith.extui %9 : i1 to i32
    %c0_i32_8 = arith.constant 0 : i32
    %11 = arith.cmpi ne, %10, %c0_i32_8 : i32
    scf.if %11 {
      %c0_9 = arith.constant 0 : index
      %c0_10 = arith.constant 0 : index
      %12 = vector.load %arg8[%c0_9, %c0_10] : memref<32x256xf32, #tpu.memory_space<vmem>>, vector<32x256xf32>
      %c0_11 = arith.constant 0 : index
      %c0_12 = arith.constant 0 : index
      %13 = vector.load %arg5[%c0_11, %c0_12] : memref<1x256xf32, #tpu.memory_space<vmem>>, vector<1x256xf32>
      %14 = vector.broadcast %13 : vector<1x256xf32> to vector<32x256xf32>
      %15 = arith.addf %12, %14 : vector<32x256xf32>
      %c0_13 = arith.constant 0 : index
      %c0_14 = arith.constant 0 : index
      %16 = vector.load %arg6[%c0_13, %c0_14] : memref<32x256xbf16, #tpu.memory_space<vmem>>, vector<32x256xbf16>
      %17 = arith.extf %16 : vector<32x256xbf16> to vector<32x256xf32>
      %18 = arith.addf %15, %17 : vector<32x256xf32>
      %19 = arith.truncf %18 : vector<32x256xf32> to vector<32x256xbf16>
      %c0_15 = arith.constant 0 : index
      %c0_16 = arith.constant 0 : index
      %20 = vector.load %arg7[%c0_15, %c0_16] : memref<32x256xbf16, #tpu.memory_space<vmem>>, vector<32x256xbf16>
      tpu.vector_store %arg7[%c0_15, %c0_16], %19 {strides = array<i32>} : memref<32x256xbf16, #tpu.memory_space<vmem>>, vector<32x256xbf16>,
    } else {
    }
    return
  }
  func.func @transform_0(%arg0: i32, %arg1: i32, %arg2: i32) -> (i32, i32) {
    %c0_i32 = arith.constant 0 : i32
    return %arg0, %arg2 : i32, i32
  }
  func.func @transform_1(%arg0: i32, %arg1: i32, %arg2: i32) -> (i32, i32) {
    %c0_i32 = arith.constant 0 : i32
    return %arg2, %arg1 : i32, i32
  }
  func.func @transform_2(%arg0: i32, %arg1: i32, %arg2: i32) -> (i32, i32) {
    %c0_i32 = arith.constant 0 : i32
    %c0_i32_0 = arith.constant 0 : i32
    return %c0_i32, %arg1 : i32, i32
  }
  func.func @transform_3(%arg0: i32, %arg1: i32, %arg2: i32) -> (i32, i32) {
    %c0_i32 = arith.constant 0 : i32
    return %arg0, %arg1 : i32, i32
  }
  func.func @transform_4(%arg0: i32, %arg1: i32, %arg2: i32) -> (i32, i32) {
    %c0_i32 = arith.constant 0 : i32
    return %arg0, %arg1 : i32, i32
  }
}

module attributes {stable_mosaic.version = 11 : i64} {
  func.func @_ln_pool_kernel(%arg0: i32, %arg1: memref<1x256xf32, #tpu.memory_space<vmem>>, %arg2: memref<1x256xf32, #tpu.memory_space<vmem>>, %arg3: memref<8x16xf32, #tpu.memory_space<vmem>>, %arg4: memref<1x16x256xbf16, #tpu.memory_space<vmem>>, %arg5: memref<1x8x256xbf16, #tpu.memory_space<vmem>>) attributes {dimension_semantics = [#tpu.dimension_semantics<parallel>], iteration_bounds = array<i64: 2>, scalar_prefetch = 0 : i64, scratch_operands = 0 : i64, tpu.core_type = #tpu.core_type<tc>, window_params = [{pipeline_mode = #tpu.pipeline_mode<synchronous>, transform_indices = @transform_0, window_bounds = array<i64: 1, 256>}, {pipeline_mode = #tpu.pipeline_mode<synchronous>, transform_indices = @transform_1, window_bounds = array<i64: 1, 256>}, {pipeline_mode = #tpu.pipeline_mode<synchronous>, transform_indices = @transform_2, window_bounds = array<i64: 8, 16>}, {transform_indices = @transform_3, window_bounds = array<i64: 1, 16, 256>}, {transform_indices = @transform_4, window_bounds = array<i64: 1, 8, 256>}]} {
    %c0 = arith.constant 0 : index
    %c0_0 = arith.constant 0 : index
    %c0_1 = arith.constant 0 : index
    %0 = vector.load %arg4[%c0, %c0_0, %c0_1] : memref<1x16x256xbf16, #tpu.memory_space<vmem>>, vector<1x16x256xbf16>
    %1 = vector.shape_cast %0 : vector<1x16x256xbf16> to vector<16x256xbf16>
    %2 = arith.extf %1 : vector<16x256xbf16> to vector<16x256xf32>
    %c0_2 = arith.constant 0 : index
    %c0_3 = arith.constant 0 : index
    %3 = vector.load %arg1[%c0_2, %c0_3] : memref<1x256xf32, #tpu.memory_space<vmem>>, vector<1x256xf32>
    %c0_4 = arith.constant 0 : index
    %c0_5 = arith.constant 0 : index
    %4 = vector.load %arg2[%c0_4, %c0_5] : memref<1x256xf32, #tpu.memory_space<vmem>>, vector<1x256xf32>
    %cst = arith.constant dense<0.000000e+00> : vector<16xf32>
    %5 = vector.multi_reduction <add>, %2, %cst [1] : vector<16x256xf32> to vector<16xf32>
    %6 = vector.shape_cast %5 : vector<16xf32> to vector<16x1xf32>
    %cst_6 = arith.constant 2.560000e+02 : f32
    %7 = vector.broadcast %cst_6 : f32 to vector<16x1xf32>
    %8 = arith.divf %6, %7 : vector<16x1xf32>
    %9 = vector.broadcast %8 : vector<16x1xf32> to vector<16x256xf32>
    %10 = arith.subf %2, %9 : vector<16x256xf32>
    %11 = arith.mulf %10, %10 : vector<16x256xf32>
    %cst_7 = arith.constant dense<0.000000e+00> : vector<16xf32>
    %12 = vector.multi_reduction <add>, %11, %cst_7 [1] : vector<16x256xf32> to vector<16xf32>
    %13 = vector.shape_cast %12 : vector<16xf32> to vector<16x1xf32>
    %cst_8 = arith.constant 2.560000e+02 : f32
    %14 = vector.broadcast %cst_8 : f32 to vector<16x1xf32>
    %15 = arith.divf %13, %14 : vector<16x1xf32>
    %cst_9 = arith.constant 9.99999974E-6 : f32
    %16 = vector.broadcast %cst_9 : f32 to vector<16x1xf32>
    %17 = arith.addf %15, %16 : vector<16x1xf32>
    %18 = math.rsqrt %17 : vector<16x1xf32>
    %19 = vector.broadcast %18 : vector<16x1xf32> to vector<16x256xf32>
    %20 = arith.mulf %10, %19 : vector<16x256xf32>
    %21 = vector.broadcast %3 : vector<1x256xf32> to vector<16x256xf32>
    %22 = arith.mulf %20, %21 : vector<16x256xf32>
    %23 = vector.broadcast %4 : vector<1x256xf32> to vector<16x256xf32>
    %24 = arith.addf %22, %23 : vector<16x256xf32>
    %c0_10 = arith.constant 0 : index
    %c0_11 = arith.constant 0 : index
    %25 = vector.load %arg3[%c0_10, %c0_11] : memref<8x16xf32, #tpu.memory_space<vmem>>, vector<8x16xf32>
    %cst_12 = arith.constant dense<0.000000e+00> : vector<8x256xf32>
    %26 = tpu.matmul %25, %24, %cst_12 {dimension_numbers = #tpu.dot_dimension_numbers<[1], [0], [0], [1], [0, 0, 1, 1], [], []>} : vector<8x16xf32>, vector<16x256xf32>, vector<8x256xf32> -> vector<8x256xf32>
    %27 = arith.truncf %26 : vector<8x256xf32> to vector<8x256xbf16>
    %c0_13 = arith.constant 0 : index
    %c0_14 = arith.constant 0 : index
    %c0_15 = arith.constant 0 : index
    %28 = vector.load %arg5[%c0_13, %c0_14, %c0_15] : memref<1x8x256xbf16, #tpu.memory_space<vmem>>, vector<1x8x256xbf16>
    %29 = vector.shape_cast %28 : vector<1x8x256xbf16> to vector<8x256xbf16>
    %30 = vector.shape_cast %27 : vector<8x256xbf16> to vector<1x8x256xbf16>
    tpu.vector_store %arg5[%c0_13, %c0_14, %c0_15], %30 {strides = array<i32>} : memref<1x8x256xbf16, #tpu.memory_space<vmem>>, vector<1x8x256xbf16>,
    return
  }
  func.func @transform_0(%arg0: i32) -> (i32, i32) {
    %c0_i32 = arith.constant 0 : i32
    %c0_i32_0 = arith.constant 0 : i32
    %c0_i32_1 = arith.constant 0 : i32
    return %c0_i32, %c0_i32_0 : i32, i32
  }
  func.func @transform_1(%arg0: i32) -> (i32, i32) {
    %c0_i32 = arith.constant 0 : i32
    %c0_i32_0 = arith.constant 0 : i32
    %c0_i32_1 = arith.constant 0 : i32
    return %c0_i32, %c0_i32_0 : i32, i32
  }
  func.func @transform_2(%arg0: i32) -> (i32, i32) {
    %c0_i32 = arith.constant 0 : i32
    %c0_i32_0 = arith.constant 0 : i32
    %c0_i32_1 = arith.constant 0 : i32
    return %c0_i32, %c0_i32_0 : i32, i32
  }
  func.func @transform_3(%arg0: i32) -> (i32, i32, i32) {
    %c0_i32 = arith.constant 0 : i32
    %c0_i32_0 = arith.constant 0 : i32
    %c0_i32_1 = arith.constant 0 : i32
    return %arg0, %c0_i32, %c0_i32_0 : i32, i32, i32
  }
  func.func @transform_4(%arg0: i32) -> (i32, i32, i32) {
    %c0_i32 = arith.constant 0 : i32
    %c0_i32_0 = arith.constant 0 : i32
    %c0_i32_1 = arith.constant 0 : i32
    return %arg0, %c0_i32, %c0_i32_0 : i32, i32, i32
  }
}

module attributes {stable_mosaic.version = 11 : i64} {
  func.func @_ln_matmul_kernel(%arg0: i32, %arg1: i32, %arg2: memref<16x256xbf16, #tpu.memory_space<vmem>>, %arg3: memref<256x128xbf16, #tpu.memory_space<vmem>>, %arg4: memref<1x128xf32, #tpu.memory_space<vmem>>, %arg5: memref<16x128xbf16, #tpu.memory_space<vmem>>, %arg6: memref<16x256xbf16, #tpu.memory_space<vmem>>) attributes {dimension_semantics = [#tpu.dimension_semantics<parallel>, #tpu.dimension_semantics<arbitrary>], iteration_bounds = array<i64: 1, 1>, scalar_prefetch = 0 : i64, scratch_operands = 1 : i64, tpu.core_type = #tpu.core_type<tc>, window_params = [{transform_indices = @transform_0, window_bounds = array<i64: 16, 256>}, {transform_indices = @transform_1, window_bounds = array<i64: 256, 128>}, {transform_indices = @transform_2, window_bounds = array<i64: 1, 128>}, {transform_indices = @transform_3, window_bounds = array<i64: 16, 128>}]} {
    %c0_i32 = arith.constant 0 : i32
    %0 = arith.cmpi eq, %arg1, %c0_i32 : i32
    %1 = arith.extui %0 : i1 to i32
    %c0_i32_0 = arith.constant 0 : i32
    %2 = arith.cmpi ne, %1, %c0_i32_0 : i32
    scf.if %2 {
      %c0_8 = arith.constant 0 : index
      %c0_9 = arith.constant 0 : index
      %11 = vector.load %arg2[%c0_8, %c0_9] : memref<16x256xbf16, #tpu.memory_space<vmem>>, vector<16x256xbf16>
      %12 = arith.extf %11 : vector<16x256xbf16> to vector<16x256xf32>
      %cst_10 = arith.constant dense<0.000000e+00> : vector<16xf32>
      %13 = vector.multi_reduction <add>, %12, %cst_10 [1] : vector<16x256xf32> to vector<16xf32>
      %14 = vector.shape_cast %13 : vector<16xf32> to vector<16x1xf32>
      %cst_11 = arith.constant 2.560000e+02 : f32
      %15 = vector.broadcast %cst_11 : f32 to vector<16x1xf32>
      %16 = arith.divf %14, %15 : vector<16x1xf32>
      %17 = vector.broadcast %16 : vector<16x1xf32> to vector<16x256xf32>
      %18 = arith.subf %12, %17 : vector<16x256xf32>
      %19 = arith.mulf %18, %18 : vector<16x256xf32>
      %cst_12 = arith.constant dense<0.000000e+00> : vector<16xf32>
      %20 = vector.multi_reduction <add>, %19, %cst_12 [1] : vector<16x256xf32> to vector<16xf32>
      %21 = vector.shape_cast %20 : vector<16xf32> to vector<16x1xf32>
      %cst_13 = arith.constant 2.560000e+02 : f32
      %22 = vector.broadcast %cst_13 : f32 to vector<16x1xf32>
      %23 = arith.divf %21, %22 : vector<16x1xf32>
      %cst_14 = arith.constant 9.99999974E-6 : f32
      %24 = vector.broadcast %cst_14 : f32 to vector<16x1xf32>
      %25 = arith.addf %23, %24 : vector<16x1xf32>
      %26 = math.rsqrt %25 : vector<16x1xf32>
      %27 = vector.broadcast %26 : vector<16x1xf32> to vector<16x256xf32>
      %28 = arith.mulf %18, %27 : vector<16x256xf32>
      %29 = arith.truncf %28 : vector<16x256xf32> to vector<16x256xbf16>
      %c0_15 = arith.constant 0 : index
      %c0_16 = arith.constant 0 : index
      %30 = vector.load %arg6[%c0_15, %c0_16] : memref<16x256xbf16, #tpu.memory_space<vmem>>, vector<16x256xbf16>
      tpu.vector_store %arg6[%c0_15, %c0_16], %29 {strides = array<i32>} : memref<16x256xbf16, #tpu.memory_space<vmem>>, vector<16x256xbf16>,
    } else {
    }
    %c0 = arith.constant 0 : index
    %c0_1 = arith.constant 0 : index
    %3 = vector.load %arg6[%c0, %c0_1] : memref<16x256xbf16, #tpu.memory_space<vmem>>, vector<16x256xbf16>
    %c0_2 = arith.constant 0 : index
    %c0_3 = arith.constant 0 : index
    %4 = vector.load %arg3[%c0_2, %c0_3] : memref<256x128xbf16, #tpu.memory_space<vmem>>, vector<256x128xbf16>
    %cst = arith.constant dense<0.000000e+00> : vector<16x128xf32>
    %5 = tpu.matmul %3, %4, %cst {dimension_numbers = #tpu.dot_dimension_numbers<[1], [0], [0], [1], [0, 0, 1, 1], [], []>} : vector<16x256xbf16>, vector<256x128xbf16>, vector<16x128xf32> -> vector<16x128xf32>
    %c0_4 = arith.constant 0 : index
    %c0_5 = arith.constant 0 : index
    %6 = vector.load %arg4[%c0_4, %c0_5] : memref<1x128xf32, #tpu.memory_space<vmem>>, vector<1x128xf32>
    %7 = vector.broadcast %6 : vector<1x128xf32> to vector<16x128xf32>
    %8 = arith.addf %5, %7 : vector<16x128xf32>
    %9 = arith.truncf %8 : vector<16x128xf32> to vector<16x128xbf16>
    %c0_6 = arith.constant 0 : index
    %c0_7 = arith.constant 0 : index
    %10 = vector.load %arg5[%c0_6, %c0_7] : memref<16x128xbf16, #tpu.memory_space<vmem>>, vector<16x128xbf16>
    tpu.vector_store %arg5[%c0_6, %c0_7], %9 {strides = array<i32>} : memref<16x128xbf16, #tpu.memory_space<vmem>>, vector<16x128xbf16>,
    return
  }
  func.func @transform_0(%arg0: i32, %arg1: i32) -> (i32, i32) {
    %c0_i32 = arith.constant 0 : i32
    %c0_i32_0 = arith.constant 0 : i32
    return %arg0, %c0_i32 : i32, i32
  }
  func.func @transform_1(%arg0: i32, %arg1: i32) -> (i32, i32) {
    %c0_i32 = arith.constant 0 : i32
    %c0_i32_0 = arith.constant 0 : i32
    return %c0_i32, %arg1 : i32, i32
  }
  func.func @transform_2(%arg0: i32, %arg1: i32) -> (i32, i32) {
    %c0_i32 = arith.constant 0 : i32
    %c0_i32_0 = arith.constant 0 : i32
    return %c0_i32, %arg1 : i32, i32
  }
  func.func @transform_3(%arg0: i32, %arg1: i32) -> (i32, i32) {
    %c0_i32 = arith.constant 0 : i32
    return %arg0, %arg1 : i32, i32
  }
}

</mosaic_0001>

<llo_original>
// kernel: tunable_whisper_audio_encoder.14
$region0: #{tunable_whisper_audio_encoder.14}
  #allocation0 [shape = 'u32[]', space=smem, size = 0x4, offset = 0x4, fixed_abs, tag = 'smem constant byte address 0x4 - core index']
  #allocation1 [shape = 'u32[72,128]{1,0:T(1,128)}', space=vmem, size = 0x9000, scoped, tag = 'internal scratch']
  #allocation2 [shape = 'bf16[40,16]{1,0:T(8,128)(2,1)}', space=vmem, size = 0x2800, scoped, tag = 'scratch operand']
  %s0 = inlined_call_operand.vmem [shape: bf16[2,40,16], index: 0, kind: input, shape index: {}, may-alias: {0,1}]
  %s1 = inlined_call_operand.vmem [shape: bf16[2,40,16], index: 1, kind: input, shape index: {}, may-alias: {0,1}]
  %s2 = inlined_call_operand.hbm [shape: bf16[3,16,256], index: 2, kind: input, shape index: {}]
  %s3 = inlined_call_operand.hbm [shape: f32[1,256], index: 3, kind: input, shape index: {}]
  %s4 = inlined_call_operand.vmem [shape: bf16[2,32,256], index: 4, kind: output, shape index: {}]
  %s5 = sld [smem:[#allocation0]]
  $region57: #{tunable_whisper_audio_encoder.14} parent=0
    _
  %s7 = ssub.s32 1, %s5
  %s8 = scalar_select 0, %s7, %s5
  $region1: #{tunable_whisper_audio_encoder.14} parent=0
    #allocation3 [shape = 'u8[24576]{0}', space=vmem, size = 0x6000, scoped, tag = 'input window, operand 2, single buffered']
    #allocation4 [shape = 's32[2]{0}', space=sflag, size = 0x8, scoped, tag = 'scoped memory for tunable_whisper_audio_encoder.14']
    #allocation5 [shape = 'u8[1024]{0}', space=vmem, size = 0x400, scoped, tag = 'input window, operand 3, single buffered']
    #allocation6 [shape = 's32[1]{0}', space=sflag, size = 0x4, scoped, tag = 'scoped memory for tunable_whisper_audio_encoder.14']
    %9 = vsyncpa [#allocation4], 0
    %10 = vsyncpa [#allocation6], 0
    loop: start=0, step=1, limit=4
    $region2: #{tunable_whisper_audio_encoder.14} parent=1 // loop_pre_header
      _
    $region3: #{tunable_whisper_audio_encoder.14} parent=1 // loop_header
      %s12 = sphi 0, %s16
      %p13 = scmp.ge.s32.totalorder %s12, 4
      %s19 = sphi 0, %s31
      %s20 = sphi 0, %s27
      %s21 = sphi 0, %s19
      %s22 = sphi 0, %s20
      %s23 = sphi 0, %s21
      %s24 = sphi 0, %s22
      %s36 = sphi 0, %s38
      %s39 = sphi 0, %s36
      %s40 = sphi 0, %s39
      %s56 = sphi 0, %s40
      %s68 = sphi 0, %s70
      %s71 = sphi 0, %s68
      %s72 = sphi 0, %s71
      %s88 = sphi 0, %s72
      %s92 = sphi 0, %s92
      %s94 = sphi 0, %s92
      %s95 = sphi 0, %s94
      %s109 = sphi 0, %s95
      %s113 = sphi 0, %s113
      %s115 = sphi 0, %s113
      %s116 = sphi 0, %s115
      %s130 = sphi 0, %s116
      %s138 = sphi 0, %s140
      %s141 = sphi 0, %s138
      %s142 = sphi 0, %s141
      %s158 = sphi 0, %s142
    $region4: #{tunable_whisper_audio_encoder.14} parent=1 // loop_header_branch
      %15 = sbr.rel (%p13) target = $region8
    $region5: #{tunable_whisper_audio_encoder.14} parent=1 // loop_body
      %s17 = ssub.s32 %s12, 1
      %s18 = ssub.s32 %s12, 2
      %s25 = sadd.s32 1, %s20
      %p26 = scmp.ge.s32.totalorder %s25, 1
      %s27 = scalar_select %p26, 0, %s25
      %s28 = sadd.s32 1, %s19
      %s29 = scalar_select %p26, %s28, %s19
      %p30 = scmp.ge.s32.totalorder %s29, 2
      %s31 = scalar_select %p30, 0, %s29
      %s32 = ssub.s32 %s19, %s31
      %s33 = ssub.s32 %s20, %s27
      %s34 = sor.u32 %s32, %s33
      %p35 = scmp.eq.s32.totalorder %s34, 0
      %s37 = sadd.s32 %s36, 1
      %s38 = scalar_select %p35, %s36, %s37
      %p41 = pneg %p35
      %p42 = scmp.eq.s32.totalorder %s12, 1
      %p43 = por %p41, %p42
      %p44 = scmp.ne.s32.totalorder %s36, %s39
      %p45 = scmp.eq.s32.totalorder %s12, 0
      %p46 = por %p44, %p45
      %p47 = scmp.ne.s32.totalorder %s36, %s39
      %p48 = scmp.eq.s32.totalorder %s17, 1
      %p49 = por %p47, %p48
      %p50 = scmp.ne.s32.totalorder %s39, %s40
      %p51 = scmp.eq.s32.totalorder %s17, 0
      %p52 = por %p50, %p51
      %p53 = scmp.ne.s32.totalorder %s39, %s40
      %p54 = scmp.eq.s32.totalorder %s18, 1
      %p55 = por %p53, %p54
      %p57 = scmp.ne.s32.totalorder %s40, %s56
      %p58 = scmp.eq.s32.totalorder %s18, 0
      %p59 = por %p57, %p58
      %s60 = sadd.s32 %s20, 1
      %s61 = smul.u32 %s60, 4
      %s62 = sadd.s32 %s27, 1
      %s63 = smul.u32 %s62, 4
      %s64 = ssub.s32 %s19, %s31
      %s65 = ssub.s32 %s61, %s63
      %s66 = sor.u32 %s64, %s65
      %p67 = scmp.eq.s32.totalorder %s66, 0
      %s69 = sadd.s32 %s68, 1
      %s70 = scalar_select %p67, %s68, %s69
      %p73 = pneg %p67
      %p74 = scmp.eq.s32.totalorder %s12, 1
      %p75 = por %p73, %p74
      %p76 = scmp.ne.s32.totalorder %s68, %s71
      %p77 = scmp.eq.s32.totalorder %s12, 0
      %p78 = por %p76, %p77
      %p79 = scmp.ne.s32.totalorder %s68, %s71
      %p80 = scmp.eq.s32.totalorder %s17, 1
      %p81 = por %p79, %p80
      %p82 = scmp.ne.s32.totalorder %s71, %s72
      %p83 = scmp.eq.s32.totalorder %s17, 0
      %p84 = por %p82, %p83
      %p85 = scmp.ne.s32.totalorder %s71, %s72
      %p86 = scmp.eq.s32.totalorder %s18, 1
      %p87 = por %p85, %p86
      %p89 = scmp.ne.s32.totalorder %s72, %s88
      %p90 = scmp.eq.s32.totalorder %s18, 0
      %p91 = por %p89, %p90
      %s93 = sadd.s32 %s92, 1
      %p96 = scmp.eq.s32.totalorder %s12, 1
      %p97 = scmp.ne.s32.totalorder %s92, %s94
      %p98 = scmp.eq.s32.totalorder %s12, 0
      %p99 = por %p97, %p98
      %p100 = scmp.ne.s32.totalorder %s92, %s94
      %p101 = scmp.eq.s32.totalorder %s17, 1
      %p102 = por %p100, %p101
      %p103 = scmp.ne.s32.totalorder %s94, %s95
      %p104 = scmp.eq.s32.totalorder %s17, 0
      %p105 = por %p103, %p104
      %p106 = scmp.ne.s32.totalorder %s94, %s95
      %p107 = scmp.eq.s32.totalorder %s18, 1
      %p108 = por %p106, %p107
      %p110 = scmp.ne.s32.totalorder %s95, %s109
      %p111 = scmp.eq.s32.totalorder %s18, 0
      %p112 = por %p110, %p111
      %s114 = sadd.s32 %s113, 1
      %p117 = scmp.eq.s32.totalorder %s12, 1
      %p118 = scmp.ne.s32.totalorder %s113, %s115
      %p119 = scmp.eq.s32.totalorder %s12, 0
      %p120 = por %p118, %p119
      %p121 = scmp.ne.s32.totalorder %s113, %s115
      %p122 = scmp.eq.s32.totalorder %s17, 1
      %p123 = por %p121, %p122
      %p124 = scmp.ne.s32.totalorder %s115, %s116
      %p125 = scmp.eq.s32.totalorder %s17, 0
      %p126 = por %p124, %p125
      %p127 = scmp.ne.s32.totalorder %s115, %s116
      %p128 = scmp.eq.s32.totalorder %s18, 1
      %p129 = por %p127, %p128
      %p131 = scmp.ne.s32.totalorder %s116, %s130
      %p132 = scmp.eq.s32.totalorder %s18, 0
      %p133 = por %p131, %p132
      %s134 = ssub.s32 %s19, %s31
      %s135 = ssub.s32 %s20, %s27
      %s136 = sor.u32 %s134, %s135
      %p137 = scmp.eq.s32.totalorder %s136, 0
      %s139 = sadd.s32 %s138, 1
      %s140 = scalar_select %p137, %s138, %s139
      %p143 = pneg %p137
      %p144 = scmp.eq.s32.totalorder %s12, 1
      %p145 = por %p143, %p144
      %p146 = scmp.ne.s32.totalorder %s138, %s141
      %p147 = scmp.eq.s32.totalorder %s12, 0
      %p148 = por %p146, %p147
      %p149 = scmp.ne.s32.totalorder %s138, %s141
      %p150 = scmp.eq.s32.totalorder %s17, 1
      %p151 = por %p149, %p150
      %p152 = scmp.ne.s32.totalorder %s141, %s142
      %p153 = scmp.eq.s32.totalorder %s17, 0
      %p154 = por %p152, %p153
      %p155 = scmp.ne.s32.totalorder %s141, %s142
      %p156 = scmp.eq.s32.totalorder %s18, 1
      %p157 = por %p155, %p156
      %p159 = scmp.ne.s32.totalorder %s142, %s158
      %p160 = scmp.eq.s32.totalorder %s18, 0
      %p161 = por %p159, %p160
      %p162 = scmp.le.s32.totalorder 1, %s12
      %p163 = scmp.lt.s32.totalorder %s12, 3
      %p164 = pnand %p162, %p163
      %p165 = pneg %p164
      // Predicated region
      $region9: #{tunable_whisper_audio_encoder.14} parent=5 // pred_check
        _
      $region10: #{tunable_whisper_audio_encoder.14} parent=5 // pred_check_branch
        %167 = sbr.rel (%p164) target = $region12
      $region11: #{tunable_whisper_audio_encoder.14} parent=5 // pred_region
        %s168 = ssub.s32 %s12, 1
        // Predicated region
        $region13: #{tunable_whisper_audio_encoder.14} parent=11 // pred_check
          %p169 = pneg %p105
        $region14: #{tunable_whisper_audio_encoder.14} parent=11 // pred_check_branch
          %171 = sbr.rel (%p169) target = $region16
        $region15: #{tunable_whisper_audio_encoder.14} parent=11 // pred_region
          %173 = vsyncadd [#allocation4], 0
          %s174 = sshll.u32 %s2, 4
          %s175 = int_to_ptr.hbm [resolvable:$true] %s174
          %s176 = sshll.u32 [#allocation3], 4
          %s177 = int_to_ptr.vmem [resolvable:$true] %s176
          %182 = dma.hbm_to_vmem [thread:$0]  %s175, 768, %s177, [#allocation4], 128, 128, 8
        $region16: #{tunable_whisper_audio_encoder.14} parent=11 // pred_fallthru
          _
        // Predicated region
        $region17: #{tunable_whisper_audio_encoder.14} parent=11 // pred_check
          %p183 = pneg %p126
        $region18: #{tunable_whisper_audio_encoder.14} parent=11 // pred_check_branch
          %185 = sbr.rel (%p183) target = $region20
        $region19: #{tunable_whisper_audio_encoder.14} parent=11 // pred_region
          %187 = vsyncadd [#allocation6], 0
          %s189 = sshll.u32 %s3, 4
          %s190 = int_to_ptr.hbm [resolvable:$true] %s189
          %s191 = sshll.u32 [#allocation5], 4
          %s192 = int_to_ptr.vmem [resolvable:$true] %s191
          %194 = dma.hbm_to_vmem [thread:$0]  %s190, 32, %s192, [#allocation6]
        $region20: #{tunable_whisper_audio_encoder.14} parent=11 // pred_fallthru
          _
      $region12: #{tunable_whisper_audio_encoder.14} parent=5 // pred_fallthru
        _
      %p195 = scmp.lt.s32.totalorder %s12, 2
      // Predicated region
      $region21: #{tunable_whisper_audio_encoder.14} parent=5 // pred_check
        %p196 = pneg %p195
      $region22: #{tunable_whisper_audio_encoder.14} parent=5 // pred_check_branch
        %198 = sbr.rel (%p196) target = $region24
      $region23: #{tunable_whisper_audio_encoder.14} parent=5 // pred_region
        // Predicated region
        $region25: #{tunable_whisper_audio_encoder.14} parent=23 // pred_check
          %p199 = pneg %p46
        $region26: #{tunable_whisper_audio_encoder.14} parent=23 // pred_check_branch
          %201 = sbr.rel (%p199) target = $region28
        $region27: #{tunable_whisper_audio_encoder.14} parent=23 // pred_region
          %s202 = smul.u32 4, %s20
          %s203 = ssub.s32 5, %s202
          %p204 = scmp.lt.s32.totalorder %s203, 4
          %s205 = scalar_select %p204, %s203, 4
          %s206 = smul.u32 4, %s205
          %p207 = scmp.lt.s32.totalorder %s19, 1
          %s208 = scalar_select %p207, %s19, 1
          %p209 = scmp.lt.s32.totalorder %s202, 4
          %s210 = scalar_select %p209, %s202, 4
          %s211 = smul.addr %s208, 5
          %s212 = sadd.s32 %s210, %s211
          %s213 = smul.addr %s212, 4
          %s214 = scalar_lea.vmem %s0, %s213
          %s215 = smul.u32 4, %s20
          %s216 = ssub.s32 5, %s215
          %p217 = scmp.lt.s32.totalorder %s216, 4
          %s218 = scalar_select %p217, %s216, 4
          %s219 = smul.u32 4, %s218
        $region28: #{tunable_whisper_audio_encoder.14} parent=23 // pred_fallthru
          _
        // Predicated region
        $region29: #{tunable_whisper_audio_encoder.14} parent=23 // pred_check
          %p220 = pneg %p78
        $region30: #{tunable_whisper_audio_encoder.14} parent=23 // pred_check_branch
          %222 = sbr.rel (%p220) target = $region32
        $region31: #{tunable_whisper_audio_encoder.14} parent=23 // pred_region
          %s223 = sadd.s32 %s20, 1
          %s224 = smul.u32 %s223, 4
          %p225 = scmp.lt.s32.totalorder %s19, 1
          %s226 = scalar_select %p225, %s19, 1
          %p227 = scmp.lt.s32.totalorder %s224, 4
          %s228 = scalar_select %p227, %s224, 4
          %s229 = smul.addr %s226, 5
          %s230 = sadd.s32 %s228, %s229
          %s231 = smul.addr %s230, 4
          %s232 = scalar_lea.vmem %s1, %s231
          %s233 = sadd.s32 %s20, 1
          %s234 = smul.u32 %s233, 4
        $region32: #{tunable_whisper_audio_encoder.14} parent=23 // pred_fallthru
          _
      $region24: #{tunable_whisper_audio_encoder.14} parent=5 // pred_fallthru
        _
      %p235 = scmp.le.s32.totalorder 1, %s12
      %p236 = scmp.lt.s32.totalorder %s12, 3
      %p237 = pnand %p235, %p236
      %p238 = pneg %p237
      // Predicated region
      $region33: #{tunable_whisper_audio_encoder.14} parent=5 // pred_check
        _
      $region34: #{tunable_whisper_audio_encoder.14} parent=5 // pred_check_branch
        %240 = sbr.rel (%p237) target = $region36
      $region35: #{tunable_whisper_audio_encoder.14} parent=5 // pred_region
        %s241 = ssub.s32 %s12, 1
        // Predicated region
        $region37: #{tunable_whisper_audio_encoder.14} parent=35 // pred_check
          %p242 = pneg %p105
        $region38: #{tunable_whisper_audio_encoder.14} parent=35 // pred_check_branch
          %244 = sbr.rel (%p242) target = $region40
        $region39: #{tunable_whisper_audio_encoder.14} parent=35 // pred_region
          %246 = dma.done [#allocation4], 768
        $region40: #{tunable_whisper_audio_encoder.14} parent=35 // pred_fallthru
          _
        // Predicated region
        $region41: #{tunable_whisper_audio_encoder.14} parent=35 // pred_check
          %p247 = pneg %p126
        $region42: #{tunable_whisper_audio_encoder.14} parent=35 // pred_check_branch
          %249 = sbr.rel (%p247) target = $region44
        $region43: #{tunable_whisper_audio_encoder.14} parent=35 // pred_region
          %251 = dma.done [#allocation6], 32
        $region44: #{tunable_whisper_audio_encoder.14} parent=35 // pred_fallthru
          _
        %s252 = smul.u32 4, %s22
        %s253 = ssub.s32 5, %s252
        %p254 = scmp.lt.s32.totalorder %s253, 4
        %s255 = scalar_select %p254, %s253, 4
        %s256 = smul.u32 4, %s255
        %p257 = scmp.lt.s32.totalorder %s21, 1
        %s258 = scalar_select %p257, %s21, 1
        %p259 = scmp.lt.s32.totalorder %s252, 4
        %s260 = scalar_select %p259, %s252, 4
        %s261 = smul.addr %s258, 5
        %s262 = sadd.s32 %s260, %s261
        %s263 = smul.addr %s262, 4
        %s264 = scalar_lea.vmem %s0, %s263
        %p265 = pneg %p52
        %p266 = pneg %p49
        %s267 = sadd.s32 %s22, 1
        %s268 = smul.u32 %s267, 4
        %p269 = scmp.lt.s32.totalorder %s21, 1
        %s270 = scalar_select %p269, %s21, 1
        %p271 = scmp.lt.s32.totalorder %s268, 4
        %s272 = scalar_select %p271, %s268, 4
        %s273 = smul.addr %s270, 5
        %s274 = sadd.s32 %s272, %s273
        %s275 = smul.addr %s274, 4
        %s276 = scalar_lea.vmem %s1, %s275
        %p277 = pneg %p84
        %p278 = pneg %p81
        %p279 = pneg %p105
        %p280 = pneg %p102
        %p281 = pneg %p126
        %p282 = pneg %p123
        %p283 = pneg %p154
        %p284 = pneg %p151
        %s285 = smul.u32 4, %s22
        %p286 = scmp.lt.s32.totalorder %s21, 1
        %s287 = scalar_select %p286, %s21, 1
        %p288 = scmp.lt.s32.totalorder %s285, 3
        %s289 = scalar_select %p288, %s285, 3
        %s290 = smul.addr %s289, 2
        %s291 = smul.addr %s287, 8
        %s292 = sadd.s32 %s290, %s291
        %s293 = smul.addr %s292, 4
        %s294 = scalar_lea.vmem %s4, %s293
        %s295 = smul.u32 4, %s22
        %s296 = ssub.s32 5, %s295
        %p297 = scmp.lt.s32.totalorder %s296, 4
        %s298 = scalar_select %p297, %s296, 4
        %s299 = smul.u32 4, %s298
        %p300 = scmp.lt.s32.totalorder %s21, 1
        %s301 = scalar_select %p300, %s21, 1
        %p302 = scmp.lt.s32.totalorder %s295, 4
        %s303 = scalar_select %p302, %s295, 4
        %s304 = smul.addr %s301, 5
        %s305 = sadd.s32 %s303, %s304
        %s306 = smul.addr %s305, 4
        %s307 = scalar_lea.vmem %s0, %s306
        %s308 = smul.u32 4, %s22
        %s309 = ssub.s32 5, %s308
        %p310 = scmp.lt.s32.totalorder %s309, 4
        %s311 = scalar_select %p310, %s309, 4
        %s312 = smul.u32 4, %s311
        %s313 = sadd.s32 %s22, 1
        %s314 = smul.u32 %s313, 4
        %p315 = scmp.lt.s32.totalorder %s21, 1
        %s316 = scalar_select %p315, %s21, 1
        %p317 = scmp.lt.s32.totalorder %s314, 4
        %s318 = scalar_select %p317, %s314, 4
        %s319 = smul.addr %s316, 5
        %s320 = sadd.s32 %s318, %s319
        %s321 = smul.addr %s320, 4
        %s322 = scalar_lea.vmem %s1, %s321
        %s323 = sadd.s32 %s22, 1
        %s324 = smul.u32 %s323, 4
        %s325 = smul.u32 4, %s22
        %p326 = scmp.lt.s32.totalorder %s21, 1
        %s327 = scalar_select %p326, %s21, 1
        %p328 = scmp.lt.s32.totalorder %s325, 3
        %s329 = scalar_select %p328, %s325, 3
        %s330 = smul.addr %s329, 2
        %s331 = smul.addr %s327, 8
        %s332 = sadd.s32 %s330, %s331
        %s333 = smul.addr %s332, 4
        %s334 = scalar_lea.vmem %s4, %s333
        %s335 = smul.u32 4, %s22
        %v337 = vld [vmem:[%s307] sm:$0xf]
        %v338 = vld [vmem:[%s307 + $0x4] sm:$0xf]
        %v339 = vld [vmem:[%s307 + $0x8] sm:$0xf]
        %v340 = vld [vmem:[%s307 + $0xc] sm:$0xf]
        %vm341 = vcmask 125952
        %342 = vst.msk [vmem:[#allocation2] sm:$0xf] %vm341, %v337
        %343 = vst.msk [vmem:[#allocation2 + $0x4] sm:$0xf] %vm341, %v338
        %344 = vst.msk [vmem:[#allocation2 + $0x8] sm:$0xf] %vm341, %v339
        %345 = vst.msk [vmem:[#allocation2 + $0xc] sm:$0xf] %vm341, %v340
        %v346 = vld [vmem:[%s322] sm:$0xf]
        %347 = vst.msk [vmem:[#allocation2 + $0x10] sm:$0xf] %vm341, %v346
        %v348 = vld [vmem:[#allocation2] sm:$0xf]
        %v349 = vld [vmem:[#allocation2 + $0x4] sm:$0xf]
        %v350 = vld [vmem:[#allocation2 + $0x8] sm:$0xf]
        %v351 = vld [vmem:[#allocation2 + $0xc] sm:$0xf]
        %v352 = vld [vmem:[#allocation3] sm:$0xff]
        %v353 = vld [vmem:[#allocation3 + $0x8] sm:$0xff]
        %v354 = vld [vmem:[#allocation2 + $0x10] sm:$0x1]
        %s355 = scalar_lea.vmem [#allocation3], 16
        %v356 = vld [vmem:[%s355] sm:$0xff]
        %v357 = vld [vmem:[%s355 + $0x8] sm:$0xff]
        %v363 = vunpack.c.l.b16 %v348
        %v364 = vunpack.c.l.b16 %v349
        %v365 = vunpack.c.l.b16 %v350
        %v366 = vunpack.c.l.b16 %v351
        %v367 = vunpack.c.l.b16 %v354
        %v368 = vpack.c.b16 %v364, %v363
        %v369 = vpack.c.b16 %v366, %v365
        %v370 = vpack.c.b16 %v367, %v367
        %vm371 = vsmask.f32 7424
        %v373 = vshrl.u32 %v368, 16
        %v375 = vshll.u32 %v368, 16
        %v377 = vrot.slane %v375, 1
        %v378 = vor.u32 %v373, %v377
        %v380 = vshll.u32 %v369, 16
        %v382 = vrot.slane %v380, 1
        %v383 = vsel %vm371, %v378, %v382
        %v384 = vshrl.u32 %v369, 16
        %v386 = vor.u32 %v384, %v382
        %v388 = vshll.u32 %v370, 16
        %v390 = vrot.slane %v388, 1
        %v391 = vsel %vm371, %v386, %v390
        %v394 = vunpack.c.l.b16 %v356
        %v395 = vunpack.c.h.b16 %v356
        %v396 = vunpack.c.l.b16 %v357
        %v397 = vunpack.c.h.b16 %v357
        %v398 = vpack.c.b16 %v396, %v394
        %v399 = vpack.c.b16 %v397, %v395
        %vm402 = vcmask 130048
        %v404 = vsel %vm402, %v383, 0
        %v407 = vsel %vm402, %v391, 0
        %409 = vmatpush.bf16.msra.mxu0 0
        %410 = vmatpush.bf16.msra.mxu0 0
        %411 = vmatpush.bf16.msra.mxu0 0
        %412 = vmatpush.bf16.msra.mxu0 0
        %413 = vmatpush.bf16.msra.mxu0 0
        %414 = vmatpush.bf16.msra.mxu0 0
        %415 = vmatpush.bf16.msra.mxu0 0
        %416 = vmatpush.bf16.msra.mxu0 %v398
        %417 = vmatmul.bf16.gmra.mxu0 %v404
        %v418 = vpop.f32.mrf.mxu0
        %v419 = vadd.f32 0.0, %v418
        %v420 = vpop.f32.mrf.mxu0
        %v421 = vadd.f32 0.0, %v420
        %422 = vmatmul.bf16.gmra.mxu0 %v407
        %v423 = vpop.f32.mrf.mxu0
        %v424 = vadd.f32 0.0, %v423
        %v425 = vpop.f32.mrf.mxu0
        %v426 = vadd.f32 0.0, %v425
        %427 = vdwg.mxu0
        %428 = vmatpush.bf16.msra.mxu0 0
        %429 = vmatpush.bf16.msra.mxu0 0
        %430 = vmatpush.bf16.msra.mxu0 0
        %431 = vmatpush.bf16.msra.mxu0 0
        %432 = vmatpush.bf16.msra.mxu0 0
        %433 = vmatpush.bf16.msra.mxu0 0
        %434 = vmatpush.bf16.msra.mxu0 0
        %435 = vmatpush.bf16.msra.mxu0 %v399
        %436 = vmatmul.bf16.gmra.mxu0 %v404
        %v437 = vpop.f32.mrf.mxu0
        %v438 = vadd.f32 0.0, %v437
        %v439 = vpop.f32.mrf.mxu0
        %v440 = vadd.f32 0.0, %v439
        %441 = vmatmul.bf16.gmra.mxu0 %v407
        %v442 = vpop.f32.mrf.mxu0
        %v443 = vadd.f32 0.0, %v442
        %v444 = vpop.f32.mrf.mxu0
        %v445 = vadd.f32 0.0, %v444
        %446 = vdwg.mxu0
        %v449 = vunpack.c.l.b16 %v352
        %v450 = vunpack.c.h.b16 %v352
        %v451 = vunpack.c.l.b16 %v353
        %v452 = vunpack.c.h.b16 %v353
        %v453 = vpack.c.b16 %v451, %v449
        %v454 = vpack.c.b16 %v452, %v450
        %v457 = vsel %vm402, %v368, 0
        %v459 = vsel %vm402, %v369, 0
        %461 = vmatpush.bf16.msra.mxu0 0
        %462 = vmatpush.bf16.msra.mxu0 0
        %463 = vmatpush.bf16.msra.mxu0 0
        %464 = vmatpush.bf16.msra.mxu0 0
        %465 = vmatpush.bf16.msra.mxu0 0
        %466 = vmatpush.bf16.msra.mxu0 0
        %467 = vmatpush.bf16.msra.mxu0 0
        %468 = vmatpush.bf16.msra.mxu0 %v453
        %469 = vmatmul.bf16.gmra.mxu0 %v457
        %v470 = vpop.f32.mrf.mxu0
        %v471 = vadd.f32 %v419, %v470
        %v472 = vpop.f32.mrf.mxu0
        %v473 = vadd.f32 %v421, %v472
        %474 = vmatmul.bf16.gmra.mxu0 %v459
        %v475 = vpop.f32.mrf.mxu0
        %v476 = vadd.f32 %v424, %v475
        %v477 = vpop.f32.mrf.mxu0
        %v478 = vadd.f32 %v426, %v477
        %479 = vdwg.mxu0
        %480 = vmatpush.bf16.msra.mxu0 0
        %481 = vmatpush.bf16.msra.mxu0 0
        %482 = vmatpush.bf16.msra.mxu0 0
        %483 = vmatpush.bf16.msra.mxu0 0
        %484 = vmatpush.bf16.msra.mxu0 0
        %485 = vmatpush.bf16.msra.mxu0 0
        %486 = vmatpush.bf16.msra.mxu0 0
        %487 = vmatpush.bf16.msra.mxu0 %v454
        %488 = vmatmul.bf16.gmra.mxu0 %v457
        %v489 = vpop.f32.mrf.mxu0
        %v490 = vadd.f32 %v438, %v489
        %v491 = vpop.f32.mrf.mxu0
        %v492 = vadd.f32 %v440, %v491
        %493 = vmatmul.bf16.gmra.mxu0 %v459
        %v494 = vpop.f32.mrf.mxu0
        %v495 = vadd.f32 %v443, %v494
        %v496 = vpop.f32.mrf.mxu0
        %v497 = vadd.f32 %v445, %v496
        %498 = vdwg.mxu0
        %v499 = vld [vmem:[#allocation2] sm:$0xe]
        %s500 = scalar_lea.vmem [#allocation3], 32
        %v501 = vld [vmem:[%s500] sm:$0xff]
        %v502 = vld [vmem:[%s500 + $0x8] sm:$0xff]
        %v504 = vunpack.c.l.b16 %v499
        %v505 = vpack.c.b16 %v364, %v504
        %vm506 = vcmask 1046528
        %v507 = vrot.slane %v505, 1
        %v508 = vrot.slane %v369, 1
        %v509 = vsel %vm506, %v507, %v508
        %v510 = vrot.slane %v370, 1
        %v511 = vsel %vm506, %v508, %v510
        %v514 = vunpack.c.l.b16 %v501
        %v515 = vunpack.c.h.b16 %v501
        %v516 = vunpack.c.l.b16 %v502
        %v517 = vunpack.c.h.b16 %v502
        %v518 = vpack.c.b16 %v516, %v514
        %v519 = vpack.c.b16 %v517, %v515
        %v523 = vsel %vm402, %v509, 0
        %v526 = vsel %vm402, %v511, 0
        %528 = vmatpush.bf16.msra.mxu0 0
        %529 = vmatpush.bf16.msra.mxu0 0
        %530 = vmatpush.bf16.msra.mxu0 0
        %531 = vmatpush.bf16.msra.mxu0 0
        %532 = vmatpush.bf16.msra.mxu0 0
        %533 = vmatpush.bf16.msra.mxu0 0
        %534 = vmatpush.bf16.msra.mxu0 0
        %535 = vmatpush.bf16.msra.mxu0 %v518
        %536 = vmatmul.bf16.gmra.mxu0 %v523
        %v537 = vpop.f32.mrf.mxu0
        %v538 = vadd.f32 0.0, %v537
        %v539 = vpop.f32.mrf.mxu0
        %v540 = vadd.f32 0.0, %v539
        %541 = vmatmul.bf16.gmra.mxu0 %v526
        %v542 = vpop.f32.mrf.mxu0
        %v543 = vadd.f32 0.0, %v542
        %v544 = vpop.f32.mrf.mxu0
        %v545 = vadd.f32 0.0, %v544
        %546 = vdwg.mxu0
        %547 = vmatpush.bf16.msra.mxu0 0
        %548 = vmatpush.bf16.msra.mxu0 0
        %549 = vmatpush.bf16.msra.mxu0 0
        %550 = vmatpush.bf16.msra.mxu0 0
        %551 = vmatpush.bf16.msra.mxu0 0
        %552 = vmatpush.bf16.msra.mxu0 0
        %553 = vmatpush.bf16.msra.mxu0 0
        %554 = vmatpush.bf16.msra.mxu0 %v519
        %555 = vmatmul.bf16.gmra.mxu0 %v523
        %v556 = vpop.f32.mrf.mxu0
        %v557 = vadd.f32 0.0, %v556
        %v558 = vpop.f32.mrf.mxu0
        %v559 = vadd.f32 0.0, %v558
        %560 = vmatmul.bf16.gmra.mxu0 %v526
        %v561 = vpop.f32.mrf.mxu0
        %v562 = vadd.f32 0.0, %v561
        %v563 = vpop.f32.mrf.mxu0
        %v564 = vadd.f32 0.0, %v563
        %565 = vdwg.mxu0
        %v566 = vadd.f32 %v471, %v538
        %v567 = vadd.f32 %v490, %v557
        %v568 = vadd.f32 %v473, %v540
        %v569 = vadd.f32 %v492, %v559
        %v570 = vadd.f32 %v476, %v543
        %v571 = vadd.f32 %v495, %v562
        %v572 = vadd.f32 %v478, %v545
        %v573 = vadd.f32 %v497, %v564
        %v574 = vld [vmem:[#allocation5] sm:$0x3]
        %v576 = vperm.slane %v574, 0
        %v577 = vperm.slane %v574, 1
        %v580 = vadd.f32 %v566, %v576
        %v581 = vadd.f32 %v567, %v577
        %v582 = vadd.f32 %v568, %v576
        %v583 = vadd.f32 %v569, %v577
        %v584 = vadd.f32 %v570, %v576
        %v585 = vadd.f32 %v571, %v577
        %v586 = vadd.f32 %v572, %v576
        %v587 = vadd.f32 %v573, %v577
        %v588 = vmul.f32 %v580, 0.5
        %v589 = vmul.f32 %v581, 0.5
        %v590 = vmul.f32 %v582, 0.5
        %v591 = vmul.f32 %v583, 0.5
        %v592 = vmul.f32 %v584, 0.5
        %v593 = vmul.f32 %v585, 0.5
        %v594 = vmul.f32 %v586, 0.5
        %v595 = vmul.f32 %v587, 0.5
        %v596 = vmul.f32 %v580, 0.044715
        %v597 = vmul.f32 %v581, 0.044715
        %v598 = vmul.f32 %v582, 0.044715
        %v599 = vmul.f32 %v583, 0.044715
        %v600 = vmul.f32 %v584, 0.044715
        %v601 = vmul.f32 %v585, 0.044715
        %v602 = vmul.f32 %v586, 0.044715
        %v603 = vmul.f32 %v587, 0.044715
        %v604 = vmul.f32 %v596, %v580
        %v605 = vmul.f32 %v597, %v581
        %v606 = vmul.f32 %v598, %v582
        %v607 = vmul.f32 %v599, %v583
        %v608 = vmul.f32 %v600, %v584
        %v609 = vmul.f32 %v601, %v585
        %v610 = vmul.f32 %v602, %v586
        %v611 = vmul.f32 %v603, %v587
        %v612 = vmul.f32 %v604, %v580
        %v613 = vmul.f32 %v605, %v581
        %v614 = vmul.f32 %v606, %v582
        %v615 = vmul.f32 %v607, %v583
        %v616 = vmul.f32 %v608, %v584
        %v617 = vmul.f32 %v609, %v585
        %v618 = vmul.f32 %v610, %v586
        %v619 = vmul.f32 %v611, %v587
        %v620 = vadd.f32 %v580, %v612
        %v621 = vadd.f32 %v581, %v613
        %v622 = vadd.f32 %v582, %v614
        %v623 = vadd.f32 %v583, %v615
        %v624 = vadd.f32 %v584, %v616
        %v625 = vadd.f32 %v585, %v617
        %v626 = vadd.f32 %v586, %v618
        %v627 = vadd.f32 %v587, %v619
        %v628 = vmul.f32 %v620, 0.7978846
        %v629 = vmul.f32 %v621, 0.7978846
        %v630 = vmul.f32 %v622, 0.7978846
        %v631 = vmul.f32 %v623, 0.7978846
        %v632 = vmul.f32 %v624, 0.7978846
        %v633 = vmul.f32 %v625, 0.7978846
        %v634 = vmul.f32 %v626, 0.7978846
        %v635 = vmul.f32 %v627, 0.7978846
        %v636 = vtanh.pop %v628
        %v637 = vtanh.pop %v629
        %v638 = vtanh.pop %v630
        %v639 = vtanh.pop %v631
        %v640 = vtanh.pop %v632
        %v641 = vtanh.pop %v633
        %v642 = vtanh.pop %v634
        %v643 = vtanh.pop %v635
        %v644 = vadd.f32 %v636, 1.0
        %v645 = vadd.f32 %v637, 1.0
        %v646 = vadd.f32 %v638, 1.0
        %v647 = vadd.f32 %v639, 1.0
        %v648 = vadd.f32 %v640, 1.0
        %v649 = vadd.f32 %v641, 1.0
        %v650 = vadd.f32 %v642, 1.0
        %v651 = vadd.f32 %v643, 1.0
        %v652 = vmul.f32 %v588, %v644
        %v653 = vmul.f32 %v589, %v645
        %v654 = vmul.f32 %v590, %v646
        %v655 = vmul.f32 %v591, %v647
        %v656 = vmul.f32 %v592, %v648
        %v657 = vmul.f32 %v593, %v649
        %v658 = vmul.f32 %v594, %v650
        %v659 = vmul.f32 %v595, %v651
        %v660 = vpack.c.bf16 %v653, %v652
        %v661 = vpack.c.bf16 %v655, %v654
        %v662 = vpack.c.bf16 %v657, %v656
        %v663 = vpack.c.bf16 %v659, %v658
        %664 = vst [vmem:[%s334] sm:$0xff] %v660
        %665 = vst [vmem:[%s334 + $0x8] sm:$0xff] %v661
        %666 = vst [vmem:[%s334 + $0x10] sm:$0xff] %v662
        %667 = vst [vmem:[%s334 + $0x18] sm:$0xff] %v663
        %s668 = smul.u32 4, %s22
        %p669 = scmp.lt.s32.totalorder %s21, 1
        %s670 = scalar_select %p669, %s21, 1
        %p671 = scmp.lt.s32.totalorder %s668, 3
        %s672 = scalar_select %p671, %s668, 3
        %s673 = smul.addr %s672, 2
        %s674 = smul.addr %s670, 8
        %s675 = sadd.s32 %s673, %s674
        %s676 = smul.addr %s675, 4
        %s677 = scalar_lea.vmem %s4, %s676
        // Predicated region
        $region45: #{tunable_whisper_audio_encoder.14} parent=35 // pred_check
          %p678 = pneg %p151
        $region46: #{tunable_whisper_audio_encoder.14} parent=35 // pred_check_branch
          %680 = sbr.rel (%p678) target = $region48
        $region47: #{tunable_whisper_audio_encoder.14} parent=35 // pred_region
          %s681 = smul.u32 4, %s22
        $region48: #{tunable_whisper_audio_encoder.14} parent=35 // pred_fallthru
          _
      $region36: #{tunable_whisper_audio_encoder.14} parent=5 // pred_fallthru
        _
      %p682 = scmp.le.s32.totalorder 2, %s12
      // Predicated region
      $region49: #{tunable_whisper_audio_encoder.14} parent=5 // pred_check
        %p683 = pneg %p682
      $region50: #{tunable_whisper_audio_encoder.14} parent=5 // pred_check_branch
        %685 = sbr.rel (%p683) target = $region52
      $region51: #{tunable_whisper_audio_encoder.14} parent=5 // pred_region
        %s686 = ssub.s32 %s12, 2
        // Predicated region
        $region53: #{tunable_whisper_audio_encoder.14} parent=51 // pred_check
          %p687 = pneg %p157
        $region54: #{tunable_whisper_audio_encoder.14} parent=51 // pred_check_branch
          %689 = sbr.rel (%p687) target = $region56
        $region55: #{tunable_whisper_audio_encoder.14} parent=51 // pred_region
          %s690 = smul.u32 4, %s24
          %p691 = scmp.lt.s32.totalorder %s23, 1
          %s692 = scalar_select %p691, %s23, 1
          %p693 = scmp.lt.s32.totalorder %s690, 3
          %s694 = scalar_select %p693, %s690, 3
          %s695 = smul.addr %s694, 2
          %s696 = smul.addr %s692, 8
          %s697 = sadd.s32 %s695, %s696
          %s698 = smul.addr %s697, 4
          %s699 = scalar_lea.vmem %s4, %s698
        $region56: #{tunable_whisper_audio_encoder.14} parent=51 // pred_fallthru
          _
      $region52: #{tunable_whisper_audio_encoder.14} parent=5 // pred_fallthru
        _
    $region6: #{tunable_whisper_audio_encoder.14} parent=1 // loop_footer
      %s16 = sadd.s32 1, %s12
    $region7: #{tunable_whisper_audio_encoder.14} parent=1 // loop_footer_branch
      %11 = sbr.rel target = $region3
    $region8: #{tunable_whisper_audio_encoder.14} parent=1 // loop_exit
      _
    %700 = vsyncpa [#allocation4], 1
    %s701 = scalar_lea.sflag [#allocation4], 1
    %702 = vsyncpa %s701, 1
    %703 = vsyncpa [#allocation6], 1

// kernel: tunable_whisper_audio_encoder.17
$region0: #{tunable_whisper_audio_encoder.17}
  #allocation0 [shape = 'u32[]', space=smem, size = 0x4, offset = 0x4, fixed_abs, tag = 'smem constant byte address 0x4 - core index']
  #allocation1 [shape = 'u32[72,128]{1,0:T(1,128)}', space=vmem, size = 0x9000, scoped, tag = 'internal scratch']
  #allocation2 [shape = 'f32[1,16,1]{2,1,0:T(8,128)}', space=vmem, size = 0x2000, scoped, tag = 'scratch operand']
  #allocation3 [shape = 'f32[1,16,1]{2,1,0:T(8,128)}', space=vmem, size = 0x2000, scoped, tag = 'scratch operand']
  #allocation4 [shape = 'f32[16,128]{1,0:T(8,128)}', space=vmem, size = 0x2000, scoped, tag = 'scratch operand']
  %s0 = inlined_call_operand.vmem [shape: bf16[2,16,768], index: 0, kind: input, shape index: {}, may-alias: {0,1,2}]
  %s1 = inlined_call_operand.vmem [shape: bf16[2,16,768], index: 1, kind: input, shape index: {}, may-alias: {0,1,2}]
  %s2 = inlined_call_operand.vmem [shape: bf16[2,16,768], index: 2, kind: input, shape index: {}, may-alias: {0,1,2}]
  %s3 = inlined_call_operand.vmem [shape: bf16[2,16,256], index: 3, kind: output, shape index: {}]
  %s4 = sld [smem:[#allocation0]]
  $region213: #{tunable_whisper_audio_encoder.17} parent=0
    _
  %s6 = ssub.s32 1, %s4
  %s7 = scalar_select 0, %s6, %s4
  $region1: #{tunable_whisper_audio_encoder.17} parent=0
    #allocation5 [shape = 'u8[8192]{0}', space=vmem, size = 0x2000, scoped, tag = 'input window, operand 0']
    #allocation6 [shape = 'u8[8192]{0}', space=vmem, size = 0x2000, scoped, tag = 'input window, operand 1']
    #allocation7 [shape = 'u8[8192]{0}', space=vmem, size = 0x2000, scoped, tag = 'input window, operand 2']
    #allocation8 [shape = 'u8[8192]{0}', space=vmem, size = 0x2000, scoped, tag = 'output window, operand 0']
    loop: start=0, step=1, limit=6
    $region2: #{tunable_whisper_audio_encoder.17} parent=1 // loop_pre_header
      _
    $region3: #{tunable_whisper_audio_encoder.17} parent=1 // loop_header
      %s9 = sphi 0, %s13
      %p10 = scmp.ge.s32.totalorder %s9, 6
      %s16 = sphi 0, %s42
      %s17 = sphi 0, %s38
      %s18 = sphi 0, %s34
      %s19 = sphi 0, %s30
      %s20 = sphi 0, %s16
      %s21 = sphi 0, %s17
      %s22 = sphi 0, %s18
      %s23 = sphi 0, %s19
      %s24 = sphi 0, %s20
      %s25 = sphi 0, %s21
      %s26 = sphi 0, %s22
      %s27 = sphi 0, %s23
      %s49 = sphi 0, %s51
      %s52 = sphi 0, %s49
      %s53 = sphi 0, %s52
      %s69 = sphi 0, %s53
      %s81 = sphi 0, %s83
      %s84 = sphi 0, %s81
      %s85 = sphi 0, %s84
      %s101 = sphi 0, %s85
      %s113 = sphi 0, %s115
      %s116 = sphi 0, %s113
      %s117 = sphi 0, %s116
      %s133 = sphi 0, %s117
      %s143 = sphi 0, %s145
      %s146 = sphi 0, %s143
      %s147 = sphi 0, %s146
      %s163 = sphi 0, %s147
    $region4: #{tunable_whisper_audio_encoder.17} parent=1 // loop_header_branch
      %12 = sbr.rel (%p10) target = $region8
    $region5: #{tunable_whisper_audio_encoder.17} parent=1 // loop_body
      %s14 = ssub.s32 %s9, 1
      %s15 = ssub.s32 %s9, 2
      %s28 = sadd.s32 1, %s19
      %p29 = scmp.ge.s32.totalorder %s28, 1
      %s30 = scalar_select %p29, 0, %s28
      %s31 = sadd.s32 1, %s18
      %s32 = scalar_select %p29, %s31, %s18
      %p33 = scmp.ge.s32.totalorder %s32, 1
      %s34 = scalar_select %p33, 0, %s32
      %s35 = sadd.s32 1, %s17
      %s36 = scalar_select %p33, %s35, %s17
      %p37 = scmp.ge.s32.totalorder %s36, 2
      %s38 = scalar_select %p37, 0, %s36
      %s39 = sadd.s32 1, %s16
      %s40 = scalar_select %p37, %s39, %s16
      %p41 = scmp.ge.s32.totalorder %s40, 2
      %s42 = scalar_select %p41, 0, %s40
      %s43 = ssub.s32 %s16, %s42
      %s44 = ssub.s32 %s18, %s34
      %s45 = sor.u32 %s43, %s44
      %s46 = ssub.s32 %s17, %s38
      %s47 = sor.u32 %s45, %s46
      %p48 = scmp.eq.s32.totalorder %s47, 0
      %s50 = sadd.s32 %s49, 1
      %s51 = scalar_select %p48, %s49, %s50
      %p54 = pneg %p48
      %p55 = scmp.eq.s32.totalorder %s9, 3
      %p56 = por %p54, %p55
      %p57 = scmp.ne.s32.totalorder %s49, %s52
      %p58 = scmp.eq.s32.totalorder %s9, 0
      %p59 = por %p57, %p58
      %p60 = scmp.ne.s32.totalorder %s49, %s52
      %p61 = scmp.eq.s32.totalorder %s14, 3
      %p62 = por %p60, %p61
      %p63 = scmp.ne.s32.totalorder %s52, %s53
      %p64 = scmp.eq.s32.totalorder %s14, 0
      %p65 = por %p63, %p64
      %p66 = scmp.ne.s32.totalorder %s52, %s53
      %p67 = scmp.eq.s32.totalorder %s15, 3
      %p68 = por %p66, %p67
      %p70 = scmp.ne.s32.totalorder %s53, %s69
      %p71 = scmp.eq.s32.totalorder %s15, 0
      %p72 = por %p70, %p71
      %s73 = sadd.s32 %s17, 2
      %s74 = sadd.s32 %s38, 2
      %s75 = ssub.s32 %s16, %s42
      %s76 = ssub.s32 %s19, %s30
      %s77 = sor.u32 %s75, %s76
      %s78 = ssub.s32 %s73, %s74
      %s79 = sor.u32 %s77, %s78
      %p80 = scmp.eq.s32.totalorder %s79, 0
      %s82 = sadd.s32 %s81, 1
      %s83 = scalar_select %p80, %s81, %s82
      %p86 = pneg %p80
      %p87 = scmp.eq.s32.totalorder %s9, 3
      %p88 = por %p86, %p87
      %p89 = scmp.ne.s32.totalorder %s81, %s84
      %p90 = scmp.eq.s32.totalorder %s9, 0
      %p91 = por %p89, %p90
      %p92 = scmp.ne.s32.totalorder %s81, %s84
      %p93 = scmp.eq.s32.totalorder %s14, 3
      %p94 = por %p92, %p93
      %p95 = scmp.ne.s32.totalorder %s84, %s85
      %p96 = scmp.eq.s32.totalorder %s14, 0
      %p97 = por %p95, %p96
      %p98 = scmp.ne.s32.totalorder %s84, %s85
      %p99 = scmp.eq.s32.totalorder %s15, 3
      %p100 = por %p98, %p99
      %p102 = scmp.ne.s32.totalorder %s85, %s101
      %p103 = scmp.eq.s32.totalorder %s15, 0
      %p104 = por %p102, %p103
      %s105 = sadd.s32 %s17, 4
      %s106 = sadd.s32 %s38, 4
      %s107 = ssub.s32 %s16, %s42
      %s108 = ssub.s32 %s19, %s30
      %s109 = sor.u32 %s107, %s108
      %s110 = ssub.s32 %s105, %s106
      %s111 = sor.u32 %s109, %s110
      %p112 = scmp.eq.s32.totalorder %s111, 0
      %s114 = sadd.s32 %s113, 1
      %s115 = scalar_select %p112, %s113, %s114
      %p118 = pneg %p112
      %p119 = scmp.eq.s32.totalorder %s9, 3
      %p120 = por %p118, %p119
      %p121 = scmp.ne.s32.totalorder %s113, %s116
      %p122 = scmp.eq.s32.totalorder %s9, 0
      %p123 = por %p121, %p122
      %p124 = scmp.ne.s32.totalorder %s113, %s116
      %p125 = scmp.eq.s32.totalorder %s14, 3
      %p126 = por %p124, %p125
      %p127 = scmp.ne.s32.totalorder %s116, %s117
      %p128 = scmp.eq.s32.totalorder %s14, 0
      %p129 = por %p127, %p128
      %p130 = scmp.ne.s32.totalorder %s116, %s117
      %p131 = scmp.eq.s32.totalorder %s15, 3
      %p132 = por %p130, %p131
      %p134 = scmp.ne.s32.totalorder %s117, %s133
      %p135 = scmp.eq.s32.totalorder %s15, 0
      %p136 = por %p134, %p135
      %s137 = ssub.s32 %s16, %s42
      %s138 = ssub.s32 %s18, %s34
      %s139 = sor.u32 %s137, %s138
      %s140 = ssub.s32 %s17, %s38
      %s141 = sor.u32 %s139, %s140
      %p142 = scmp.eq.s32.totalorder %s141, 0
      %s144 = sadd.s32 %s143, 1
      %s145 = scalar_select %p142, %s143, %s144
      %p148 = pneg %p142
      %p149 = scmp.eq.s32.totalorder %s9, 3
      %p150 = por %p148, %p149
      %p151 = scmp.ne.s32.totalorder %s143, %s146
      %p152 = scmp.eq.s32.totalorder %s9, 0
      %p153 = por %p151, %p152
      %p154 = scmp.ne.s32.totalorder %s143, %s146
      %p155 = scmp.eq.s32.totalorder %s14, 3
      %p156 = por %p154, %p155
      %p157 = scmp.ne.s32.totalorder %s146, %s147
      %p158 = scmp.eq.s32.totalorder %s14, 0
      %p159 = por %p157, %p158
      %p160 = scmp.ne.s32.totalorder %s146, %s147
      %p161 = scmp.eq.s32.totalorder %s15, 3
      %p162 = por %p160, %p161
      %p164 = scmp.ne.s32.totalorder %s147, %s163
      %p165 = scmp.eq.s32.totalorder %s15, 0
      %p166 = por %p164, %p165
      %p167 = scmp.le.s32.totalorder 1, %s9
      %p168 = scmp.lt.s32.totalorder %s9, 5
      %p169 = pnand %p167, %p168
      %p170 = pneg %p169
      // Predicated region
      $region9: #{tunable_whisper_audio_encoder.17} parent=5 // pred_check
        _
      $region10: #{tunable_whisper_audio_encoder.17} parent=5 // pred_check_branch
        %172 = sbr.rel (%p169) target = $region12
      $region11: #{tunable_whisper_audio_encoder.17} parent=5 // pred_region
        %s173 = ssub.s32 %s9, 1
      $region12: #{tunable_whisper_audio_encoder.17} parent=5 // pred_fallthru
        _
      %p174 = scmp.lt.s32.totalorder %s9, 4
      // Predicated region
      $region13: #{tunable_whisper_audio_encoder.17} parent=5 // pred_check
        %p175 = pneg %p174
      $region14: #{tunable_whisper_audio_encoder.17} parent=5 // pred_check_branch
        %177 = sbr.rel (%p175) target = $region16
      $region15: #{tunable_whisper_audio_encoder.17} parent=5 // pred_region
        // Predicated region
        $region17: #{tunable_whisper_audio_encoder.17} parent=15 // pred_check
          %p178 = pneg %p59
        $region18: #{tunable_whisper_audio_encoder.17} parent=15 // pred_check_branch
          %180 = sbr.rel (%p178) target = $region20
        $region19: #{tunable_whisper_audio_encoder.17} parent=15 // pred_region
          %s181 = sand.u32 %s49, 1
          %s182 = sand.u32 %s49, 1
          %s183 = smul.addr %s182, 8
          %s184 = scalar_lea.vmem [#allocation5], %s183
          %s185 = smul.u32 2, %s18
          %s186 = smul.addr %s185, 6
          %s187 = sadd.s32 %s17, %s186
          %s188 = smul.addr %s16, 12
          %s189 = sadd.s32 %s187, %s188
          %s190 = smul.addr %s189, 4
          %s191 = scalar_lea.vmem %s0, %s190
          // Predicated region
          $region21: #{tunable_whisper_audio_encoder.17} parent=19 // pred_check
            _
          $region22: #{tunable_whisper_audio_encoder.17} parent=19 // pred_check_branch
            %193 = sbr.rel (0) target = $region24
          $region23: #{tunable_whisper_audio_encoder.17} parent=19 // pred_region
            // Predicated region
            $region25: #{tunable_whisper_audio_encoder.17} parent=23 // pred_check
              _
            $region26: #{tunable_whisper_audio_encoder.17} parent=23 // pred_check_branch
              %195 = sbr.rel target = $region28
            $region27: #{tunable_whisper_audio_encoder.17} parent=23 // pred_region
              // Predicated region
              $region40: #{tunable_whisper_audio_encoder.17} parent=27 // pred_check
                _
              $region41: #{tunable_whisper_audio_encoder.17} parent=27 // pred_check_branch
                %213 = sbr.rel (0) target = $region43
              $region42: #{tunable_whisper_audio_encoder.17} parent=27 // pred_region
                loop: start=0, step=1, limit=1
                $region44: #{tunable_whisper_audio_encoder.17} parent=42 // loop_pre_header
                  _
                $region45: #{tunable_whisper_audio_encoder.17} parent=42 // loop_header
                  %s215 = sphi 0, %s219
                  %p216 = scmp.ge.s32.totalorder %s215, 1
                  %s220 = sphi %s191, %s191
                  %s221 = sphi %s184, %s184
                $region46: #{tunable_whisper_audio_encoder.17} parent=42 // loop_header_branch
                  %218 = sbr.rel (%p216) target = $region50
                $region47: #{tunable_whisper_audio_encoder.17} parent=42 // loop_body
                  _
                $region48: #{tunable_whisper_audio_encoder.17} parent=42 // loop_footer
                  %s219 = sadd.s32 1, %s215
                $region49: #{tunable_whisper_audio_encoder.17} parent=42 // loop_footer_branch
                  %214 = sbr.rel target = $region45
                $region50: #{tunable_whisper_audio_encoder.17} parent=42 // loop_exit
                  _
                %s223 = ssub.s32 16, 1
                loop: start=0, step=1, limit=1
                $region51: #{tunable_whisper_audio_encoder.17} parent=42 // loop_pre_header
                  _
                $region52: #{tunable_whisper_audio_encoder.17} parent=42 // loop_header
                  %s225 = sphi 0, %s229
                  %p226 = scmp.ge.s32.totalorder %s225, 1
                  %s230 = sphi %s191, %s191
                  %s231 = sphi %s184, %s184
                $region53: #{tunable_whisper_audio_encoder.17} parent=42 // loop_header_branch
                  %228 = sbr.rel (%p226) target = $region57
                $region54: #{tunable_whisper_audio_encoder.17} parent=42 // loop_body
                  %v232 = vld [vmem:[%s230] sm:%s223]
                  %233 = vst [vmem:[%s231] sm:%s223] %v232
                  %v234 = vld [vmem:[%s230 + $0x18] sm:%s223]
                  %235 = vst [vmem:[%s231 + $0x4] sm:%s223] %v234
                $region55: #{tunable_whisper_audio_encoder.17} parent=42 // loop_footer
                  %s229 = sadd.s32 1, %s225
                $region56: #{tunable_whisper_audio_encoder.17} parent=42 // loop_footer_branch
                  %224 = sbr.rel target = $region52
                $region57: #{tunable_whisper_audio_encoder.17} parent=42 // loop_exit
                  _
              $region43: #{tunable_whisper_audio_encoder.17} parent=27 // pred_fallthru
                _
            $region28: #{tunable_whisper_audio_encoder.17} parent=23 // pred_fallthru
              _
            // Predicated region
            $region29: #{tunable_whisper_audio_encoder.17} parent=23 // pred_check
              _
            $region30: #{tunable_whisper_audio_encoder.17} parent=23 // pred_check_branch
              %197 = sbr.rel (0) target = $region32
            $region31: #{tunable_whisper_audio_encoder.17} parent=23 // pred_region
              %s199 = ssub.s32 16, 1
              loop: start=0, step=1, limit=1
              $region33: #{tunable_whisper_audio_encoder.17} parent=31 // loop_pre_header
                _
              $region34: #{tunable_whisper_audio_encoder.17} parent=31 // loop_header
                %s201 = sphi 0, %s205
                %p202 = scmp.ge.s32.totalorder %s201, 1
                %s206 = sphi %s191, %s191
                %s207 = sphi %s184, %s184
              $region35: #{tunable_whisper_audio_encoder.17} parent=31 // loop_header_branch
                %204 = sbr.rel (%p202) target = $region39
              $region36: #{tunable_whisper_audio_encoder.17} parent=31 // loop_body
                %v208 = vld [vmem:[%s206] sm:%s199]
                %209 = vst [vmem:[%s207] sm:%s199] %v208
                %v210 = vld [vmem:[%s206 + $0x18] sm:%s199]
                %211 = vst [vmem:[%s207 + $0x4] sm:%s199] %v210
              $region37: #{tunable_whisper_audio_encoder.17} parent=31 // loop_footer
                %s205 = sadd.s32 1, %s201
              $region38: #{tunable_whisper_audio_encoder.17} parent=31 // loop_footer_branch
                %200 = sbr.rel target = $region34
              $region39: #{tunable_whisper_audio_encoder.17} parent=31 // loop_exit
                _
            $region32: #{tunable_whisper_audio_encoder.17} parent=23 // pred_fallthru
              _
          $region24: #{tunable_whisper_audio_encoder.17} parent=19 // pred_fallthru
            _
          %236 = vnop
        $region20: #{tunable_whisper_audio_encoder.17} parent=15 // pred_fallthru
          _
        // Predicated region
        $region58: #{tunable_whisper_audio_encoder.17} parent=15 // pred_check
          %p237 = pneg %p91
        $region59: #{tunable_whisper_audio_encoder.17} parent=15 // pred_check_branch
          %239 = sbr.rel (%p237) target = $region61
        $region60: #{tunable_whisper_audio_encoder.17} parent=15 // pred_region
          %s240 = sand.u32 %s81, 1
          %s241 = sand.u32 %s81, 1
          %s242 = smul.addr %s241, 8
          %s243 = scalar_lea.vmem [#allocation6], %s242
          %s244 = sadd.s32 %s17, 2
          %s245 = smul.u32 2, %s19
          %s246 = smul.addr %s245, 6
          %s247 = sadd.s32 %s244, %s246
          %s248 = smul.addr %s16, 12
          %s249 = sadd.s32 %s247, %s248
          %s250 = smul.addr %s249, 4
          %s251 = scalar_lea.vmem %s1, %s250
          // Predicated region
          $region62: #{tunable_whisper_audio_encoder.17} parent=60 // pred_check
            _
          $region63: #{tunable_whisper_audio_encoder.17} parent=60 // pred_check_branch
            %253 = sbr.rel (0) target = $region65
          $region64: #{tunable_whisper_audio_encoder.17} parent=60 // pred_region
            // Predicated region
            $region66: #{tunable_whisper_audio_encoder.17} parent=64 // pred_check
              _
            $region67: #{tunable_whisper_audio_encoder.17} parent=64 // pred_check_branch
              %255 = sbr.rel target = $region69
            $region68: #{tunable_whisper_audio_encoder.17} parent=64 // pred_region
              // Predicated region
              $region81: #{tunable_whisper_audio_encoder.17} parent=68 // pred_check
                _
              $region82: #{tunable_whisper_audio_encoder.17} parent=68 // pred_check_branch
                %273 = sbr.rel (0) target = $region84
              $region83: #{tunable_whisper_audio_encoder.17} parent=68 // pred_region
                loop: start=0, step=1, limit=1
                $region85: #{tunable_whisper_audio_encoder.17} parent=83 // loop_pre_header
                  _
                $region86: #{tunable_whisper_audio_encoder.17} parent=83 // loop_header
                  %s275 = sphi 0, %s279
                  %p276 = scmp.ge.s32.totalorder %s275, 1
                  %s280 = sphi %s251, %s251
                  %s281 = sphi %s243, %s243
                $region87: #{tunable_whisper_audio_encoder.17} parent=83 // loop_header_branch
                  %278 = sbr.rel (%p276) target = $region91
                $region88: #{tunable_whisper_audio_encoder.17} parent=83 // loop_body
                  _
                $region89: #{tunable_whisper_audio_encoder.17} parent=83 // loop_footer
                  %s279 = sadd.s32 1, %s275
                $region90: #{tunable_whisper_audio_encoder.17} parent=83 // loop_footer_branch
                  %274 = sbr.rel target = $region86
                $region91: #{tunable_whisper_audio_encoder.17} parent=83 // loop_exit
                  _
                %s283 = ssub.s32 16, 1
                loop: start=0, step=1, limit=1
                $region92: #{tunable_whisper_audio_encoder.17} parent=83 // loop_pre_header
                  _
                $region93: #{tunable_whisper_audio_encoder.17} parent=83 // loop_header
                  %s285 = sphi 0, %s289
                  %p286 = scmp.ge.s32.totalorder %s285, 1
                  %s290 = sphi %s251, %s251
                  %s291 = sphi %s243, %s243
                $region94: #{tunable_whisper_audio_encoder.17} parent=83 // loop_header_branch
                  %288 = sbr.rel (%p286) target = $region98
                $region95: #{tunable_whisper_audio_encoder.17} parent=83 // loop_body
                  %v292 = vld [vmem:[%s290] sm:%s283]
                  %293 = vst [vmem:[%s291] sm:%s283] %v292
                  %v294 = vld [vmem:[%s290 + $0x18] sm:%s283]
                  %295 = vst [vmem:[%s291 + $0x4] sm:%s283] %v294
                $region96: #{tunable_whisper_audio_encoder.17} parent=83 // loop_footer
                  %s289 = sadd.s32 1, %s285
                $region97: #{tunable_whisper_audio_encoder.17} parent=83 // loop_footer_branch
                  %284 = sbr.rel target = $region93
                $region98: #{tunable_whisper_audio_encoder.17} parent=83 // loop_exit
                  _
              $region84: #{tunable_whisper_audio_encoder.17} parent=68 // pred_fallthru
                _
            $region69: #{tunable_whisper_audio_encoder.17} parent=64 // pred_fallthru
              _
            // Predicated region
            $region70: #{tunable_whisper_audio_encoder.17} parent=64 // pred_check
              _
            $region71: #{tunable_whisper_audio_encoder.17} parent=64 // pred_check_branch
              %257 = sbr.rel (0) target = $region73
            $region72: #{tunable_whisper_audio_encoder.17} parent=64 // pred_region
              %s259 = ssub.s32 16, 1
              loop: start=0, step=1, limit=1
              $region74: #{tunable_whisper_audio_encoder.17} parent=72 // loop_pre_header
                _
              $region75: #{tunable_whisper_audio_encoder.17} parent=72 // loop_header
                %s261 = sphi 0, %s265
                %p262 = scmp.ge.s32.totalorder %s261, 1
                %s266 = sphi %s251, %s251
                %s267 = sphi %s243, %s243
              $region76: #{tunable_whisper_audio_encoder.17} parent=72 // loop_header_branch
                %264 = sbr.rel (%p262) target = $region80
              $region77: #{tunable_whisper_audio_encoder.17} parent=72 // loop_body
                %v268 = vld [vmem:[%s266] sm:%s259]
                %269 = vst [vmem:[%s267] sm:%s259] %v268
                %v270 = vld [vmem:[%s266 + $0x18] sm:%s259]
                %271 = vst [vmem:[%s267 + $0x4] sm:%s259] %v270
              $region78: #{tunable_whisper_audio_encoder.17} parent=72 // loop_footer
                %s265 = sadd.s32 1, %s261
              $region79: #{tunable_whisper_audio_encoder.17} parent=72 // loop_footer_branch
                %260 = sbr.rel target = $region75
              $region80: #{tunable_whisper_audio_encoder.17} parent=72 // loop_exit
                _
            $region73: #{tunable_whisper_audio_encoder.17} parent=64 // pred_fallthru
              _
          $region65: #{tunable_whisper_audio_encoder.17} parent=60 // pred_fallthru
            _
          %296 = vnop
        $region61: #{tunable_whisper_audio_encoder.17} parent=15 // pred_fallthru
          _
        // Predicated region
        $region99: #{tunable_whisper_audio_encoder.17} parent=15 // pred_check
          %p297 = pneg %p123
        $region100: #{tunable_whisper_audio_encoder.17} parent=15 // pred_check_branch
          %299 = sbr.rel (%p297) target = $region102
        $region101: #{tunable_whisper_audio_encoder.17} parent=15 // pred_region
          %s300 = sand.u32 %s113, 1
          %s301 = sand.u32 %s113, 1
          %s302 = smul.addr %s301, 8
          %s303 = scalar_lea.vmem [#allocation7], %s302
          %s304 = sadd.s32 %s17, 4
          %s305 = smul.u32 2, %s19
          %s306 = smul.addr %s305, 6
          %s307 = sadd.s32 %s304, %s306
          %s308 = smul.addr %s16, 12
          %s309 = sadd.s32 %s307, %s308
          %s310 = smul.addr %s309, 4
          %s311 = scalar_lea.vmem %s2, %s310
          // Predicated region
          $region103: #{tunable_whisper_audio_encoder.17} parent=101 // pred_check
            _
          $region104: #{tunable_whisper_audio_encoder.17} parent=101 // pred_check_branch
            %313 = sbr.rel (0) target = $region106
          $region105: #{tunable_whisper_audio_encoder.17} parent=101 // pred_region
            // Predicated region
            $region107: #{tunable_whisper_audio_encoder.17} parent=105 // pred_check
              _
            $region108: #{tunable_whisper_audio_encoder.17} parent=105 // pred_check_branch
              %315 = sbr.rel target = $region110
            $region109: #{tunable_whisper_audio_encoder.17} parent=105 // pred_region
              // Predicated region
              $region122: #{tunable_whisper_audio_encoder.17} parent=109 // pred_check
                _
              $region123: #{tunable_whisper_audio_encoder.17} parent=109 // pred_check_branch
                %333 = sbr.rel (0) target = $region125
              $region124: #{tunable_whisper_audio_encoder.17} parent=109 // pred_region
                loop: start=0, step=1, limit=1
                $region126: #{tunable_whisper_audio_encoder.17} parent=124 // loop_pre_header
                  _
                $region127: #{tunable_whisper_audio_encoder.17} parent=124 // loop_header
                  %s335 = sphi 0, %s339
                  %p336 = scmp.ge.s32.totalorder %s335, 1
                  %s340 = sphi %s311, %s311
                  %s341 = sphi %s303, %s303
                $region128: #{tunable_whisper_audio_encoder.17} parent=124 // loop_header_branch
                  %338 = sbr.rel (%p336) target = $region132
                $region129: #{tunable_whisper_audio_encoder.17} parent=124 // loop_body
                  _
                $region130: #{tunable_whisper_audio_encoder.17} parent=124 // loop_footer
                  %s339 = sadd.s32 1, %s335
                $region131: #{tunable_whisper_audio_encoder.17} parent=124 // loop_footer_branch
                  %334 = sbr.rel target = $region127
                $region132: #{tunable_whisper_audio_encoder.17} parent=124 // loop_exit
                  _
                %s343 = ssub.s32 16, 1
                loop: start=0, step=1, limit=1
                $region133: #{tunable_whisper_audio_encoder.17} parent=124 // loop_pre_header
                  _
                $region134: #{tunable_whisper_audio_encoder.17} parent=124 // loop_header
                  %s345 = sphi 0, %s349
                  %p346 = scmp.ge.s32.totalorder %s345, 1
                  %s350 = sphi %s311, %s311
                  %s351 = sphi %s303, %s303
                $region135: #{tunable_whisper_audio_encoder.17} parent=124 // loop_header_branch
                  %348 = sbr.rel (%p346) target = $region139
                $region136: #{tunable_whisper_audio_encoder.17} parent=124 // loop_body
                  %v352 = vld [vmem:[%s350] sm:%s343]
                  %353 = vst [vmem:[%s351] sm:%s343] %v352
                  %v354 = vld [vmem:[%s350 + $0x18] sm:%s343]
                  %355 = vst [vmem:[%s351 + $0x4] sm:%s343] %v354
                $region137: #{tunable_whisper_audio_encoder.17} parent=124 // loop_footer
                  %s349 = sadd.s32 1, %s345
                $region138: #{tunable_whisper_audio_encoder.17} parent=124 // loop_footer_branch
                  %344 = sbr.rel target = $region134
                $region139: #{tunable_whisper_audio_encoder.17} parent=124 // loop_exit
                  _
              $region125: #{tunable_whisper_audio_encoder.17} parent=109 // pred_fallthru
                _
            $region110: #{tunable_whisper_audio_encoder.17} parent=105 // pred_fallthru
              _
            // Predicated region
            $region111: #{tunable_whisper_audio_encoder.17} parent=105 // pred_check
              _
            $region112: #{tunable_whisper_audio_encoder.17} parent=105 // pred_check_branch
              %317 = sbr.rel (0) target = $region114
            $region113: #{tunable_whisper_audio_encoder.17} parent=105 // pred_region
              %s319 = ssub.s32 16, 1
              loop: start=0, step=1, limit=1
              $region115: #{tunable_whisper_audio_encoder.17} parent=113 // loop_pre_header
                _
              $region116: #{tunable_whisper_audio_encoder.17} parent=113 // loop_header
                %s321 = sphi 0, %s325
                %p322 = scmp.ge.s32.totalorder %s321, 1
                %s326 = sphi %s311, %s311
                %s327 = sphi %s303, %s303
              $region117: #{tunable_whisper_audio_encoder.17} parent=113 // loop_header_branch
                %324 = sbr.rel (%p322) target = $region121
              $region118: #{tunable_whisper_audio_encoder.17} parent=113 // loop_body
                %v328 = vld [vmem:[%s326] sm:%s319]
                %329 = vst [vmem:[%s327] sm:%s319] %v328
                %v330 = vld [vmem:[%s326 + $0x18] sm:%s319]
                %331 = vst [vmem:[%s327 + $0x4] sm:%s319] %v330
              $region119: #{tunable_whisper_audio_encoder.17} parent=113 // loop_footer
                %s325 = sadd.s32 1, %s321
              $region120: #{tunable_whisper_audio_encoder.17} parent=113 // loop_footer_branch
                %320 = sbr.rel target = $region116
              $region121: #{tunable_whisper_audio_encoder.17} parent=113 // loop_exit
                _
            $region114: #{tunable_whisper_audio_encoder.17} parent=105 // pred_fallthru
              _
          $region106: #{tunable_whisper_audio_encoder.17} parent=101 // pred_fallthru
            _
          %356 = vnop
        $region102: #{tunable_whisper_audio_encoder.17} parent=15 // pred_fallthru
          _
      $region16: #{tunable_whisper_audio_encoder.17} parent=5 // pred_fallthru
        _
      %p357 = scmp.le.s32.totalorder 1, %s9
      %p358 = scmp.lt.s32.totalorder %s9, 5
      %p359 = pnand %p357, %p358
      %p360 = pneg %p359
      // Predicated region
      $region140: #{tunable_whisper_audio_encoder.17} parent=5 // pred_check
        _
      $region141: #{tunable_whisper_audio_encoder.17} parent=5 // pred_check_branch
        %362 = sbr.rel (%p359) target = $region143
      $region142: #{tunable_whisper_audio_encoder.17} parent=5 // pred_region
        %s363 = ssub.s32 %s9, 1
        %s364 = sand.u32 %s52, 1
        %s365 = sand.u32 %s52, 1
        %s366 = smul.addr %s365, 8
        %s367 = scalar_lea.vmem [#allocation5], %s366
        // Predicated region
        $region144: #{tunable_whisper_audio_encoder.17} parent=142 // pred_check
          %p368 = pneg %p65
        $region145: #{tunable_whisper_audio_encoder.17} parent=142 // pred_check_branch
          %370 = sbr.rel (%p368) target = $region147
        $region146: #{tunable_whisper_audio_encoder.17} parent=142 // pred_region
          _
        $region147: #{tunable_whisper_audio_encoder.17} parent=142 // pred_fallthru
          _
        %s371 = sand.u32 %s84, 1
        %s372 = sand.u32 %s84, 1
        %s373 = smul.addr %s372, 8
        %s374 = scalar_lea.vmem [#allocation6], %s373
        // Predicated region
        $region148: #{tunable_whisper_audio_encoder.17} parent=142 // pred_check
          %p375 = pneg %p97
        $region149: #{tunable_whisper_audio_encoder.17} parent=142 // pred_check_branch
          %377 = sbr.rel (%p375) target = $region151
        $region150: #{tunable_whisper_audio_encoder.17} parent=142 // pred_region
          _
        $region151: #{tunable_whisper_audio_encoder.17} parent=142 // pred_fallthru
          _
        %s378 = sand.u32 %s116, 1
        %s379 = sand.u32 %s116, 1
        %s380 = smul.addr %s379, 8
        %s381 = scalar_lea.vmem [#allocation7], %s380
        // Predicated region
        $region152: #{tunable_whisper_audio_encoder.17} parent=142 // pred_check
          %p382 = pneg %p129
        $region153: #{tunable_whisper_audio_encoder.17} parent=142 // pred_check_branch
          %384 = sbr.rel (%p382) target = $region155
        $region154: #{tunable_whisper_audio_encoder.17} parent=142 // pred_region
          _
        $region155: #{tunable_whisper_audio_encoder.17} parent=142 // pred_fallthru
          _
        %s385 = sand.u32 %s52, 1
        %s386 = sand.u32 %s52, 1
        %s387 = smul.addr %s386, 8
        %s388 = scalar_lea.vmem [#allocation5], %s387
        %p389 = pneg %p65
        %p390 = pneg %p62
        %s391 = sand.u32 %s84, 1
        %s392 = sand.u32 %s84, 1
        %s393 = smul.addr %s392, 8
        %s394 = scalar_lea.vmem [#allocation6], %s393
        %p395 = pneg %p97
        %p396 = pneg %p94
        %s397 = sand.u32 %s116, 1
        %s398 = sand.u32 %s116, 1
        %s399 = smul.addr %s398, 8
        %s400 = scalar_lea.vmem [#allocation7], %s399
        %p401 = pneg %p129
        %p402 = pneg %p126
        %p403 = pneg %p159
        %p404 = pneg %p156
        %s405 = sand.u32 %s146, 1
        %s406 = sand.u32 %s146, 1
        %s407 = smul.addr %s406, 8
        %s408 = scalar_lea.vmem [#allocation8], %s407
        %s409 = smul.u32 2, %s22
        %s410 = sadd.s32 %s21, 2
        %s411 = smul.u32 2, %s23
        %s412 = sadd.s32 %s21, 4
        %s413 = smul.u32 2, %s23
        %s414 = smul.u32 2, %s22
        %p416 = scmp.eq.s32.totalorder %s23, 0
        // Predicated region
        $region156: #{tunable_whisper_audio_encoder.17} parent=142 // pred_check
          %p417 = pneg %p416
        $region157: #{tunable_whisper_audio_encoder.17} parent=142 // pred_check_branch
          %419 = sbr.rel (%p417) target = $region159
        $region158: #{tunable_whisper_audio_encoder.17} parent=142 // pred_region
          %vm420 = vcmask 7168
          %421 = vst.msk [vmem:[#allocation2] sm:$0xff] %vm420, -1e+30
          %422 = vst.msk [vmem:[#allocation2 + $0x8] sm:$0xff] %vm420, -1e+30
          %423 = vst.msk [vmem:[#allocation3] sm:$0xff] %vm420, 0.0
          %424 = vst.msk [vmem:[#allocation3 + $0x8] sm:$0xff] %vm420, 0.0
          %425 = vst [vmem:[#allocation4] sm:$0xff] 0.0
          %426 = vst [vmem:[#allocation4 + $0x8] sm:$0xff] 0.0
        $region159: #{tunable_whisper_audio_encoder.17} parent=142 // pred_fallthru
          _
        %v427 = vld [vmem:[%s367] sm:$0xf]
        %v428 = vld [vmem:[%s367 + $0x4] sm:$0xf]
        %v429 = vld [vmem:[%s374] sm:$0xf]
        %v430 = vld [vmem:[%s374 + $0x4] sm:$0xf]
        %v431 = vld [vmem:[%s381] sm:$0xf]
        %v432 = vld [vmem:[%s381 + $0x4] sm:$0xf]
        %v435 = vunpack.c.l.b16 %v427
        %v436 = vunpack.c.l.b16 %v428
        %v437 = vpack.c.b16 %v436, %v435
        %v441 = vunpack.c.l.b16 %v429
        %v442 = vunpack.c.l.b16 %v430
        %v443 = vpack.c.b16 %v442, %v441
        %445 = vmatpush.bf16.xpose.msra.mxu0 0
        %446 = vmatpush.bf16.xpose.msra.mxu0 0
        %447 = vmatpush.bf16.xpose.msra.mxu0 0
        %448 = vmatpush.bf16.xpose.msra.mxu0 0
        %449 = vmatpush.bf16.xpose.msra.mxu0 0
        %450 = vmatpush.bf16.xpose.msra.mxu0 0
        %451 = vmatpush.bf16.xpose.msra.mxu0 0
        %452 = vmatpush.bf16.xpose.msra.mxu0 %v443
        %453 = vmatmul.bf16.gmra.mxu0 %v437
        %v454 = vpop.f32.mrf.mxu0
        %v455 = vadd.f32 0.0, %v454
        %v456 = vpop.f32.mrf.mxu0
        %v457 = vadd.f32 0.0, %v456
        %458 = vdwg.mxu0
        %v459 = vld [vmem:[#allocation2] sm:$0xff]
        %v460 = vld [vmem:[#allocation2 + $0x8] sm:$0xff]
        %vm461 = vcmask 130048
        %v462 = vsel %vm461, %v455, -inf
        %463 = vmax.xlane.f32.xlu0 %v462
        %v464 = vpop.xlane.xlu0 %463
        %v465 = vsel %vm461, %v457, -inf
        %466 = vmax.xlane.f32.xlu0 %v465
        %v467 = vpop.xlane.xlu0 %466
        %v468 = vmax.f32 %v459, %v464
        %v469 = vmax.f32 %v460, %v467
        %v470 = vsub.f32 %v459, %v468
        %v471 = vsub.f32 %v460, %v469
        %v472 = vmul.f32 %v470, 1.442695
        %v473 = vpow.pop %v472
        %v474 = vmul.f32 %v471, 1.442695
        %v475 = vpow.pop %v474
        %477 = vset.pattern.permute.xlu0 0
        %478 = vperm.xlu0 %477, %v468
        %v479 = vpop.permute.xlu0 %478
        %482 = vset.pattern.permute.xlu0 0
        %483 = vperm.xlu0 %482, %v469
        %v484 = vpop.permute.xlu0 %483
        %v486 = vsub.f32 %v455, %v479
        %v487 = vsub.f32 %v457, %v484
        %v488 = vmul.f32 %v486, 1.442695
        %v489 = vpow.pop %v488
        %v490 = vmul.f32 %v487, 1.442695
        %v491 = vpow.pop %v490
        %v492 = vld [vmem:[#allocation3] sm:$0xff]
        %v493 = vld [vmem:[#allocation3 + $0x8] sm:$0xff]
        %v494 = vmul.f32 %v473, %v492
        %v495 = vmul.f32 %v475, %v493
        %v496 = vsel %vm461, %v489, 0.0
        %497 = vadd.xlane.f32.xlu0 %v496
        %v498 = vpop.xlane.xlu0 %497
        %v499 = vsel %vm461, %v491, 0.0
        %500 = vadd.xlane.f32.xlu0 %v499
        %v501 = vpop.xlane.xlu0 %500
        %v502 = vadd.f32 %v494, %v498
        %v503 = vadd.f32 %v495, %v501
        %vm504 = vcmask 7168
        %505 = vst.msk [vmem:[#allocation3] sm:$0xff] %vm504, %v502
        %506 = vst.msk [vmem:[#allocation3 + $0x8] sm:$0xff] %vm504, %v503
        %v507 = vld [vmem:[#allocation4] sm:$0xff]
        %v508 = vld [vmem:[#allocation4 + $0x8] sm:$0xff]
        %510 = vset.pattern.permute.xlu0 0
        %511 = vperm.xlu0 %510, %v473
        %v512 = vpop.permute.xlu0 %511
        %515 = vset.pattern.permute.xlu0 0
        %516 = vperm.xlu0 %515, %v475
        %v517 = vpop.permute.xlu0 %516
        %v519 = vmul.f32 %v512, %v507
        %v520 = vmul.f32 %v517, %v508
        %v521 = vpack.c.bf16 %v491, %v489
        %v524 = vunpack.c.l.b16 %v431
        %v525 = vunpack.c.l.b16 %v432
        %v526 = vpack.c.b16 %v525, %v524
        %v529 = vsel %vm461, %v521, 0
        %531 = vmatpush.bf16.msra.mxu0 0
        %532 = vmatpush.bf16.msra.mxu0 0
        %533 = vmatpush.bf16.msra.mxu0 0
        %534 = vmatpush.bf16.msra.mxu0 0
        %535 = vmatpush.bf16.msra.mxu0 0
        %536 = vmatpush.bf16.msra.mxu0 0
        %537 = vmatpush.bf16.msra.mxu0 0
        %538 = vmatpush.bf16.msra.mxu0 %v526
        %539 = vmatmul.bf16.gmra.mxu0 %v529
        %v540 = vpop.f32.mrf.mxu0
        %v541 = vadd.f32 0.0, %v540
        %v542 = vpop.f32.mrf.mxu0
        %v543 = vadd.f32 0.0, %v542
        %544 = vdwg.mxu0
        %v545 = vadd.f32 %v519, %v541
        %v546 = vadd.f32 %v520, %v543
        %547 = vst [vmem:[#allocation4] sm:$0xff] %v545
        %548 = vst [vmem:[#allocation4 + $0x8] sm:$0xff] %v546
        %549 = vst.msk [vmem:[#allocation2] sm:$0xff] %vm504, %v468
        %550 = vst.msk [vmem:[#allocation2 + $0x8] sm:$0xff] %vm504, %v469
        // Predicated region
        $region160: #{tunable_whisper_audio_encoder.17} parent=142 // pred_check
          %p551 = pneg %p416
        $region161: #{tunable_whisper_audio_encoder.17} parent=142 // pred_check_branch
          %553 = sbr.rel (%p551) target = $region163
        $region162: #{tunable_whisper_audio_encoder.17} parent=142 // pred_region
          %v554 = vld [vmem:[#allocation4] sm:$0xff]
          %v555 = vld [vmem:[#allocation4 + $0x8] sm:$0xff]
          %v556 = vld [vmem:[#allocation3] sm:$0xff]
          %v557 = vld [vmem:[#allocation3 + $0x8] sm:$0xff]
          %v558 = vrcp.pop %v556
          %v559 = vrcp.pop %v557
          %561 = vset.pattern.permute.xlu0 0
          %562 = vperm.xlu0 %561, %v558
          %v563 = vpop.permute.xlu0 %562
          %566 = vset.pattern.permute.xlu0 0
          %567 = vperm.xlu0 %566, %v559
          %v568 = vpop.permute.xlu0 %567
          %v570 = vmul.f32 %v554, %v563
          %v571 = vmul.f32 %v555, %v568
          %v572 = vpack.c.bf16 %v570, %v570
          %v573 = vpack.c.bf16 %v571, %v571
          %574 = vst [vmem:[%s408] sm:$0xf] %v572
          %575 = vst [vmem:[%s408 + $0x4] sm:$0xf] %v573
        $region163: #{tunable_whisper_audio_encoder.17} parent=142 // pred_fallthru
          _
        %s576 = sand.u32 %s146, 1
        %s577 = sand.u32 %s146, 1
        %s578 = smul.addr %s577, 8
        %s579 = scalar_lea.vmem [#allocation8], %s578
        // Predicated region
        $region164: #{tunable_whisper_audio_encoder.17} parent=142 // pred_check
          %p580 = pneg %p156
        $region165: #{tunable_whisper_audio_encoder.17} parent=142 // pred_check_branch
          %582 = sbr.rel (%p580) target = $region167
        $region166: #{tunable_whisper_audio_encoder.17} parent=142 // pred_region
          %s583 = smul.u32 2, %s22
          %s584 = smul.addr %s583, 2
          %s585 = sadd.s32 %s21, %s584
          %s586 = smul.addr %s20, 4
          %s587 = sadd.s32 %s585, %s586
          %s588 = smul.addr %s587, 4
          %s589 = scalar_lea.vmem %s3, %s588
          // Predicated region
          $region168: #{tunable_whisper_audio_encoder.17} parent=166 // pred_check
            _
          $region169: #{tunable_whisper_audio_encoder.17} parent=166 // pred_check_branch
            %591 = sbr.rel (0) target = $region171
          $region170: #{tunable_whisper_audio_encoder.17} parent=166 // pred_region
            // Predicated region
            $region172: #{tunable_whisper_audio_encoder.17} parent=170 // pred_check
              _
            $region173: #{tunable_whisper_audio_encoder.17} parent=170 // pred_check_branch
              %593 = sbr.rel target = $region175
            $region174: #{tunable_whisper_audio_encoder.17} parent=170 // pred_region
              // Predicated region
              $region187: #{tunable_whisper_audio_encoder.17} parent=174 // pred_check
                _
              $region188: #{tunable_whisper_audio_encoder.17} parent=174 // pred_check_branch
                %611 = sbr.rel (0) target = $region190
              $region189: #{tunable_whisper_audio_encoder.17} parent=174 // pred_region
                loop: start=0, step=1, limit=1
                $region191: #{tunable_whisper_audio_encoder.17} parent=189 // loop_pre_header
                  _
                $region192: #{tunable_whisper_audio_encoder.17} parent=189 // loop_header
                  %s613 = sphi 0, %s617
                  %p614 = scmp.ge.s32.totalorder %s613, 1
                  %s618 = sphi %s579, %s579
                  %s619 = sphi %s589, %s589
                $region193: #{tunable_whisper_audio_encoder.17} parent=189 // loop_header_branch
                  %616 = sbr.rel (%p614) target = $region197
                $region194: #{tunable_whisper_audio_encoder.17} parent=189 // loop_body
                  _
                $region195: #{tunable_whisper_audio_encoder.17} parent=189 // loop_footer
                  %s617 = sadd.s32 1, %s613
                $region196: #{tunable_whisper_audio_encoder.17} parent=189 // loop_footer_branch
                  %612 = sbr.rel target = $region192
                $region197: #{tunable_whisper_audio_encoder.17} parent=189 // loop_exit
                  _
                %s621 = ssub.s32 16, 1
                loop: start=0, step=1, limit=1
                $region198: #{tunable_whisper_audio_encoder.17} parent=189 // loop_pre_header
                  _
                $region199: #{tunable_whisper_audio_encoder.17} parent=189 // loop_header
                  %s623 = sphi 0, %s627
                  %p624 = scmp.ge.s32.totalorder %s623, 1
                  %s628 = sphi %s579, %s579
                  %s629 = sphi %s589, %s589
                $region200: #{tunable_whisper_audio_encoder.17} parent=189 // loop_header_branch
                  %626 = sbr.rel (%p624) target = $region204
                $region201: #{tunable_whisper_audio_encoder.17} parent=189 // loop_body
                  %v630 = vld [vmem:[%s628] sm:%s621]
                  %631 = vst [vmem:[%s629] sm:%s621] %v630
                  %v632 = vld [vmem:[%s628 + $0x4] sm:%s621]
                  %633 = vst [vmem:[%s629 + $0x8] sm:%s621] %v632
                $region202: #{tunable_whisper_audio_encoder.17} parent=189 // loop_footer
                  %s627 = sadd.s32 1, %s623
                $region203: #{tunable_whisper_audio_encoder.17} parent=189 // loop_footer_branch
                  %622 = sbr.rel target = $region199
                $region204: #{tunable_whisper_audio_encoder.17} parent=189 // loop_exit
                  _
              $region190: #{tunable_whisper_audio_encoder.17} parent=174 // pred_fallthru
                _
            $region175: #{tunable_whisper_audio_encoder.17} parent=170 // pred_fallthru
              _
            // Predicated region
            $region176: #{tunable_whisper_audio_encoder.17} parent=170 // pred_check
              _
            $region177: #{tunable_whisper_audio_encoder.17} parent=170 // pred_check_branch
              %595 = sbr.rel (0) target = $region179
            $region178: #{tunable_whisper_audio_encoder.17} parent=170 // pred_region
              %s597 = ssub.s32 16, 1
              loop: start=0, step=1, limit=1
              $region180: #{tunable_whisper_audio_encoder.17} parent=178 // loop_pre_header
                _
              $region181: #{tunable_whisper_audio_encoder.17} parent=178 // loop_header
                %s599 = sphi 0, %s603
                %p600 = scmp.ge.s32.totalorder %s599, 1
                %s604 = sphi %s579, %s579
                %s605 = sphi %s589, %s589
              $region182: #{tunable_whisper_audio_encoder.17} parent=178 // loop_header_branch
                %602 = sbr.rel (%p600) target = $region186
              $region183: #{tunable_whisper_audio_encoder.17} parent=178 // loop_body
                %v606 = vld [vmem:[%s604] sm:%s597]
                %607 = vst [vmem:[%s605] sm:%s597] %v606
                %v608 = vld [vmem:[%s604 + $0x4] sm:%s597]
                %609 = vst [vmem:[%s605 + $0x8] sm:%s597] %v608
              $region184: #{tunable_whisper_audio_encoder.17} parent=178 // loop_footer
                %s603 = sadd.s32 1, %s599
              $region185: #{tunable_whisper_audio_encoder.17} parent=178 // loop_footer_branch
                %598 = sbr.rel target = $region181
              $region186: #{tunable_whisper_audio_encoder.17} parent=178 // loop_exit
                _
            $region179: #{tunable_whisper_audio_encoder.17} parent=170 // pred_fallthru
              _
          $region171: #{tunable_whisper_audio_encoder.17} parent=166 // pred_fallthru
            _
          %634 = vnop
        $region167: #{tunable_whisper_audio_encoder.17} parent=142 // pred_fallthru
          _
      $region143: #{tunable_whisper_audio_encoder.17} parent=5 // pred_fallthru
        _
      %p635 = scmp.le.s32.totalorder 2, %s9
      // Predicated region
      $region205: #{tunable_whisper_audio_encoder.17} parent=5 // pred_check
        %p636 = pneg %p635
      $region206: #{tunable_whisper_audio_encoder.17} parent=5 // pred_check_branch
        %638 = sbr.rel (%p636) target = $region208
      $region207: #{tunable_whisper_audio_encoder.17} parent=5 // pred_region
        %s639 = ssub.s32 %s9, 2
        // Predicated region
        $region209: #{tunable_whisper_audio_encoder.17} parent=207 // pred_check
          %p640 = pneg %p162
        $region210: #{tunable_whisper_audio_encoder.17} parent=207 // pred_check_branch
          %642 = sbr.rel (%p640) target = $region212
        $region211: #{tunable_whisper_audio_encoder.17} parent=207 // pred_region
          %s643 = sand.u32 %s147, 1
          %s644 = sand.u32 %s147, 1
          %s645 = smul.addr %s644, 8
          %s646 = scalar_lea.vmem [#allocation8], %s645
        $region212: #{tunable_whisper_audio_encoder.17} parent=207 // pred_fallthru
          _
      $region208: #{tunable_whisper_audio_encoder.17} parent=5 // pred_fallthru
        _
    $region6: #{tunable_whisper_audio_encoder.17} parent=1 // loop_footer
      %s13 = sadd.s32 1, %s9
    $region7: #{tunable_whisper_audio_encoder.17} parent=1 // loop_footer_branch
      %8 = sbr.rel target = $region3
    $region8: #{tunable_whisper_audio_encoder.17} parent=1 // loop_exit
      _

// kernel: tunable_whisper_audio_encoder.15
$region0: #{tunable_whisper_audio_encoder.15}
  #allocation0 [shape = 'u32[]', space=smem, size = 0x4, offset = 0x4, fixed_abs, tag = 'smem constant byte address 0x4 - core index']
  #allocation1 [shape = 'u32[72,128]{1,0:T(1,128)}', space=vmem, size = 0x9000, scoped, tag = 'internal scratch']
  #allocation2 [shape = 'bf16[24,512]{1,0:T(8,128)(2,1)}', space=vmem, size = 0x6000, scoped, tag = 'scratch operand']
  %s0 = inlined_call_operand.vmem [shape: bf16[2,24,512], index: 0, kind: input, shape index: {}, may-alias: {0,1}]
  %s1 = inlined_call_operand.vmem [shape: bf16[2,24,512], index: 1, kind: input, shape index: {}, may-alias: {0,1}]
  %s2 = inlined_call_operand.hbm [shape: bf16[3,256,256], index: 2, kind: input, shape index: {}]
  %s3 = inlined_call_operand.vmem [shape: f32[1,256], index: 3, kind: input, shape index: {}]
  %s4 = inlined_call_operand.vmem [shape: f32[16,256], index: 4, kind: input, shape index: {}]
  %s5 = inlined_call_operand.vmem [shape: bf16[2,16,256], index: 5, kind: output, shape index: {}]
  %s6 = sld [smem:[#allocation0]]
  $region57: #{tunable_whisper_audio_encoder.15} parent=0
    _
  %s8 = ssub.s32 1, %s6
  %s9 = scalar_select 0, %s8, %s6
  $region1: #{tunable_whisper_audio_encoder.15} parent=0
    #allocation3 [shape = 'u8[393216]{0}', space=vmem, size = 0x60000, scoped, tag = 'input window, operand 2, single buffered']
    #allocation4 [shape = 's32[2]{0}', space=sflag, size = 0x8, scoped, tag = 'scoped memory for tunable_whisper_audio_encoder.15']
    %10 = vsyncpa [#allocation4], 0
    loop: start=0, step=1, limit=4
    $region2: #{tunable_whisper_audio_encoder.15} parent=1 // loop_pre_header
      _
    $region3: #{tunable_whisper_audio_encoder.15} parent=1 // loop_header
      %s12 = sphi 0, %s16
      %p13 = scmp.ge.s32.totalorder %s12, 4
      %s19 = sphi 0, %s31
      %s20 = sphi 0, %s27
      %s21 = sphi 0, %s19
      %s22 = sphi 0, %s20
      %s23 = sphi 0, %s21
      %s24 = sphi 0, %s22
      %s36 = sphi 0, %s38
      %s39 = sphi 0, %s36
      %s40 = sphi 0, %s39
      %s56 = sphi 0, %s40
      %s68 = sphi 0, %s70
      %s71 = sphi 0, %s68
      %s72 = sphi 0, %s71
      %s88 = sphi 0, %s72
      %s92 = sphi 0, %s92
      %s94 = sphi 0, %s92
      %s95 = sphi 0, %s94
      %s109 = sphi 0, %s95
      %s113 = sphi 0, %s113
      %s115 = sphi 0, %s113
      %s116 = sphi 0, %s115
      %s130 = sphi 0, %s116
      %s136 = sphi 0, %s138
      %s139 = sphi 0, %s136
      %s140 = sphi 0, %s139
      %s156 = sphi 0, %s140
      %s164 = sphi 0, %s166
      %s167 = sphi 0, %s164
      %s168 = sphi 0, %s167
      %s184 = sphi 0, %s168
    $region4: #{tunable_whisper_audio_encoder.15} parent=1 // loop_header_branch
      %15 = sbr.rel (%p13) target = $region8
    $region5: #{tunable_whisper_audio_encoder.15} parent=1 // loop_body
      %s17 = ssub.s32 %s12, 1
      %s18 = ssub.s32 %s12, 2
      %s25 = sadd.s32 1, %s20
      %p26 = scmp.ge.s32.totalorder %s25, 1
      %s27 = scalar_select %p26, 0, %s25
      %s28 = sadd.s32 1, %s19
      %s29 = scalar_select %p26, %s28, %s19
      %p30 = scmp.ge.s32.totalorder %s29, 2
      %s31 = scalar_select %p30, 0, %s29
      %s32 = ssub.s32 %s19, %s31
      %s33 = ssub.s32 %s20, %s27
      %s34 = sor.u32 %s32, %s33
      %p35 = scmp.eq.s32.totalorder %s34, 0
      %s37 = sadd.s32 %s36, 1
      %s38 = scalar_select %p35, %s36, %s37
      %p41 = pneg %p35
      %p42 = scmp.eq.s32.totalorder %s12, 1
      %p43 = por %p41, %p42
      %p44 = scmp.ne.s32.totalorder %s36, %s39
      %p45 = scmp.eq.s32.totalorder %s12, 0
      %p46 = por %p44, %p45
      %p47 = scmp.ne.s32.totalorder %s36, %s39
      %p48 = scmp.eq.s32.totalorder %s17, 1
      %p49 = por %p47, %p48
      %p50 = scmp.ne.s32.totalorder %s39, %s40
      %p51 = scmp.eq.s32.totalorder %s17, 0
      %p52 = por %p50, %p51
      %p53 = scmp.ne.s32.totalorder %s39, %s40
      %p54 = scmp.eq.s32.totalorder %s18, 1
      %p55 = por %p53, %p54
      %p57 = scmp.ne.s32.totalorder %s40, %s56
      %p58 = scmp.eq.s32.totalorder %s18, 0
      %p59 = por %p57, %p58
      %s60 = sadd.s32 %s20, 1
      %s61 = smul.u32 %s60, 2
      %s62 = sadd.s32 %s27, 1
      %s63 = smul.u32 %s62, 2
      %s64 = ssub.s32 %s19, %s31
      %s65 = ssub.s32 %s61, %s63
      %s66 = sor.u32 %s64, %s65
      %p67 = scmp.eq.s32.totalorder %s66, 0
      %s69 = sadd.s32 %s68, 1
      %s70 = scalar_select %p67, %s68, %s69
      %p73 = pneg %p67
      %p74 = scmp.eq.s32.totalorder %s12, 1
      %p75 = por %p73, %p74
      %p76 = scmp.ne.s32.totalorder %s68, %s71
      %p77 = scmp.eq.s32.totalorder %s12, 0
      %p78 = por %p76, %p77
      %p79 = scmp.ne.s32.totalorder %s68, %s71
      %p80 = scmp.eq.s32.totalorder %s17, 1
      %p81 = por %p79, %p80
      %p82 = scmp.ne.s32.totalorder %s71, %s72
      %p83 = scmp.eq.s32.totalorder %s17, 0
      %p84 = por %p82, %p83
      %p85 = scmp.ne.s32.totalorder %s71, %s72
      %p86 = scmp.eq.s32.totalorder %s18, 1
      %p87 = por %p85, %p86
      %p89 = scmp.ne.s32.totalorder %s72, %s88
      %p90 = scmp.eq.s32.totalorder %s18, 0
      %p91 = por %p89, %p90
      %s93 = sadd.s32 %s92, 1
      %p96 = scmp.eq.s32.totalorder %s12, 1
      %p97 = scmp.ne.s32.totalorder %s92, %s94
      %p98 = scmp.eq.s32.totalorder %s12, 0
      %p99 = por %p97, %p98
      %p100 = scmp.ne.s32.totalorder %s92, %s94
      %p101 = scmp.eq.s32.totalorder %s17, 1
      %p102 = por %p100, %p101
      %p103 = scmp.ne.s32.totalorder %s94, %s95
      %p104 = scmp.eq.s32.totalorder %s17, 0
      %p105 = por %p103, %p104
      %p106 = scmp.ne.s32.totalorder %s94, %s95
      %p107 = scmp.eq.s32.totalorder %s18, 1
      %p108 = por %p106, %p107
      %p110 = scmp.ne.s32.totalorder %s95, %s109
      %p111 = scmp.eq.s32.totalorder %s18, 0
      %p112 = por %p110, %p111
      %s114 = sadd.s32 %s113, 1
      %p117 = scmp.eq.s32.totalorder %s12, 1
      %p118 = scmp.ne.s32.totalorder %s113, %s115
      %p119 = scmp.eq.s32.totalorder %s12, 0
      %p120 = por %p118, %p119
      %p121 = scmp.ne.s32.totalorder %s113, %s115
      %p122 = scmp.eq.s32.totalorder %s17, 1
      %p123 = por %p121, %p122
      %p124 = scmp.ne.s32.totalorder %s115, %s116
      %p125 = scmp.eq.s32.totalorder %s17, 0
      %p126 = por %p124, %p125
      %p127 = scmp.ne.s32.totalorder %s115, %s116
      %p128 = scmp.eq.s32.totalorder %s18, 1
      %p129 = por %p127, %p128
      %p131 = scmp.ne.s32.totalorder %s116, %s130
      %p132 = scmp.eq.s32.totalorder %s18, 0
      %p133 = por %p131, %p132
      %s134 = ssub.s32 %s20, %s27
      %p135 = scmp.eq.s32.totalorder %s134, 0
      %s137 = sadd.s32 %s136, 1
      %s138 = scalar_select %p135, %s136, %s137
      %p141 = pneg %p135
      %p142 = scmp.eq.s32.totalorder %s12, 1
      %p143 = por %p141, %p142
      %p144 = scmp.ne.s32.totalorder %s136, %s139
      %p145 = scmp.eq.s32.totalorder %s12, 0
      %p146 = por %p144, %p145
      %p147 = scmp.ne.s32.totalorder %s136, %s139
      %p148 = scmp.eq.s32.totalorder %s17, 1
      %p149 = por %p147, %p148
      %p150 = scmp.ne.s32.totalorder %s139, %s140
      %p151 = scmp.eq.s32.totalorder %s17, 0
      %p152 = por %p150, %p151
      %p153 = scmp.ne.s32.totalorder %s139, %s140
      %p154 = scmp.eq.s32.totalorder %s18, 1
      %p155 = por %p153, %p154
      %p157 = scmp.ne.s32.totalorder %s140, %s156
      %p158 = scmp.eq.s32.totalorder %s18, 0
      %p159 = por %p157, %p158
      %s160 = ssub.s32 %s19, %s31
      %s161 = ssub.s32 %s20, %s27
      %s162 = sor.u32 %s160, %s161
      %p163 = scmp.eq.s32.totalorder %s162, 0
      %s165 = sadd.s32 %s164, 1
      %s166 = scalar_select %p163, %s164, %s165
      %p169 = pneg %p163
      %p170 = scmp.eq.s32.totalorder %s12, 1
      %p171 = por %p169, %p170
      %p172 = scmp.ne.s32.totalorder %s164, %s167
      %p173 = scmp.eq.s32.totalorder %s12, 0
      %p174 = por %p172, %p173
      %p175 = scmp.ne.s32.totalorder %s164, %s167
      %p176 = scmp.eq.s32.totalorder %s17, 1
      %p177 = por %p175, %p176
      %p178 = scmp.ne.s32.totalorder %s167, %s168
      %p179 = scmp.eq.s32.totalorder %s17, 0
      %p180 = por %p178, %p179
      %p181 = scmp.ne.s32.totalorder %s167, %s168
      %p182 = scmp.eq.s32.totalorder %s18, 1
      %p183 = por %p181, %p182
      %p185 = scmp.ne.s32.totalorder %s168, %s184
      %p186 = scmp.eq.s32.totalorder %s18, 0
      %p187 = por %p185, %p186
      %p188 = scmp.le.s32.totalorder 1, %s12
      %p189 = scmp.lt.s32.totalorder %s12, 3
      %p190 = pnand %p188, %p189
      %p191 = pneg %p190
      // Predicated region
      $region9: #{tunable_whisper_audio_encoder.15} parent=5 // pred_check
        _
      $region10: #{tunable_whisper_audio_encoder.15} parent=5 // pred_check_branch
        %193 = sbr.rel (%p190) target = $region12
      $region11: #{tunable_whisper_audio_encoder.15} parent=5 // pred_region
        %s194 = ssub.s32 %s12, 1
        // Predicated region
        $region13: #{tunable_whisper_audio_encoder.15} parent=11 // pred_check
          %p195 = pneg %p105
        $region14: #{tunable_whisper_audio_encoder.15} parent=11 // pred_check_branch
          %197 = sbr.rel (%p195) target = $region16
        $region15: #{tunable_whisper_audio_encoder.15} parent=11 // pred_region
          %199 = vsyncadd [#allocation4], 0
          %s200 = sshll.u32 %s2, 4
          %s201 = int_to_ptr.hbm [resolvable:$true] %s200
          %s202 = sshll.u32 [#allocation3], 4
          %s203 = int_to_ptr.vmem [resolvable:$true] %s202
          %208 = dma.hbm_to_vmem [thread:$0]  %s201, 12288, %s203, [#allocation4], 128, 128, 8
        $region16: #{tunable_whisper_audio_encoder.15} parent=11 // pred_fallthru
          _
        // Predicated region
        $region17: #{tunable_whisper_audio_encoder.15} parent=11 // pred_check
          %p209 = pneg %p126
        $region18: #{tunable_whisper_audio_encoder.15} parent=11 // pred_check_branch
          %211 = sbr.rel (%p209) target = $region20
        $region19: #{tunable_whisper_audio_encoder.15} parent=11 // pred_region
          _
        $region20: #{tunable_whisper_audio_encoder.15} parent=11 // pred_fallthru
          _
        // Predicated region
        $region21: #{tunable_whisper_audio_encoder.15} parent=11 // pred_check
          %p212 = pneg %p152
        $region22: #{tunable_whisper_audio_encoder.15} parent=11 // pred_check_branch
          %214 = sbr.rel (%p212) target = $region24
        $region23: #{tunable_whisper_audio_encoder.15} parent=11 // pred_region
          %s215 = smul.u32 2, %s22
          %p216 = scmp.lt.s32.totalorder %s215, 1
          %s217 = scalar_select %p216, %s215, 1
          %s218 = smul.addr %s217, 2
          %s219 = smul.addr %s218, 8
          %s220 = scalar_lea.vmem %s4, %s219
          %s221 = smul.u32 2, %s22
        $region24: #{tunable_whisper_audio_encoder.15} parent=11 // pred_fallthru
          _
      $region12: #{tunable_whisper_audio_encoder.15} parent=5 // pred_fallthru
        _
      %p222 = scmp.lt.s32.totalorder %s12, 2
      // Predicated region
      $region25: #{tunable_whisper_audio_encoder.15} parent=5 // pred_check
        %p223 = pneg %p222
      $region26: #{tunable_whisper_audio_encoder.15} parent=5 // pred_check_branch
        %225 = sbr.rel (%p223) target = $region28
      $region27: #{tunable_whisper_audio_encoder.15} parent=5 // pred_region
        // Predicated region
        $region29: #{tunable_whisper_audio_encoder.15} parent=27 // pred_check
          %p226 = pneg %p46
        $region30: #{tunable_whisper_audio_encoder.15} parent=27 // pred_check_branch
          %228 = sbr.rel (%p226) target = $region32
        $region31: #{tunable_whisper_audio_encoder.15} parent=27 // pred_region
          %s229 = smul.u32 2, %s20
          %s230 = ssub.s32 3, %s229
          %p231 = scmp.lt.s32.totalorder %s230, 2
          %s232 = scalar_select %p231, %s230, 2
          %s233 = smul.u32 4, %s232
          %s234 = smul.u32 %s233, 4
          %p235 = scmp.lt.s32.totalorder %s19, 1
          %s236 = scalar_select %p235, %s19, 1
          %p237 = scmp.lt.s32.totalorder %s229, 2
          %s238 = scalar_select %p237, %s229, 2
          %s239 = smul.addr %s238, 4
          %s240 = smul.addr %s236, 12
          %s241 = sadd.s32 %s239, %s240
          %s242 = smul.addr %s241, 4
          %s243 = scalar_lea.vmem %s0, %s242
          %s244 = smul.u32 2, %s20
          %s245 = ssub.s32 3, %s244
          %p246 = scmp.lt.s32.totalorder %s245, 2
          %s247 = scalar_select %p246, %s245, 2
          %s248 = smul.u32 4, %s247
          %s249 = smul.u32 %s248, 4
        $region32: #{tunable_whisper_audio_encoder.15} parent=27 // pred_fallthru
          _
        // Predicated region
        $region33: #{tunable_whisper_audio_encoder.15} parent=27 // pred_check
          %p250 = pneg %p78
        $region34: #{tunable_whisper_audio_encoder.15} parent=27 // pred_check_branch
          %252 = sbr.rel (%p250) target = $region36
        $region35: #{tunable_whisper_audio_encoder.15} parent=27 // pred_region
          %s253 = sadd.s32 %s20, 1
          %s254 = smul.u32 %s253, 2
          %p255 = scmp.lt.s32.totalorder %s19, 1
          %s256 = scalar_select %p255, %s19, 1
          %p257 = scmp.lt.s32.totalorder %s254, 2
          %s258 = scalar_select %p257, %s254, 2
          %s259 = smul.addr %s258, 4
          %s260 = smul.addr %s256, 12
          %s261 = sadd.s32 %s259, %s260
          %s262 = smul.addr %s261, 4
          %s263 = scalar_lea.vmem %s1, %s262
          %s264 = sadd.s32 %s20, 1
          %s265 = smul.u32 %s264, 2
        $region36: #{tunable_whisper_audio_encoder.15} parent=27 // pred_fallthru
          _
      $region28: #{tunable_whisper_audio_encoder.15} parent=5 // pred_fallthru
        _
      %p266 = scmp.le.s32.totalorder 1, %s12
      %p267 = scmp.lt.s32.totalorder %s12, 3
      %p268 = pnand %p266, %p267
      %p269 = pneg %p268
      // Predicated region
      $region37: #{tunable_whisper_audio_encoder.15} parent=5 // pred_check
        _
      $region38: #{tunable_whisper_audio_encoder.15} parent=5 // pred_check_branch
        %271 = sbr.rel (%p268) target = $region40
      $region39: #{tunable_whisper_audio_encoder.15} parent=5 // pred_region
        %s272 = ssub.s32 %s12, 1
        // Predicated region
        $region41: #{tunable_whisper_audio_encoder.15} parent=39 // pred_check
          %p273 = pneg %p105
        $region42: #{tunable_whisper_audio_encoder.15} parent=39 // pred_check_branch
          %275 = sbr.rel (%p273) target = $region44
        $region43: #{tunable_whisper_audio_encoder.15} parent=39 // pred_region
          %277 = dma.done [#allocation4], 12288
        $region44: #{tunable_whisper_audio_encoder.15} parent=39 // pred_fallthru
          _
        %s278 = smul.u32 2, %s22
        %s279 = ssub.s32 3, %s278
        %p280 = scmp.lt.s32.totalorder %s279, 2
        %s281 = scalar_select %p280, %s279, 2
        %s282 = smul.u32 4, %s281
        %s283 = smul.u32 %s282, 4
        %p284 = scmp.lt.s32.totalorder %s21, 1
        %s285 = scalar_select %p284, %s21, 1
        %p286 = scmp.lt.s32.totalorder %s278, 2
        %s287 = scalar_select %p286, %s278, 2
        %s288 = smul.addr %s287, 4
        %s289 = smul.addr %s285, 12
        %s290 = sadd.s32 %s288, %s289
        %s291 = smul.addr %s290, 4
        %s292 = scalar_lea.vmem %s0, %s291
        %p293 = pneg %p52
        %p294 = pneg %p49
        %s295 = sadd.s32 %s22, 1
        %s296 = smul.u32 %s295, 2
        %p297 = scmp.lt.s32.totalorder %s21, 1
        %s298 = scalar_select %p297, %s21, 1
        %p299 = scmp.lt.s32.totalorder %s296, 2
        %s300 = scalar_select %p299, %s296, 2
        %s301 = smul.addr %s300, 4
        %s302 = smul.addr %s298, 12
        %s303 = sadd.s32 %s301, %s302
        %s304 = smul.addr %s303, 4
        %s305 = scalar_lea.vmem %s1, %s304
        %p306 = pneg %p84
        %p307 = pneg %p81
        %p308 = pneg %p105
        %p309 = pneg %p102
        %p310 = pneg %p126
        %p311 = pneg %p123
        %s312 = smul.u32 2, %s22
        %p313 = scmp.lt.s32.totalorder %s312, 1
        %s314 = scalar_select %p313, %s312, 1
        %s315 = smul.addr %s314, 2
        %s316 = smul.addr %s315, 8
        %s317 = scalar_lea.vmem %s4, %s316
        %p318 = pneg %p152
        %p319 = pneg %p149
        %p320 = pneg %p180
        %p321 = pneg %p177
        %s322 = smul.u32 2, %s22
        %p323 = scmp.lt.s32.totalorder %s21, 1
        %s324 = scalar_select %p323, %s21, 1
        %p325 = scmp.lt.s32.totalorder %s322, 1
        %s326 = scalar_select %p325, %s322, 1
        %s327 = smul.addr %s326, 2
        %s328 = smul.addr %s324, 4
        %s329 = sadd.s32 %s327, %s328
        %s330 = smul.addr %s329, 4
        %s331 = scalar_lea.vmem %s5, %s330
        %s332 = smul.u32 2, %s22
        %s333 = ssub.s32 3, %s332
        %p334 = scmp.lt.s32.totalorder %s333, 2
        %s335 = scalar_select %p334, %s333, 2
        %s336 = smul.u32 4, %s335
        %s337 = smul.u32 %s336, 4
        %p338 = scmp.lt.s32.totalorder %s21, 1
        %s339 = scalar_select %p338, %s21, 1
        %p340 = scmp.lt.s32.totalorder %s332, 2
        %s341 = scalar_select %p340, %s332, 2
        %s342 = smul.addr %s341, 4
        %s343 = smul.addr %s339, 12
        %s344 = sadd.s32 %s342, %s343
        %s345 = smul.addr %s344, 4
        %s346 = scalar_lea.vmem %s0, %s345
        %s347 = smul.u32 2, %s22
        %s348 = ssub.s32 3, %s347
        %p349 = scmp.lt.s32.totalorder %s348, 2
        %s350 = scalar_select %p349, %s348, 2
        %s351 = smul.u32 4, %s350
        %s352 = smul.u32 %s351, 4
        %s353 = sadd.s32 %s22, 1
        %s354 = smul.u32 %s353, 2
        %p355 = scmp.lt.s32.totalorder %s21, 1
        %s356 = scalar_select %p355, %s21, 1
        %p357 = scmp.lt.s32.totalorder %s354, 2
        %s358 = scalar_select %p357, %s354, 2
        %s359 = smul.addr %s358, 4
        %s360 = smul.addr %s356, 12
        %s361 = sadd.s32 %s359, %s360
        %s362 = smul.addr %s361, 4
        %s363 = scalar_lea.vmem %s1, %s362
        %s364 = sadd.s32 %s22, 1
        %s365 = smul.u32 %s364, 2
        %s366 = smul.u32 2, %s22
        %p367 = scmp.lt.s32.totalorder %s366, 1
        %s368 = scalar_select %p367, %s366, 1
        %s369 = smul.addr %s368, 2
        %s370 = smul.addr %s369, 8
        %s371 = scalar_lea.vmem %s4, %s370
        %s372 = smul.u32 2, %s22
        %s373 = smul.u32 2, %s22
        %p374 = scmp.lt.s32.totalorder %s21, 1
        %s375 = scalar_select %p374, %s21, 1
        %p376 = scmp.lt.s32.totalorder %s373, 1
        %s377 = scalar_select %p376, %s373, 1
        %s378 = smul.addr %s377, 2
        %s379 = smul.addr %s375, 4
        %s380 = sadd.s32 %s378, %s379
        %s381 = smul.addr %s380, 4
        %s382 = scalar_lea.vmem %s5, %s381
        %s383 = smul.u32 2, %s22
        %v384 = vld [vmem:[%s346] sm:$0xff]
        %v385 = vld [vmem:[%s346 + $0x8] sm:$0xff]
        %v386 = vld [vmem:[%s346 + $0x10] sm:$0xff]
        %v387 = vld [vmem:[%s346 + $0x18] sm:$0xff]
        %388 = vst [vmem:[#allocation2] sm:$0xff] %v384
        %389 = vst [vmem:[#allocation2 + $0x8] sm:$0xff] %v385
        %390 = vst [vmem:[#allocation2 + $0x10] sm:$0xff] %v386
        %391 = vst [vmem:[#allocation2 + $0x18] sm:$0xff] %v387
        %v392 = vld [vmem:[%s363] sm:$0xff]
        %v393 = vld [vmem:[%s363 + $0x8] sm:$0xff]
        %394 = vst [vmem:[#allocation2 + $0x20] sm:$0xff] %v392
        %395 = vst [vmem:[#allocation2 + $0x28] sm:$0xff] %v393
        %v396 = vld [vmem:[#allocation2] sm:$0xff]
        %v397 = vld [vmem:[#allocation2 + $0x10] sm:$0xff]
        %v398 = vld [vmem:[#allocation2 + $0x8] sm:$0xff]
        %v399 = vld [vmem:[#allocation2 + $0x18] sm:$0xff]
        %v400 = vld [vmem:[#allocation2 + $0x20] sm:$0x11]
        %v401 = vld [vmem:[#allocation3] sm:$0xff]
        %v402 = vld [vmem:[#allocation3 + $0x8] sm:$0xff]
        %v403 = vld [vmem:[#allocation3 + $0x10] sm:$0xff]
        %v404 = vld [vmem:[#allocation3 + $0x18] sm:$0xff]
        %v405 = vld [vmem:[#allocation3 + $0x20] sm:$0xff]
        %v406 = vld [vmem:[#allocation3 + $0x28] sm:$0xff]
        %v407 = vld [vmem:[#allocation3 + $0x30] sm:$0xff]
        %v408 = vld [vmem:[#allocation3 + $0x38] sm:$0xff]
        %v409 = vld [vmem:[#allocation3 + $0x40] sm:$0xff]
        %v410 = vld [vmem:[#allocation3 + $0x48] sm:$0xff]
        %v411 = vld [vmem:[#allocation3 + $0x50] sm:$0xff]
        %v412 = vld [vmem:[#allocation3 + $0x58] sm:$0xff]
        %v413 = vld [vmem:[#allocation3 + $0x60] sm:$0xff]
        %v414 = vld [vmem:[#allocation3 + $0x68] sm:$0xff]
        %v415 = vld [vmem:[#allocation3 + $0x70] sm:$0xff]
        %v416 = vld [vmem:[#allocation3 + $0x78] sm:$0xff]
        %v417 = vld [vmem:[#allocation3 + $0x80] sm:$0xff]
        %v418 = vld [vmem:[#allocation3 + $0x88] sm:$0xff]
        %v419 = vld [vmem:[#allocation3 + $0x90] sm:$0xff]
        %v420 = vld [vmem:[#allocation3 + $0x98] sm:$0xff]
        %v421 = vld [vmem:[#allocation3 + $0xa0] sm:$0xff]
        %v422 = vld [vmem:[#allocation3 + $0xa8] sm:$0xff]
        %v423 = vld [vmem:[#allocation3 + $0xb0] sm:$0xff]
        %v424 = vld [vmem:[#allocation3 + $0xb8] sm:$0xff]
        %v425 = vld [vmem:[#allocation3 + $0xc0] sm:$0xff]
        %v426 = vld [vmem:[#allocation3 + $0xc8] sm:$0xff]
        %v427 = vld [vmem:[#allocation3 + $0xd0] sm:$0xff]
        %v428 = vld [vmem:[#allocation3 + $0xd8] sm:$0xff]
        %v429 = vld [vmem:[#allocation3 + $0xe0] sm:$0xff]
        %v430 = vld [vmem:[#allocation3 + $0xe8] sm:$0xff]
        %v431 = vld [vmem:[#allocation3 + $0xf0] sm:$0xff]
        %v432 = vld [vmem:[#allocation3 + $0xf8] sm:$0xff]
        %s433 = scalar_lea.vmem [#allocation3], 256
        %v434 = vld [vmem:[%s433] sm:$0xff]
        %v435 = vld [vmem:[%s433 + $0x8] sm:$0xff]
        %v436 = vld [vmem:[%s433 + $0x10] sm:$0xff]
        %v437 = vld [vmem:[%s433 + $0x18] sm:$0xff]
        %v438 = vld [vmem:[%s433 + $0x20] sm:$0xff]
        %v439 = vld [vmem:[%s433 + $0x28] sm:$0xff]
        %v440 = vld [vmem:[%s433 + $0x30] sm:$0xff]
        %v441 = vld [vmem:[%s433 + $0x38] sm:$0xff]
        %v442 = vld [vmem:[%s433 + $0x40] sm:$0xff]
        %v443 = vld [vmem:[%s433 + $0x48] sm:$0xff]
        %v444 = vld [vmem:[%s433 + $0x50] sm:$0xff]
        %v445 = vld [vmem:[%s433 + $0x58] sm:$0xff]
        %v446 = vld [vmem:[%s433 + $0x60] sm:$0xff]
        %v447 = vld [vmem:[%s433 + $0x68] sm:$0xff]
        %v448 = vld [vmem:[%s433 + $0x70] sm:$0xff]
        %v449 = vld [vmem:[%s433 + $0x78] sm:$0xff]
        %v450 = vld [vmem:[%s433 + $0x80] sm:$0xff]
        %v451 = vld [vmem:[%s433 + $0x88] sm:$0xff]
        %v452 = vld [vmem:[%s433 + $0x90] sm:$0xff]
        %v453 = vld [vmem:[%s433 + $0x98] sm:$0xff]
        %v454 = vld [vmem:[%s433 + $0xa0] sm:$0xff]
        %v455 = vld [vmem:[%s433 + $0xa8] sm:$0xff]
        %v456 = vld [vmem:[%s433 + $0xb0] sm:$0xff]
        %v457 = vld [vmem:[%s433 + $0xb8] sm:$0xff]
        %v458 = vld [vmem:[%s433 + $0xc0] sm:$0xff]
        %v459 = vld [vmem:[%s433 + $0xc8] sm:$0xff]
        %v460 = vld [vmem:[%s433 + $0xd0] sm:$0xff]
        %v461 = vld [vmem:[%s433 + $0xd8] sm:$0xff]
        %v462 = vld [vmem:[%s433 + $0xe0] sm:$0xff]
        %v463 = vld [vmem:[%s433 + $0xe8] sm:$0xff]
        %v464 = vld [vmem:[%s433 + $0xf0] sm:$0xff]
        %v465 = vld [vmem:[%s433 + $0xf8] sm:$0xff]
        %v468 = vunpack.c.l.b16 %v398
        %v469 = vunpack.c.h.b16 %v398
        %v470 = vunpack.c.l.b16 %v399
        %v471 = vunpack.c.h.b16 %v399
        %v472 = vpack.c.b16 %v470, %v468
        %v473 = vpack.c.b16 %v471, %v469
        %v508 = vunpack.c.l.b16 %v434
        %v509 = vunpack.c.h.b16 %v434
        %v510 = vunpack.c.l.b16 %v435
        %v511 = vunpack.c.h.b16 %v435
        %v512 = vunpack.c.l.b16 %v436
        %v513 = vunpack.c.h.b16 %v436
        %v514 = vunpack.c.l.b16 %v437
        %v515 = vunpack.c.h.b16 %v437
        %v516 = vunpack.c.l.b16 %v438
        %v517 = vunpack.c.h.b16 %v438
        %v518 = vunpack.c.l.b16 %v439
        %v519 = vunpack.c.h.b16 %v439
        %v520 = vunpack.c.l.b16 %v440
        %v521 = vunpack.c.h.b16 %v440
        %v522 = vunpack.c.l.b16 %v441
        %v523 = vunpack.c.h.b16 %v441
        %v524 = vunpack.c.l.b16 %v442
        %v525 = vunpack.c.h.b16 %v442
        %v526 = vunpack.c.l.b16 %v443
        %v527 = vunpack.c.h.b16 %v443
        %v528 = vunpack.c.l.b16 %v444
        %v529 = vunpack.c.h.b16 %v444
        %v530 = vunpack.c.l.b16 %v445
        %v531 = vunpack.c.h.b16 %v445
        %v532 = vunpack.c.l.b16 %v446
        %v533 = vunpack.c.h.b16 %v446
        %v534 = vunpack.c.l.b16 %v447
        %v535 = vunpack.c.h.b16 %v447
        %v536 = vunpack.c.l.b16 %v448
        %v537 = vunpack.c.h.b16 %v448
        %v538 = vunpack.c.l.b16 %v449
        %v539 = vunpack.c.h.b16 %v449
        %v540 = vunpack.c.l.b16 %v450
        %v541 = vunpack.c.h.b16 %v450
        %v542 = vunpack.c.l.b16 %v451
        %v543 = vunpack.c.h.b16 %v451
        %v544 = vunpack.c.l.b16 %v452
        %v545 = vunpack.c.h.b16 %v452
        %v546 = vunpack.c.l.b16 %v453
        %v547 = vunpack.c.h.b16 %v453
        %v548 = vunpack.c.l.b16 %v454
        %v549 = vunpack.c.h.b16 %v454
        %v550 = vunpack.c.l.b16 %v455
        %v551 = vunpack.c.h.b16 %v455
        %v552 = vunpack.c.l.b16 %v456
        %v553 = vunpack.c.h.b16 %v456
        %v554 = vunpack.c.l.b16 %v457
        %v555 = vunpack.c.h.b16 %v457
        %v556 = vunpack.c.l.b16 %v458
        %v557 = vunpack.c.h.b16 %v458
        %v558 = vunpack.c.l.b16 %v459
        %v559 = vunpack.c.h.b16 %v459
        %v560 = vunpack.c.l.b16 %v460
        %v561 = vunpack.c.h.b16 %v460
        %v562 = vunpack.c.l.b16 %v461
        %v563 = vunpack.c.h.b16 %v461
        %v564 = vunpack.c.l.b16 %v462
        %v565 = vunpack.c.h.b16 %v462
        %v566 = vunpack.c.l.b16 %v463
        %v567 = vunpack.c.h.b16 %v463
        %v568 = vunpack.c.l.b16 %v464
        %v569 = vunpack.c.h.b16 %v464
        %v570 = vunpack.c.l.b16 %v465
        %v571 = vunpack.c.h.b16 %v465
        %v572 = vpack.c.b16 %v510, %v508
        %v573 = vpack.c.b16 %v511, %v509
        %v574 = vpack.c.b16 %v514, %v512
        %v575 = vpack.c.b16 %v515, %v513
        %v576 = vpack.c.b16 %v518, %v516
        %v577 = vpack.c.b16 %v519, %v517
        %v578 = vpack.c.b16 %v522, %v520
        %v579 = vpack.c.b16 %v523, %v521
        %v580 = vpack.c.b16 %v526, %v524
        %v581 = vpack.c.b16 %v527, %v525
        %v582 = vpack.c.b16 %v530, %v528
        %v583 = vpack.c.b16 %v531, %v529
        %v584 = vpack.c.b16 %v534, %v532
        %v585 = vpack.c.b16 %v535, %v533
        %v586 = vpack.c.b16 %v538, %v536
        %v587 = vpack.c.b16 %v539, %v537
        %v588 = vpack.c.b16 %v542, %v540
        %v589 = vpack.c.b16 %v543, %v541
        %v590 = vpack.c.b16 %v546, %v544
        %v591 = vpack.c.b16 %v547, %v545
        %v592 = vpack.c.b16 %v550, %v548
        %v593 = vpack.c.b16 %v551, %v549
        %v594 = vpack.c.b16 %v554, %v552
        %v595 = vpack.c.b16 %v555, %v553
        %v596 = vpack.c.b16 %v558, %v556
        %v597 = vpack.c.b16 %v559, %v557
        %v598 = vpack.c.b16 %v562, %v560
        %v599 = vpack.c.b16 %v563, %v561
        %v600 = vpack.c.b16 %v566, %v564
        %v601 = vpack.c.b16 %v567, %v565
        %v602 = vpack.c.b16 %v570, %v568
        %v603 = vpack.c.b16 %v571, %v569
        %636 = vmatpush.bf16.msra.mxu0 %v586
        %637 = vmatpush.bf16.msra.mxu0 %v584
        %638 = vmatpush.bf16.msra.mxu0 %v582
        %639 = vmatpush.bf16.msra.mxu0 %v580
        %640 = vmatpush.bf16.msra.mxu0 %v578
        %641 = vmatpush.bf16.msra.mxu0 %v576
        %642 = vmatpush.bf16.msra.mxu0 %v574
        %643 = vmatpush.bf16.msra.mxu0 %v572
        %644 = vmatmul.bf16.gmra.mxu0 %v472
        %v645 = vpop.f32.mrf.mxu0
        %v646 = vadd.f32 0.0, %v645
        %v647 = vpop.f32.mrf.mxu0
        %v648 = vadd.f32 0.0, %v647
        %649 = vdwg.mxu0
        %650 = vmatpush.bf16.msra.mxu0 %v602
        %651 = vmatpush.bf16.msra.mxu0 %v600
        %652 = vmatpush.bf16.msra.mxu0 %v598
        %653 = vmatpush.bf16.msra.mxu0 %v596
        %654 = vmatpush.bf16.msra.mxu0 %v594
        %655 = vmatpush.bf16.msra.mxu0 %v592
        %656 = vmatpush.bf16.msra.mxu0 %v590
        %657 = vmatpush.bf16.msra.mxu0 %v588
        %658 = vmatmul.bf16.gmra.mxu0 %v473
        %v659 = vpop.f32.mrf.mxu0
        %v660 = vadd.f32 %v646, %v659
        %v661 = vpop.f32.mrf.mxu0
        %v662 = vadd.f32 %v648, %v661
        %663 = vdwg.mxu0
        %664 = vmatpush.bf16.msra.mxu0 %v587
        %665 = vmatpush.bf16.msra.mxu0 %v585
        %666 = vmatpush.bf16.msra.mxu0 %v583
        %667 = vmatpush.bf16.msra.mxu0 %v581
        %668 = vmatpush.bf16.msra.mxu0 %v579
        %669 = vmatpush.bf16.msra.mxu0 %v577
        %670 = vmatpush.bf16.msra.mxu0 %v575
        %671 = vmatpush.bf16.msra.mxu0 %v573
        %672 = vmatmul.bf16.gmra.mxu0 %v472
        %v673 = vpop.f32.mrf.mxu0
        %v674 = vadd.f32 0.0, %v673
        %v675 = vpop.f32.mrf.mxu0
        %v676 = vadd.f32 0.0, %v675
        %677 = vdwg.mxu0
        %678 = vmatpush.bf16.msra.mxu0 %v603
        %679 = vmatpush.bf16.msra.mxu0 %v601
        %680 = vmatpush.bf16.msra.mxu0 %v599
        %681 = vmatpush.bf16.msra.mxu0 %v597
        %682 = vmatpush.bf16.msra.mxu0 %v595
        %683 = vmatpush.bf16.msra.mxu0 %v593
        %684 = vmatpush.bf16.msra.mxu0 %v591
        %685 = vmatpush.bf16.msra.mxu0 %v589
        %686 = vmatmul.bf16.gmra.mxu0 %v473
        %v687 = vpop.f32.mrf.mxu0
        %v688 = vadd.f32 %v674, %v687
        %v689 = vpop.f32.mrf.mxu0
        %v690 = vadd.f32 %v676, %v689
        %691 = vdwg.mxu0
        %v694 = vunpack.c.l.b16 %v396
        %v695 = vunpack.c.h.b16 %v396
        %v696 = vunpack.c.l.b16 %v397
        %v697 = vunpack.c.h.b16 %v397
        %v698 = vpack.c.b16 %v696, %v694
        %v699 = vpack.c.b16 %v697, %v695
        %v734 = vunpack.c.l.b16 %v401
        %v735 = vunpack.c.h.b16 %v401
        %v736 = vunpack.c.l.b16 %v402
        %v737 = vunpack.c.h.b16 %v402
        %v738 = vunpack.c.l.b16 %v403
        %v739 = vunpack.c.h.b16 %v403
        %v740 = vunpack.c.l.b16 %v404
        %v741 = vunpack.c.h.b16 %v404
        %v742 = vunpack.c.l.b16 %v405
        %v743 = vunpack.c.h.b16 %v405
        %v744 = vunpack.c.l.b16 %v406
        %v745 = vunpack.c.h.b16 %v406
        %v746 = vunpack.c.l.b16 %v407
        %v747 = vunpack.c.h.b16 %v407
        %v748 = vunpack.c.l.b16 %v408
        %v749 = vunpack.c.h.b16 %v408
        %v750 = vunpack.c.l.b16 %v409
        %v751 = vunpack.c.h.b16 %v409
        %v752 = vunpack.c.l.b16 %v410
        %v753 = vunpack.c.h.b16 %v410
        %v754 = vunpack.c.l.b16 %v411
        %v755 = vunpack.c.h.b16 %v411
        %v756 = vunpack.c.l.b16 %v412
        %v757 = vunpack.c.h.b16 %v412
        %v758 = vunpack.c.l.b16 %v413
        %v759 = vunpack.c.h.b16 %v413
        %v760 = vunpack.c.l.b16 %v414
        %v761 = vunpack.c.h.b16 %v414
        %v762 = vunpack.c.l.b16 %v415
        %v763 = vunpack.c.h.b16 %v415
        %v764 = vunpack.c.l.b16 %v416
        %v765 = vunpack.c.h.b16 %v416
        %v766 = vunpack.c.l.b16 %v417
        %v767 = vunpack.c.h.b16 %v417
        %v768 = vunpack.c.l.b16 %v418
        %v769 = vunpack.c.h.b16 %v418
        %v770 = vunpack.c.l.b16 %v419
        %v771 = vunpack.c.h.b16 %v419
        %v772 = vunpack.c.l.b16 %v420
        %v773 = vunpack.c.h.b16 %v420
        %v774 = vunpack.c.l.b16 %v421
        %v775 = vunpack.c.h.b16 %v421
        %v776 = vunpack.c.l.b16 %v422
        %v777 = vunpack.c.h.b16 %v422
        %v778 = vunpack.c.l.b16 %v423
        %v779 = vunpack.c.h.b16 %v423
        %v780 = vunpack.c.l.b16 %v424
        %v781 = vunpack.c.h.b16 %v424
        %v782 = vunpack.c.l.b16 %v425
        %v783 = vunpack.c.h.b16 %v425
        %v784 = vunpack.c.l.b16 %v426
        %v785 = vunpack.c.h.b16 %v426
        %v786 = vunpack.c.l.b16 %v427
        %v787 = vunpack.c.h.b16 %v427
        %v788 = vunpack.c.l.b16 %v428
        %v789 = vunpack.c.h.b16 %v428
        %v790 = vunpack.c.l.b16 %v429
        %v791 = vunpack.c.h.b16 %v429
        %v792 = vunpack.c.l.b16 %v430
        %v793 = vunpack.c.h.b16 %v430
        %v794 = vunpack.c.l.b16 %v431
        %v795 = vunpack.c.h.b16 %v431
        %v796 = vunpack.c.l.b16 %v432
        %v797 = vunpack.c.h.b16 %v432
        %v798 = vpack.c.b16 %v736, %v734
        %v799 = vpack.c.b16 %v737, %v735
        %v800 = vpack.c.b16 %v740, %v738
        %v801 = vpack.c.b16 %v741, %v739
        %v802 = vpack.c.b16 %v744, %v742
        %v803 = vpack.c.b16 %v745, %v743
        %v804 = vpack.c.b16 %v748, %v746
        %v805 = vpack.c.b16 %v749, %v747
        %v806 = vpack.c.b16 %v752, %v750
        %v807 = vpack.c.b16 %v753, %v751
        %v808 = vpack.c.b16 %v756, %v754
        %v809 = vpack.c.b16 %v757, %v755
        %v810 = vpack.c.b16 %v760, %v758
        %v811 = vpack.c.b16 %v761, %v759
        %v812 = vpack.c.b16 %v764, %v762
        %v813 = vpack.c.b16 %v765, %v763
        %v814 = vpack.c.b16 %v768, %v766
        %v815 = vpack.c.b16 %v769, %v767
        %v816 = vpack.c.b16 %v772, %v770
        %v817 = vpack.c.b16 %v773, %v771
        %v818 = vpack.c.b16 %v776, %v774
        %v819 = vpack.c.b16 %v777, %v775
        %v820 = vpack.c.b16 %v780, %v778
        %v821 = vpack.c.b16 %v781, %v779
        %v822 = vpack.c.b16 %v784, %v782
        %v823 = vpack.c.b16 %v785, %v783
        %v824 = vpack.c.b16 %v788, %v786
        %v825 = vpack.c.b16 %v789, %v787
        %v826 = vpack.c.b16 %v792, %v790
        %v827 = vpack.c.b16 %v793, %v791
        %v828 = vpack.c.b16 %v796, %v794
        %v829 = vpack.c.b16 %v797, %v795
        %862 = vmatpush.bf16.msra.mxu0 %v812
        %863 = vmatpush.bf16.msra.mxu0 %v810
        %864 = vmatpush.bf16.msra.mxu0 %v808
        %865 = vmatpush.bf16.msra.mxu0 %v806
        %866 = vmatpush.bf16.msra.mxu0 %v804
        %867 = vmatpush.bf16.msra.mxu0 %v802
        %868 = vmatpush.bf16.msra.mxu0 %v800
        %869 = vmatpush.bf16.msra.mxu0 %v798
        %870 = vmatmul.bf16.gmra.mxu0 %v698
        %v871 = vpop.f32.mrf.mxu0
        %v872 = vadd.f32 %v660, %v871
        %v873 = vpop.f32.mrf.mxu0
        %v874 = vadd.f32 %v662, %v873
        %875 = vdwg.mxu0
        %876 = vmatpush.bf16.msra.mxu0 %v828
        %877 = vmatpush.bf16.msra.mxu0 %v826
        %878 = vmatpush.bf16.msra.mxu0 %v824
        %879 = vmatpush.bf16.msra.mxu0 %v822
        %880 = vmatpush.bf16.msra.mxu0 %v820
        %881 = vmatpush.bf16.msra.mxu0 %v818
        %882 = vmatpush.bf16.msra.mxu0 %v816
        %883 = vmatpush.bf16.msra.mxu0 %v814
        %884 = vmatmul.bf16.gmra.mxu0 %v699
        %v885 = vpop.f32.mrf.mxu0
        %v886 = vadd.f32 %v872, %v885
        %v887 = vpop.f32.mrf.mxu0
        %v888 = vadd.f32 %v874, %v887
        %889 = vdwg.mxu0
        %890 = vmatpush.bf16.msra.mxu0 %v813
        %891 = vmatpush.bf16.msra.mxu0 %v811
        %892 = vmatpush.bf16.msra.mxu0 %v809
        %893 = vmatpush.bf16.msra.mxu0 %v807
        %894 = vmatpush.bf16.msra.mxu0 %v805
        %895 = vmatpush.bf16.msra.mxu0 %v803
        %896 = vmatpush.bf16.msra.mxu0 %v801
        %897 = vmatpush.bf16.msra.mxu0 %v799
        %898 = vmatmul.bf16.gmra.mxu0 %v698
        %v899 = vpop.f32.mrf.mxu0
        %v900 = vadd.f32 %v688, %v899
        %v901 = vpop.f32.mrf.mxu0
        %v902 = vadd.f32 %v690, %v901
        %903 = vdwg.mxu0
        %904 = vmatpush.bf16.msra.mxu0 %v829
        %905 = vmatpush.bf16.msra.mxu0 %v827
        %906 = vmatpush.bf16.msra.mxu0 %v825
        %907 = vmatpush.bf16.msra.mxu0 %v823
        %908 = vmatpush.bf16.msra.mxu0 %v821
        %909 = vmatpush.bf16.msra.mxu0 %v819
        %910 = vmatpush.bf16.msra.mxu0 %v817
        %911 = vmatpush.bf16.msra.mxu0 %v815
        %912 = vmatmul.bf16.gmra.mxu0 %v699
        %v913 = vpop.f32.mrf.mxu0
        %v914 = vadd.f32 %v900, %v913
        %v915 = vpop.f32.mrf.mxu0
        %v916 = vadd.f32 %v902, %v915
        %917 = vdwg.mxu0
        %s918 = scalar_lea.vmem [#allocation3], 512
        %v919 = vld [vmem:[%s918] sm:$0xff]
        %v920 = vld [vmem:[%s918 + $0x8] sm:$0xff]
        %v921 = vld [vmem:[%s918 + $0x10] sm:$0xff]
        %v922 = vld [vmem:[%s918 + $0x18] sm:$0xff]
        %v923 = vld [vmem:[%s918 + $0x20] sm:$0xff]
        %v924 = vld [vmem:[%s918 + $0x28] sm:$0xff]
        %v925 = vld [vmem:[%s918 + $0x30] sm:$0xff]
        %v926 = vld [vmem:[%s918 + $0x38] sm:$0xff]
        %v927 = vld [vmem:[%s918 + $0x40] sm:$0xff]
        %v928 = vld [vmem:[%s918 + $0x48] sm:$0xff]
        %v929 = vld [vmem:[%s918 + $0x50] sm:$0xff]
        %v930 = vld [vmem:[%s918 + $0x58] sm:$0xff]
        %v931 = vld [vmem:[%s918 + $0x60] sm:$0xff]
        %v932 = vld [vmem:[%s918 + $0x68] sm:$0xff]
        %v933 = vld [vmem:[%s918 + $0x70] sm:$0xff]
        %v934 = vld [vmem:[%s918 + $0x78] sm:$0xff]
        %v935 = vld [vmem:[%s918 + $0x80] sm:$0xff]
        %v936 = vld [vmem:[%s918 + $0x88] sm:$0xff]
        %v937 = vld [vmem:[%s918 + $0x90] sm:$0xff]
        %v938 = vld [vmem:[%s918 + $0x98] sm:$0xff]
        %v939 = vld [vmem:[%s918 + $0xa0] sm:$0xff]
        %v940 = vld [vmem:[%s918 + $0xa8] sm:$0xff]
        %v941 = vld [vmem:[%s918 + $0xb0] sm:$0xff]
        %v942 = vld [vmem:[%s918 + $0xb8] sm:$0xff]
        %v943 = vld [vmem:[%s918 + $0xc0] sm:$0xff]
        %v944 = vld [vmem:[%s918 + $0xc8] sm:$0xff]
        %v945 = vld [vmem:[%s918 + $0xd0] sm:$0xff]
        %v946 = vld [vmem:[%s918 + $0xd8] sm:$0xff]
        %v947 = vld [vmem:[%s918 + $0xe0] sm:$0xff]
        %v948 = vld [vmem:[%s918 + $0xe8] sm:$0xff]
        %v949 = vld [vmem:[%s918 + $0xf0] sm:$0xff]
        %v950 = vld [vmem:[%s918 + $0xf8] sm:$0xff]
        %v952 = vunpack.c.l.b16 %v400
        %v953 = vunpack.c.h.b16 %v400
        %v954 = vpack.c.b16 %v952, %v952
        %v955 = vpack.c.b16 %v953, %v953
        %vm956 = vsmask.f32 7424
        %v958 = vshrl.u32 %v698, 16
        %v960 = vshll.u32 %v698, 16
        %v962 = vrot.slane %v960, 1
        %v963 = vor.u32 %v958, %v962
        %v965 = vshll.u32 %v954, 16
        %v967 = vrot.slane %v965, 1
        %v968 = vsel %vm956, %v963, %v967
        %v970 = vshrl.u32 %v699, 16
        %v972 = vshll.u32 %v699, 16
        %v974 = vrot.slane %v972, 1
        %v975 = vor.u32 %v970, %v974
        %v977 = vshll.u32 %v955, 16
        %v979 = vrot.slane %v977, 1
        %v980 = vsel %vm956, %v975, %v979
        %v1015 = vunpack.c.l.b16 %v919
        %v1016 = vunpack.c.h.b16 %v919
        %v1017 = vunpack.c.l.b16 %v920
        %v1018 = vunpack.c.h.b16 %v920
        %v1019 = vunpack.c.l.b16 %v921
        %v1020 = vunpack.c.h.b16 %v921
        %v1021 = vunpack.c.l.b16 %v922
        %v1022 = vunpack.c.h.b16 %v922
        %v1023 = vunpack.c.l.b16 %v923
        %v1024 = vunpack.c.h.b16 %v923
        %v1025 = vunpack.c.l.b16 %v924
        %v1026 = vunpack.c.h.b16 %v924
        %v1027 = vunpack.c.l.b16 %v925
        %v1028 = vunpack.c.h.b16 %v925
        %v1029 = vunpack.c.l.b16 %v926
        %v1030 = vunpack.c.h.b16 %v926
        %v1031 = vunpack.c.l.b16 %v927
        %v1032 = vunpack.c.h.b16 %v927
        %v1033 = vunpack.c.l.b16 %v928
        %v1034 = vunpack.c.h.b16 %v928
        %v1035 = vunpack.c.l.b16 %v929
        %v1036 = vunpack.c.h.b16 %v929
        %v1037 = vunpack.c.l.b16 %v930
        %v1038 = vunpack.c.h.b16 %v930
        %v1039 = vunpack.c.l.b16 %v931
        %v1040 = vunpack.c.h.b16 %v931
        %v1041 = vunpack.c.l.b16 %v932
        %v1042 = vunpack.c.h.b16 %v932
        %v1043 = vunpack.c.l.b16 %v933
        %v1044 = vunpack.c.h.b16 %v933
        %v1045 = vunpack.c.l.b16 %v934
        %v1046 = vunpack.c.h.b16 %v934
        %v1047 = vunpack.c.l.b16 %v935
        %v1048 = vunpack.c.h.b16 %v935
        %v1049 = vunpack.c.l.b16 %v936
        %v1050 = vunpack.c.h.b16 %v936
        %v1051 = vunpack.c.l.b16 %v937
        %v1052 = vunpack.c.h.b16 %v937
        %v1053 = vunpack.c.l.b16 %v938
        %v1054 = vunpack.c.h.b16 %v938
        %v1055 = vunpack.c.l.b16 %v939
        %v1056 = vunpack.c.h.b16 %v939
        %v1057 = vunpack.c.l.b16 %v940
        %v1058 = vunpack.c.h.b16 %v940
        %v1059 = vunpack.c.l.b16 %v941
        %v1060 = vunpack.c.h.b16 %v941
        %v1061 = vunpack.c.l.b16 %v942
        %v1062 = vunpack.c.h.b16 %v942
        %v1063 = vunpack.c.l.b16 %v943
        %v1064 = vunpack.c.h.b16 %v943
        %v1065 = vunpack.c.l.b16 %v944
        %v1066 = vunpack.c.h.b16 %v944
        %v1067 = vunpack.c.l.b16 %v945
        %v1068 = vunpack.c.h.b16 %v945
        %v1069 = vunpack.c.l.b16 %v946
        %v1070 = vunpack.c.h.b16 %v946
        %v1071 = vunpack.c.l.b16 %v947
        %v1072 = vunpack.c.h.b16 %v947
        %v1073 = vunpack.c.l.b16 %v948
        %v1074 = vunpack.c.h.b16 %v948
        %v1075 = vunpack.c.l.b16 %v949
        %v1076 = vunpack.c.h.b16 %v949
        %v1077 = vunpack.c.l.b16 %v950
        %v1078 = vunpack.c.h.b16 %v950
        %v1079 = vpack.c.b16 %v1017, %v1015
        %v1080 = vpack.c.b16 %v1018, %v1016
        %v1081 = vpack.c.b16 %v1021, %v1019
        %v1082 = vpack.c.b16 %v1022, %v1020
        %v1083 = vpack.c.b16 %v1025, %v1023
        %v1084 = vpack.c.b16 %v1026, %v1024
        %v1085 = vpack.c.b16 %v1029, %v1027
        %v1086 = vpack.c.b16 %v1030, %v1028
        %v1087 = vpack.c.b16 %v1033, %v1031
        %v1088 = vpack.c.b16 %v1034, %v1032
        %v1089 = vpack.c.b16 %v1037, %v1035
        %v1090 = vpack.c.b16 %v1038, %v1036
        %v1091 = vpack.c.b16 %v1041, %v1039
        %v1092 = vpack.c.b16 %v1042, %v1040
        %v1093 = vpack.c.b16 %v1045, %v1043
        %v1094 = vpack.c.b16 %v1046, %v1044
        %v1095 = vpack.c.b16 %v1049, %v1047
        %v1096 = vpack.c.b16 %v1050, %v1048
        %v1097 = vpack.c.b16 %v1053, %v1051
        %v1098 = vpack.c.b16 %v1054, %v1052
        %v1099 = vpack.c.b16 %v1057, %v1055
        %v1100 = vpack.c.b16 %v1058, %v1056
        %v1101 = vpack.c.b16 %v1061, %v1059
        %v1102 = vpack.c.b16 %v1062, %v1060
        %v1103 = vpack.c.b16 %v1065, %v1063
        %v1104 = vpack.c.b16 %v1066, %v1064
        %v1105 = vpack.c.b16 %v1069, %v1067
        %v1106 = vpack.c.b16 %v1070, %v1068
        %v1107 = vpack.c.b16 %v1073, %v1071
        %v1108 = vpack.c.b16 %v1074, %v1072
        %v1109 = vpack.c.b16 %v1077, %v1075
        %v1110 = vpack.c.b16 %v1078, %v1076
        %1143 = vmatpush.bf16.msra.mxu0 %v1093
        %1144 = vmatpush.bf16.msra.mxu0 %v1091
        %1145 = vmatpush.bf16.msra.mxu0 %v1089
        %1146 = vmatpush.bf16.msra.mxu0 %v1087
        %1147 = vmatpush.bf16.msra.mxu0 %v1085
        %1148 = vmatpush.bf16.msra.mxu0 %v1083
        %1149 = vmatpush.bf16.msra.mxu0 %v1081
        %1150 = vmatpush.bf16.msra.mxu0 %v1079
        %1151 = vmatmul.bf16.gmra.mxu0 %v968
        %v1152 = vpop.f32.mrf.mxu0
        %v1153 = vadd.f32 0.0, %v1152
        %v1154 = vpop.f32.mrf.mxu0
        %v1155 = vadd.f32 0.0, %v1154
        %1156 = vdwg.mxu0
        %1157 = vmatpush.bf16.msra.mxu0 %v1109
        %1158 = vmatpush.bf16.msra.mxu0 %v1107
        %1159 = vmatpush.bf16.msra.mxu0 %v1105
        %1160 = vmatpush.bf16.msra.mxu0 %v1103
        %1161 = vmatpush.bf16.msra.mxu0 %v1101
        %1162 = vmatpush.bf16.msra.mxu0 %v1099
        %1163 = vmatpush.bf16.msra.mxu0 %v1097
        %1164 = vmatpush.bf16.msra.mxu0 %v1095
        %1165 = vmatmul.bf16.gmra.mxu0 %v980
        %v1166 = vpop.f32.mrf.mxu0
        %v1167 = vadd.f32 %v1153, %v1166
        %v1168 = vpop.f32.mrf.mxu0
        %v1169 = vadd.f32 %v1155, %v1168
        %1170 = vdwg.mxu0
        %1171 = vmatpush.bf16.msra.mxu0 %v1094
        %1172 = vmatpush.bf16.msra.mxu0 %v1092
        %1173 = vmatpush.bf16.msra.mxu0 %v1090
        %1174 = vmatpush.bf16.msra.mxu0 %v1088
        %1175 = vmatpush.bf16.msra.mxu0 %v1086
        %1176 = vmatpush.bf16.msra.mxu0 %v1084
        %1177 = vmatpush.bf16.msra.mxu0 %v1082
        %1178 = vmatpush.bf16.msra.mxu0 %v1080
        %1179 = vmatmul.bf16.gmra.mxu0 %v968
        %v1180 = vpop.f32.mrf.mxu0
        %v1181 = vadd.f32 0.0, %v1180
        %v1182 = vpop.f32.mrf.mxu0
        %v1183 = vadd.f32 0.0, %v1182
        %1184 = vdwg.mxu0
        %1185 = vmatpush.bf16.msra.mxu0 %v1110
        %1186 = vmatpush.bf16.msra.mxu0 %v1108
        %1187 = vmatpush.bf16.msra.mxu0 %v1106
        %1188 = vmatpush.bf16.msra.mxu0 %v1104
        %1189 = vmatpush.bf16.msra.mxu0 %v1102
        %1190 = vmatpush.bf16.msra.mxu0 %v1100
        %1191 = vmatpush.bf16.msra.mxu0 %v1098
        %1192 = vmatpush.bf16.msra.mxu0 %v1096
        %1193 = vmatmul.bf16.gmra.mxu0 %v980
        %v1194 = vpop.f32.mrf.mxu0
        %v1195 = vadd.f32 %v1181, %v1194
        %v1196 = vpop.f32.mrf.mxu0
        %v1197 = vadd.f32 %v1183, %v1196
        %1198 = vdwg.mxu0
        %v1199 = vadd.f32 %v886, %v1167
        %v1200 = vadd.f32 %v914, %v1195
        %v1201 = vadd.f32 %v888, %v1169
        %v1202 = vadd.f32 %v916, %v1197
        %v1203 = vld [vmem:[%s3] sm:$0x3]
        %v1205 = vperm.slane %v1203, 0
        %v1206 = vperm.slane %v1203, 1
        %v1209 = vadd.f32 %v1199, %v1205
        %v1210 = vadd.f32 %v1200, %v1206
        %v1211 = vadd.f32 %v1201, %v1205
        %v1212 = vadd.f32 %v1202, %v1206
        %v1213 = vmul.f32 %v1209, 0.5
        %v1214 = vmul.f32 %v1210, 0.5
        %v1215 = vmul.f32 %v1211, 0.5
        %v1216 = vmul.f32 %v1212, 0.5
        %v1217 = vmul.f32 %v1209, 0.044715
        %v1218 = vmul.f32 %v1210, 0.044715
        %v1219 = vmul.f32 %v1211, 0.044715
        %v1220 = vmul.f32 %v1212, 0.044715
        %v1221 = vmul.f32 %v1217, %v1209
        %v1222 = vmul.f32 %v1218, %v1210
        %v1223 = vmul.f32 %v1219, %v1211
        %v1224 = vmul.f32 %v1220, %v1212
        %v1225 = vmul.f32 %v1221, %v1209
        %v1226 = vmul.f32 %v1222, %v1210
        %v1227 = vmul.f32 %v1223, %v1211
        %v1228 = vmul.f32 %v1224, %v1212
        %v1229 = vadd.f32 %v1209, %v1225
        %v1230 = vadd.f32 %v1210, %v1226
        %v1231 = vadd.f32 %v1211, %v1227
        %v1232 = vadd.f32 %v1212, %v1228
        %v1233 = vmul.f32 %v1229, 0.7978846
        %v1234 = vmul.f32 %v1230, 0.7978846
        %v1235 = vmul.f32 %v1231, 0.7978846
        %v1236 = vmul.f32 %v1232, 0.7978846
        %v1237 = vtanh.pop %v1233
        %v1238 = vtanh.pop %v1234
        %v1239 = vtanh.pop %v1235
        %v1240 = vtanh.pop %v1236
        %v1241 = vadd.f32 %v1237, 1.0
        %v1242 = vadd.f32 %v1238, 1.0
        %v1243 = vadd.f32 %v1239, 1.0
        %v1244 = vadd.f32 %v1240, 1.0
        %v1245 = vmul.f32 %v1213, %v1241
        %v1246 = vmul.f32 %v1214, %v1242
        %v1247 = vmul.f32 %v1215, %v1243
        %v1248 = vmul.f32 %v1216, %v1244
        %v1249 = vld [vmem:[%s371] sm:$0xff]
        %v1250 = vld [vmem:[%s371 + $0x8] sm:$0xff]
        %v1251 = vld [vmem:[%s371 + $0x10] sm:$0xff]
        %v1252 = vld [vmem:[%s371 + $0x18] sm:$0xff]
        %v1253 = vadd.f32 %v1245, %v1249
        %v1254 = vadd.f32 %v1246, %v1250
        %v1255 = vadd.f32 %v1247, %v1251
        %v1256 = vadd.f32 %v1248, %v1252
        %v1257 = vpack.c.bf16 %v1254, %v1253
        %v1258 = vpack.c.bf16 %v1256, %v1255
        %1259 = vst [vmem:[%s382] sm:$0xff] %v1257
        %1260 = vst [vmem:[%s382 + $0x8] sm:$0xff] %v1258
        %s1261 = smul.u32 2, %s22
        %p1262 = scmp.lt.s32.totalorder %s21, 1
        %s1263 = scalar_select %p1262, %s21, 1
        %p1264 = scmp.lt.s32.totalorder %s1261, 1
        %s1265 = scalar_select %p1264, %s1261, 1
        %s1266 = smul.addr %s1265, 2
        %s1267 = smul.addr %s1263, 4
        %s1268 = sadd.s32 %s1266, %s1267
        %s1269 = smul.addr %s1268, 4
        %s1270 = scalar_lea.vmem %s5, %s1269
        // Predicated region
        $region45: #{tunable_whisper_audio_encoder.15} parent=39 // pred_check
          %p1271 = pneg %p177
        $region46: #{tunable_whisper_audio_encoder.15} parent=39 // pred_check_branch
          %1273 = sbr.rel (%p1271) target = $region48
        $region47: #{tunable_whisper_audio_encoder.15} parent=39 // pred_region
          %s1274 = smul.u32 2, %s22
        $region48: #{tunable_whisper_audio_encoder.15} parent=39 // pred_fallthru
          _
      $region40: #{tunable_whisper_audio_encoder.15} parent=5 // pred_fallthru
        _
      %p1275 = scmp.le.s32.totalorder 2, %s12
      // Predicated region
      $region49: #{tunable_whisper_audio_encoder.15} parent=5 // pred_check
        %p1276 = pneg %p1275
      $region50: #{tunable_whisper_audio_encoder.15} parent=5 // pred_check_branch
        %1278 = sbr.rel (%p1276) target = $region52
      $region51: #{tunable_whisper_audio_encoder.15} parent=5 // pred_region
        %s1279 = ssub.s32 %s12, 2
        // Predicated region
        $region53: #{tunable_whisper_audio_encoder.15} parent=51 // pred_check
          %p1280 = pneg %p183
        $region54: #{tunable_whisper_audio_encoder.15} parent=51 // pred_check_branch
          %1282 = sbr.rel (%p1280) target = $region56
        $region55: #{tunable_whisper_audio_encoder.15} parent=51 // pred_region
          %s1283 = smul.u32 2, %s24
          %p1284 = scmp.lt.s32.totalorder %s23, 1
          %s1285 = scalar_select %p1284, %s23, 1
          %p1286 = scmp.lt.s32.totalorder %s1283, 1
          %s1287 = scalar_select %p1286, %s1283, 1
          %s1288 = smul.addr %s1287, 2
          %s1289 = smul.addr %s1285, 4
          %s1290 = sadd.s32 %s1288, %s1289
          %s1291 = smul.addr %s1290, 4
          %s1292 = scalar_lea.vmem %s5, %s1291
        $region56: #{tunable_whisper_audio_encoder.15} parent=51 // pred_fallthru
          _
      $region52: #{tunable_whisper_audio_encoder.15} parent=5 // pred_fallthru
        _
    $region6: #{tunable_whisper_audio_encoder.15} parent=1 // loop_footer
      %s16 = sadd.s32 1, %s12
    $region7: #{tunable_whisper_audio_encoder.15} parent=1 // loop_footer_branch
      %11 = sbr.rel target = $region3
    $region8: #{tunable_whisper_audio_encoder.15} parent=1 // loop_exit
      _
    %1293 = vsyncpa [#allocation4], 1
    %s1294 = scalar_lea.sflag [#allocation4], 1
    %1295 = vsyncpa %s1294, 1

// kernel: tunable_whisper_audio_encoder.16
$region0: #{tunable_whisper_audio_encoder.16}
  #allocation0 [shape = 'u32[]', space=smem, size = 0x4, offset = 0x4, fixed_abs, tag = 'smem constant byte address 0x4 - core index']
  #allocation1 [shape = 'u32[72,128]{1,0:T(1,128)}', space=vmem, size = 0x9000, scoped, tag = 'internal scratch']
  #allocation2 [shape = 'bf16[32,256]{1,0:T(8,128)(2,1)}', space=vmem, size = 0x4000, scoped, tag = 'scratch operand']
  %s0 = inlined_call_operand.vmem [shape: bf16[32,256], index: 0, kind: input, shape index: {}]
  %s1 = inlined_call_operand.hbm [shape: bf16[256,768], index: 1, kind: input, shape index: {}]
  %s2 = inlined_call_operand.hbm [shape: f32[1,768], index: 2, kind: input, shape index: {}]
  %s3 = inlined_call_operand.vmem [shape: bf16[32,768], index: 3, kind: output, shape index: {}]
  %s4 = sld [smem:[#allocation0]]
  $region79: #{tunable_whisper_audio_encoder.16} parent=0
    _
  %s6 = ssub.s32 1, %s4
  %s7 = scalar_select 0, %s6, %s4
  $region1: #{tunable_whisper_audio_encoder.16} parent=0
    #allocation3 [shape = 'u8[393216]{0}', space=vmem, size = 0x60000, scoped, tag = 'input window, operand 1']
    #allocation4 [shape = 's32[2]{0}', space=sflag, size = 0x8, scoped, tag = 'scoped memory for tunable_whisper_audio_encoder.16']
    #allocation5 [shape = 'u8[3072]{0}', space=vmem, size = 0xc00, scoped, tag = 'input window, operand 2']
    #allocation6 [shape = 's32[2]{0}', space=sflag, size = 0x8, scoped, tag = 'scoped memory for tunable_whisper_audio_encoder.16']
    #allocation7 [shape = 'u8[49152]{0}', space=vmem, size = 0xc000, scoped, tag = 'output window, operand 0']
    %8 = vsyncpa [#allocation4], 0
    %s9 = scalar_lea.sflag [#allocation4], 1
    %10 = vsyncpa %s9, 0
    %11 = vsyncpa [#allocation6], 0
    %s12 = scalar_lea.sflag [#allocation6], 1
    %13 = vsyncpa %s12, 0
    loop: start=0, step=1, limit=4
    $region2: #{tunable_whisper_audio_encoder.16} parent=1 // loop_pre_header
      _
    $region3: #{tunable_whisper_audio_encoder.16} parent=1 // loop_header
      %s15 = sphi 0, %s19
      %p16 = scmp.ge.s32.totalorder %s15, 4
      %s22 = sphi 0, %s34
      %s23 = sphi 0, %s30
      %s24 = sphi 0, %s22
      %s25 = sphi 0, %s23
      %s26 = sphi 0, %s24
      %s27 = sphi 0, %s25
      %s37 = sphi 0, %s39
      %s40 = sphi 0, %s37
      %s41 = sphi 0, %s40
      %s57 = sphi 0, %s41
      %s63 = sphi 0, %s65
      %s66 = sphi 0, %s63
      %s67 = sphi 0, %s66
      %s83 = sphi 0, %s67
      %s89 = sphi 0, %s91
      %s92 = sphi 0, %s89
      %s93 = sphi 0, %s92
      %s109 = sphi 0, %s93
      %s117 = sphi 0, %s119
      %s120 = sphi 0, %s117
      %s121 = sphi 0, %s120
      %s137 = sphi 0, %s121
    $region4: #{tunable_whisper_audio_encoder.16} parent=1 // loop_header_branch
      %18 = sbr.rel (%p16) target = $region8
    $region5: #{tunable_whisper_audio_encoder.16} parent=1 // loop_body
      %s20 = ssub.s32 %s15, 1
      %s21 = ssub.s32 %s15, 2
      %s28 = sadd.s32 1, %s23
      %p29 = scmp.ge.s32.totalorder %s28, 2
      %s30 = scalar_select %p29, 0, %s28
      %s31 = sadd.s32 1, %s22
      %s32 = scalar_select %p29, %s31, %s22
      %p33 = scmp.ge.s32.totalorder %s32, 1
      %s34 = scalar_select %p33, 0, %s32
      %s35 = ssub.s32 %s22, %s34
      %p36 = scmp.eq.s32.totalorder %s35, 0
      %s38 = sadd.s32 %s37, 1
      %s39 = scalar_select %p36, %s37, %s38
      %p42 = pneg %p36
      %p43 = scmp.eq.s32.totalorder %s15, 1
      %p44 = por %p42, %p43
      %p45 = scmp.ne.s32.totalorder %s37, %s40
      %p46 = scmp.eq.s32.totalorder %s15, 0
      %p47 = por %p45, %p46
      %p48 = scmp.ne.s32.totalorder %s37, %s40
      %p49 = scmp.eq.s32.totalorder %s20, 1
      %p50 = por %p48, %p49
      %p51 = scmp.ne.s32.totalorder %s40, %s41
      %p52 = scmp.eq.s32.totalorder %s20, 0
      %p53 = por %p51, %p52
      %p54 = scmp.ne.s32.totalorder %s40, %s41
      %p55 = scmp.eq.s32.totalorder %s21, 1
      %p56 = por %p54, %p55
      %p58 = scmp.ne.s32.totalorder %s41, %s57
      %p59 = scmp.eq.s32.totalorder %s21, 0
      %p60 = por %p58, %p59
      %s61 = ssub.s32 %s23, %s30
      %p62 = scmp.eq.s32.totalorder %s61, 0
      %s64 = sadd.s32 %s63, 1
      %s65 = scalar_select %p62, %s63, %s64
      %p68 = pneg %p62
      %p69 = scmp.eq.s32.totalorder %s15, 1
      %p70 = por %p68, %p69
      %p71 = scmp.ne.s32.totalorder %s63, %s66
      %p72 = scmp.eq.s32.totalorder %s15, 0
      %p73 = por %p71, %p72
      %p74 = scmp.ne.s32.totalorder %s63, %s66
      %p75 = scmp.eq.s32.totalorder %s20, 1
      %p76 = por %p74, %p75
      %p77 = scmp.ne.s32.totalorder %s66, %s67
      %p78 = scmp.eq.s32.totalorder %s20, 0
      %p79 = por %p77, %p78
      %p80 = scmp.ne.s32.totalorder %s66, %s67
      %p81 = scmp.eq.s32.totalorder %s21, 1
      %p82 = por %p80, %p81
      %p84 = scmp.ne.s32.totalorder %s67, %s83
      %p85 = scmp.eq.s32.totalorder %s21, 0
      %p86 = por %p84, %p85
      %s87 = ssub.s32 %s23, %s30
      %p88 = scmp.eq.s32.totalorder %s87, 0
      %s90 = sadd.s32 %s89, 1
      %s91 = scalar_select %p88, %s89, %s90
      %p94 = pneg %p88
      %p95 = scmp.eq.s32.totalorder %s15, 1
      %p96 = por %p94, %p95
      %p97 = scmp.ne.s32.totalorder %s89, %s92
      %p98 = scmp.eq.s32.totalorder %s15, 0
      %p99 = por %p97, %p98
      %p100 = scmp.ne.s32.totalorder %s89, %s92
      %p101 = scmp.eq.s32.totalorder %s20, 1
      %p102 = por %p100, %p101
      %p103 = scmp.ne.s32.totalorder %s92, %s93
      %p104 = scmp.eq.s32.totalorder %s20, 0
      %p105 = por %p103, %p104
      %p106 = scmp.ne.s32.totalorder %s92, %s93
      %p107 = scmp.eq.s32.totalorder %s21, 1
      %p108 = por %p106, %p107
      %p110 = scmp.ne.s32.totalorder %s93, %s109
      %p111 = scmp.eq.s32.totalorder %s21, 0
      %p112 = por %p110, %p111
      %s113 = ssub.s32 %s22, %s34
      %s114 = ssub.s32 %s23, %s30
      %s115 = sor.u32 %s113, %s114
      %p116 = scmp.eq.s32.totalorder %s115, 0
      %s118 = sadd.s32 %s117, 1
      %s119 = scalar_select %p116, %s117, %s118
      %p122 = pneg %p116
      %p123 = scmp.eq.s32.totalorder %s15, 1
      %p124 = por %p122, %p123
      %p125 = scmp.ne.s32.totalorder %s117, %s120
      %p126 = scmp.eq.s32.totalorder %s15, 0
      %p127 = por %p125, %p126
      %p128 = scmp.ne.s32.totalorder %s117, %s120
      %p129 = scmp.eq.s32.totalorder %s20, 1
      %p130 = por %p128, %p129
      %p131 = scmp.ne.s32.totalorder %s120, %s121
      %p132 = scmp.eq.s32.totalorder %s20, 0
      %p133 = por %p131, %p132
      %p134 = scmp.ne.s32.totalorder %s120, %s121
      %p135 = scmp.eq.s32.totalorder %s21, 1
      %p136 = por %p134, %p135
      %p138 = scmp.ne.s32.totalorder %s121, %s137
      %p139 = scmp.eq.s32.totalorder %s21, 0
      %p140 = por %p138, %p139
      %p141 = scmp.le.s32.totalorder 1, %s15
      %p142 = scmp.lt.s32.totalorder %s15, 3
      %p143 = pnand %p141, %p142
      %p144 = pneg %p143
      // Predicated region
      $region9: #{tunable_whisper_audio_encoder.16} parent=5 // pred_check
        _
      $region10: #{tunable_whisper_audio_encoder.16} parent=5 // pred_check_branch
        %146 = sbr.rel (%p143) target = $region12
      $region11: #{tunable_whisper_audio_encoder.16} parent=5 // pred_region
        %s147 = ssub.s32 %s15, 1
        // Predicated region
        $region13: #{tunable_whisper_audio_encoder.16} parent=11 // pred_check
          %p148 = pneg %p53
        $region14: #{tunable_whisper_audio_encoder.16} parent=11 // pred_check_branch
          %150 = sbr.rel (%p148) target = $region16
        $region15: #{tunable_whisper_audio_encoder.16} parent=11 // pred_region
          %s151 = smul.u32 4, %s24
          %p152 = scmp.lt.s32.totalorder %s151, 3
          %s153 = scalar_select %p152, %s151, 3
          %s154 = smul.addr %s153, 2
          %s155 = smul.addr %s154, 4
          %s156 = scalar_lea.vmem %s0, %s155
          %s157 = smul.u32 4, %s24
        $region16: #{tunable_whisper_audio_encoder.16} parent=11 // pred_fallthru
          _
      $region12: #{tunable_whisper_audio_encoder.16} parent=5 // pred_fallthru
        _
      %p158 = scmp.lt.s32.totalorder %s15, 2
      // Predicated region
      $region17: #{tunable_whisper_audio_encoder.16} parent=5 // pred_check
        %p159 = pneg %p158
      $region18: #{tunable_whisper_audio_encoder.16} parent=5 // pred_check_branch
        %161 = sbr.rel (%p159) target = $region20
      $region19: #{tunable_whisper_audio_encoder.16} parent=5 // pred_region
        // Predicated region
        $region21: #{tunable_whisper_audio_encoder.16} parent=19 // pred_check
          %p162 = pneg %p73
        $region22: #{tunable_whisper_audio_encoder.16} parent=19 // pred_check_branch
          %164 = sbr.rel (%p162) target = $region24
        $region23: #{tunable_whisper_audio_encoder.16} parent=19 // pred_region
          %s165 = sand.u32 %s63, 1
          %s166 = scalar_lea.sflag [#allocation4], %s165
          %s167 = sand.u32 %s63, 1
          %s168 = smul.addr %s167, 384
          %s169 = scalar_lea.vmem [#allocation3], %s168
          %s170 = smul.u32 3, %s23
          %172 = vsyncadd %s166, 0
          %s173 = smul.addr %s170, 4
          %s174 = scalar_lea.hbm %s1, %s173
          %s175 = sshll.u32 %s174, 4
          %s176 = int_to_ptr.hbm [resolvable:$true] %s175
          %s177 = sshll.u32 %s169, 4
          %s178 = int_to_ptr.vmem [resolvable:$true] %s177
          %183 = dma.hbm_to_vmem [thread:$0]  %s176, 6144, %s178, %s166, 384, 192, 12
        $region24: #{tunable_whisper_audio_encoder.16} parent=19 // pred_fallthru
          _
        // Predicated region
        $region25: #{tunable_whisper_audio_encoder.16} parent=19 // pred_check
          %p184 = pneg %p99
        $region26: #{tunable_whisper_audio_encoder.16} parent=19 // pred_check_branch
          %186 = sbr.rel (%p184) target = $region28
        $region27: #{tunable_whisper_audio_encoder.16} parent=19 // pred_region
          %s187 = sand.u32 %s89, 1
          %s188 = scalar_lea.sflag [#allocation6], %s187
          %s189 = sand.u32 %s89, 1
          %s190 = smul.addr %s189, 3
          %s191 = scalar_lea.vmem [#allocation5], %s190
          %s192 = smul.u32 3, %s23
          %194 = vsyncadd %s188, 0
          %s195 = scalar_lea.hbm %s2, %s192
          %s197 = sshll.u32 %s195, 4
          %s198 = int_to_ptr.hbm [resolvable:$true] %s197
          %s199 = sshll.u32 %s191, 4
          %s200 = int_to_ptr.vmem [resolvable:$true] %s199
          %202 = dma.hbm_to_vmem [thread:$0]  %s198, 48, %s200, %s188
        $region28: #{tunable_whisper_audio_encoder.16} parent=19 // pred_fallthru
          _
      $region20: #{tunable_whisper_audio_encoder.16} parent=5 // pred_fallthru
        _
      %p203 = scmp.le.s32.totalorder 1, %s15
      %p204 = scmp.lt.s32.totalorder %s15, 3
      %p205 = pnand %p203, %p204
      %p206 = pneg %p205
      // Predicated region
      $region29: #{tunable_whisper_audio_encoder.16} parent=5 // pred_check
        _
      $region30: #{tunable_whisper_audio_encoder.16} parent=5 // pred_check_branch
        %208 = sbr.rel (%p205) target = $region32
      $region31: #{tunable_whisper_audio_encoder.16} parent=5 // pred_region
        %s209 = ssub.s32 %s15, 1
        %s210 = sand.u32 %s66, 1
        %s211 = scalar_lea.sflag [#allocation4], %s210
        %s212 = sand.u32 %s66, 1
        %s213 = smul.addr %s212, 384
        %s214 = scalar_lea.vmem [#allocation3], %s213
        // Predicated region
        $region33: #{tunable_whisper_audio_encoder.16} parent=31 // pred_check
          %p215 = pneg %p79
        $region34: #{tunable_whisper_audio_encoder.16} parent=31 // pred_check_branch
          %217 = sbr.rel (%p215) target = $region36
        $region35: #{tunable_whisper_audio_encoder.16} parent=31 // pred_region
          %219 = dma.done %s211, 6144
        $region36: #{tunable_whisper_audio_encoder.16} parent=31 // pred_fallthru
          _
        %s220 = sand.u32 %s92, 1
        %s221 = scalar_lea.sflag [#allocation6], %s220
        %s222 = sand.u32 %s92, 1
        %s223 = smul.addr %s222, 3
        %s224 = scalar_lea.vmem [#allocation5], %s223
        // Predicated region
        $region37: #{tunable_whisper_audio_encoder.16} parent=31 // pred_check
          %p225 = pneg %p105
        $region38: #{tunable_whisper_audio_encoder.16} parent=31 // pred_check_branch
          %227 = sbr.rel (%p225) target = $region40
        $region39: #{tunable_whisper_audio_encoder.16} parent=31 // pred_region
          %229 = dma.done %s221, 48
        $region40: #{tunable_whisper_audio_encoder.16} parent=31 // pred_fallthru
          _
        %s230 = smul.u32 4, %s24
        %p231 = scmp.lt.s32.totalorder %s230, 3
        %s232 = scalar_select %p231, %s230, 3
        %s233 = smul.addr %s232, 2
        %s234 = smul.addr %s233, 4
        %s235 = scalar_lea.vmem %s0, %s234
        %p236 = pneg %p53
        %p237 = pneg %p50
        %s238 = sand.u32 %s66, 1
        %s239 = scalar_lea.sflag [#allocation4], %s238
        %s240 = sand.u32 %s66, 1
        %s241 = smul.addr %s240, 384
        %s242 = scalar_lea.vmem [#allocation3], %s241
        %p243 = pneg %p79
        %p244 = pneg %p76
        %s245 = sand.u32 %s92, 1
        %s246 = scalar_lea.sflag [#allocation6], %s245
        %s247 = sand.u32 %s92, 1
        %s248 = smul.addr %s247, 3
        %s249 = scalar_lea.vmem [#allocation5], %s248
        %p250 = pneg %p105
        %p251 = pneg %p102
        %p252 = pneg %p133
        %p253 = pneg %p130
        %s254 = sand.u32 %s120, 1
        %s255 = sand.u32 %s120, 1
        %s256 = smul.addr %s255, 48
        %s257 = scalar_lea.vmem [#allocation7], %s256
        %s258 = smul.u32 4, %s24
        %p259 = scmp.lt.s32.totalorder %s258, 3
        %s260 = scalar_select %p259, %s258, 3
        %s261 = smul.addr %s260, 2
        %s262 = smul.addr %s261, 4
        %s263 = scalar_lea.vmem %s0, %s262
        %s264 = smul.u32 4, %s24
        %s265 = smul.u32 3, %s25
        %s266 = smul.u32 3, %s25
        %s267 = smul.u32 4, %s24
        %s268 = smul.u32 3, %s25
        %p269 = scmp.eq.s32.totalorder %s25, 0
        // Predicated region
        $region41: #{tunable_whisper_audio_encoder.16} parent=31 // pred_check
          %p270 = pneg %p269
        $region42: #{tunable_whisper_audio_encoder.16} parent=31 // pred_check_branch
          %272 = sbr.rel (%p270) target = $region44
        $region43: #{tunable_whisper_audio_encoder.16} parent=31 // pred_region
          %v273 = vld [vmem:[%s263] sm:$0xff]
          %v274 = vld [vmem:[%s263 + $0x8] sm:$0xff]
          %v275 = vld [vmem:[%s263 + $0x10] sm:$0xff]
          %v276 = vld [vmem:[%s263 + $0x18] sm:$0xff]
          %v277 = vunpack.c.l.bf16 %v273
          %v278 = vunpack.c.h.bf16 %v273
          %v279 = vunpack.c.l.bf16 %v274
          %v280 = vunpack.c.h.bf16 %v274
          %v281 = vunpack.c.l.bf16 %v275
          %v282 = vunpack.c.h.bf16 %v275
          %v283 = vunpack.c.l.bf16 %v276
          %v284 = vunpack.c.h.bf16 %v276
          %v285 = vadd.f32 %v277, %v278
          %286 = vadd.xlane.f32.xlu0 %v285
          %v287 = vpop.xlane.xlu0 %286
          %v288 = vadd.f32 %v279, %v280
          %289 = vadd.xlane.f32.xlu0 %v288
          %v290 = vpop.xlane.xlu0 %289
          %v291 = vadd.f32 %v281, %v282
          %292 = vadd.xlane.f32.xlu0 %v291
          %v293 = vpop.xlane.xlu0 %292
          %v294 = vadd.f32 %v283, %v284
          %295 = vadd.xlane.f32.xlu0 %v294
          %v296 = vpop.xlane.xlu0 %295
          %v297 = vrcp.pop 256.0
          %v298 = vmul.f32 256.0, %v297
          %v299 = vsub.f32 1.0, %v298
          %v300 = vmul.f32 %v297, %v299
          %v301 = vadd.f32 %v297, %v300
          %vm302 = vweird.f32 %v297
          %v303 = vsel %vm302, %v297, %v301
          %v304 = vmul.f32 %v287, %v303
          %v305 = vmul.f32 %v290, %v303
          %v306 = vmul.f32 %v293, %v303
          %v307 = vmul.f32 %v296, %v303
          %v308 = vsub.f32 %v277, %v304
          %v309 = vsub.f32 %v278, %v304
          %v310 = vsub.f32 %v279, %v305
          %v311 = vsub.f32 %v280, %v305
          %v312 = vsub.f32 %v281, %v306
          %v313 = vsub.f32 %v282, %v306
          %v314 = vsub.f32 %v283, %v307
          %v315 = vsub.f32 %v284, %v307
          %v316 = vmul.f32 %v308, %v308
          %v317 = vmul.f32 %v309, %v309
          %v318 = vmul.f32 %v310, %v310
          %v319 = vmul.f32 %v311, %v311
          %v320 = vmul.f32 %v312, %v312
          %v321 = vmul.f32 %v313, %v313
          %v322 = vmul.f32 %v314, %v314
          %v323 = vmul.f32 %v315, %v315
          %v324 = vadd.f32 %v316, %v317
          %325 = vadd.xlane.f32.xlu0 %v324
          %v326 = vpop.xlane.xlu0 %325
          %v327 = vadd.f32 %v318, %v319
          %328 = vadd.xlane.f32.xlu0 %v327
          %v329 = vpop.xlane.xlu0 %328
          %v330 = vadd.f32 %v320, %v321
          %331 = vadd.xlane.f32.xlu0 %v330
          %v332 = vpop.xlane.xlu0 %331
          %v333 = vadd.f32 %v322, %v323
          %334 = vadd.xlane.f32.xlu0 %v333
          %v335 = vpop.xlane.xlu0 %334
          %v336 = vmul.f32 %v326, %v303
          %v337 = vmul.f32 %v329, %v303
          %v338 = vmul.f32 %v332, %v303
          %v339 = vmul.f32 %v335, %v303
          %v340 = vadd.f32 %v336, 1e-05
          %v341 = vadd.f32 %v337, 1e-05
          %v342 = vadd.f32 %v338, 1e-05
          %v343 = vadd.f32 %v339, 1e-05
          %v344 = vrsqrt.pop %v340
          %v345 = vmul.f32 %v344, %v340
          %v346 = vmul.f32 %v345, %v344
          %v347 = vmul.f32 0.5, %v346
          %v348 = vsub.f32 1.5, %v347
          %v349 = vmul.f32 %v344, %v348
          %vm350 = vweird.f32 %v340
          %vm351 = vweird.f32 %v344
          %vm352 = vmor %vm350, %vm351
          %v353 = vsel %vm352, %v344, %v349
          %v354 = vrsqrt.pop %v341
          %v355 = vmul.f32 %v354, %v341
          %v356 = vmul.f32 %v355, %v354
          %v357 = vmul.f32 0.5, %v356
          %v358 = vsub.f32 1.5, %v357
          %v359 = vmul.f32 %v354, %v358
          %vm360 = vweird.f32 %v341
          %vm361 = vweird.f32 %v354
          %vm362 = vmor %vm360, %vm361
          %v363 = vsel %vm362, %v354, %v359
          %v364 = vrsqrt.pop %v342
          %v365 = vmul.f32 %v364, %v342
          %v366 = vmul.f32 %v365, %v364
          %v367 = vmul.f32 0.5, %v366
          %v368 = vsub.f32 1.5, %v367
          %v369 = vmul.f32 %v364, %v368
          %vm370 = vweird.f32 %v342
          %vm371 = vweird.f32 %v364
          %vm372 = vmor %vm370, %vm371
          %v373 = vsel %vm372, %v364, %v369
          %v374 = vrsqrt.pop %v343
          %v375 = vmul.f32 %v374, %v343
          %v376 = vmul.f32 %v375, %v374
          %v377 = vmul.f32 0.5, %v376
          %v378 = vsub.f32 1.5, %v377
          %v379 = vmul.f32 %v374, %v378
          %vm380 = vweird.f32 %v343
          %vm381 = vweird.f32 %v374
          %vm382 = vmor %vm380, %vm381
          %v383 = vsel %vm382, %v374, %v379
          %v384 = vmul.f32 %v308, %v353
          %v385 = vmul.f32 %v309, %v353
          %v386 = vmul.f32 %v310, %v363
          %v387 = vmul.f32 %v311, %v363
          %v388 = vmul.f32 %v312, %v373
          %v389 = vmul.f32 %v313, %v373
          %v390 = vmul.f32 %v314, %v383
          %v391 = vmul.f32 %v315, %v383
          %v392 = vpack.c.bf16 %v385, %v384
          %v393 = vpack.c.bf16 %v387, %v386
          %v394 = vpack.c.bf16 %v389, %v388
          %v395 = vpack.c.bf16 %v391, %v390
          %396 = vst [vmem:[#allocation2] sm:$0xff] %v392
          %397 = vst [vmem:[#allocation2 + $0x8] sm:$0xff] %v393
          %398 = vst [vmem:[#allocation2 + $0x10] sm:$0xff] %v394
          %399 = vst [vmem:[#allocation2 + $0x18] sm:$0xff] %v395
        $region44: #{tunable_whisper_audio_encoder.16} parent=31 // pred_fallthru
          _
        %v400 = vld [vmem:[#allocation2] sm:$0xff]
        %v401 = vld [vmem:[#allocation2 + $0x8] sm:$0xff]
        %v402 = vld [vmem:[#allocation2 + $0x10] sm:$0xff]
        %v403 = vld [vmem:[#allocation2 + $0x18] sm:$0xff]
        %v404 = vld [vmem:[%s214] sm:$0xff]
        %v405 = vld [vmem:[%s214 + $0x8] sm:$0xf]
        %v406 = vld [vmem:[%s214 + $0xc] sm:$0xff]
        %v407 = vld [vmem:[%s214 + $0x14] sm:$0xf]
        %v408 = vld [vmem:[%s214 + $0x18] sm:$0xff]
        %v409 = vld [vmem:[%s214 + $0x20] sm:$0xf]
        %v410 = vld [vmem:[%s214 + $0x24] sm:$0xff]
        %v411 = vld [vmem:[%s214 + $0x2c] sm:$0xf]
        %v412 = vld [vmem:[%s214 + $0x30] sm:$0xff]
        %v413 = vld [vmem:[%s214 + $0x38] sm:$0xf]
        %v414 = vld [vmem:[%s214 + $0x3c] sm:$0xff]
        %v415 = vld [vmem:[%s214 + $0x44] sm:$0xf]
        %v416 = vld [vmem:[%s214 + $0x48] sm:$0xff]
        %v417 = vld [vmem:[%s214 + $0x50] sm:$0xf]
        %v418 = vld [vmem:[%s214 + $0x54] sm:$0xff]
        %v419 = vld [vmem:[%s214 + $0x5c] sm:$0xf]
        %v420 = vld [vmem:[%s214 + $0x60] sm:$0xff]
        %v421 = vld [vmem:[%s214 + $0x68] sm:$0xf]
        %v422 = vld [vmem:[%s214 + $0x6c] sm:$0xff]
        %v423 = vld [vmem:[%s214 + $0x74] sm:$0xf]
        %v424 = vld [vmem:[%s214 + $0x78] sm:$0xff]
        %v425 = vld [vmem:[%s214 + $0x80] sm:$0xf]
        %v426 = vld [vmem:[%s214 + $0x84] sm:$0xff]
        %v427 = vld [vmem:[%s214 + $0x8c] sm:$0xf]
        %v428 = vld [vmem:[%s214 + $0x90] sm:$0xff]
        %v429 = vld [vmem:[%s214 + $0x98] sm:$0xf]
        %v430 = vld [vmem:[%s214 + $0x9c] sm:$0xff]
        %v431 = vld [vmem:[%s214 + $0xa4] sm:$0xf]
        %v432 = vld [vmem:[%s214 + $0xa8] sm:$0xff]
        %v433 = vld [vmem:[%s214 + $0xb0] sm:$0xf]
        %v434 = vld [vmem:[%s214 + $0xb4] sm:$0xff]
        %v435 = vld [vmem:[%s214 + $0xbc] sm:$0xf]
        %v436 = vld [vmem:[%s214 + $0xc0] sm:$0xff]
        %v437 = vld [vmem:[%s214 + $0xc8] sm:$0xf]
        %v438 = vld [vmem:[%s214 + $0xcc] sm:$0xff]
        %v439 = vld [vmem:[%s214 + $0xd4] sm:$0xf]
        %v440 = vld [vmem:[%s214 + $0xd8] sm:$0xff]
        %v441 = vld [vmem:[%s214 + $0xe0] sm:$0xf]
        %v442 = vld [vmem:[%s214 + $0xe4] sm:$0xff]
        %v443 = vld [vmem:[%s214 + $0xec] sm:$0xf]
        %v444 = vld [vmem:[%s214 + $0xf0] sm:$0xff]
        %v445 = vld [vmem:[%s214 + $0xf8] sm:$0xf]
        %v446 = vld [vmem:[%s214 + $0xfc] sm:$0xff]
        %v447 = vld [vmem:[%s214 + $0x104] sm:$0xf]
        %v448 = vld [vmem:[%s214 + $0x108] sm:$0xff]
        %v449 = vld [vmem:[%s214 + $0x110] sm:$0xf]
        %v450 = vld [vmem:[%s214 + $0x114] sm:$0xff]
        %v451 = vld [vmem:[%s214 + $0x11c] sm:$0xf]
        %v452 = vld [vmem:[%s214 + $0x120] sm:$0xff]
        %v453 = vld [vmem:[%s214 + $0x128] sm:$0xf]
        %v454 = vld [vmem:[%s214 + $0x12c] sm:$0xff]
        %v455 = vld [vmem:[%s214 + $0x134] sm:$0xf]
        %v456 = vld [vmem:[%s214 + $0x138] sm:$0xff]
        %v457 = vld [vmem:[%s214 + $0x140] sm:$0xf]
        %v458 = vld [vmem:[%s214 + $0x144] sm:$0xff]
        %v459 = vld [vmem:[%s214 + $0x14c] sm:$0xf]
        %v460 = vld [vmem:[%s214 + $0x150] sm:$0xff]
        %v461 = vld [vmem:[%s214 + $0x158] sm:$0xf]
        %v462 = vld [vmem:[%s214 + $0x15c] sm:$0xff]
        %v463 = vld [vmem:[%s214 + $0x164] sm:$0xf]
        %v464 = vld [vmem:[%s214 + $0x168] sm:$0xff]
        %v465 = vld [vmem:[%s214 + $0x170] sm:$0xf]
        %v466 = vld [vmem:[%s214 + $0x174] sm:$0xff]
        %v467 = vld [vmem:[%s214 + $0x17c] sm:$0xf]
        %v468 = vld [vmem:[%s224] sm:$0x7]
        %v470 = vperm.slane %v468, 0
        %v471 = vperm.slane %v468, 1
        %v472 = vperm.slane %v468, 2
        %v480 = vunpack.c.l.b16 %v400
        %v481 = vunpack.c.h.b16 %v400
        %v482 = vunpack.c.l.b16 %v401
        %v483 = vunpack.c.h.b16 %v401
        %v484 = vunpack.c.l.b16 %v402
        %v485 = vunpack.c.h.b16 %v402
        %v486 = vunpack.c.l.b16 %v403
        %v487 = vunpack.c.h.b16 %v403
        %v488 = vpack.c.b16 %v482, %v480
        %v489 = vpack.c.b16 %v483, %v481
        %v490 = vpack.c.b16 %v486, %v484
        %v491 = vpack.c.b16 %v487, %v485
        %v560 = vunpack.c.l.b16 %v404
        %v561 = vunpack.c.h.b16 %v404
        %v562 = vunpack.c.l.b16 %v405
        %v563 = vunpack.c.l.b16 %v406
        %v564 = vunpack.c.h.b16 %v406
        %v565 = vunpack.c.l.b16 %v407
        %v566 = vunpack.c.l.b16 %v408
        %v567 = vunpack.c.h.b16 %v408
        %v568 = vunpack.c.l.b16 %v409
        %v569 = vunpack.c.l.b16 %v410
        %v570 = vunpack.c.h.b16 %v410
        %v571 = vunpack.c.l.b16 %v411
        %v572 = vunpack.c.l.b16 %v412
        %v573 = vunpack.c.h.b16 %v412
        %v574 = vunpack.c.l.b16 %v413
        %v575 = vunpack.c.l.b16 %v414
        %v576 = vunpack.c.h.b16 %v414
        %v577 = vunpack.c.l.b16 %v415
        %v578 = vunpack.c.l.b16 %v416
        %v579 = vunpack.c.h.b16 %v416
        %v580 = vunpack.c.l.b16 %v417
        %v581 = vunpack.c.l.b16 %v418
        %v582 = vunpack.c.h.b16 %v418
        %v583 = vunpack.c.l.b16 %v419
        %v584 = vunpack.c.l.b16 %v420
        %v585 = vunpack.c.h.b16 %v420
        %v586 = vunpack.c.l.b16 %v421
        %v587 = vunpack.c.l.b16 %v422
        %v588 = vunpack.c.h.b16 %v422
        %v589 = vunpack.c.l.b16 %v423
        %v590 = vunpack.c.l.b16 %v424
        %v591 = vunpack.c.h.b16 %v424
        %v592 = vunpack.c.l.b16 %v425
        %v593 = vunpack.c.l.b16 %v426
        %v594 = vunpack.c.h.b16 %v426
        %v595 = vunpack.c.l.b16 %v427
        %v596 = vunpack.c.l.b16 %v428
        %v597 = vunpack.c.h.b16 %v428
        %v598 = vunpack.c.l.b16 %v429
        %v599 = vunpack.c.l.b16 %v430
        %v600 = vunpack.c.h.b16 %v430
        %v601 = vunpack.c.l.b16 %v431
        %v602 = vunpack.c.l.b16 %v432
        %v603 = vunpack.c.h.b16 %v432
        %v604 = vunpack.c.l.b16 %v433
        %v605 = vunpack.c.l.b16 %v434
        %v606 = vunpack.c.h.b16 %v434
        %v607 = vunpack.c.l.b16 %v435
        %v608 = vunpack.c.l.b16 %v436
        %v609 = vunpack.c.h.b16 %v436
        %v610 = vunpack.c.l.b16 %v437
        %v611 = vunpack.c.l.b16 %v438
        %v612 = vunpack.c.h.b16 %v438
        %v613 = vunpack.c.l.b16 %v439
        %v614 = vunpack.c.l.b16 %v440
        %v615 = vunpack.c.h.b16 %v440
        %v616 = vunpack.c.l.b16 %v441
        %v617 = vunpack.c.l.b16 %v442
        %v618 = vunpack.c.h.b16 %v442
        %v619 = vunpack.c.l.b16 %v443
        %v620 = vunpack.c.l.b16 %v444
        %v621 = vunpack.c.h.b16 %v444
        %v622 = vunpack.c.l.b16 %v445
        %v623 = vunpack.c.l.b16 %v446
        %v624 = vunpack.c.h.b16 %v446
        %v625 = vunpack.c.l.b16 %v447
        %v626 = vunpack.c.l.b16 %v448
        %v627 = vunpack.c.h.b16 %v448
        %v628 = vunpack.c.l.b16 %v449
        %v629 = vunpack.c.l.b16 %v450
        %v630 = vunpack.c.h.b16 %v450
        %v631 = vunpack.c.l.b16 %v451
        %v632 = vunpack.c.l.b16 %v452
        %v633 = vunpack.c.h.b16 %v452
        %v634 = vunpack.c.l.b16 %v453
        %v635 = vunpack.c.l.b16 %v454
        %v636 = vunpack.c.h.b16 %v454
        %v637 = vunpack.c.l.b16 %v455
        %v638 = vunpack.c.l.b16 %v456
        %v639 = vunpack.c.h.b16 %v456
        %v640 = vunpack.c.l.b16 %v457
        %v641 = vunpack.c.l.b16 %v458
        %v642 = vunpack.c.h.b16 %v458
        %v643 = vunpack.c.l.b16 %v459
        %v644 = vunpack.c.l.b16 %v460
        %v645 = vunpack.c.h.b16 %v460
        %v646 = vunpack.c.l.b16 %v461
        %v647 = vunpack.c.l.b16 %v462
        %v648 = vunpack.c.h.b16 %v462
        %v649 = vunpack.c.l.b16 %v463
        %v650 = vunpack.c.l.b16 %v464
        %v651 = vunpack.c.h.b16 %v464
        %v652 = vunpack.c.l.b16 %v465
        %v653 = vunpack.c.l.b16 %v466
        %v654 = vunpack.c.h.b16 %v466
        %v655 = vunpack.c.l.b16 %v467
        %v656 = vpack.c.b16 %v563, %v560
        %v657 = vpack.c.b16 %v564, %v561
        %v658 = vpack.c.b16 %v565, %v562
        %v659 = vpack.c.b16 %v569, %v566
        %v660 = vpack.c.b16 %v570, %v567
        %v661 = vpack.c.b16 %v571, %v568
        %v662 = vpack.c.b16 %v575, %v572
        %v663 = vpack.c.b16 %v576, %v573
        %v664 = vpack.c.b16 %v577, %v574
        %v665 = vpack.c.b16 %v581, %v578
        %v666 = vpack.c.b16 %v582, %v579
        %v667 = vpack.c.b16 %v583, %v580
        %v668 = vpack.c.b16 %v587, %v584
        %v669 = vpack.c.b16 %v588, %v585
        %v670 = vpack.c.b16 %v589, %v586
        %v671 = vpack.c.b16 %v593, %v590
        %v672 = vpack.c.b16 %v594, %v591
        %v673 = vpack.c.b16 %v595, %v592
        %v674 = vpack.c.b16 %v599, %v596
        %v675 = vpack.c.b16 %v600, %v597
        %v676 = vpack.c.b16 %v601, %v598
        %v677 = vpack.c.b16 %v605, %v602
        %v678 = vpack.c.b16 %v606, %v603
        %v679 = vpack.c.b16 %v607, %v604
        %v680 = vpack.c.b16 %v611, %v608
        %v681 = vpack.c.b16 %v612, %v609
        %v682 = vpack.c.b16 %v613, %v610
        %v683 = vpack.c.b16 %v617, %v614
        %v684 = vpack.c.b16 %v618, %v615
        %v685 = vpack.c.b16 %v619, %v616
        %v686 = vpack.c.b16 %v623, %v620
        %v687 = vpack.c.b16 %v624, %v621
        %v688 = vpack.c.b16 %v625, %v622
        %v689 = vpack.c.b16 %v629, %v626
        %v690 = vpack.c.b16 %v630, %v627
        %v691 = vpack.c.b16 %v631, %v628
        %v692 = vpack.c.b16 %v635, %v632
        %v693 = vpack.c.b16 %v636, %v633
        %v694 = vpack.c.b16 %v637, %v634
        %v695 = vpack.c.b16 %v641, %v638
        %v696 = vpack.c.b16 %v642, %v639
        %v697 = vpack.c.b16 %v643, %v640
        %v698 = vpack.c.b16 %v647, %v644
        %v699 = vpack.c.b16 %v648, %v645
        %v700 = vpack.c.b16 %v649, %v646
        %v701 = vpack.c.b16 %v653, %v650
        %v702 = vpack.c.b16 %v654, %v651
        %v703 = vpack.c.b16 %v655, %v652
        %752 = vmatpush.bf16.msra.mxu0 %v677
        %753 = vmatpush.bf16.msra.mxu0 %v674
        %754 = vmatpush.bf16.msra.mxu0 %v671
        %755 = vmatpush.bf16.msra.mxu0 %v668
        %756 = vmatpush.bf16.msra.mxu0 %v665
        %757 = vmatpush.bf16.msra.mxu0 %v662
        %758 = vmatpush.bf16.msra.mxu0 %v659
        %759 = vmatpush.bf16.msra.mxu0 %v656
        %760 = vmatmul.bf16.gmra.mxu0 %v488
        %v761 = vpop.f32.mrf.mxu0
        %v762 = vadd.f32 %v470, %v761
        %v763 = vpop.f32.mrf.mxu0
        %v764 = vadd.f32 %v470, %v763
        %765 = vmatmul.bf16.gmra.mxu0 %v490
        %v766 = vpop.f32.mrf.mxu0
        %v767 = vadd.f32 %v470, %v766
        %v768 = vpop.f32.mrf.mxu0
        %v769 = vadd.f32 %v470, %v768
        %770 = vdwg.mxu0
        %771 = vmatpush.bf16.msra.mxu0 %v701
        %772 = vmatpush.bf16.msra.mxu0 %v698
        %773 = vmatpush.bf16.msra.mxu0 %v695
        %774 = vmatpush.bf16.msra.mxu0 %v692
        %775 = vmatpush.bf16.msra.mxu0 %v689
        %776 = vmatpush.bf16.msra.mxu0 %v686
        %777 = vmatpush.bf16.msra.mxu0 %v683
        %778 = vmatpush.bf16.msra.mxu0 %v680
        %779 = vmatmul.bf16.gmra.mxu0 %v489
        %v780 = vpop.f32.mrf.mxu0
        %v781 = vadd.f32 %v762, %v780
        %v782 = vpop.f32.mrf.mxu0
        %v783 = vadd.f32 %v764, %v782
        %784 = vmatmul.bf16.gmra.mxu0 %v491
        %v785 = vpop.f32.mrf.mxu0
        %v786 = vadd.f32 %v767, %v785
        %v787 = vpop.f32.mrf.mxu0
        %v788 = vadd.f32 %v769, %v787
        %789 = vdwg.mxu0
        %790 = vmatpush.bf16.msra.mxu0 %v678
        %791 = vmatpush.bf16.msra.mxu0 %v675
        %792 = vmatpush.bf16.msra.mxu0 %v672
        %793 = vmatpush.bf16.msra.mxu0 %v669
        %794 = vmatpush.bf16.msra.mxu0 %v666
        %795 = vmatpush.bf16.msra.mxu0 %v663
        %796 = vmatpush.bf16.msra.mxu0 %v660
        %797 = vmatpush.bf16.msra.mxu0 %v657
        %798 = vmatmul.bf16.gmra.mxu0 %v488
        %v799 = vpop.f32.mrf.mxu0
        %v800 = vadd.f32 %v471, %v799
        %v801 = vpop.f32.mrf.mxu0
        %v802 = vadd.f32 %v471, %v801
        %803 = vmatmul.bf16.gmra.mxu0 %v490
        %v804 = vpop.f32.mrf.mxu0
        %v805 = vadd.f32 %v471, %v804
        %v806 = vpop.f32.mrf.mxu0
        %v807 = vadd.f32 %v471, %v806
        %808 = vdwg.mxu0
        %809 = vmatpush.bf16.msra.mxu0 %v702
        %810 = vmatpush.bf16.msra.mxu0 %v699
        %811 = vmatpush.bf16.msra.mxu0 %v696
        %812 = vmatpush.bf16.msra.mxu0 %v693
        %813 = vmatpush.bf16.msra.mxu0 %v690
        %814 = vmatpush.bf16.msra.mxu0 %v687
        %815 = vmatpush.bf16.msra.mxu0 %v684
        %816 = vmatpush.bf16.msra.mxu0 %v681
        %817 = vmatmul.bf16.gmra.mxu0 %v489
        %v818 = vpop.f32.mrf.mxu0
        %v819 = vadd.f32 %v800, %v818
        %v820 = vpop.f32.mrf.mxu0
        %v821 = vadd.f32 %v802, %v820
        %822 = vmatmul.bf16.gmra.mxu0 %v491
        %v823 = vpop.f32.mrf.mxu0
        %v824 = vadd.f32 %v805, %v823
        %v825 = vpop.f32.mrf.mxu0
        %v826 = vadd.f32 %v807, %v825
        %827 = vdwg.mxu0
        %828 = vmatpush.bf16.msra.mxu0 %v679
        %829 = vmatpush.bf16.msra.mxu0 %v676
        %830 = vmatpush.bf16.msra.mxu0 %v673
        %831 = vmatpush.bf16.msra.mxu0 %v670
        %832 = vmatpush.bf16.msra.mxu0 %v667
        %833 = vmatpush.bf16.msra.mxu0 %v664
        %834 = vmatpush.bf16.msra.mxu0 %v661
        %835 = vmatpush.bf16.msra.mxu0 %v658
        %836 = vmatmul.bf16.gmra.mxu0 %v488
        %v837 = vpop.f32.mrf.mxu0
        %v838 = vadd.f32 %v472, %v837
        %v839 = vpop.f32.mrf.mxu0
        %v840 = vadd.f32 %v472, %v839
        %841 = vmatmul.bf16.gmra.mxu0 %v490
        %v842 = vpop.f32.mrf.mxu0
        %v843 = vadd.f32 %v472, %v842
        %v844 = vpop.f32.mrf.mxu0
        %v845 = vadd.f32 %v472, %v844
        %846 = vdwg.mxu0
        %847 = vmatpush.bf16.msra.mxu0 %v703
        %848 = vmatpush.bf16.msra.mxu0 %v700
        %849 = vmatpush.bf16.msra.mxu0 %v697
        %850 = vmatpush.bf16.msra.mxu0 %v694
        %851 = vmatpush.bf16.msra.mxu0 %v691
        %852 = vmatpush.bf16.msra.mxu0 %v688
        %853 = vmatpush.bf16.msra.mxu0 %v685
        %854 = vmatpush.bf16.msra.mxu0 %v682
        %855 = vmatmul.bf16.gmra.mxu0 %v489
        %v856 = vpop.f32.mrf.mxu0
        %v857 = vadd.f32 %v838, %v856
        %v858 = vpop.f32.mrf.mxu0
        %v859 = vadd.f32 %v840, %v858
        %860 = vmatmul.bf16.gmra.mxu0 %v491
        %v861 = vpop.f32.mrf.mxu0
        %v862 = vadd.f32 %v843, %v861
        %v863 = vpop.f32.mrf.mxu0
        %v864 = vadd.f32 %v845, %v863
        %865 = vdwg.mxu0
        %v866 = vpack.c.bf16 %v819, %v781
        %v867 = vpack.c.bf16 %v857, %v857
        %v868 = vpack.c.bf16 %v821, %v783
        %v869 = vpack.c.bf16 %v859, %v859
        %v870 = vpack.c.bf16 %v824, %v786
        %v871 = vpack.c.bf16 %v862, %v862
        %v872 = vpack.c.bf16 %v826, %v788
        %v873 = vpack.c.bf16 %v864, %v864
        %874 = vst [vmem:[%s257] sm:$0xff] %v866
        %875 = vst [vmem:[%s257 + $0x8] sm:$0xf] %v867
        %876 = vst [vmem:[%s257 + $0xc] sm:$0xff] %v868
        %877 = vst [vmem:[%s257 + $0x14] sm:$0xf] %v869
        %878 = vst [vmem:[%s257 + $0x18] sm:$0xff] %v870
        %879 = vst [vmem:[%s257 + $0x20] sm:$0xf] %v871
        %880 = vst [vmem:[%s257 + $0x24] sm:$0xff] %v872
        %881 = vst [vmem:[%s257 + $0x2c] sm:$0xf] %v873
        %s882 = sand.u32 %s120, 1
        %s883 = sand.u32 %s120, 1
        %s884 = smul.addr %s883, 48
        %s885 = scalar_lea.vmem [#allocation7], %s884
        // Predicated region
        $region45: #{tunable_whisper_audio_encoder.16} parent=31 // pred_check
          %p886 = pneg %p130
        $region46: #{tunable_whisper_audio_encoder.16} parent=31 // pred_check_branch
          %888 = sbr.rel (%p886) target = $region48
        $region47: #{tunable_whisper_audio_encoder.16} parent=31 // pred_region
          %s889 = smul.u32 4, %s24
          %s890 = smul.u32 3, %s25
          %s891 = smul.addr %s889, 6
          %s892 = sadd.s32 %s890, %s891
          %s893 = smul.addr %s892, 4
          %s894 = scalar_lea.vmem %s3, %s893
          // Predicated region
          $region49: #{tunable_whisper_audio_encoder.16} parent=47 // pred_check
            _
          $region50: #{tunable_whisper_audio_encoder.16} parent=47 // pred_check_branch
            %896 = sbr.rel (0) target = $region52
          $region51: #{tunable_whisper_audio_encoder.16} parent=47 // pred_region
            // Predicated region
            $region53: #{tunable_whisper_audio_encoder.16} parent=51 // pred_check
              _
            $region54: #{tunable_whisper_audio_encoder.16} parent=51 // pred_check_branch
              %898 = sbr.rel (0) target = $region56
            $region55: #{tunable_whisper_audio_encoder.16} parent=51 // pred_region
              %s899 = scalar_lea.vmem %s885, 8 [#allocation7]
              %s900 = scalar_lea.vmem %s894, 8
              loop: start=0, step=1, limit=1
              $region57: #{tunable_whisper_audio_encoder.16} parent=55 // loop_pre_header
                _
              $region58: #{tunable_whisper_audio_encoder.16} parent=55 // loop_header
                %s902 = sphi 0, %s906
                %p903 = scmp.ge.s32.totalorder %s902, 1
                %s907 = sphi %s885, %s885
                %s908 = sphi %s894, %s894
              $region59: #{tunable_whisper_audio_encoder.16} parent=55 // loop_header_branch
                %905 = sbr.rel (%p903) target = $region63
              $region60: #{tunable_whisper_audio_encoder.16} parent=55 // loop_body
                %v909 = vld [vmem:[%s907] sm:$0xff]
                %910 = vst [vmem:[%s908] sm:$0xff] %v909
                %v911 = vld [vmem:[%s907 + $0xc] sm:$0xff]
                %912 = vst [vmem:[%s908 + $0x18] sm:$0xff] %v911
                %v913 = vld [vmem:[%s907 + $0x18] sm:$0xff]
                %914 = vst [vmem:[%s908 + $0x30] sm:$0xff] %v913
                %v915 = vld [vmem:[%s907 + $0x24] sm:$0xff]
                %916 = vst [vmem:[%s908 + $0x48] sm:$0xff] %v915
              $region61: #{tunable_whisper_audio_encoder.16} parent=55 // loop_footer
                %s906 = sadd.s32 1, %s902
              $region62: #{tunable_whisper_audio_encoder.16} parent=55 // loop_footer_branch
                %901 = sbr.rel target = $region58
              $region63: #{tunable_whisper_audio_encoder.16} parent=55 // loop_exit
                _
              %s918 = ssub.s32 16, 1
              loop: start=0, step=1, limit=1
              $region64: #{tunable_whisper_audio_encoder.16} parent=55 // loop_pre_header
                _
              $region65: #{tunable_whisper_audio_encoder.16} parent=55 // loop_header
                %s920 = sphi 0, %s924
                %p921 = scmp.ge.s32.totalorder %s920, 1
                %s925 = sphi %s899, %s899
                %s926 = sphi %s900, %s900
              $region66: #{tunable_whisper_audio_encoder.16} parent=55 // loop_header_branch
                %923 = sbr.rel (%p921) target = $region70
              $region67: #{tunable_whisper_audio_encoder.16} parent=55 // loop_body
                %v927 = vld [vmem:[%s925] sm:%s918]
                %928 = vst [vmem:[%s926] sm:%s918] %v927
                %v929 = vld [vmem:[%s925 + $0xc] sm:%s918]
                %930 = vst [vmem:[%s926 + $0x18] sm:%s918] %v929
                %v931 = vld [vmem:[%s925 + $0x18] sm:%s918]
                %932 = vst [vmem:[%s926 + $0x30] sm:%s918] %v931
                %v933 = vld [vmem:[%s925 + $0x24] sm:%s918]
                %934 = vst [vmem:[%s926 + $0x48] sm:%s918] %v933
              $region68: #{tunable_whisper_audio_encoder.16} parent=55 // loop_footer
                %s924 = sadd.s32 1, %s920
              $region69: #{tunable_whisper_audio_encoder.16} parent=55 // loop_footer_branch
                %919 = sbr.rel target = $region65
              $region70: #{tunable_whisper_audio_encoder.16} parent=55 // loop_exit
                _
            $region56: #{tunable_whisper_audio_encoder.16} parent=51 // pred_fallthru
              _
          $region52: #{tunable_whisper_audio_encoder.16} parent=47 // pred_fallthru
            _
          %935 = vnop
        $region48: #{tunable_whisper_audio_encoder.16} parent=31 // pred_fallthru
          _
      $region32: #{tunable_whisper_audio_encoder.16} parent=5 // pred_fallthru
        _
      %p936 = scmp.le.s32.totalorder 2, %s15
      // Predicated region
      $region71: #{tunable_whisper_audio_encoder.16} parent=5 // pred_check
        %p937 = pneg %p936
      $region72: #{tunable_whisper_audio_encoder.16} parent=5 // pred_check_branch
        %939 = sbr.rel (%p937) target = $region74
      $region73: #{tunable_whisper_audio_encoder.16} parent=5 // pred_region
        %s940 = ssub.s32 %s15, 2
        // Predicated region
        $region75: #{tunable_whisper_audio_encoder.16} parent=73 // pred_check
          %p941 = pneg %p136
        $region76: #{tunable_whisper_audio_encoder.16} parent=73 // pred_check_branch
          %943 = sbr.rel (%p941) target = $region78
        $region77: #{tunable_whisper_audio_encoder.16} parent=73 // pred_region
          %s944 = sand.u32 %s121, 1
          %s945 = sand.u32 %s121, 1
          %s946 = smul.addr %s945, 48
          %s947 = scalar_lea.vmem [#allocation7], %s946
        $region78: #{tunable_whisper_audio_encoder.16} parent=73 // pred_fallthru
          _
      $region74: #{tunable_whisper_audio_encoder.16} parent=5 // pred_fallthru
        _
    $region6: #{tunable_whisper_audio_encoder.16} parent=1 // loop_footer
      %s19 = sadd.s32 1, %s15
    $region7: #{tunable_whisper_audio_encoder.16} parent=1 // loop_footer_branch
      %14 = sbr.rel target = $region3
    $region8: #{tunable_whisper_audio_encoder.16} parent=1 // loop_exit
      _
    %948 = vsyncpa [#allocation4], 1
    %s949 = scalar_lea.sflag [#allocation4], 1
    %950 = vsyncpa %s949, 1
    %951 = vsyncpa [#allocation6], 1
    %s952 = scalar_lea.sflag [#allocation6], 1
    %953 = vsyncpa %s952, 1

// kernel: tunable_whisper_audio_encoder.18
$region0: #{tunable_whisper_audio_encoder.18}
  #allocation0 [shape = 'u32[]', space=smem, size = 0x4, offset = 0x4, fixed_abs, tag = 'smem constant byte address 0x4 - core index']
  #allocation1 [shape = 'u32[72,128]{1,0:T(1,128)}', space=vmem, size = 0x9000, scoped, tag = 'internal scratch']
  #allocation2 [shape = 'f32[32,256]{1,0:T(8,128)}', space=vmem, size = 0x8000, scoped, tag = 'scratch operand']
  %s0 = inlined_call_operand.vmem [shape: bf16[32,256], index: 0, kind: input, shape index: {}]
  %s1 = inlined_call_operand.vmem [shape: bf16[256,256], index: 1, kind: input, shape index: {}]
  %s2 = inlined_call_operand.hbm [shape: f32[1,256], index: 2, kind: input, shape index: {}]
  %s3 = inlined_call_operand.vmem [shape: bf16[32,256], index: 3, kind: input, shape index: {}]
  %s4 = inlined_call_operand.vmem [shape: bf16[32,256], index: 4, kind: output, shape index: {}]
  %s5 = sld [smem:[#allocation0]]
  $region38: #{tunable_whisper_audio_encoder.18} parent=0
    _
  %s7 = ssub.s32 1, %s5
  %s8 = scalar_select 0, %s7, %s5
  $region1: #{tunable_whisper_audio_encoder.18} parent=0
    #allocation3 [shape = 'u8[1024]{0}', space=vmem, size = 0x400, scoped, tag = 'input window, operand 2, single buffered']
    #allocation4 [shape = 's32[1]{0}', space=sflag, size = 0x4, scoped, tag = 'scoped memory for tunable_whisper_audio_encoder.18']
    %9 = vsyncpa [#allocation4], 0
    // Predicated region
    $region2: #{tunable_whisper_audio_encoder.18} parent=1 // pred_check
      _
    $region3: #{tunable_whisper_audio_encoder.18} parent=1 // pred_check_branch
      %11 = sbr.rel (0) target = $region5
    $region4: #{tunable_whisper_audio_encoder.18} parent=1 // pred_region
      _
    $region5: #{tunable_whisper_audio_encoder.18} parent=1 // pred_fallthru
      _
    // Predicated region
    $region6: #{tunable_whisper_audio_encoder.18} parent=1 // pred_check
      _
    $region7: #{tunable_whisper_audio_encoder.18} parent=1 // pred_check_branch
      %13 = sbr.rel (0) target = $region9
    $region8: #{tunable_whisper_audio_encoder.18} parent=1 // pred_region
      _
    $region9: #{tunable_whisper_audio_encoder.18} parent=1 // pred_fallthru
      _
    // Predicated region
    $region10: #{tunable_whisper_audio_encoder.18} parent=1 // pred_check
      _
    $region11: #{tunable_whisper_audio_encoder.18} parent=1 // pred_check_branch
      %15 = sbr.rel (0) target = $region13
    $region12: #{tunable_whisper_audio_encoder.18} parent=1 // pred_region
      %17 = vsyncadd [#allocation4], 0
      %s19 = sshll.u32 %s2, 4
      %s20 = int_to_ptr.hbm [resolvable:$true] %s19
      %s21 = sshll.u32 [#allocation3], 4
      %s22 = int_to_ptr.vmem [resolvable:$true] %s21
      %24 = dma.hbm_to_vmem [thread:$0]  %s20, 32, %s22, [#allocation4]
    $region13: #{tunable_whisper_audio_encoder.18} parent=1 // pred_fallthru
      _
    // Predicated region
    $region14: #{tunable_whisper_audio_encoder.18} parent=1 // pred_check
      _
    $region15: #{tunable_whisper_audio_encoder.18} parent=1 // pred_check_branch
      %26 = sbr.rel (0) target = $region17
    $region16: #{tunable_whisper_audio_encoder.18} parent=1 // pred_region
      _
    $region17: #{tunable_whisper_audio_encoder.18} parent=1 // pred_fallthru
      _
    // Predicated region
    $region18: #{tunable_whisper_audio_encoder.18} parent=1 // pred_check
      _
    $region19: #{tunable_whisper_audio_encoder.18} parent=1 // pred_check_branch
      %28 = sbr.rel (0) target = $region21
    $region20: #{tunable_whisper_audio_encoder.18} parent=1 // pred_region
      %30 = dma.done [#allocation4], 32
    $region21: #{tunable_whisper_audio_encoder.18} parent=1 // pred_fallthru
      _
    %p31 = scmp.eq.s32.totalorder 0, 0
    // Predicated region
    $region22: #{tunable_whisper_audio_encoder.18} parent=1 // pred_check
      %p32 = pneg %p31
    $region23: #{tunable_whisper_audio_encoder.18} parent=1 // pred_check_branch
      %34 = sbr.rel (%p32) target = $region25
    $region24: #{tunable_whisper_audio_encoder.18} parent=1 // pred_region
      %35 = vst [vmem:[#allocation2] sm:$0xff] 0.0
      %36 = vst [vmem:[#allocation2 + $0x8] sm:$0xff] 0.0
      %37 = vst [vmem:[#allocation2 + $0x10] sm:$0xff] 0.0
      %38 = vst [vmem:[#allocation2 + $0x18] sm:$0xff] 0.0
      %39 = vst [vmem:[#allocation2 + $0x20] sm:$0xff] 0.0
      %40 = vst [vmem:[#allocation2 + $0x28] sm:$0xff] 0.0
      %41 = vst [vmem:[#allocation2 + $0x30] sm:$0xff] 0.0
      %42 = vst [vmem:[#allocation2 + $0x38] sm:$0xff] 0.0
    $region25: #{tunable_whisper_audio_encoder.18} parent=1 // pred_fallthru
      _
    %v43 = vld [vmem:[#allocation2] sm:$0xff]
    %v44 = vld [vmem:[#allocation2 + $0x8] sm:$0xff]
    %v45 = vld [vmem:[#allocation2 + $0x10] sm:$0xff]
    %v46 = vld [vmem:[#allocation2 + $0x18] sm:$0xff]
    %v47 = vld [vmem:[#allocation2 + $0x20] sm:$0xff]
    %v48 = vld [vmem:[#allocation2 + $0x28] sm:$0xff]
    %v49 = vld [vmem:[#allocation2 + $0x30] sm:$0xff]
    %v50 = vld [vmem:[#allocation2 + $0x38] sm:$0xff]
    %v51 = vld [vmem:[%s0] sm:$0xff]
    %v52 = vld [vmem:[%s0 + $0x8] sm:$0xff]
    %v53 = vld [vmem:[%s0 + $0x10] sm:$0xff]
    %v54 = vld [vmem:[%s0 + $0x18] sm:$0xff]
    %v55 = vld [vmem:[%s1] sm:$0xff]
    %v56 = vld [vmem:[%s1 + $0x8] sm:$0xff]
    %v57 = vld [vmem:[%s1 + $0x10] sm:$0xff]
    %v58 = vld [vmem:[%s1 + $0x18] sm:$0xff]
    %v59 = vld [vmem:[%s1 + $0x20] sm:$0xff]
    %v60 = vld [vmem:[%s1 + $0x28] sm:$0xff]
    %v61 = vld [vmem:[%s1 + $0x30] sm:$0xff]
    %v62 = vld [vmem:[%s1 + $0x38] sm:$0xff]
    %v63 = vld [vmem:[%s1 + $0x40] sm:$0xff]
    %v64 = vld [vmem:[%s1 + $0x48] sm:$0xff]
    %v65 = vld [vmem:[%s1 + $0x50] sm:$0xff]
    %v66 = vld [vmem:[%s1 + $0x58] sm:$0xff]
    %v67 = vld [vmem:[%s1 + $0x60] sm:$0xff]
    %v68 = vld [vmem:[%s1 + $0x68] sm:$0xff]
    %v69 = vld [vmem:[%s1 + $0x70] sm:$0xff]
    %v70 = vld [vmem:[%s1 + $0x78] sm:$0xff]
    %v71 = vld [vmem:[%s1 + $0x80] sm:$0xff]
    %v72 = vld [vmem:[%s1 + $0x88] sm:$0xff]
    %v73 = vld [vmem:[%s1 + $0x90] sm:$0xff]
    %v74 = vld [vmem:[%s1 + $0x98] sm:$0xff]
    %v75 = vld [vmem:[%s1 + $0xa0] sm:$0xff]
    %v76 = vld [vmem:[%s1 + $0xa8] sm:$0xff]
    %v77 = vld [vmem:[%s1 + $0xb0] sm:$0xff]
    %v78 = vld [vmem:[%s1 + $0xb8] sm:$0xff]
    %v79 = vld [vmem:[%s1 + $0xc0] sm:$0xff]
    %v80 = vld [vmem:[%s1 + $0xc8] sm:$0xff]
    %v81 = vld [vmem:[%s1 + $0xd0] sm:$0xff]
    %v82 = vld [vmem:[%s1 + $0xd8] sm:$0xff]
    %v83 = vld [vmem:[%s1 + $0xe0] sm:$0xff]
    %v84 = vld [vmem:[%s1 + $0xe8] sm:$0xff]
    %v85 = vld [vmem:[%s1 + $0xf0] sm:$0xff]
    %v86 = vld [vmem:[%s1 + $0xf8] sm:$0xff]
    %v91 = vunpack.c.l.b16 %v51
    %v92 = vunpack.c.h.b16 %v51
    %v93 = vunpack.c.l.b16 %v52
    %v94 = vunpack.c.h.b16 %v52
    %v95 = vunpack.c.l.b16 %v53
    %v96 = vunpack.c.h.b16 %v53
    %v97 = vunpack.c.l.b16 %v54
    %v98 = vunpack.c.h.b16 %v54
    %v99 = vpack.c.b16 %v93, %v91
    %v100 = vpack.c.b16 %v94, %v92
    %v101 = vpack.c.b16 %v97, %v95
    %v102 = vpack.c.b16 %v98, %v96
    %v139 = vunpack.c.l.b16 %v55
    %v140 = vunpack.c.h.b16 %v55
    %v141 = vunpack.c.l.b16 %v56
    %v142 = vunpack.c.h.b16 %v56
    %v143 = vunpack.c.l.b16 %v57
    %v144 = vunpack.c.h.b16 %v57
    %v145 = vunpack.c.l.b16 %v58
    %v146 = vunpack.c.h.b16 %v58
    %v147 = vunpack.c.l.b16 %v59
    %v148 = vunpack.c.h.b16 %v59
    %v149 = vunpack.c.l.b16 %v60
    %v150 = vunpack.c.h.b16 %v60
    %v151 = vunpack.c.l.b16 %v61
    %v152 = vunpack.c.h.b16 %v61
    %v153 = vunpack.c.l.b16 %v62
    %v154 = vunpack.c.h.b16 %v62
    %v155 = vunpack.c.l.b16 %v63
    %v156 = vunpack.c.h.b16 %v63
    %v157 = vunpack.c.l.b16 %v64
    %v158 = vunpack.c.h.b16 %v64
    %v159 = vunpack.c.l.b16 %v65
    %v160 = vunpack.c.h.b16 %v65
    %v161 = vunpack.c.l.b16 %v66
    %v162 = vunpack.c.h.b16 %v66
    %v163 = vunpack.c.l.b16 %v67
    %v164 = vunpack.c.h.b16 %v67
    %v165 = vunpack.c.l.b16 %v68
    %v166 = vunpack.c.h.b16 %v68
    %v167 = vunpack.c.l.b16 %v69
    %v168 = vunpack.c.h.b16 %v69
    %v169 = vunpack.c.l.b16 %v70
    %v170 = vunpack.c.h.b16 %v70
    %v171 = vunpack.c.l.b16 %v71
    %v172 = vunpack.c.h.b16 %v71
    %v173 = vunpack.c.l.b16 %v72
    %v174 = vunpack.c.h.b16 %v72
    %v175 = vunpack.c.l.b16 %v73
    %v176 = vunpack.c.h.b16 %v73
    %v177 = vunpack.c.l.b16 %v74
    %v178 = vunpack.c.h.b16 %v74
    %v179 = vunpack.c.l.b16 %v75
    %v180 = vunpack.c.h.b16 %v75
    %v181 = vunpack.c.l.b16 %v76
    %v182 = vunpack.c.h.b16 %v76
    %v183 = vunpack.c.l.b16 %v77
    %v184 = vunpack.c.h.b16 %v77
    %v185 = vunpack.c.l.b16 %v78
    %v186 = vunpack.c.h.b16 %v78
    %v187 = vunpack.c.l.b16 %v79
    %v188 = vunpack.c.h.b16 %v79
    %v189 = vunpack.c.l.b16 %v80
    %v190 = vunpack.c.h.b16 %v80
    %v191 = vunpack.c.l.b16 %v81
    %v192 = vunpack.c.h.b16 %v81
    %v193 = vunpack.c.l.b16 %v82
    %v194 = vunpack.c.h.b16 %v82
    %v195 = vunpack.c.l.b16 %v83
    %v196 = vunpack.c.h.b16 %v83
    %v197 = vunpack.c.l.b16 %v84
    %v198 = vunpack.c.h.b16 %v84
    %v199 = vunpack.c.l.b16 %v85
    %v200 = vunpack.c.h.b16 %v85
    %v201 = vunpack.c.l.b16 %v86
    %v202 = vunpack.c.h.b16 %v86
    %v203 = vpack.c.b16 %v141, %v139
    %v204 = vpack.c.b16 %v142, %v140
    %v205 = vpack.c.b16 %v145, %v143
    %v206 = vpack.c.b16 %v146, %v144
    %v207 = vpack.c.b16 %v149, %v147
    %v208 = vpack.c.b16 %v150, %v148
    %v209 = vpack.c.b16 %v153, %v151
    %v210 = vpack.c.b16 %v154, %v152
    %v211 = vpack.c.b16 %v157, %v155
    %v212 = vpack.c.b16 %v158, %v156
    %v213 = vpack.c.b16 %v161, %v159
    %v214 = vpack.c.b16 %v162, %v160
    %v215 = vpack.c.b16 %v165, %v163
    %v216 = vpack.c.b16 %v166, %v164
    %v217 = vpack.c.b16 %v169, %v167
    %v218 = vpack.c.b16 %v170, %v168
    %v219 = vpack.c.b16 %v173, %v171
    %v220 = vpack.c.b16 %v174, %v172
    %v221 = vpack.c.b16 %v177, %v175
    %v222 = vpack.c.b16 %v178, %v176
    %v223 = vpack.c.b16 %v181, %v179
    %v224 = vpack.c.b16 %v182, %v180
    %v225 = vpack.c.b16 %v185, %v183
    %v226 = vpack.c.b16 %v186, %v184
    %v227 = vpack.c.b16 %v189, %v187
    %v228 = vpack.c.b16 %v190, %v188
    %v229 = vpack.c.b16 %v193, %v191
    %v230 = vpack.c.b16 %v194, %v192
    %v231 = vpack.c.b16 %v197, %v195
    %v232 = vpack.c.b16 %v198, %v196
    %v233 = vpack.c.b16 %v201, %v199
    %v234 = vpack.c.b16 %v202, %v200
    %267 = vmatpush.bf16.msra.mxu0 %v217
    %268 = vmatpush.bf16.msra.mxu0 %v215
    %269 = vmatpush.bf16.msra.mxu0 %v213
    %270 = vmatpush.bf16.msra.mxu0 %v211
    %271 = vmatpush.bf16.msra.mxu0 %v209
    %272 = vmatpush.bf16.msra.mxu0 %v207
    %273 = vmatpush.bf16.msra.mxu0 %v205
    %274 = vmatpush.bf16.msra.mxu0 %v203
    %275 = vmatmul.bf16.gmra.mxu0 %v99
    %v276 = vpop.f32.mrf.mxu0
    %v277 = vadd.f32 0.0, %v276
    %v278 = vpop.f32.mrf.mxu0
    %v279 = vadd.f32 0.0, %v278
    %280 = vmatmul.bf16.gmra.mxu0 %v101
    %v281 = vpop.f32.mrf.mxu0
    %v282 = vadd.f32 0.0, %v281
    %v283 = vpop.f32.mrf.mxu0
    %v284 = vadd.f32 0.0, %v283
    %285 = vdwg.mxu0
    %286 = vmatpush.bf16.msra.mxu0 %v233
    %287 = vmatpush.bf16.msra.mxu0 %v231
    %288 = vmatpush.bf16.msra.mxu0 %v229
    %289 = vmatpush.bf16.msra.mxu0 %v227
    %290 = vmatpush.bf16.msra.mxu0 %v225
    %291 = vmatpush.bf16.msra.mxu0 %v223
    %292 = vmatpush.bf16.msra.mxu0 %v221
    %293 = vmatpush.bf16.msra.mxu0 %v219
    %294 = vmatmul.bf16.gmra.mxu0 %v100
    %v295 = vpop.f32.mrf.mxu0
    %v296 = vadd.f32 %v277, %v295
    %v297 = vpop.f32.mrf.mxu0
    %v298 = vadd.f32 %v279, %v297
    %299 = vmatmul.bf16.gmra.mxu0 %v102
    %v300 = vpop.f32.mrf.mxu0
    %v301 = vadd.f32 %v282, %v300
    %v302 = vpop.f32.mrf.mxu0
    %v303 = vadd.f32 %v284, %v302
    %304 = vdwg.mxu0
    %305 = vmatpush.bf16.msra.mxu0 %v218
    %306 = vmatpush.bf16.msra.mxu0 %v216
    %307 = vmatpush.bf16.msra.mxu0 %v214
    %308 = vmatpush.bf16.msra.mxu0 %v212
    %309 = vmatpush.bf16.msra.mxu0 %v210
    %310 = vmatpush.bf16.msra.mxu0 %v208
    %311 = vmatpush.bf16.msra.mxu0 %v206
    %312 = vmatpush.bf16.msra.mxu0 %v204
    %313 = vmatmul.bf16.gmra.mxu0 %v99
    %v314 = vpop.f32.mrf.mxu0
    %v315 = vadd.f32 0.0, %v314
    %v316 = vpop.f32.mrf.mxu0
    %v317 = vadd.f32 0.0, %v316
    %318 = vmatmul.bf16.gmra.mxu0 %v101
    %v319 = vpop.f32.mrf.mxu0
    %v320 = vadd.f32 0.0, %v319
    %v321 = vpop.f32.mrf.mxu0
    %v322 = vadd.f32 0.0, %v321
    %323 = vdwg.mxu0
    %324 = vmatpush.bf16.msra.mxu0 %v234
    %325 = vmatpush.bf16.msra.mxu0 %v232
    %326 = vmatpush.bf16.msra.mxu0 %v230
    %327 = vmatpush.bf16.msra.mxu0 %v228
    %328 = vmatpush.bf16.msra.mxu0 %v226
    %329 = vmatpush.bf16.msra.mxu0 %v224
    %330 = vmatpush.bf16.msra.mxu0 %v222
    %331 = vmatpush.bf16.msra.mxu0 %v220
    %332 = vmatmul.bf16.gmra.mxu0 %v100
    %v333 = vpop.f32.mrf.mxu0
    %v334 = vadd.f32 %v315, %v333
    %v335 = vpop.f32.mrf.mxu0
    %v336 = vadd.f32 %v317, %v335
    %337 = vmatmul.bf16.gmra.mxu0 %v102
    %v338 = vpop.f32.mrf.mxu0
    %v339 = vadd.f32 %v320, %v338
    %v340 = vpop.f32.mrf.mxu0
    %v341 = vadd.f32 %v322, %v340
    %342 = vdwg.mxu0
    %v343 = vadd.f32 %v43, %v296
    %v344 = vadd.f32 %v44, %v334
    %v345 = vadd.f32 %v45, %v298
    %v346 = vadd.f32 %v46, %v336
    %v347 = vadd.f32 %v47, %v301
    %v348 = vadd.f32 %v48, %v339
    %v349 = vadd.f32 %v49, %v303
    %v350 = vadd.f32 %v50, %v341
    %351 = vst [vmem:[#allocation2] sm:$0xff] %v343
    %352 = vst [vmem:[#allocation2 + $0x8] sm:$0xff] %v344
    %353 = vst [vmem:[#allocation2 + $0x10] sm:$0xff] %v345
    %354 = vst [vmem:[#allocation2 + $0x18] sm:$0xff] %v346
    %355 = vst [vmem:[#allocation2 + $0x20] sm:$0xff] %v347
    %356 = vst [vmem:[#allocation2 + $0x28] sm:$0xff] %v348
    %357 = vst [vmem:[#allocation2 + $0x30] sm:$0xff] %v349
    %358 = vst [vmem:[#allocation2 + $0x38] sm:$0xff] %v350
    // Predicated region
    $region26: #{tunable_whisper_audio_encoder.18} parent=1 // pred_check
      %p359 = pneg %p31
    $region27: #{tunable_whisper_audio_encoder.18} parent=1 // pred_check_branch
      %361 = sbr.rel (%p359) target = $region29
    $region28: #{tunable_whisper_audio_encoder.18} parent=1 // pred_region
      %v362 = vld [vmem:[#allocation2] sm:$0xff]
      %v363 = vld [vmem:[#allocation2 + $0x8] sm:$0xff]
      %v364 = vld [vmem:[#allocation2 + $0x10] sm:$0xff]
      %v365 = vld [vmem:[#allocation2 + $0x18] sm:$0xff]
      %v366 = vld [vmem:[#allocation2 + $0x20] sm:$0xff]
      %v367 = vld [vmem:[#allocation2 + $0x28] sm:$0xff]
      %v368 = vld [vmem:[#allocation2 + $0x30] sm:$0xff]
      %v369 = vld [vmem:[#allocation2 + $0x38] sm:$0xff]
      %v370 = vld [vmem:[#allocation3] sm:$0x3]
      %v372 = vperm.slane %v370, 0
      %v373 = vperm.slane %v370, 1
      %v376 = vadd.f32 %v362, %v372
      %v377 = vadd.f32 %v363, %v373
      %v378 = vadd.f32 %v364, %v372
      %v379 = vadd.f32 %v365, %v373
      %v380 = vadd.f32 %v366, %v372
      %v381 = vadd.f32 %v367, %v373
      %v382 = vadd.f32 %v368, %v372
      %v383 = vadd.f32 %v369, %v373
      %v384 = vld [vmem:[%s3] sm:$0xff]
      %v385 = vld [vmem:[%s3 + $0x8] sm:$0xff]
      %v386 = vld [vmem:[%s3 + $0x10] sm:$0xff]
      %v387 = vld [vmem:[%s3 + $0x18] sm:$0xff]
      %v388 = vunpack.c.l.bf16 %v384
      %v389 = vunpack.c.h.bf16 %v384
      %v390 = vunpack.c.l.bf16 %v385
      %v391 = vunpack.c.h.bf16 %v385
      %v392 = vunpack.c.l.bf16 %v386
      %v393 = vunpack.c.h.bf16 %v386
      %v394 = vunpack.c.l.bf16 %v387
      %v395 = vunpack.c.h.bf16 %v387
      %v396 = vadd.f32 %v376, %v388
      %v397 = vadd.f32 %v377, %v389
      %v398 = vadd.f32 %v378, %v390
      %v399 = vadd.f32 %v379, %v391
      %v400 = vadd.f32 %v380, %v392
      %v401 = vadd.f32 %v381, %v393
      %v402 = vadd.f32 %v382, %v394
      %v403 = vadd.f32 %v383, %v395
      %v404 = vpack.c.bf16 %v397, %v396
      %v405 = vpack.c.bf16 %v399, %v398
      %v406 = vpack.c.bf16 %v401, %v400
      %v407 = vpack.c.bf16 %v403, %v402
      %408 = vst [vmem:[%s4] sm:$0xff] %v404
      %409 = vst [vmem:[%s4 + $0x8] sm:$0xff] %v405
      %410 = vst [vmem:[%s4 + $0x10] sm:$0xff] %v406
      %411 = vst [vmem:[%s4 + $0x18] sm:$0xff] %v407
    $region29: #{tunable_whisper_audio_encoder.18} parent=1 // pred_fallthru
      _
    // Predicated region
    $region30: #{tunable_whisper_audio_encoder.18} parent=1 // pred_check
      _
    $region31: #{tunable_whisper_audio_encoder.18} parent=1 // pred_check_branch
      %413 = sbr.rel (0) target = $region33
    $region32: #{tunable_whisper_audio_encoder.18} parent=1 // pred_region
      _
    $region33: #{tunable_whisper_audio_encoder.18} parent=1 // pred_fallthru
      _
    // Predicated region
    $region34: #{tunable_whisper_audio_encoder.18} parent=1 // pred_check
      _
    $region35: #{tunable_whisper_audio_encoder.18} parent=1 // pred_check_branch
      %415 = sbr.rel (0) target = $region37
    $region36: #{tunable_whisper_audio_encoder.18} parent=1 // pred_region
      _
    $region37: #{tunable_whisper_audio_encoder.18} parent=1 // pred_fallthru
      _
    %416 = vsyncpa [#allocation4], 1

// kernel: tunable_whisper_audio_encoder.19
$region0: #{tunable_whisper_audio_encoder.19}
  #allocation0 [shape = 'u32[]', space=smem, size = 0x4, offset = 0x4, fixed_abs, tag = 'smem constant byte address 0x4 - core index']
  #allocation1 [shape = 'u32[72,128]{1,0:T(1,128)}', space=vmem, size = 0x9000, scoped, tag = 'internal scratch']
  #allocation2 [shape = 'bf16[32,256]{1,0:T(8,128)(2,1)}', space=vmem, size = 0x4000, scoped, tag = 'scratch operand']
  %s0 = inlined_call_operand.vmem [shape: bf16[32,256], index: 0, kind: input, shape index: {}]
  %s1 = inlined_call_operand.hbm [shape: bf16[256,1024], index: 1, kind: input, shape index: {}]
  %s2 = inlined_call_operand.hbm [shape: f32[1,1024], index: 2, kind: input, shape index: {}]
  %s3 = inlined_call_operand.vmem [shape: bf16[32,1024], index: 3, kind: output, shape index: {}]
  %s4 = sld [smem:[#allocation0]]
  $region76: #{tunable_whisper_audio_encoder.19} parent=0
    _
  %s6 = ssub.s32 1, %s4
  %s7 = scalar_select 0, %s6, %s4
  $region1: #{tunable_whisper_audio_encoder.19} parent=0
    #allocation3 [shape = 'u8[524288]{0}', space=vmem, size = 0x80000, scoped, tag = 'input window, operand 1']
    #allocation4 [shape = 's32[2]{0}', space=sflag, size = 0x8, scoped, tag = 'scoped memory for tunable_whisper_audio_encoder.19']
    #allocation5 [shape = 'u8[4096]{0}', space=vmem, size = 0x1000, scoped, tag = 'input window, operand 2']
    #allocation6 [shape = 's32[2]{0}', space=sflag, size = 0x8, scoped, tag = 'scoped memory for tunable_whisper_audio_encoder.19']
    #allocation7 [shape = 'u8[65536]{0}', space=vmem, size = 0x10000, scoped, tag = 'output window, operand 0']
    %8 = vsyncpa [#allocation4], 0
    %s9 = scalar_lea.sflag [#allocation4], 1
    %10 = vsyncpa %s9, 0
    %11 = vsyncpa [#allocation6], 0
    %s12 = scalar_lea.sflag [#allocation6], 1
    %13 = vsyncpa %s12, 0
    loop: start=0, step=1, limit=4
    $region2: #{tunable_whisper_audio_encoder.19} parent=1 // loop_pre_header
      _
    $region3: #{tunable_whisper_audio_encoder.19} parent=1 // loop_header
      %s15 = sphi 0, %s19
      %p16 = scmp.ge.s32.totalorder %s15, 4
      %s22 = sphi 0, %s34
      %s23 = sphi 0, %s30
      %s24 = sphi 0, %s22
      %s25 = sphi 0, %s23
      %s26 = sphi 0, %s24
      %s27 = sphi 0, %s25
      %s37 = sphi 0, %s39
      %s40 = sphi 0, %s37
      %s41 = sphi 0, %s40
      %s57 = sphi 0, %s41
      %s63 = sphi 0, %s65
      %s66 = sphi 0, %s63
      %s67 = sphi 0, %s66
      %s83 = sphi 0, %s67
      %s89 = sphi 0, %s91
      %s92 = sphi 0, %s89
      %s93 = sphi 0, %s92
      %s109 = sphi 0, %s93
      %s117 = sphi 0, %s119
      %s120 = sphi 0, %s117
      %s121 = sphi 0, %s120
      %s137 = sphi 0, %s121
    $region4: #{tunable_whisper_audio_encoder.19} parent=1 // loop_header_branch
      %18 = sbr.rel (%p16) target = $region8
    $region5: #{tunable_whisper_audio_encoder.19} parent=1 // loop_body
      %s20 = ssub.s32 %s15, 1
      %s21 = ssub.s32 %s15, 2
      %s28 = sadd.s32 1, %s23
      %p29 = scmp.ge.s32.totalorder %s28, 2
      %s30 = scalar_select %p29, 0, %s28
      %s31 = sadd.s32 1, %s22
      %s32 = scalar_select %p29, %s31, %s22
      %p33 = scmp.ge.s32.totalorder %s32, 1
      %s34 = scalar_select %p33, 0, %s32
      %s35 = ssub.s32 %s22, %s34
      %p36 = scmp.eq.s32.totalorder %s35, 0
      %s38 = sadd.s32 %s37, 1
      %s39 = scalar_select %p36, %s37, %s38
      %p42 = pneg %p36
      %p43 = scmp.eq.s32.totalorder %s15, 1
      %p44 = por %p42, %p43
      %p45 = scmp.ne.s32.totalorder %s37, %s40
      %p46 = scmp.eq.s32.totalorder %s15, 0
      %p47 = por %p45, %p46
      %p48 = scmp.ne.s32.totalorder %s37, %s40
      %p49 = scmp.eq.s32.totalorder %s20, 1
      %p50 = por %p48, %p49
      %p51 = scmp.ne.s32.totalorder %s40, %s41
      %p52 = scmp.eq.s32.totalorder %s20, 0
      %p53 = por %p51, %p52
      %p54 = scmp.ne.s32.totalorder %s40, %s41
      %p55 = scmp.eq.s32.totalorder %s21, 1
      %p56 = por %p54, %p55
      %p58 = scmp.ne.s32.totalorder %s41, %s57
      %p59 = scmp.eq.s32.totalorder %s21, 0
      %p60 = por %p58, %p59
      %s61 = ssub.s32 %s23, %s30
      %p62 = scmp.eq.s32.totalorder %s61, 0
      %s64 = sadd.s32 %s63, 1
      %s65 = scalar_select %p62, %s63, %s64
      %p68 = pneg %p62
      %p69 = scmp.eq.s32.totalorder %s15, 1
      %p70 = por %p68, %p69
      %p71 = scmp.ne.s32.totalorder %s63, %s66
      %p72 = scmp.eq.s32.totalorder %s15, 0
      %p73 = por %p71, %p72
      %p74 = scmp.ne.s32.totalorder %s63, %s66
      %p75 = scmp.eq.s32.totalorder %s20, 1
      %p76 = por %p74, %p75
      %p77 = scmp.ne.s32.totalorder %s66, %s67
      %p78 = scmp.eq.s32.totalorder %s20, 0
      %p79 = por %p77, %p78
      %p80 = scmp.ne.s32.totalorder %s66, %s67
      %p81 = scmp.eq.s32.totalorder %s21, 1
      %p82 = por %p80, %p81
      %p84 = scmp.ne.s32.totalorder %s67, %s83
      %p85 = scmp.eq.s32.totalorder %s21, 0
      %p86 = por %p84, %p85
      %s87 = ssub.s32 %s23, %s30
      %p88 = scmp.eq.s32.totalorder %s87, 0
      %s90 = sadd.s32 %s89, 1
      %s91 = scalar_select %p88, %s89, %s90
      %p94 = pneg %p88
      %p95 = scmp.eq.s32.totalorder %s15, 1
      %p96 = por %p94, %p95
      %p97 = scmp.ne.s32.totalorder %s89, %s92
      %p98 = scmp.eq.s32.totalorder %s15, 0
      %p99 = por %p97, %p98
      %p100 = scmp.ne.s32.totalorder %s89, %s92
      %p101 = scmp.eq.s32.totalorder %s20, 1
      %p102 = por %p100, %p101
      %p103 = scmp.ne.s32.totalorder %s92, %s93
      %p104 = scmp.eq.s32.totalorder %s20, 0
      %p105 = por %p103, %p104
      %p106 = scmp.ne.s32.totalorder %s92, %s93
      %p107 = scmp.eq.s32.totalorder %s21, 1
      %p108 = por %p106, %p107
      %p110 = scmp.ne.s32.totalorder %s93, %s109
      %p111 = scmp.eq.s32.totalorder %s21, 0
      %p112 = por %p110, %p111
      %s113 = ssub.s32 %s22, %s34
      %s114 = ssub.s32 %s23, %s30
      %s115 = sor.u32 %s113, %s114
      %p116 = scmp.eq.s32.totalorder %s115, 0
      %s118 = sadd.s32 %s117, 1
      %s119 = scalar_select %p116, %s117, %s118
      %p122 = pneg %p116
      %p123 = scmp.eq.s32.totalorder %s15, 1
      %p124 = por %p122, %p123
      %p125 = scmp.ne.s32.totalorder %s117, %s120
      %p126 = scmp.eq.s32.totalorder %s15, 0
      %p127 = por %p125, %p126
      %p128 = scmp.ne.s32.totalorder %s117, %s120
      %p129 = scmp.eq.s32.totalorder %s20, 1
      %p130 = por %p128, %p129
      %p131 = scmp.ne.s32.totalorder %s120, %s121
      %p132 = scmp.eq.s32.totalorder %s20, 0
      %p133 = por %p131, %p132
      %p134 = scmp.ne.s32.totalorder %s120, %s121
      %p135 = scmp.eq.s32.totalorder %s21, 1
      %p136 = por %p134, %p135
      %p138 = scmp.ne.s32.totalorder %s121, %s137
      %p139 = scmp.eq.s32.totalorder %s21, 0
      %p140 = por %p138, %p139
      %p141 = scmp.le.s32.totalorder 1, %s15
      %p142 = scmp.lt.s32.totalorder %s15, 3
      %p143 = pnand %p141, %p142
      %p144 = pneg %p143
      // Predicated region
      $region9: #{tunable_whisper_audio_encoder.19} parent=5 // pred_check
        _
      $region10: #{tunable_whisper_audio_encoder.19} parent=5 // pred_check_branch
        %146 = sbr.rel (%p143) target = $region12
      $region11: #{tunable_whisper_audio_encoder.19} parent=5 // pred_region
        %s147 = ssub.s32 %s15, 1
        // Predicated region
        $region13: #{tunable_whisper_audio_encoder.19} parent=11 // pred_check
          %p148 = pneg %p53
        $region14: #{tunable_whisper_audio_encoder.19} parent=11 // pred_check_branch
          %150 = sbr.rel (%p148) target = $region16
        $region15: #{tunable_whisper_audio_encoder.19} parent=11 // pred_region
          %s151 = smul.u32 4, %s24
          %p152 = scmp.lt.s32.totalorder %s151, 3
          %s153 = scalar_select %p152, %s151, 3
          %s154 = smul.addr %s153, 2
          %s155 = smul.addr %s154, 4
          %s156 = scalar_lea.vmem %s0, %s155
          %s157 = smul.u32 4, %s24
        $region16: #{tunable_whisper_audio_encoder.19} parent=11 // pred_fallthru
          _
      $region12: #{tunable_whisper_audio_encoder.19} parent=5 // pred_fallthru
        _
      %p158 = scmp.lt.s32.totalorder %s15, 2
      // Predicated region
      $region17: #{tunable_whisper_audio_encoder.19} parent=5 // pred_check
        %p159 = pneg %p158
      $region18: #{tunable_whisper_audio_encoder.19} parent=5 // pred_check_branch
        %161 = sbr.rel (%p159) target = $region20
      $region19: #{tunable_whisper_audio_encoder.19} parent=5 // pred_region
        // Predicated region
        $region21: #{tunable_whisper_audio_encoder.19} parent=19 // pred_check
          %p162 = pneg %p73
        $region22: #{tunable_whisper_audio_encoder.19} parent=19 // pred_check_branch
          %164 = sbr.rel (%p162) target = $region24
        $region23: #{tunable_whisper_audio_encoder.19} parent=19 // pred_region
          %s165 = sand.u32 %s63, 1
          %s166 = scalar_lea.sflag [#allocation4], %s165
          %s167 = sand.u32 %s63, 1
          %s168 = smul.addr %s167, 512
          %s169 = scalar_lea.vmem [#allocation3], %s168
          %s170 = smul.u32 4, %s23
          %172 = vsyncadd %s166, 0
          %s173 = smul.addr %s170, 4
          %s174 = scalar_lea.hbm %s1, %s173
          %s175 = sshll.u32 %s174, 4
          %s176 = int_to_ptr.hbm [resolvable:$true] %s175
          %s177 = sshll.u32 %s169, 4
          %s178 = int_to_ptr.vmem [resolvable:$true] %s177
          %183 = dma.hbm_to_vmem [thread:$0]  %s176, 8192, %s178, %s166, 512, 256, 16
        $region24: #{tunable_whisper_audio_encoder.19} parent=19 // pred_fallthru
          _
        // Predicated region
        $region25: #{tunable_whisper_audio_encoder.19} parent=19 // pred_check
          %p184 = pneg %p99
        $region26: #{tunable_whisper_audio_encoder.19} parent=19 // pred_check_branch
          %186 = sbr.rel (%p184) target = $region28
        $region27: #{tunable_whisper_audio_encoder.19} parent=19 // pred_region
          %s187 = sand.u32 %s89, 1
          %s188 = scalar_lea.sflag [#allocation6], %s187
          %s189 = sand.u32 %s89, 1
          %s190 = smul.addr %s189, 4
          %s191 = scalar_lea.vmem [#allocation5], %s190
          %s192 = smul.u32 4, %s23
          %194 = vsyncadd %s188, 0
          %s195 = scalar_lea.hbm %s2, %s192
          %s197 = sshll.u32 %s195, 4
          %s198 = int_to_ptr.hbm [resolvable:$true] %s197
          %s199 = sshll.u32 %s191, 4
          %s200 = int_to_ptr.vmem [resolvable:$true] %s199
          %202 = dma.hbm_to_vmem [thread:$0]  %s198, 64, %s200, %s188
        $region28: #{tunable_whisper_audio_encoder.19} parent=19 // pred_fallthru
          _
      $region20: #{tunable_whisper_audio_encoder.19} parent=5 // pred_fallthru
        _
      %p203 = scmp.le.s32.totalorder 1, %s15
      %p204 = scmp.lt.s32.totalorder %s15, 3
      %p205 = pnand %p203, %p204
      %p206 = pneg %p205
      // Predicated region
      $region29: #{tunable_whisper_audio_encoder.19} parent=5 // pred_check
        _
      $region30: #{tunable_whisper_audio_encoder.19} parent=5 // pred_check_branch
        %208 = sbr.rel (%p205) target = $region32
      $region31: #{tunable_whisper_audio_encoder.19} parent=5 // pred_region
        %s209 = ssub.s32 %s15, 1
        %s210 = sand.u32 %s66, 1
        %s211 = scalar_lea.sflag [#allocation4], %s210
        %s212 = sand.u32 %s66, 1
        %s213 = smul.addr %s212, 512
        %s214 = scalar_lea.vmem [#allocation3], %s213
        // Predicated region
        $region33: #{tunable_whisper_audio_encoder.19} parent=31 // pred_check
          %p215 = pneg %p79
        $region34: #{tunable_whisper_audio_encoder.19} parent=31 // pred_check_branch
          %217 = sbr.rel (%p215) target = $region36
        $region35: #{tunable_whisper_audio_encoder.19} parent=31 // pred_region
          %219 = dma.done %s211, 8192
        $region36: #{tunable_whisper_audio_encoder.19} parent=31 // pred_fallthru
          _
        %s220 = sand.u32 %s92, 1
        %s221 = scalar_lea.sflag [#allocation6], %s220
        %s222 = sand.u32 %s92, 1
        %s223 = smul.addr %s222, 4
        %s224 = scalar_lea.vmem [#allocation5], %s223
        // Predicated region
        $region37: #{tunable_whisper_audio_encoder.19} parent=31 // pred_check
          %p225 = pneg %p105
        $region38: #{tunable_whisper_audio_encoder.19} parent=31 // pred_check_branch
          %227 = sbr.rel (%p225) target = $region40
        $region39: #{tunable_whisper_audio_encoder.19} parent=31 // pred_region
          %229 = dma.done %s221, 64
        $region40: #{tunable_whisper_audio_encoder.19} parent=31 // pred_fallthru
          _
        %s230 = smul.u32 4, %s24
        %p231 = scmp.lt.s32.totalorder %s230, 3
        %s232 = scalar_select %p231, %s230, 3
        %s233 = smul.addr %s232, 2
        %s234 = smul.addr %s233, 4
        %s235 = scalar_lea.vmem %s0, %s234
        %p236 = pneg %p53
        %p237 = pneg %p50
        %s238 = sand.u32 %s66, 1
        %s239 = scalar_lea.sflag [#allocation4], %s238
        %s240 = sand.u32 %s66, 1
        %s241 = smul.addr %s240, 512
        %s242 = scalar_lea.vmem [#allocation3], %s241
        %p243 = pneg %p79
        %p244 = pneg %p76
        %s245 = sand.u32 %s92, 1
        %s246 = scalar_lea.sflag [#allocation6], %s245
        %s247 = sand.u32 %s92, 1
        %s248 = smul.addr %s247, 4
        %s249 = scalar_lea.vmem [#allocation5], %s248
        %p250 = pneg %p105
        %p251 = pneg %p102
        %p252 = pneg %p133
        %p253 = pneg %p130
        %s254 = sand.u32 %s120, 1
        %s255 = sand.u32 %s120, 1
        %s256 = smul.addr %s255, 64
        %s257 = scalar_lea.vmem [#allocation7], %s256
        %s258 = smul.u32 4, %s24
        %p259 = scmp.lt.s32.totalorder %s258, 3
        %s260 = scalar_select %p259, %s258, 3
        %s261 = smul.addr %s260, 2
        %s262 = smul.addr %s261, 4
        %s263 = scalar_lea.vmem %s0, %s262
        %s264 = smul.u32 4, %s24
        %s265 = smul.u32 4, %s25
        %s266 = smul.u32 4, %s25
        %s267 = smul.u32 4, %s24
        %s268 = smul.u32 4, %s25
        %p269 = scmp.eq.s32.totalorder %s25, 0
        // Predicated region
        $region41: #{tunable_whisper_audio_encoder.19} parent=31 // pred_check
          %p270 = pneg %p269
        $region42: #{tunable_whisper_audio_encoder.19} parent=31 // pred_check_branch
          %272 = sbr.rel (%p270) target = $region44
        $region43: #{tunable_whisper_audio_encoder.19} parent=31 // pred_region
          %v273 = vld [vmem:[%s263] sm:$0xff]
          %v274 = vld [vmem:[%s263 + $0x8] sm:$0xff]
          %v275 = vld [vmem:[%s263 + $0x10] sm:$0xff]
          %v276 = vld [vmem:[%s263 + $0x18] sm:$0xff]
          %v277 = vunpack.c.l.bf16 %v273
          %v278 = vunpack.c.h.bf16 %v273
          %v279 = vunpack.c.l.bf16 %v274
          %v280 = vunpack.c.h.bf16 %v274
          %v281 = vunpack.c.l.bf16 %v275
          %v282 = vunpack.c.h.bf16 %v275
          %v283 = vunpack.c.l.bf16 %v276
          %v284 = vunpack.c.h.bf16 %v276
          %v285 = vadd.f32 %v277, %v278
          %286 = vadd.xlane.f32.xlu0 %v285
          %v287 = vpop.xlane.xlu0 %286
          %v288 = vadd.f32 %v279, %v280
          %289 = vadd.xlane.f32.xlu0 %v288
          %v290 = vpop.xlane.xlu0 %289
          %v291 = vadd.f32 %v281, %v282
          %292 = vadd.xlane.f32.xlu0 %v291
          %v293 = vpop.xlane.xlu0 %292
          %v294 = vadd.f32 %v283, %v284
          %295 = vadd.xlane.f32.xlu0 %v294
          %v296 = vpop.xlane.xlu0 %295
          %v297 = vrcp.pop 256.0
          %v298 = vmul.f32 256.0, %v297
          %v299 = vsub.f32 1.0, %v298
          %v300 = vmul.f32 %v297, %v299
          %v301 = vadd.f32 %v297, %v300
          %vm302 = vweird.f32 %v297
          %v303 = vsel %vm302, %v297, %v301
          %v304 = vmul.f32 %v287, %v303
          %v305 = vmul.f32 %v290, %v303
          %v306 = vmul.f32 %v293, %v303
          %v307 = vmul.f32 %v296, %v303
          %v308 = vsub.f32 %v277, %v304
          %v309 = vsub.f32 %v278, %v304
          %v310 = vsub.f32 %v279, %v305
          %v311 = vsub.f32 %v280, %v305
          %v312 = vsub.f32 %v281, %v306
          %v313 = vsub.f32 %v282, %v306
          %v314 = vsub.f32 %v283, %v307
          %v315 = vsub.f32 %v284, %v307
          %v316 = vmul.f32 %v308, %v308
          %v317 = vmul.f32 %v309, %v309
          %v318 = vmul.f32 %v310, %v310
          %v319 = vmul.f32 %v311, %v311
          %v320 = vmul.f32 %v312, %v312
          %v321 = vmul.f32 %v313, %v313
          %v322 = vmul.f32 %v314, %v314
          %v323 = vmul.f32 %v315, %v315
          %v324 = vadd.f32 %v316, %v317
          %325 = vadd.xlane.f32.xlu0 %v324
          %v326 = vpop.xlane.xlu0 %325
          %v327 = vadd.f32 %v318, %v319
          %328 = vadd.xlane.f32.xlu0 %v327
          %v329 = vpop.xlane.xlu0 %328
          %v330 = vadd.f32 %v320, %v321
          %331 = vadd.xlane.f32.xlu0 %v330
          %v332 = vpop.xlane.xlu0 %331
          %v333 = vadd.f32 %v322, %v323
          %334 = vadd.xlane.f32.xlu0 %v333
          %v335 = vpop.xlane.xlu0 %334
          %v336 = vmul.f32 %v326, %v303
          %v337 = vmul.f32 %v329, %v303
          %v338 = vmul.f32 %v332, %v303
          %v339 = vmul.f32 %v335, %v303
          %v340 = vadd.f32 %v336, 1e-05
          %v341 = vadd.f32 %v337, 1e-05
          %v342 = vadd.f32 %v338, 1e-05
          %v343 = vadd.f32 %v339, 1e-05
          %v344 = vrsqrt.pop %v340
          %v345 = vmul.f32 %v344, %v340
          %v346 = vmul.f32 %v345, %v344
          %v347 = vmul.f32 0.5, %v346
          %v348 = vsub.f32 1.5, %v347
          %v349 = vmul.f32 %v344, %v348
          %vm350 = vweird.f32 %v340
          %vm351 = vweird.f32 %v344
          %vm352 = vmor %vm350, %vm351
          %v353 = vsel %vm352, %v344, %v349
          %v354 = vrsqrt.pop %v341
          %v355 = vmul.f32 %v354, %v341
          %v356 = vmul.f32 %v355, %v354
          %v357 = vmul.f32 0.5, %v356
          %v358 = vsub.f32 1.5, %v357
          %v359 = vmul.f32 %v354, %v358
          %vm360 = vweird.f32 %v341
          %vm361 = vweird.f32 %v354
          %vm362 = vmor %vm360, %vm361
          %v363 = vsel %vm362, %v354, %v359
          %v364 = vrsqrt.pop %v342
          %v365 = vmul.f32 %v364, %v342
          %v366 = vmul.f32 %v365, %v364
          %v367 = vmul.f32 0.5, %v366
          %v368 = vsub.f32 1.5, %v367
          %v369 = vmul.f32 %v364, %v368
          %vm370 = vweird.f32 %v342
          %vm371 = vweird.f32 %v364
          %vm372 = vmor %vm370, %vm371
          %v373 = vsel %vm372, %v364, %v369
          %v374 = vrsqrt.pop %v343
          %v375 = vmul.f32 %v374, %v343
          %v376 = vmul.f32 %v375, %v374
          %v377 = vmul.f32 0.5, %v376
          %v378 = vsub.f32 1.5, %v377
          %v379 = vmul.f32 %v374, %v378
          %vm380 = vweird.f32 %v343
          %vm381 = vweird.f32 %v374
          %vm382 = vmor %vm380, %vm381
          %v383 = vsel %vm382, %v374, %v379
          %v384 = vmul.f32 %v308, %v353
          %v385 = vmul.f32 %v309, %v353
          %v386 = vmul.f32 %v310, %v363
          %v387 = vmul.f32 %v311, %v363
          %v388 = vmul.f32 %v312, %v373
          %v389 = vmul.f32 %v313, %v373
          %v390 = vmul.f32 %v314, %v383
          %v391 = vmul.f32 %v315, %v383
          %v392 = vpack.c.bf16 %v385, %v384
          %v393 = vpack.c.bf16 %v387, %v386
          %v394 = vpack.c.bf16 %v389, %v388
          %v395 = vpack.c.bf16 %v391, %v390
          %396 = vst [vmem:[#allocation2] sm:$0xff] %v392
          %397 = vst [vmem:[#allocation2 + $0x8] sm:$0xff] %v393
          %398 = vst [vmem:[#allocation2 + $0x10] sm:$0xff] %v394
          %399 = vst [vmem:[#allocation2 + $0x18] sm:$0xff] %v395
        $region44: #{tunable_whisper_audio_encoder.19} parent=31 // pred_fallthru
          _
        %v400 = vld [vmem:[#allocation2] sm:$0xff]
        %v401 = vld [vmem:[#allocation2 + $0x8] sm:$0xff]
        %v402 = vld [vmem:[#allocation2 + $0x10] sm:$0xff]
        %v403 = vld [vmem:[#allocation2 + $0x18] sm:$0xff]
        %v404 = vld [vmem:[%s214] sm:$0xff]
        %v405 = vld [vmem:[%s214 + $0x8] sm:$0xff]
        %v406 = vld [vmem:[%s214 + $0x10] sm:$0xff]
        %v407 = vld [vmem:[%s214 + $0x18] sm:$0xff]
        %v408 = vld [vmem:[%s214 + $0x20] sm:$0xff]
        %v409 = vld [vmem:[%s214 + $0x28] sm:$0xff]
        %v410 = vld [vmem:[%s214 + $0x30] sm:$0xff]
        %v411 = vld [vmem:[%s214 + $0x38] sm:$0xff]
        %v412 = vld [vmem:[%s214 + $0x40] sm:$0xff]
        %v413 = vld [vmem:[%s214 + $0x48] sm:$0xff]
        %v414 = vld [vmem:[%s214 + $0x50] sm:$0xff]
        %v415 = vld [vmem:[%s214 + $0x58] sm:$0xff]
        %v416 = vld [vmem:[%s214 + $0x60] sm:$0xff]
        %v417 = vld [vmem:[%s214 + $0x68] sm:$0xff]
        %v418 = vld [vmem:[%s214 + $0x70] sm:$0xff]
        %v419 = vld [vmem:[%s214 + $0x78] sm:$0xff]
        %v420 = vld [vmem:[%s214 + $0x80] sm:$0xff]
        %v421 = vld [vmem:[%s214 + $0x88] sm:$0xff]
        %v422 = vld [vmem:[%s214 + $0x90] sm:$0xff]
        %v423 = vld [vmem:[%s214 + $0x98] sm:$0xff]
        %v424 = vld [vmem:[%s214 + $0xa0] sm:$0xff]
        %v425 = vld [vmem:[%s214 + $0xa8] sm:$0xff]
        %v426 = vld [vmem:[%s214 + $0xb0] sm:$0xff]
        %v427 = vld [vmem:[%s214 + $0xb8] sm:$0xff]
        %v428 = vld [vmem:[%s214 + $0xc0] sm:$0xff]
        %v429 = vld [vmem:[%s214 + $0xc8] sm:$0xff]
        %v430 = vld [vmem:[%s214 + $0xd0] sm:$0xff]
        %v431 = vld [vmem:[%s214 + $0xd8] sm:$0xff]
        %v432 = vld [vmem:[%s214 + $0xe0] sm:$0xff]
        %v433 = vld [vmem:[%s214 + $0xe8] sm:$0xff]
        %v434 = vld [vmem:[%s214 + $0xf0] sm:$0xff]
        %v435 = vld [vmem:[%s214 + $0xf8] sm:$0xff]
        %v436 = vld [vmem:[%s214 + $0x100] sm:$0xff]
        %v437 = vld [vmem:[%s214 + $0x108] sm:$0xff]
        %v438 = vld [vmem:[%s214 + $0x110] sm:$0xff]
        %v439 = vld [vmem:[%s214 + $0x118] sm:$0xff]
        %v440 = vld [vmem:[%s214 + $0x120] sm:$0xff]
        %v441 = vld [vmem:[%s214 + $0x128] sm:$0xff]
        %v442 = vld [vmem:[%s214 + $0x130] sm:$0xff]
        %v443 = vld [vmem:[%s214 + $0x138] sm:$0xff]
        %v444 = vld [vmem:[%s214 + $0x140] sm:$0xff]
        %v445 = vld [vmem:[%s214 + $0x148] sm:$0xff]
        %v446 = vld [vmem:[%s214 + $0x150] sm:$0xff]
        %v447 = vld [vmem:[%s214 + $0x158] sm:$0xff]
        %v448 = vld [vmem:[%s214 + $0x160] sm:$0xff]
        %v449 = vld [vmem:[%s214 + $0x168] sm:$0xff]
        %v450 = vld [vmem:[%s214 + $0x170] sm:$0xff]
        %v451 = vld [vmem:[%s214 + $0x178] sm:$0xff]
        %v452 = vld [vmem:[%s214 + $0x180] sm:$0xff]
        %v453 = vld [vmem:[%s214 + $0x188] sm:$0xff]
        %v454 = vld [vmem:[%s214 + $0x190] sm:$0xff]
        %v455 = vld [vmem:[%s214 + $0x198] sm:$0xff]
        %v456 = vld [vmem:[%s214 + $0x1a0] sm:$0xff]
        %v457 = vld [vmem:[%s214 + $0x1a8] sm:$0xff]
        %v458 = vld [vmem:[%s214 + $0x1b0] sm:$0xff]
        %v459 = vld [vmem:[%s214 + $0x1b8] sm:$0xff]
        %v460 = vld [vmem:[%s214 + $0x1c0] sm:$0xff]
        %v461 = vld [vmem:[%s214 + $0x1c8] sm:$0xff]
        %v462 = vld [vmem:[%s214 + $0x1d0] sm:$0xff]
        %v463 = vld [vmem:[%s214 + $0x1d8] sm:$0xff]
        %v464 = vld [vmem:[%s214 + $0x1e0] sm:$0xff]
        %v465 = vld [vmem:[%s214 + $0x1e8] sm:$0xff]
        %v466 = vld [vmem:[%s214 + $0x1f0] sm:$0xff]
        %v467 = vld [vmem:[%s214 + $0x1f8] sm:$0xff]
        %v468 = vld [vmem:[%s224] sm:$0xf]
        %v470 = vperm.slane %v468, 0
        %v471 = vperm.slane %v468, 1
        %v472 = vperm.slane %v468, 2
        %v473 = vperm.slane %v468, 3
        %v482 = vunpack.c.l.b16 %v400
        %v483 = vunpack.c.h.b16 %v400
        %v484 = vunpack.c.l.b16 %v401
        %v485 = vunpack.c.h.b16 %v401
        %v486 = vunpack.c.l.b16 %v402
        %v487 = vunpack.c.h.b16 %v402
        %v488 = vunpack.c.l.b16 %v403
        %v489 = vunpack.c.h.b16 %v403
        %v490 = vpack.c.b16 %v484, %v482
        %v491 = vpack.c.b16 %v485, %v483
        %v492 = vpack.c.b16 %v488, %v486
        %v493 = vpack.c.b16 %v489, %v487
        %v562 = vunpack.c.l.b16 %v404
        %v563 = vunpack.c.h.b16 %v404
        %v564 = vunpack.c.l.b16 %v405
        %v565 = vunpack.c.h.b16 %v405
        %v566 = vunpack.c.l.b16 %v406
        %v567 = vunpack.c.h.b16 %v406
        %v568 = vunpack.c.l.b16 %v407
        %v569 = vunpack.c.h.b16 %v407
        %v570 = vunpack.c.l.b16 %v408
        %v571 = vunpack.c.h.b16 %v408
        %v572 = vunpack.c.l.b16 %v409
        %v573 = vunpack.c.h.b16 %v409
        %v574 = vunpack.c.l.b16 %v410
        %v575 = vunpack.c.h.b16 %v410
        %v576 = vunpack.c.l.b16 %v411
        %v577 = vunpack.c.h.b16 %v411
        %v578 = vunpack.c.l.b16 %v412
        %v579 = vunpack.c.h.b16 %v412
        %v580 = vunpack.c.l.b16 %v413
        %v581 = vunpack.c.h.b16 %v413
        %v582 = vunpack.c.l.b16 %v414
        %v583 = vunpack.c.h.b16 %v414
        %v584 = vunpack.c.l.b16 %v415
        %v585 = vunpack.c.h.b16 %v415
        %v586 = vunpack.c.l.b16 %v416
        %v587 = vunpack.c.h.b16 %v416
        %v588 = vunpack.c.l.b16 %v417
        %v589 = vunpack.c.h.b16 %v417
        %v590 = vunpack.c.l.b16 %v418
        %v591 = vunpack.c.h.b16 %v418
        %v592 = vunpack.c.l.b16 %v419
        %v593 = vunpack.c.h.b16 %v419
        %v594 = vunpack.c.l.b16 %v420
        %v595 = vunpack.c.h.b16 %v420
        %v596 = vunpack.c.l.b16 %v421
        %v597 = vunpack.c.h.b16 %v421
        %v598 = vunpack.c.l.b16 %v422
        %v599 = vunpack.c.h.b16 %v422
        %v600 = vunpack.c.l.b16 %v423
        %v601 = vunpack.c.h.b16 %v423
        %v602 = vunpack.c.l.b16 %v424
        %v603 = vunpack.c.h.b16 %v424
        %v604 = vunpack.c.l.b16 %v425
        %v605 = vunpack.c.h.b16 %v425
        %v606 = vunpack.c.l.b16 %v426
        %v607 = vunpack.c.h.b16 %v426
        %v608 = vunpack.c.l.b16 %v427
        %v609 = vunpack.c.h.b16 %v427
        %v610 = vunpack.c.l.b16 %v428
        %v611 = vunpack.c.h.b16 %v428
        %v612 = vunpack.c.l.b16 %v429
        %v613 = vunpack.c.h.b16 %v429
        %v614 = vunpack.c.l.b16 %v430
        %v615 = vunpack.c.h.b16 %v430
        %v616 = vunpack.c.l.b16 %v431
        %v617 = vunpack.c.h.b16 %v431
        %v618 = vunpack.c.l.b16 %v432
        %v619 = vunpack.c.h.b16 %v432
        %v620 = vunpack.c.l.b16 %v433
        %v621 = vunpack.c.h.b16 %v433
        %v622 = vunpack.c.l.b16 %v434
        %v623 = vunpack.c.h.b16 %v434
        %v624 = vunpack.c.l.b16 %v435
        %v625 = vunpack.c.h.b16 %v435
        %v626 = vunpack.c.l.b16 %v436
        %v627 = vunpack.c.h.b16 %v436
        %v628 = vunpack.c.l.b16 %v437
        %v629 = vunpack.c.h.b16 %v437
        %v630 = vunpack.c.l.b16 %v438
        %v631 = vunpack.c.h.b16 %v438
        %v632 = vunpack.c.l.b16 %v439
        %v633 = vunpack.c.h.b16 %v439
        %v634 = vunpack.c.l.b16 %v440
        %v635 = vunpack.c.h.b16 %v440
        %v636 = vunpack.c.l.b16 %v441
        %v637 = vunpack.c.h.b16 %v441
        %v638 = vunpack.c.l.b16 %v442
        %v639 = vunpack.c.h.b16 %v442
        %v640 = vunpack.c.l.b16 %v443
        %v641 = vunpack.c.h.b16 %v443
        %v642 = vunpack.c.l.b16 %v444
        %v643 = vunpack.c.h.b16 %v444
        %v644 = vunpack.c.l.b16 %v445
        %v645 = vunpack.c.h.b16 %v445
        %v646 = vunpack.c.l.b16 %v446
        %v647 = vunpack.c.h.b16 %v446
        %v648 = vunpack.c.l.b16 %v447
        %v649 = vunpack.c.h.b16 %v447
        %v650 = vunpack.c.l.b16 %v448
        %v651 = vunpack.c.h.b16 %v448
        %v652 = vunpack.c.l.b16 %v449
        %v653 = vunpack.c.h.b16 %v449
        %v654 = vunpack.c.l.b16 %v450
        %v655 = vunpack.c.h.b16 %v450
        %v656 = vunpack.c.l.b16 %v451
        %v657 = vunpack.c.h.b16 %v451
        %v658 = vunpack.c.l.b16 %v452
        %v659 = vunpack.c.h.b16 %v452
        %v660 = vunpack.c.l.b16 %v453
        %v661 = vunpack.c.h.b16 %v453
        %v662 = vunpack.c.l.b16 %v454
        %v663 = vunpack.c.h.b16 %v454
        %v664 = vunpack.c.l.b16 %v455
        %v665 = vunpack.c.h.b16 %v455
        %v666 = vunpack.c.l.b16 %v456
        %v667 = vunpack.c.h.b16 %v456
        %v668 = vunpack.c.l.b16 %v457
        %v669 = vunpack.c.h.b16 %v457
        %v670 = vunpack.c.l.b16 %v458
        %v671 = vunpack.c.h.b16 %v458
        %v672 = vunpack.c.l.b16 %v459
        %v673 = vunpack.c.h.b16 %v459
        %v674 = vunpack.c.l.b16 %v460
        %v675 = vunpack.c.h.b16 %v460
        %v676 = vunpack.c.l.b16 %v461
        %v677 = vunpack.c.h.b16 %v461
        %v678 = vunpack.c.l.b16 %v462
        %v679 = vunpack.c.h.b16 %v462
        %v680 = vunpack.c.l.b16 %v463
        %v681 = vunpack.c.h.b16 %v463
        %v682 = vunpack.c.l.b16 %v464
        %v683 = vunpack.c.h.b16 %v464
        %v684 = vunpack.c.l.b16 %v465
        %v685 = vunpack.c.h.b16 %v465
        %v686 = vunpack.c.l.b16 %v466
        %v687 = vunpack.c.h.b16 %v466
        %v688 = vunpack.c.l.b16 %v467
        %v689 = vunpack.c.h.b16 %v467
        %v690 = vpack.c.b16 %v566, %v562
        %v691 = vpack.c.b16 %v567, %v563
        %v692 = vpack.c.b16 %v568, %v564
        %v693 = vpack.c.b16 %v569, %v565
        %v694 = vpack.c.b16 %v574, %v570
        %v695 = vpack.c.b16 %v575, %v571
        %v696 = vpack.c.b16 %v576, %v572
        %v697 = vpack.c.b16 %v577, %v573
        %v698 = vpack.c.b16 %v582, %v578
        %v699 = vpack.c.b16 %v583, %v579
        %v700 = vpack.c.b16 %v584, %v580
        %v701 = vpack.c.b16 %v585, %v581
        %v702 = vpack.c.b16 %v590, %v586
        %v703 = vpack.c.b16 %v591, %v587
        %v704 = vpack.c.b16 %v592, %v588
        %v705 = vpack.c.b16 %v593, %v589
        %v706 = vpack.c.b16 %v598, %v594
        %v707 = vpack.c.b16 %v599, %v595
        %v708 = vpack.c.b16 %v600, %v596
        %v709 = vpack.c.b16 %v601, %v597
        %v710 = vpack.c.b16 %v606, %v602
        %v711 = vpack.c.b16 %v607, %v603
        %v712 = vpack.c.b16 %v608, %v604
        %v713 = vpack.c.b16 %v609, %v605
        %v714 = vpack.c.b16 %v614, %v610
        %v715 = vpack.c.b16 %v615, %v611
        %v716 = vpack.c.b16 %v616, %v612
        %v717 = vpack.c.b16 %v617, %v613
        %v718 = vpack.c.b16 %v622, %v618
        %v719 = vpack.c.b16 %v623, %v619
        %v720 = vpack.c.b16 %v624, %v620
        %v721 = vpack.c.b16 %v625, %v621
        %v722 = vpack.c.b16 %v630, %v626
        %v723 = vpack.c.b16 %v631, %v627
        %v724 = vpack.c.b16 %v632, %v628
        %v725 = vpack.c.b16 %v633, %v629
        %v726 = vpack.c.b16 %v638, %v634
        %v727 = vpack.c.b16 %v639, %v635
        %v728 = vpack.c.b16 %v640, %v636
        %v729 = vpack.c.b16 %v641, %v637
        %v730 = vpack.c.b16 %v646, %v642
        %v731 = vpack.c.b16 %v647, %v643
        %v732 = vpack.c.b16 %v648, %v644
        %v733 = vpack.c.b16 %v649, %v645
        %v734 = vpack.c.b16 %v654, %v650
        %v735 = vpack.c.b16 %v655, %v651
        %v736 = vpack.c.b16 %v656, %v652
        %v737 = vpack.c.b16 %v657, %v653
        %v738 = vpack.c.b16 %v662, %v658
        %v739 = vpack.c.b16 %v663, %v659
        %v740 = vpack.c.b16 %v664, %v660
        %v741 = vpack.c.b16 %v665, %v661
        %v742 = vpack.c.b16 %v670, %v666
        %v743 = vpack.c.b16 %v671, %v667
        %v744 = vpack.c.b16 %v672, %v668
        %v745 = vpack.c.b16 %v673, %v669
        %v746 = vpack.c.b16 %v678, %v674
        %v747 = vpack.c.b16 %v679, %v675
        %v748 = vpack.c.b16 %v680, %v676
        %v749 = vpack.c.b16 %v681, %v677
        %v750 = vpack.c.b16 %v686, %v682
        %v751 = vpack.c.b16 %v687, %v683
        %v752 = vpack.c.b16 %v688, %v684
        %v753 = vpack.c.b16 %v689, %v685
        %818 = vmatpush.bf16.msra.mxu0 %v718
        %819 = vmatpush.bf16.msra.mxu0 %v714
        %820 = vmatpush.bf16.msra.mxu0 %v710
        %821 = vmatpush.bf16.msra.mxu0 %v706
        %822 = vmatpush.bf16.msra.mxu0 %v702
        %823 = vmatpush.bf16.msra.mxu0 %v698
        %824 = vmatpush.bf16.msra.mxu0 %v694
        %825 = vmatpush.bf16.msra.mxu0 %v690
        %826 = vmatmul.bf16.gmra.mxu0 %v490
        %v827 = vpop.f32.mrf.mxu0
        %v828 = vadd.f32 %v470, %v827
        %v829 = vpop.f32.mrf.mxu0
        %v830 = vadd.f32 %v470, %v829
        %831 = vmatmul.bf16.gmra.mxu0 %v492
        %v832 = vpop.f32.mrf.mxu0
        %v833 = vadd.f32 %v470, %v832
        %v834 = vpop.f32.mrf.mxu0
        %v835 = vadd.f32 %v470, %v834
        %836 = vdwg.mxu0
        %837 = vmatpush.bf16.msra.mxu0 %v750
        %838 = vmatpush.bf16.msra.mxu0 %v746
        %839 = vmatpush.bf16.msra.mxu0 %v742
        %840 = vmatpush.bf16.msra.mxu0 %v738
        %841 = vmatpush.bf16.msra.mxu0 %v734
        %842 = vmatpush.bf16.msra.mxu0 %v730
        %843 = vmatpush.bf16.msra.mxu0 %v726
        %844 = vmatpush.bf16.msra.mxu0 %v722
        %845 = vmatmul.bf16.gmra.mxu0 %v491
        %v846 = vpop.f32.mrf.mxu0
        %v847 = vadd.f32 %v828, %v846
        %v848 = vpop.f32.mrf.mxu0
        %v849 = vadd.f32 %v830, %v848
        %850 = vmatmul.bf16.gmra.mxu0 %v493
        %v851 = vpop.f32.mrf.mxu0
        %v852 = vadd.f32 %v833, %v851
        %v853 = vpop.f32.mrf.mxu0
        %v854 = vadd.f32 %v835, %v853
        %855 = vdwg.mxu0
        %856 = vmatpush.bf16.msra.mxu0 %v719
        %857 = vmatpush.bf16.msra.mxu0 %v715
        %858 = vmatpush.bf16.msra.mxu0 %v711
        %859 = vmatpush.bf16.msra.mxu0 %v707
        %860 = vmatpush.bf16.msra.mxu0 %v703
        %861 = vmatpush.bf16.msra.mxu0 %v699
        %862 = vmatpush.bf16.msra.mxu0 %v695
        %863 = vmatpush.bf16.msra.mxu0 %v691
        %864 = vmatmul.bf16.gmra.mxu0 %v490
        %v865 = vpop.f32.mrf.mxu0
        %v866 = vadd.f32 %v471, %v865
        %v867 = vpop.f32.mrf.mxu0
        %v868 = vadd.f32 %v471, %v867
        %869 = vmatmul.bf16.gmra.mxu0 %v492
        %v870 = vpop.f32.mrf.mxu0
        %v871 = vadd.f32 %v471, %v870
        %v872 = vpop.f32.mrf.mxu0
        %v873 = vadd.f32 %v471, %v872
        %874 = vdwg.mxu0
        %875 = vmatpush.bf16.msra.mxu0 %v751
        %876 = vmatpush.bf16.msra.mxu0 %v747
        %877 = vmatpush.bf16.msra.mxu0 %v743
        %878 = vmatpush.bf16.msra.mxu0 %v739
        %879 = vmatpush.bf16.msra.mxu0 %v735
        %880 = vmatpush.bf16.msra.mxu0 %v731
        %881 = vmatpush.bf16.msra.mxu0 %v727
        %882 = vmatpush.bf16.msra.mxu0 %v723
        %883 = vmatmul.bf16.gmra.mxu0 %v491
        %v884 = vpop.f32.mrf.mxu0
        %v885 = vadd.f32 %v866, %v884
        %v886 = vpop.f32.mrf.mxu0
        %v887 = vadd.f32 %v868, %v886
        %888 = vmatmul.bf16.gmra.mxu0 %v493
        %v889 = vpop.f32.mrf.mxu0
        %v890 = vadd.f32 %v871, %v889
        %v891 = vpop.f32.mrf.mxu0
        %v892 = vadd.f32 %v873, %v891
        %893 = vdwg.mxu0
        %894 = vmatpush.bf16.msra.mxu0 %v720
        %895 = vmatpush.bf16.msra.mxu0 %v716
        %896 = vmatpush.bf16.msra.mxu0 %v712
        %897 = vmatpush.bf16.msra.mxu0 %v708
        %898 = vmatpush.bf16.msra.mxu0 %v704
        %899 = vmatpush.bf16.msra.mxu0 %v700
        %900 = vmatpush.bf16.msra.mxu0 %v696
        %901 = vmatpush.bf16.msra.mxu0 %v692
        %902 = vmatmul.bf16.gmra.mxu0 %v490
        %v903 = vpop.f32.mrf.mxu0
        %v904 = vadd.f32 %v472, %v903
        %v905 = vpop.f32.mrf.mxu0
        %v906 = vadd.f32 %v472, %v905
        %907 = vmatmul.bf16.gmra.mxu0 %v492
        %v908 = vpop.f32.mrf.mxu0
        %v909 = vadd.f32 %v472, %v908
        %v910 = vpop.f32.mrf.mxu0
        %v911 = vadd.f32 %v472, %v910
        %912 = vdwg.mxu0
        %913 = vmatpush.bf16.msra.mxu0 %v752
        %914 = vmatpush.bf16.msra.mxu0 %v748
        %915 = vmatpush.bf16.msra.mxu0 %v744
        %916 = vmatpush.bf16.msra.mxu0 %v740
        %917 = vmatpush.bf16.msra.mxu0 %v736
        %918 = vmatpush.bf16.msra.mxu0 %v732
        %919 = vmatpush.bf16.msra.mxu0 %v728
        %920 = vmatpush.bf16.msra.mxu0 %v724
        %921 = vmatmul.bf16.gmra.mxu0 %v491
        %v922 = vpop.f32.mrf.mxu0
        %v923 = vadd.f32 %v904, %v922
        %v924 = vpop.f32.mrf.mxu0
        %v925 = vadd.f32 %v906, %v924
        %926 = vmatmul.bf16.gmra.mxu0 %v493
        %v927 = vpop.f32.mrf.mxu0
        %v928 = vadd.f32 %v909, %v927
        %v929 = vpop.f32.mrf.mxu0
        %v930 = vadd.f32 %v911, %v929
        %931 = vdwg.mxu0
        %932 = vmatpush.bf16.msra.mxu0 %v721
        %933 = vmatpush.bf16.msra.mxu0 %v717
        %934 = vmatpush.bf16.msra.mxu0 %v713
        %935 = vmatpush.bf16.msra.mxu0 %v709
        %936 = vmatpush.bf16.msra.mxu0 %v705
        %937 = vmatpush.bf16.msra.mxu0 %v701
        %938 = vmatpush.bf16.msra.mxu0 %v697
        %939 = vmatpush.bf16.msra.mxu0 %v693
        %940 = vmatmul.bf16.gmra.mxu0 %v490
        %v941 = vpop.f32.mrf.mxu0
        %v942 = vadd.f32 %v473, %v941
        %v943 = vpop.f32.mrf.mxu0
        %v944 = vadd.f32 %v473, %v943
        %945 = vmatmul.bf16.gmra.mxu0 %v492
        %v946 = vpop.f32.mrf.mxu0
        %v947 = vadd.f32 %v473, %v946
        %v948 = vpop.f32.mrf.mxu0
        %v949 = vadd.f32 %v473, %v948
        %950 = vdwg.mxu0
        %951 = vmatpush.bf16.msra.mxu0 %v753
        %952 = vmatpush.bf16.msra.mxu0 %v749
        %953 = vmatpush.bf16.msra.mxu0 %v745
        %954 = vmatpush.bf16.msra.mxu0 %v741
        %955 = vmatpush.bf16.msra.mxu0 %v737
        %956 = vmatpush.bf16.msra.mxu0 %v733
        %957 = vmatpush.bf16.msra.mxu0 %v729
        %958 = vmatpush.bf16.msra.mxu0 %v725
        %959 = vmatmul.bf16.gmra.mxu0 %v491
        %v960 = vpop.f32.mrf.mxu0
        %v961 = vadd.f32 %v942, %v960
        %v962 = vpop.f32.mrf.mxu0
        %v963 = vadd.f32 %v944, %v962
        %964 = vmatmul.bf16.gmra.mxu0 %v493
        %v965 = vpop.f32.mrf.mxu0
        %v966 = vadd.f32 %v947, %v965
        %v967 = vpop.f32.mrf.mxu0
        %v968 = vadd.f32 %v949, %v967
        %969 = vdwg.mxu0
        %v970 = vmul.f32 %v847, 0.5
        %v971 = vmul.f32 %v885, 0.5
        %v972 = vmul.f32 %v923, 0.5
        %v973 = vmul.f32 %v961, 0.5
        %v974 = vmul.f32 %v849, 0.5
        %v975 = vmul.f32 %v887, 0.5
        %v976 = vmul.f32 %v925, 0.5
        %v977 = vmul.f32 %v963, 0.5
        %v978 = vmul.f32 %v852, 0.5
        %v979 = vmul.f32 %v890, 0.5
        %v980 = vmul.f32 %v928, 0.5
        %v981 = vmul.f32 %v966, 0.5
        %v982 = vmul.f32 %v854, 0.5
        %v983 = vmul.f32 %v892, 0.5
        %v984 = vmul.f32 %v930, 0.5
        %v985 = vmul.f32 %v968, 0.5
        %v986 = vmul.f32 %v847, 0.044715
        %v987 = vmul.f32 %v885, 0.044715
        %v988 = vmul.f32 %v923, 0.044715
        %v989 = vmul.f32 %v961, 0.044715
        %v990 = vmul.f32 %v849, 0.044715
        %v991 = vmul.f32 %v887, 0.044715
        %v992 = vmul.f32 %v925, 0.044715
        %v993 = vmul.f32 %v963, 0.044715
        %v994 = vmul.f32 %v852, 0.044715
        %v995 = vmul.f32 %v890, 0.044715
        %v996 = vmul.f32 %v928, 0.044715
        %v997 = vmul.f32 %v966, 0.044715
        %v998 = vmul.f32 %v854, 0.044715
        %v999 = vmul.f32 %v892, 0.044715
        %v1000 = vmul.f32 %v930, 0.044715
        %v1001 = vmul.f32 %v968, 0.044715
        %v1002 = vmul.f32 %v986, %v847
        %v1003 = vmul.f32 %v987, %v885
        %v1004 = vmul.f32 %v988, %v923
        %v1005 = vmul.f32 %v989, %v961
        %v1006 = vmul.f32 %v990, %v849
        %v1007 = vmul.f32 %v991, %v887
        %v1008 = vmul.f32 %v992, %v925
        %v1009 = vmul.f32 %v993, %v963
        %v1010 = vmul.f32 %v994, %v852
        %v1011 = vmul.f32 %v995, %v890
        %v1012 = vmul.f32 %v996, %v928
        %v1013 = vmul.f32 %v997, %v966
        %v1014 = vmul.f32 %v998, %v854
        %v1015 = vmul.f32 %v999, %v892
        %v1016 = vmul.f32 %v1000, %v930
        %v1017 = vmul.f32 %v1001, %v968
        %v1018 = vmul.f32 %v1002, %v847
        %v1019 = vmul.f32 %v1003, %v885
        %v1020 = vmul.f32 %v1004, %v923
        %v1021 = vmul.f32 %v1005, %v961
        %v1022 = vmul.f32 %v1006, %v849
        %v1023 = vmul.f32 %v1007, %v887
        %v1024 = vmul.f32 %v1008, %v925
        %v1025 = vmul.f32 %v1009, %v963
        %v1026 = vmul.f32 %v1010, %v852
        %v1027 = vmul.f32 %v1011, %v890
        %v1028 = vmul.f32 %v1012, %v928
        %v1029 = vmul.f32 %v1013, %v966
        %v1030 = vmul.f32 %v1014, %v854
        %v1031 = vmul.f32 %v1015, %v892
        %v1032 = vmul.f32 %v1016, %v930
        %v1033 = vmul.f32 %v1017, %v968
        %v1034 = vadd.f32 %v847, %v1018
        %v1035 = vadd.f32 %v885, %v1019
        %v1036 = vadd.f32 %v923, %v1020
        %v1037 = vadd.f32 %v961, %v1021
        %v1038 = vadd.f32 %v849, %v1022
        %v1039 = vadd.f32 %v887, %v1023
        %v1040 = vadd.f32 %v925, %v1024
        %v1041 = vadd.f32 %v963, %v1025
        %v1042 = vadd.f32 %v852, %v1026
        %v1043 = vadd.f32 %v890, %v1027
        %v1044 = vadd.f32 %v928, %v1028
        %v1045 = vadd.f32 %v966, %v1029
        %v1046 = vadd.f32 %v854, %v1030
        %v1047 = vadd.f32 %v892, %v1031
        %v1048 = vadd.f32 %v930, %v1032
        %v1049 = vadd.f32 %v968, %v1033
        %v1050 = vmul.f32 %v1034, 0.7978846
        %v1051 = vmul.f32 %v1035, 0.7978846
        %v1052 = vmul.f32 %v1036, 0.7978846
        %v1053 = vmul.f32 %v1037, 0.7978846
        %v1054 = vmul.f32 %v1038, 0.7978846
        %v1055 = vmul.f32 %v1039, 0.7978846
        %v1056 = vmul.f32 %v1040, 0.7978846
        %v1057 = vmul.f32 %v1041, 0.7978846
        %v1058 = vmul.f32 %v1042, 0.7978846
        %v1059 = vmul.f32 %v1043, 0.7978846
        %v1060 = vmul.f32 %v1044, 0.7978846
        %v1061 = vmul.f32 %v1045, 0.7978846
        %v1062 = vmul.f32 %v1046, 0.7978846
        %v1063 = vmul.f32 %v1047, 0.7978846
        %v1064 = vmul.f32 %v1048, 0.7978846
        %v1065 = vmul.f32 %v1049, 0.7978846
        %v1066 = vtanh.pop %v1050
        %v1067 = vtanh.pop %v1051
        %v1068 = vtanh.pop %v1052
        %v1069 = vtanh.pop %v1053
        %v1070 = vtanh.pop %v1054
        %v1071 = vtanh.pop %v1055
        %v1072 = vtanh.pop %v1056
        %v1073 = vtanh.pop %v1057
        %v1074 = vtanh.pop %v1058
        %v1075 = vtanh.pop %v1059
        %v1076 = vtanh.pop %v1060
        %v1077 = vtanh.pop %v1061
        %v1078 = vtanh.pop %v1062
        %v1079 = vtanh.pop %v1063
        %v1080 = vtanh.pop %v1064
        %v1081 = vtanh.pop %v1065
        %v1082 = vadd.f32 %v1066, 1.0
        %v1083 = vadd.f32 %v1067, 1.0
        %v1084 = vadd.f32 %v1068, 1.0
        %v1085 = vadd.f32 %v1069, 1.0
        %v1086 = vadd.f32 %v1070, 1.0
        %v1087 = vadd.f32 %v1071, 1.0
        %v1088 = vadd.f32 %v1072, 1.0
        %v1089 = vadd.f32 %v1073, 1.0
        %v1090 = vadd.f32 %v1074, 1.0
        %v1091 = vadd.f32 %v1075, 1.0
        %v1092 = vadd.f32 %v1076, 1.0
        %v1093 = vadd.f32 %v1077, 1.0
        %v1094 = vadd.f32 %v1078, 1.0
        %v1095 = vadd.f32 %v1079, 1.0
        %v1096 = vadd.f32 %v1080, 1.0
        %v1097 = vadd.f32 %v1081, 1.0
        %v1098 = vmul.f32 %v970, %v1082
        %v1099 = vmul.f32 %v971, %v1083
        %v1100 = vmul.f32 %v972, %v1084
        %v1101 = vmul.f32 %v973, %v1085
        %v1102 = vmul.f32 %v974, %v1086
        %v1103 = vmul.f32 %v975, %v1087
        %v1104 = vmul.f32 %v976, %v1088
        %v1105 = vmul.f32 %v977, %v1089
        %v1106 = vmul.f32 %v978, %v1090
        %v1107 = vmul.f32 %v979, %v1091
        %v1108 = vmul.f32 %v980, %v1092
        %v1109 = vmul.f32 %v981, %v1093
        %v1110 = vmul.f32 %v982, %v1094
        %v1111 = vmul.f32 %v983, %v1095
        %v1112 = vmul.f32 %v984, %v1096
        %v1113 = vmul.f32 %v985, %v1097
        %v1114 = vpack.c.bf16 %v1099, %v1098
        %v1115 = vpack.c.bf16 %v1101, %v1100
        %v1116 = vpack.c.bf16 %v1103, %v1102
        %v1117 = vpack.c.bf16 %v1105, %v1104
        %v1118 = vpack.c.bf16 %v1107, %v1106
        %v1119 = vpack.c.bf16 %v1109, %v1108
        %v1120 = vpack.c.bf16 %v1111, %v1110
        %v1121 = vpack.c.bf16 %v1113, %v1112
        %1122 = vst [vmem:[%s257] sm:$0xff] %v1114
        %1123 = vst [vmem:[%s257 + $0x8] sm:$0xff] %v1115
        %1124 = vst [vmem:[%s257 + $0x10] sm:$0xff] %v1116
        %1125 = vst [vmem:[%s257 + $0x18] sm:$0xff] %v1117
        %1126 = vst [vmem:[%s257 + $0x20] sm:$0xff] %v1118
        %1127 = vst [vmem:[%s257 + $0x28] sm:$0xff] %v1119
        %1128 = vst [vmem:[%s257 + $0x30] sm:$0xff] %v1120
        %1129 = vst [vmem:[%s257 + $0x38] sm:$0xff] %v1121
        %s1130 = sand.u32 %s120, 1
        %s1131 = sand.u32 %s120, 1
        %s1132 = smul.addr %s1131, 64
        %s1133 = scalar_lea.vmem [#allocation7], %s1132
        // Predicated region
        $region45: #{tunable_whisper_audio_encoder.19} parent=31 // pred_check
          %p1134 = pneg %p130
        $region46: #{tunable_whisper_audio_encoder.19} parent=31 // pred_check_branch
          %1136 = sbr.rel (%p1134) target = $region48
        $region47: #{tunable_whisper_audio_encoder.19} parent=31 // pred_region
          %s1137 = smul.u32 4, %s24
          %s1138 = smul.u32 4, %s25
          %s1139 = smul.addr %s1137, 8
          %s1140 = sadd.s32 %s1138, %s1139
          %s1141 = smul.addr %s1140, 4
          %s1142 = scalar_lea.vmem %s3, %s1141
          // Predicated region
          $region49: #{tunable_whisper_audio_encoder.19} parent=47 // pred_check
            _
          $region50: #{tunable_whisper_audio_encoder.19} parent=47 // pred_check_branch
            %1144 = sbr.rel (0) target = $region52
          $region51: #{tunable_whisper_audio_encoder.19} parent=47 // pred_region
            // Predicated region
            $region53: #{tunable_whisper_audio_encoder.19} parent=51 // pred_check
              _
            $region54: #{tunable_whisper_audio_encoder.19} parent=51 // pred_check_branch
              %1146 = sbr.rel (0) target = $region56
            $region55: #{tunable_whisper_audio_encoder.19} parent=51 // pred_region
              loop: start=0, step=1, limit=1
              $region57: #{tunable_whisper_audio_encoder.19} parent=55 // loop_pre_header
                _
              $region58: #{tunable_whisper_audio_encoder.19} parent=55 // loop_header
                %s1148 = sphi 0, %s1152
                %p1149 = scmp.ge.s32.totalorder %s1148, 1
                %s1153 = sphi %s1133, %s1133
                %s1154 = sphi %s1142, %s1142
              $region59: #{tunable_whisper_audio_encoder.19} parent=55 // loop_header_branch
                %1151 = sbr.rel (%p1149) target = $region63
              $region60: #{tunable_whisper_audio_encoder.19} parent=55 // loop_body
                %v1155 = vld [vmem:[%s1153] sm:$0xff]
                %1156 = vst [vmem:[%s1154] sm:$0xff] %v1155
                %v1157 = vld [vmem:[%s1153 + $0x8] sm:$0xff]
                %1158 = vst [vmem:[%s1154 + $0x8] sm:$0xff] %v1157
                %v1159 = vld [vmem:[%s1153 + $0x10] sm:$0xff]
                %1160 = vst [vmem:[%s1154 + $0x20] sm:$0xff] %v1159
                %v1161 = vld [vmem:[%s1153 + $0x18] sm:$0xff]
                %1162 = vst [vmem:[%s1154 + $0x28] sm:$0xff] %v1161
                %v1163 = vld [vmem:[%s1153 + $0x20] sm:$0xff]
                %1164 = vst [vmem:[%s1154 + $0x40] sm:$0xff] %v1163
                %v1165 = vld [vmem:[%s1153 + $0x28] sm:$0xff]
                %1166 = vst [vmem:[%s1154 + $0x48] sm:$0xff] %v1165
                %v1167 = vld [vmem:[%s1153 + $0x30] sm:$0xff]
                %1168 = vst [vmem:[%s1154 + $0x60] sm:$0xff] %v1167
                %v1169 = vld [vmem:[%s1153 + $0x38] sm:$0xff]
                %1170 = vst [vmem:[%s1154 + $0x68] sm:$0xff] %v1169
              $region61: #{tunable_whisper_audio_encoder.19} parent=55 // loop_footer
                %s1152 = sadd.s32 1, %s1148
              $region62: #{tunable_whisper_audio_encoder.19} parent=55 // loop_footer_branch
                %1147 = sbr.rel target = $region58
              $region63: #{tunable_whisper_audio_encoder.19} parent=55 // loop_exit
                _
            $region56: #{tunable_whisper_audio_encoder.19} parent=51 // pred_fallthru
              _
            // Predicated region
            $region64: #{tunable_whisper_audio_encoder.19} parent=51 // pred_check
              _
            $region65: #{tunable_whisper_audio_encoder.19} parent=51 // pred_check_branch
              %1172 = sbr.rel target = $region67
            $region66: #{tunable_whisper_audio_encoder.19} parent=51 // pred_region
              _
            $region67: #{tunable_whisper_audio_encoder.19} parent=51 // pred_fallthru
              _
          $region52: #{tunable_whisper_audio_encoder.19} parent=47 // pred_fallthru
            _
          %1173 = vnop
        $region48: #{tunable_whisper_audio_encoder.19} parent=31 // pred_fallthru
          _
      $region32: #{tunable_whisper_audio_encoder.19} parent=5 // pred_fallthru
        _
      %p1174 = scmp.le.s32.totalorder 2, %s15
      // Predicated region
      $region68: #{tunable_whisper_audio_encoder.19} parent=5 // pred_check
        %p1175 = pneg %p1174
      $region69: #{tunable_whisper_audio_encoder.19} parent=5 // pred_check_branch
        %1177 = sbr.rel (%p1175) target = $region71
      $region70: #{tunable_whisper_audio_encoder.19} parent=5 // pred_region
        %s1178 = ssub.s32 %s15, 2
        // Predicated region
        $region72: #{tunable_whisper_audio_encoder.19} parent=70 // pred_check
          %p1179 = pneg %p136
        $region73: #{tunable_whisper_audio_encoder.19} parent=70 // pred_check_branch
          %1181 = sbr.rel (%p1179) target = $region75
        $region74: #{tunable_whisper_audio_encoder.19} parent=70 // pred_region
          %s1182 = sand.u32 %s121, 1
          %s1183 = sand.u32 %s121, 1
          %s1184 = smul.addr %s1183, 64
          %s1185 = scalar_lea.vmem [#allocation7], %s1184
        $region75: #{tunable_whisper_audio_encoder.19} parent=70 // pred_fallthru
          _
      $region71: #{tunable_whisper_audio_encoder.19} parent=5 // pred_fallthru
        _
    $region6: #{tunable_whisper_audio_encoder.19} parent=1 // loop_footer
      %s19 = sadd.s32 1, %s15
    $region7: #{tunable_whisper_audio_encoder.19} parent=1 // loop_footer_branch
      %14 = sbr.rel target = $region3
    $region8: #{tunable_whisper_audio_encoder.19} parent=1 // loop_exit
      _
    %1186 = vsyncpa [#allocation4], 1
    %s1187 = scalar_lea.sflag [#allocation4], 1
    %1188 = vsyncpa %s1187, 1
    %1189 = vsyncpa [#allocation6], 1
    %s1190 = scalar_lea.sflag [#allocation6], 1
    %1191 = vsyncpa %s1190, 1

// kernel: tunable_whisper_audio_encoder.25
$region0: #{tunable_whisper_audio_encoder.25}
  #allocation0 [shape = 'u32[]', space=smem, size = 0x4, offset = 0x4, fixed_abs, tag = 'smem constant byte address 0x4 - core index']
  #allocation1 [shape = 'u32[72,128]{1,0:T(1,128)}', space=vmem, size = 0x9000, scoped, tag = 'internal scratch']
  #allocation2 [shape = 'f32[32,256]{1,0:T(8,128)}', space=vmem, size = 0x8000, scoped, tag = 'scratch operand']
  %s0 = inlined_call_operand.vmem [shape: bf16[32,1024], index: 0, kind: input, shape index: {}]
  %s1 = inlined_call_operand.hbm [shape: bf16[1024,256], index: 1, kind: input, shape index: {}]
  %s2 = inlined_call_operand.vmem [shape: f32[1,256], index: 2, kind: input, shape index: {}]
  %s3 = inlined_call_operand.vmem [shape: bf16[32,256], index: 3, kind: input, shape index: {}]
  %s4 = inlined_call_operand.vmem [shape: bf16[32,256], index: 4, kind: output, shape index: {}]
  %s5 = sld [smem:[#allocation0]]
  $region84: #{tunable_whisper_audio_encoder.25} parent=0
    _
  %s7 = ssub.s32 1, %s5
  %s8 = scalar_select 0, %s7, %s5
  $region1: #{tunable_whisper_audio_encoder.25} parent=0
    #allocation3 [shape = 'u8[65536]{0}', space=vmem, size = 0x10000, scoped, tag = 'input window, operand 0']
    #allocation4 [shape = 'u8[524288]{0}', space=vmem, size = 0x80000, scoped, tag = 'input window, operand 1']
    #allocation5 [shape = 's32[2]{0}', space=sflag, size = 0x8, scoped, tag = 'scoped memory for tunable_whisper_audio_encoder.25']
    %9 = vsyncpa [#allocation5], 0
    %s10 = scalar_lea.sflag [#allocation5], 1
    %11 = vsyncpa %s10, 0
    loop: start=0, step=1, limit=4
    $region2: #{tunable_whisper_audio_encoder.25} parent=1 // loop_pre_header
      _
    $region3: #{tunable_whisper_audio_encoder.25} parent=1 // loop_header
      %s13 = sphi 0, %s17
      %p14 = scmp.ge.s32.totalorder %s13, 4
      %s20 = sphi 0, %s39
      %s21 = sphi 0, %s35
      %s22 = sphi 0, %s31
      %s23 = sphi 0, %s20
      %s24 = sphi 0, %s21
      %s25 = sphi 0, %s22
      %s26 = sphi 0, %s23
      %s27 = sphi 0, %s24
      %s28 = sphi 0, %s25
      %s44 = sphi 0, %s46
      %s47 = sphi 0, %s44
      %s48 = sphi 0, %s47
      %s64 = sphi 0, %s48
      %s72 = sphi 0, %s74
      %s75 = sphi 0, %s72
      %s76 = sphi 0, %s75
      %s92 = sphi 0, %s76
      %s98 = sphi 0, %s100
      %s101 = sphi 0, %s98
      %s102 = sphi 0, %s101
      %s118 = sphi 0, %s102
      %s126 = sphi 0, %s128
      %s129 = sphi 0, %s126
      %s130 = sphi 0, %s129
      %s146 = sphi 0, %s130
      %s154 = sphi 0, %s156
      %s157 = sphi 0, %s154
      %s158 = sphi 0, %s157
      %s174 = sphi 0, %s158
    $region4: #{tunable_whisper_audio_encoder.25} parent=1 // loop_header_branch
      %16 = sbr.rel (%p14) target = $region8
    $region5: #{tunable_whisper_audio_encoder.25} parent=1 // loop_body
      %s18 = ssub.s32 %s13, 1
      %s19 = ssub.s32 %s13, 2
      %s29 = sadd.s32 1, %s22
      %p30 = scmp.ge.s32.totalorder %s29, 2
      %s31 = scalar_select %p30, 0, %s29
      %s32 = sadd.s32 1, %s21
      %s33 = scalar_select %p30, %s32, %s21
      %p34 = scmp.ge.s32.totalorder %s33, 1
      %s35 = scalar_select %p34, 0, %s33
      %s36 = sadd.s32 1, %s20
      %s37 = scalar_select %p34, %s36, %s20
      %p38 = scmp.ge.s32.totalorder %s37, 1
      %s39 = scalar_select %p38, 0, %s37
      %s40 = ssub.s32 %s20, %s39
      %s41 = ssub.s32 %s22, %s31
      %s42 = sor.u32 %s40, %s41
      %p43 = scmp.eq.s32.totalorder %s42, 0
      %s45 = sadd.s32 %s44, 1
      %s46 = scalar_select %p43, %s44, %s45
      %p49 = pneg %p43
      %p50 = scmp.eq.s32.totalorder %s13, 1
      %p51 = por %p49, %p50
      %p52 = scmp.ne.s32.totalorder %s44, %s47
      %p53 = scmp.eq.s32.totalorder %s13, 0
      %p54 = por %p52, %p53
      %p55 = scmp.ne.s32.totalorder %s44, %s47
      %p56 = scmp.eq.s32.totalorder %s18, 1
      %p57 = por %p55, %p56
      %p58 = scmp.ne.s32.totalorder %s47, %s48
      %p59 = scmp.eq.s32.totalorder %s18, 0
      %p60 = por %p58, %p59
      %p61 = scmp.ne.s32.totalorder %s47, %s48
      %p62 = scmp.eq.s32.totalorder %s19, 1
      %p63 = por %p61, %p62
      %p65 = scmp.ne.s32.totalorder %s48, %s64
      %p66 = scmp.eq.s32.totalorder %s19, 0
      %p67 = por %p65, %p66
      %s68 = ssub.s32 %s22, %s31
      %s69 = ssub.s32 %s21, %s35
      %s70 = sor.u32 %s68, %s69
      %p71 = scmp.eq.s32.totalorder %s70, 0
      %s73 = sadd.s32 %s72, 1
      %s74 = scalar_select %p71, %s72, %s73
      %p77 = pneg %p71
      %p78 = scmp.eq.s32.totalorder %s13, 1
      %p79 = por %p77, %p78
      %p80 = scmp.ne.s32.totalorder %s72, %s75
      %p81 = scmp.eq.s32.totalorder %s13, 0
      %p82 = por %p80, %p81
      %p83 = scmp.ne.s32.totalorder %s72, %s75
      %p84 = scmp.eq.s32.totalorder %s18, 1
      %p85 = por %p83, %p84
      %p86 = scmp.ne.s32.totalorder %s75, %s76
      %p87 = scmp.eq.s32.totalorder %s18, 0
      %p88 = por %p86, %p87
      %p89 = scmp.ne.s32.totalorder %s75, %s76
      %p90 = scmp.eq.s32.totalorder %s19, 1
      %p91 = por %p89, %p90
      %p93 = scmp.ne.s32.totalorder %s76, %s92
      %p94 = scmp.eq.s32.totalorder %s19, 0
      %p95 = por %p93, %p94
      %s96 = ssub.s32 %s21, %s35
      %p97 = scmp.eq.s32.totalorder %s96, 0
      %s99 = sadd.s32 %s98, 1
      %s100 = scalar_select %p97, %s98, %s99
      %p103 = pneg %p97
      %p104 = scmp.eq.s32.totalorder %s13, 1
      %p105 = por %p103, %p104
      %p106 = scmp.ne.s32.totalorder %s98, %s101
      %p107 = scmp.eq.s32.totalorder %s13, 0
      %p108 = por %p106, %p107
      %p109 = scmp.ne.s32.totalorder %s98, %s101
      %p110 = scmp.eq.s32.totalorder %s18, 1
      %p111 = por %p109, %p110
      %p112 = scmp.ne.s32.totalorder %s101, %s102
      %p113 = scmp.eq.s32.totalorder %s18, 0
      %p114 = por %p112, %p113
      %p115 = scmp.ne.s32.totalorder %s101, %s102
      %p116 = scmp.eq.s32.totalorder %s19, 1
      %p117 = por %p115, %p116
      %p119 = scmp.ne.s32.totalorder %s102, %s118
      %p120 = scmp.eq.s32.totalorder %s19, 0
      %p121 = por %p119, %p120
      %s122 = ssub.s32 %s20, %s39
      %s123 = ssub.s32 %s21, %s35
      %s124 = sor.u32 %s122, %s123
      %p125 = scmp.eq.s32.totalorder %s124, 0
      %s127 = sadd.s32 %s126, 1
      %s128 = scalar_select %p125, %s126, %s127
      %p131 = pneg %p125
      %p132 = scmp.eq.s32.totalorder %s13, 1
      %p133 = por %p131, %p132
      %p134 = scmp.ne.s32.totalorder %s126, %s129
      %p135 = scmp.eq.s32.totalorder %s13, 0
      %p136 = por %p134, %p135
      %p137 = scmp.ne.s32.totalorder %s126, %s129
      %p138 = scmp.eq.s32.totalorder %s18, 1
      %p139 = por %p137, %p138
      %p140 = scmp.ne.s32.totalorder %s129, %s130
      %p141 = scmp.eq.s32.totalorder %s18, 0
      %p142 = por %p140, %p141
      %p143 = scmp.ne.s32.totalorder %s129, %s130
      %p144 = scmp.eq.s32.totalorder %s19, 1
      %p145 = por %p143, %p144
      %p147 = scmp.ne.s32.totalorder %s130, %s146
      %p148 = scmp.eq.s32.totalorder %s19, 0
      %p149 = por %p147, %p148
      %s150 = ssub.s32 %s20, %s39
      %s151 = ssub.s32 %s21, %s35
      %s152 = sor.u32 %s150, %s151
      %p153 = scmp.eq.s32.totalorder %s152, 0
      %s155 = sadd.s32 %s154, 1
      %s156 = scalar_select %p153, %s154, %s155
      %p159 = pneg %p153
      %p160 = scmp.eq.s32.totalorder %s13, 1
      %p161 = por %p159, %p160
      %p162 = scmp.ne.s32.totalorder %s154, %s157
      %p163 = scmp.eq.s32.totalorder %s13, 0
      %p164 = por %p162, %p163
      %p165 = scmp.ne.s32.totalorder %s154, %s157
      %p166 = scmp.eq.s32.totalorder %s18, 1
      %p167 = por %p165, %p166
      %p168 = scmp.ne.s32.totalorder %s157, %s158
      %p169 = scmp.eq.s32.totalorder %s18, 0
      %p170 = por %p168, %p169
      %p171 = scmp.ne.s32.totalorder %s157, %s158
      %p172 = scmp.eq.s32.totalorder %s19, 1
      %p173 = por %p171, %p172
      %p175 = scmp.ne.s32.totalorder %s158, %s174
      %p176 = scmp.eq.s32.totalorder %s19, 0
      %p177 = por %p175, %p176
      %p178 = scmp.le.s32.totalorder 1, %s13
      %p179 = scmp.lt.s32.totalorder %s13, 3
      %p180 = pnand %p178, %p179
      %p181 = pneg %p180
      // Predicated region
      $region9: #{tunable_whisper_audio_encoder.25} parent=5 // pred_check
        _
      $region10: #{tunable_whisper_audio_encoder.25} parent=5 // pred_check_branch
        %183 = sbr.rel (%p180) target = $region12
      $region11: #{tunable_whisper_audio_encoder.25} parent=5 // pred_region
        %s184 = ssub.s32 %s13, 1
        // Predicated region
        $region13: #{tunable_whisper_audio_encoder.25} parent=11 // pred_check
          %p185 = pneg %p114
        $region14: #{tunable_whisper_audio_encoder.25} parent=11 // pred_check_branch
          %187 = sbr.rel (%p185) target = $region16
        $region15: #{tunable_whisper_audio_encoder.25} parent=11 // pred_region
          %s188 = smul.u32 2, %s24
          %p189 = scmp.lt.s32.totalorder %s188, 1
          %s190 = scalar_select %p189, %s188, 1
          %s191 = scalar_lea.vmem %s2, %s190
          %s192 = smul.u32 2, %s24
        $region16: #{tunable_whisper_audio_encoder.25} parent=11 // pred_fallthru
          _
        // Predicated region
        $region17: #{tunable_whisper_audio_encoder.25} parent=11 // pred_check
          %p193 = pneg %p142
        $region18: #{tunable_whisper_audio_encoder.25} parent=11 // pred_check_branch
          %195 = sbr.rel (%p193) target = $region20
        $region19: #{tunable_whisper_audio_encoder.25} parent=11 // pred_region
          %s196 = smul.u32 4, %s23
          %s197 = smul.u32 2, %s24
          %p198 = scmp.lt.s32.totalorder %s196, 3
          %s199 = scalar_select %p198, %s196, 3
          %p200 = scmp.lt.s32.totalorder %s197, 1
          %s201 = scalar_select %p200, %s197, 1
          %s202 = smul.addr %s199, 2
          %s203 = sadd.s32 %s201, %s202
          %s204 = smul.addr %s203, 4
          %s205 = scalar_lea.vmem %s3, %s204
          %s206 = smul.u32 4, %s23
          %s207 = smul.u32 2, %s24
        $region20: #{tunable_whisper_audio_encoder.25} parent=11 // pred_fallthru
          _
      $region12: #{tunable_whisper_audio_encoder.25} parent=5 // pred_fallthru
        _
      %p208 = scmp.lt.s32.totalorder %s13, 2
      // Predicated region
      $region21: #{tunable_whisper_audio_encoder.25} parent=5 // pred_check
        %p209 = pneg %p208
      $region22: #{tunable_whisper_audio_encoder.25} parent=5 // pred_check_branch
        %211 = sbr.rel (%p209) target = $region24
      $region23: #{tunable_whisper_audio_encoder.25} parent=5 // pred_region
        // Predicated region
        $region25: #{tunable_whisper_audio_encoder.25} parent=23 // pred_check
          %p212 = pneg %p54
        $region26: #{tunable_whisper_audio_encoder.25} parent=23 // pred_check_branch
          %214 = sbr.rel (%p212) target = $region28
        $region27: #{tunable_whisper_audio_encoder.25} parent=23 // pred_region
          %s215 = sand.u32 %s44, 1
          %s216 = sand.u32 %s44, 1
          %s217 = smul.addr %s216, 64
          %s218 = scalar_lea.vmem [#allocation3], %s217
          %s219 = smul.u32 4, %s20
          %s220 = smul.u32 4, %s22
          %s221 = smul.addr %s219, 8
          %s222 = sadd.s32 %s220, %s221
          %s223 = smul.addr %s222, 4
          %s224 = scalar_lea.vmem %s0, %s223
          // Predicated region
          $region29: #{tunable_whisper_audio_encoder.25} parent=27 // pred_check
            _
          $region30: #{tunable_whisper_audio_encoder.25} parent=27 // pred_check_branch
            %226 = sbr.rel (0) target = $region32
          $region31: #{tunable_whisper_audio_encoder.25} parent=27 // pred_region
            // Predicated region
            $region33: #{tunable_whisper_audio_encoder.25} parent=31 // pred_check
              _
            $region34: #{tunable_whisper_audio_encoder.25} parent=31 // pred_check_branch
              %228 = sbr.rel (0) target = $region36
            $region35: #{tunable_whisper_audio_encoder.25} parent=31 // pred_region
              loop: start=0, step=1, limit=1
              $region37: #{tunable_whisper_audio_encoder.25} parent=35 // loop_pre_header
                _
              $region38: #{tunable_whisper_audio_encoder.25} parent=35 // loop_header
                %s230 = sphi 0, %s234
                %p231 = scmp.ge.s32.totalorder %s230, 1
                %s235 = sphi %s224, %s224
                %s236 = sphi %s218, %s218
              $region39: #{tunable_whisper_audio_encoder.25} parent=35 // loop_header_branch
                %233 = sbr.rel (%p231) target = $region43
              $region40: #{tunable_whisper_audio_encoder.25} parent=35 // loop_body
                %v237 = vld [vmem:[%s235] sm:$0xff]
                %238 = vst [vmem:[%s236] sm:$0xff] %v237
                %v239 = vld [vmem:[%s235 + $0x8] sm:$0xff]
                %240 = vst [vmem:[%s236 + $0x8] sm:$0xff] %v239
                %v241 = vld [vmem:[%s235 + $0x20] sm:$0xff]
                %242 = vst [vmem:[%s236 + $0x10] sm:$0xff] %v241
                %v243 = vld [vmem:[%s235 + $0x28] sm:$0xff]
                %244 = vst [vmem:[%s236 + $0x18] sm:$0xff] %v243
                %v245 = vld [vmem:[%s235 + $0x40] sm:$0xff]
                %246 = vst [vmem:[%s236 + $0x20] sm:$0xff] %v245
                %v247 = vld [vmem:[%s235 + $0x48] sm:$0xff]
                %248 = vst [vmem:[%s236 + $0x28] sm:$0xff] %v247
                %v249 = vld [vmem:[%s235 + $0x60] sm:$0xff]
                %250 = vst [vmem:[%s236 + $0x30] sm:$0xff] %v249
                %v251 = vld [vmem:[%s235 + $0x68] sm:$0xff]
                %252 = vst [vmem:[%s236 + $0x38] sm:$0xff] %v251
              $region41: #{tunable_whisper_audio_encoder.25} parent=35 // loop_footer
                %s234 = sadd.s32 1, %s230
              $region42: #{tunable_whisper_audio_encoder.25} parent=35 // loop_footer_branch
                %229 = sbr.rel target = $region38
              $region43: #{tunable_whisper_audio_encoder.25} parent=35 // loop_exit
                _
            $region36: #{tunable_whisper_audio_encoder.25} parent=31 // pred_fallthru
              _
            // Predicated region
            $region44: #{tunable_whisper_audio_encoder.25} parent=31 // pred_check
              _
            $region45: #{tunable_whisper_audio_encoder.25} parent=31 // pred_check_branch
              %254 = sbr.rel target = $region47
            $region46: #{tunable_whisper_audio_encoder.25} parent=31 // pred_region
              _
            $region47: #{tunable_whisper_audio_encoder.25} parent=31 // pred_fallthru
              _
          $region32: #{tunable_whisper_audio_encoder.25} parent=27 // pred_fallthru
            _
          %255 = vnop
        $region28: #{tunable_whisper_audio_encoder.25} parent=23 // pred_fallthru
          _
        // Predicated region
        $region48: #{tunable_whisper_audio_encoder.25} parent=23 // pred_check
          %p256 = pneg %p82
        $region49: #{tunable_whisper_audio_encoder.25} parent=23 // pred_check_branch
          %258 = sbr.rel (%p256) target = $region51
        $region50: #{tunable_whisper_audio_encoder.25} parent=23 // pred_region
          %s259 = sand.u32 %s72, 1
          %s260 = scalar_lea.sflag [#allocation5], %s259
          %s261 = sand.u32 %s72, 1
          %s262 = smul.addr %s261, 512
          %s263 = scalar_lea.vmem [#allocation4], %s262
          %s264 = smul.u32 64, %s22
          %s265 = smul.u32 2, %s21
          %267 = vsyncadd %s260, 0
          %s268 = smul.addr %s264, 2
          %s269 = sadd.s32 %s265, %s268
          %s270 = smul.addr %s269, 4
          %s271 = scalar_lea.hbm %s1, %s270
          %s272 = sshll.u32 %s271, 4
          %s273 = int_to_ptr.hbm [resolvable:$true] %s272
          %s274 = sshll.u32 %s263, 4
          %s275 = int_to_ptr.vmem [resolvable:$true] %s274
          %280 = dma.hbm_to_vmem [thread:$0]  %s273, 8192, %s275, %s260, 128, 128, 8
        $region51: #{tunable_whisper_audio_encoder.25} parent=23 // pred_fallthru
          _
      $region24: #{tunable_whisper_audio_encoder.25} parent=5 // pred_fallthru
        _
      %p281 = scmp.le.s32.totalorder 1, %s13
      %p282 = scmp.lt.s32.totalorder %s13, 3
      %p283 = pnand %p281, %p282
      %p284 = pneg %p283
      // Predicated region
      $region52: #{tunable_whisper_audio_encoder.25} parent=5 // pred_check
        _
      $region53: #{tunable_whisper_audio_encoder.25} parent=5 // pred_check_branch
        %286 = sbr.rel (%p283) target = $region55
      $region54: #{tunable_whisper_audio_encoder.25} parent=5 // pred_region
        %s287 = ssub.s32 %s13, 1
        %s288 = sand.u32 %s47, 1
        %s289 = sand.u32 %s47, 1
        %s290 = smul.addr %s289, 64
        %s291 = scalar_lea.vmem [#allocation3], %s290
        // Predicated region
        $region56: #{tunable_whisper_audio_encoder.25} parent=54 // pred_check
          %p292 = pneg %p60
        $region57: #{tunable_whisper_audio_encoder.25} parent=54 // pred_check_branch
          %294 = sbr.rel (%p292) target = $region59
        $region58: #{tunable_whisper_audio_encoder.25} parent=54 // pred_region
          _
        $region59: #{tunable_whisper_audio_encoder.25} parent=54 // pred_fallthru
          _
        %s295 = sand.u32 %s75, 1
        %s296 = scalar_lea.sflag [#allocation5], %s295
        %s297 = sand.u32 %s75, 1
        %s298 = smul.addr %s297, 512
        %s299 = scalar_lea.vmem [#allocation4], %s298
        // Predicated region
        $region60: #{tunable_whisper_audio_encoder.25} parent=54 // pred_check
          %p300 = pneg %p88
        $region61: #{tunable_whisper_audio_encoder.25} parent=54 // pred_check_branch
          %302 = sbr.rel (%p300) target = $region63
        $region62: #{tunable_whisper_audio_encoder.25} parent=54 // pred_region
          %304 = dma.done %s296, 8192
        $region63: #{tunable_whisper_audio_encoder.25} parent=54 // pred_fallthru
          _
        %s305 = sand.u32 %s47, 1
        %s306 = sand.u32 %s47, 1
        %s307 = smul.addr %s306, 64
        %s308 = scalar_lea.vmem [#allocation3], %s307
        %p309 = pneg %p60
        %p310 = pneg %p57
        %s311 = sand.u32 %s75, 1
        %s312 = scalar_lea.sflag [#allocation5], %s311
        %s313 = sand.u32 %s75, 1
        %s314 = smul.addr %s313, 512
        %s315 = scalar_lea.vmem [#allocation4], %s314
        %p316 = pneg %p88
        %p317 = pneg %p85
        %s318 = smul.u32 2, %s24
        %p319 = scmp.lt.s32.totalorder %s318, 1
        %s320 = scalar_select %p319, %s318, 1
        %s321 = scalar_lea.vmem %s2, %s320
        %p322 = pneg %p114
        %p323 = pneg %p111
        %s324 = smul.u32 4, %s23
        %s325 = smul.u32 2, %s24
        %p326 = scmp.lt.s32.totalorder %s324, 3
        %s327 = scalar_select %p326, %s324, 3
        %p328 = scmp.lt.s32.totalorder %s325, 1
        %s329 = scalar_select %p328, %s325, 1
        %s330 = smul.addr %s327, 2
        %s331 = sadd.s32 %s329, %s330
        %s332 = smul.addr %s331, 4
        %s333 = scalar_lea.vmem %s3, %s332
        %p334 = pneg %p142
        %p335 = pneg %p139
        %p336 = pneg %p170
        %p337 = pneg %p167
        %s338 = smul.u32 4, %s23
        %s339 = smul.u32 2, %s24
        %p340 = scmp.lt.s32.totalorder %s338, 3
        %s341 = scalar_select %p340, %s338, 3
        %p342 = scmp.lt.s32.totalorder %s339, 1
        %s343 = scalar_select %p342, %s339, 1
        %s344 = smul.addr %s341, 2
        %s345 = sadd.s32 %s343, %s344
        %s346 = smul.addr %s345, 4
        %s347 = scalar_lea.vmem %s4, %s346
        %s348 = smul.u32 4, %s23
        %s349 = smul.u32 4, %s25
        %s350 = smul.u32 64, %s25
        %s351 = smul.u32 2, %s24
        %s352 = smul.u32 2, %s24
        %p353 = scmp.lt.s32.totalorder %s352, 1
        %s354 = scalar_select %p353, %s352, 1
        %s355 = scalar_lea.vmem %s2, %s354
        %s356 = smul.u32 2, %s24
        %s357 = smul.u32 4, %s23
        %s358 = smul.u32 2, %s24
        %p359 = scmp.lt.s32.totalorder %s357, 3
        %s360 = scalar_select %p359, %s357, 3
        %p361 = scmp.lt.s32.totalorder %s358, 1
        %s362 = scalar_select %p361, %s358, 1
        %s363 = smul.addr %s360, 2
        %s364 = sadd.s32 %s362, %s363
        %s365 = smul.addr %s364, 4
        %s366 = scalar_lea.vmem %s3, %s365
        %s367 = smul.u32 4, %s23
        %s368 = smul.u32 2, %s24
        %s369 = smul.u32 4, %s23
        %s370 = smul.u32 2, %s24
        %p371 = scmp.lt.s32.totalorder %s369, 3
        %s372 = scalar_select %p371, %s369, 3
        %p373 = scmp.lt.s32.totalorder %s370, 1
        %s374 = scalar_select %p373, %s370, 1
        %s375 = smul.addr %s372, 2
        %s376 = sadd.s32 %s374, %s375
        %s377 = smul.addr %s376, 4
        %s378 = scalar_lea.vmem %s4, %s377
        %s379 = smul.u32 4, %s23
        %s380 = smul.u32 2, %s24
        %p381 = scmp.eq.s32.totalorder %s25, 0
        // Predicated region
        $region64: #{tunable_whisper_audio_encoder.25} parent=54 // pred_check
          %p382 = pneg %p381
        $region65: #{tunable_whisper_audio_encoder.25} parent=54 // pred_check_branch
          %384 = sbr.rel (%p382) target = $region67
        $region66: #{tunable_whisper_audio_encoder.25} parent=54 // pred_region
          %385 = vst [vmem:[#allocation2] sm:$0xff] 0.0
          %386 = vst [vmem:[#allocation2 + $0x8] sm:$0xff] 0.0
          %387 = vst [vmem:[#allocation2 + $0x10] sm:$0xff] 0.0
          %388 = vst [vmem:[#allocation2 + $0x18] sm:$0xff] 0.0
          %389 = vst [vmem:[#allocation2 + $0x20] sm:$0xff] 0.0
          %390 = vst [vmem:[#allocation2 + $0x28] sm:$0xff] 0.0
          %391 = vst [vmem:[#allocation2 + $0x30] sm:$0xff] 0.0
          %392 = vst [vmem:[#allocation2 + $0x38] sm:$0xff] 0.0
        $region67: #{tunable_whisper_audio_encoder.25} parent=54 // pred_fallthru
          _
        %v393 = vld [vmem:[#allocation2] sm:$0xff]
        %v394 = vld [vmem:[#allocation2 + $0x8] sm:$0xff]
        %v395 = vld [vmem:[#allocation2 + $0x10] sm:$0xff]
        %v396 = vld [vmem:[#allocation2 + $0x18] sm:$0xff]
        %v397 = vld [vmem:[#allocation2 + $0x20] sm:$0xff]
        %v398 = vld [vmem:[#allocation2 + $0x28] sm:$0xff]
        %v399 = vld [vmem:[#allocation2 + $0x30] sm:$0xff]
        %v400 = vld [vmem:[#allocation2 + $0x38] sm:$0xff]
        %v401 = vld [vmem:[%s291] sm:$0xff]
        %v402 = vld [vmem:[%s291 + $0x8] sm:$0xff]
        %v403 = vld [vmem:[%s291 + $0x10] sm:$0xff]
        %v404 = vld [vmem:[%s291 + $0x18] sm:$0xff]
        %v405 = vld [vmem:[%s291 + $0x20] sm:$0xff]
        %v406 = vld [vmem:[%s291 + $0x28] sm:$0xff]
        %v407 = vld [vmem:[%s291 + $0x30] sm:$0xff]
        %v408 = vld [vmem:[%s291 + $0x38] sm:$0xff]
        %v409 = vld [vmem:[%s299] sm:$0xff]
        %v410 = vld [vmem:[%s299 + $0x8] sm:$0xff]
        %v411 = vld [vmem:[%s299 + $0x10] sm:$0xff]
        %v412 = vld [vmem:[%s299 + $0x18] sm:$0xff]
        %v413 = vld [vmem:[%s299 + $0x20] sm:$0xff]
        %v414 = vld [vmem:[%s299 + $0x28] sm:$0xff]
        %v415 = vld [vmem:[%s299 + $0x30] sm:$0xff]
        %v416 = vld [vmem:[%s299 + $0x38] sm:$0xff]
        %v417 = vld [vmem:[%s299 + $0x40] sm:$0xff]
        %v418 = vld [vmem:[%s299 + $0x48] sm:$0xff]
        %v419 = vld [vmem:[%s299 + $0x50] sm:$0xff]
        %v420 = vld [vmem:[%s299 + $0x58] sm:$0xff]
        %v421 = vld [vmem:[%s299 + $0x60] sm:$0xff]
        %v422 = vld [vmem:[%s299 + $0x68] sm:$0xff]
        %v423 = vld [vmem:[%s299 + $0x70] sm:$0xff]
        %v424 = vld [vmem:[%s299 + $0x78] sm:$0xff]
        %v425 = vld [vmem:[%s299 + $0x80] sm:$0xff]
        %v426 = vld [vmem:[%s299 + $0x88] sm:$0xff]
        %v427 = vld [vmem:[%s299 + $0x90] sm:$0xff]
        %v428 = vld [vmem:[%s299 + $0x98] sm:$0xff]
        %v429 = vld [vmem:[%s299 + $0xa0] sm:$0xff]
        %v430 = vld [vmem:[%s299 + $0xa8] sm:$0xff]
        %v431 = vld [vmem:[%s299 + $0xb0] sm:$0xff]
        %v432 = vld [vmem:[%s299 + $0xb8] sm:$0xff]
        %v433 = vld [vmem:[%s299 + $0xc0] sm:$0xff]
        %v434 = vld [vmem:[%s299 + $0xc8] sm:$0xff]
        %v435 = vld [vmem:[%s299 + $0xd0] sm:$0xff]
        %v436 = vld [vmem:[%s299 + $0xd8] sm:$0xff]
        %v437 = vld [vmem:[%s299 + $0xe0] sm:$0xff]
        %v438 = vld [vmem:[%s299 + $0xe8] sm:$0xff]
        %v439 = vld [vmem:[%s299 + $0xf0] sm:$0xff]
        %v440 = vld [vmem:[%s299 + $0xf8] sm:$0xff]
        %v441 = vld [vmem:[%s299 + $0x100] sm:$0xff]
        %v442 = vld [vmem:[%s299 + $0x108] sm:$0xff]
        %v443 = vld [vmem:[%s299 + $0x110] sm:$0xff]
        %v444 = vld [vmem:[%s299 + $0x118] sm:$0xff]
        %v445 = vld [vmem:[%s299 + $0x120] sm:$0xff]
        %v446 = vld [vmem:[%s299 + $0x128] sm:$0xff]
        %v447 = vld [vmem:[%s299 + $0x130] sm:$0xff]
        %v448 = vld [vmem:[%s299 + $0x138] sm:$0xff]
        %v449 = vld [vmem:[%s299 + $0x140] sm:$0xff]
        %v450 = vld [vmem:[%s299 + $0x148] sm:$0xff]
        %v451 = vld [vmem:[%s299 + $0x150] sm:$0xff]
        %v452 = vld [vmem:[%s299 + $0x158] sm:$0xff]
        %v453 = vld [vmem:[%s299 + $0x160] sm:$0xff]
        %v454 = vld [vmem:[%s299 + $0x168] sm:$0xff]
        %v455 = vld [vmem:[%s299 + $0x170] sm:$0xff]
        %v456 = vld [vmem:[%s299 + $0x178] sm:$0xff]
        %v457 = vld [vmem:[%s299 + $0x180] sm:$0xff]
        %v458 = vld [vmem:[%s299 + $0x188] sm:$0xff]
        %v459 = vld [vmem:[%s299 + $0x190] sm:$0xff]
        %v460 = vld [vmem:[%s299 + $0x198] sm:$0xff]
        %v461 = vld [vmem:[%s299 + $0x1a0] sm:$0xff]
        %v462 = vld [vmem:[%s299 + $0x1a8] sm:$0xff]
        %v463 = vld [vmem:[%s299 + $0x1b0] sm:$0xff]
        %v464 = vld [vmem:[%s299 + $0x1b8] sm:$0xff]
        %v465 = vld [vmem:[%s299 + $0x1c0] sm:$0xff]
        %v466 = vld [vmem:[%s299 + $0x1c8] sm:$0xff]
        %v467 = vld [vmem:[%s299 + $0x1d0] sm:$0xff]
        %v468 = vld [vmem:[%s299 + $0x1d8] sm:$0xff]
        %v469 = vld [vmem:[%s299 + $0x1e0] sm:$0xff]
        %v470 = vld [vmem:[%s299 + $0x1e8] sm:$0xff]
        %v471 = vld [vmem:[%s299 + $0x1f0] sm:$0xff]
        %v472 = vld [vmem:[%s299 + $0x1f8] sm:$0xff]
        %v481 = vunpack.c.l.b16 %v401
        %v482 = vunpack.c.h.b16 %v401
        %v483 = vunpack.c.l.b16 %v402
        %v484 = vunpack.c.h.b16 %v402
        %v485 = vunpack.c.l.b16 %v403
        %v486 = vunpack.c.h.b16 %v403
        %v487 = vunpack.c.l.b16 %v404
        %v488 = vunpack.c.h.b16 %v404
        %v489 = vunpack.c.l.b16 %v405
        %v490 = vunpack.c.h.b16 %v405
        %v491 = vunpack.c.l.b16 %v406
        %v492 = vunpack.c.h.b16 %v406
        %v493 = vunpack.c.l.b16 %v407
        %v494 = vunpack.c.h.b16 %v407
        %v495 = vunpack.c.l.b16 %v408
        %v496 = vunpack.c.h.b16 %v408
        %v497 = vpack.c.b16 %v485, %v481
        %v498 = vpack.c.b16 %v486, %v482
        %v499 = vpack.c.b16 %v487, %v483
        %v500 = vpack.c.b16 %v488, %v484
        %v501 = vpack.c.b16 %v493, %v489
        %v502 = vpack.c.b16 %v494, %v490
        %v503 = vpack.c.b16 %v495, %v491
        %v504 = vpack.c.b16 %v496, %v492
        %v577 = vunpack.c.l.b16 %v409
        %v578 = vunpack.c.h.b16 %v409
        %v579 = vunpack.c.l.b16 %v410
        %v580 = vunpack.c.h.b16 %v410
        %v581 = vunpack.c.l.b16 %v411
        %v582 = vunpack.c.h.b16 %v411
        %v583 = vunpack.c.l.b16 %v412
        %v584 = vunpack.c.h.b16 %v412
        %v585 = vunpack.c.l.b16 %v413
        %v586 = vunpack.c.h.b16 %v413
        %v587 = vunpack.c.l.b16 %v414
        %v588 = vunpack.c.h.b16 %v414
        %v589 = vunpack.c.l.b16 %v415
        %v590 = vunpack.c.h.b16 %v415
        %v591 = vunpack.c.l.b16 %v416
        %v592 = vunpack.c.h.b16 %v416
        %v593 = vunpack.c.l.b16 %v417
        %v594 = vunpack.c.h.b16 %v417
        %v595 = vunpack.c.l.b16 %v418
        %v596 = vunpack.c.h.b16 %v418
        %v597 = vunpack.c.l.b16 %v419
        %v598 = vunpack.c.h.b16 %v419
        %v599 = vunpack.c.l.b16 %v420
        %v600 = vunpack.c.h.b16 %v420
        %v601 = vunpack.c.l.b16 %v421
        %v602 = vunpack.c.h.b16 %v421
        %v603 = vunpack.c.l.b16 %v422
        %v604 = vunpack.c.h.b16 %v422
        %v605 = vunpack.c.l.b16 %v423
        %v606 = vunpack.c.h.b16 %v423
        %v607 = vunpack.c.l.b16 %v424
        %v608 = vunpack.c.h.b16 %v424
        %v609 = vunpack.c.l.b16 %v425
        %v610 = vunpack.c.h.b16 %v425
        %v611 = vunpack.c.l.b16 %v426
        %v612 = vunpack.c.h.b16 %v426
        %v613 = vunpack.c.l.b16 %v427
        %v614 = vunpack.c.h.b16 %v427
        %v615 = vunpack.c.l.b16 %v428
        %v616 = vunpack.c.h.b16 %v428
        %v617 = vunpack.c.l.b16 %v429
        %v618 = vunpack.c.h.b16 %v429
        %v619 = vunpack.c.l.b16 %v430
        %v620 = vunpack.c.h.b16 %v430
        %v621 = vunpack.c.l.b16 %v431
        %v622 = vunpack.c.h.b16 %v431
        %v623 = vunpack.c.l.b16 %v432
        %v624 = vunpack.c.h.b16 %v432
        %v625 = vunpack.c.l.b16 %v433
        %v626 = vunpack.c.h.b16 %v433
        %v627 = vunpack.c.l.b16 %v434
        %v628 = vunpack.c.h.b16 %v434
        %v629 = vunpack.c.l.b16 %v435
        %v630 = vunpack.c.h.b16 %v435
        %v631 = vunpack.c.l.b16 %v436
        %v632 = vunpack.c.h.b16 %v436
        %v633 = vunpack.c.l.b16 %v437
        %v634 = vunpack.c.h.b16 %v437
        %v635 = vunpack.c.l.b16 %v438
        %v636 = vunpack.c.h.b16 %v438
        %v637 = vunpack.c.l.b16 %v439
        %v638 = vunpack.c.h.b16 %v439
        %v639 = vunpack.c.l.b16 %v440
        %v640 = vunpack.c.h.b16 %v440
        %v641 = vunpack.c.l.b16 %v441
        %v642 = vunpack.c.h.b16 %v441
        %v643 = vunpack.c.l.b16 %v442
        %v644 = vunpack.c.h.b16 %v442
        %v645 = vunpack.c.l.b16 %v443
        %v646 = vunpack.c.h.b16 %v443
        %v647 = vunpack.c.l.b16 %v444
        %v648 = vunpack.c.h.b16 %v444
        %v649 = vunpack.c.l.b16 %v445
        %v650 = vunpack.c.h.b16 %v445
        %v651 = vunpack.c.l.b16 %v446
        %v652 = vunpack.c.h.b16 %v446
        %v653 = vunpack.c.l.b16 %v447
        %v654 = vunpack.c.h.b16 %v447
        %v655 = vunpack.c.l.b16 %v448
        %v656 = vunpack.c.h.b16 %v448
        %v657 = vunpack.c.l.b16 %v449
        %v658 = vunpack.c.h.b16 %v449
        %v659 = vunpack.c.l.b16 %v450
        %v660 = vunpack.c.h.b16 %v450
        %v661 = vunpack.c.l.b16 %v451
        %v662 = vunpack.c.h.b16 %v451
        %v663 = vunpack.c.l.b16 %v452
        %v664 = vunpack.c.h.b16 %v452
        %v665 = vunpack.c.l.b16 %v453
        %v666 = vunpack.c.h.b16 %v453
        %v667 = vunpack.c.l.b16 %v454
        %v668 = vunpack.c.h.b16 %v454
        %v669 = vunpack.c.l.b16 %v455
        %v670 = vunpack.c.h.b16 %v455
        %v671 = vunpack.c.l.b16 %v456
        %v672 = vunpack.c.h.b16 %v456
        %v673 = vunpack.c.l.b16 %v457
        %v674 = vunpack.c.h.b16 %v457
        %v675 = vunpack.c.l.b16 %v458
        %v676 = vunpack.c.h.b16 %v458
        %v677 = vunpack.c.l.b16 %v459
        %v678 = vunpack.c.h.b16 %v459
        %v679 = vunpack.c.l.b16 %v460
        %v680 = vunpack.c.h.b16 %v460
        %v681 = vunpack.c.l.b16 %v461
        %v682 = vunpack.c.h.b16 %v461
        %v683 = vunpack.c.l.b16 %v462
        %v684 = vunpack.c.h.b16 %v462
        %v685 = vunpack.c.l.b16 %v463
        %v686 = vunpack.c.h.b16 %v463
        %v687 = vunpack.c.l.b16 %v464
        %v688 = vunpack.c.h.b16 %v464
        %v689 = vunpack.c.l.b16 %v465
        %v690 = vunpack.c.h.b16 %v465
        %v691 = vunpack.c.l.b16 %v466
        %v692 = vunpack.c.h.b16 %v466
        %v693 = vunpack.c.l.b16 %v467
        %v694 = vunpack.c.h.b16 %v467
        %v695 = vunpack.c.l.b16 %v468
        %v696 = vunpack.c.h.b16 %v468
        %v697 = vunpack.c.l.b16 %v469
        %v698 = vunpack.c.h.b16 %v469
        %v699 = vunpack.c.l.b16 %v470
        %v700 = vunpack.c.h.b16 %v470
        %v701 = vunpack.c.l.b16 %v471
        %v702 = vunpack.c.h.b16 %v471
        %v703 = vunpack.c.l.b16 %v472
        %v704 = vunpack.c.h.b16 %v472
        %v705 = vpack.c.b16 %v579, %v577
        %v706 = vpack.c.b16 %v580, %v578
        %v707 = vpack.c.b16 %v583, %v581
        %v708 = vpack.c.b16 %v584, %v582
        %v709 = vpack.c.b16 %v587, %v585
        %v710 = vpack.c.b16 %v588, %v586
        %v711 = vpack.c.b16 %v591, %v589
        %v712 = vpack.c.b16 %v592, %v590
        %v713 = vpack.c.b16 %v595, %v593
        %v714 = vpack.c.b16 %v596, %v594
        %v715 = vpack.c.b16 %v599, %v597
        %v716 = vpack.c.b16 %v600, %v598
        %v717 = vpack.c.b16 %v603, %v601
        %v718 = vpack.c.b16 %v604, %v602
        %v719 = vpack.c.b16 %v607, %v605
        %v720 = vpack.c.b16 %v608, %v606
        %v721 = vpack.c.b16 %v611, %v609
        %v722 = vpack.c.b16 %v612, %v610
        %v723 = vpack.c.b16 %v615, %v613
        %v724 = vpack.c.b16 %v616, %v614
        %v725 = vpack.c.b16 %v619, %v617
        %v726 = vpack.c.b16 %v620, %v618
        %v727 = vpack.c.b16 %v623, %v621
        %v728 = vpack.c.b16 %v624, %v622
        %v729 = vpack.c.b16 %v627, %v625
        %v730 = vpack.c.b16 %v628, %v626
        %v731 = vpack.c.b16 %v631, %v629
        %v732 = vpack.c.b16 %v632, %v630
        %v733 = vpack.c.b16 %v635, %v633
        %v734 = vpack.c.b16 %v636, %v634
        %v735 = vpack.c.b16 %v639, %v637
        %v736 = vpack.c.b16 %v640, %v638
        %v737 = vpack.c.b16 %v643, %v641
        %v738 = vpack.c.b16 %v644, %v642
        %v739 = vpack.c.b16 %v647, %v645
        %v740 = vpack.c.b16 %v648, %v646
        %v741 = vpack.c.b16 %v651, %v649
        %v742 = vpack.c.b16 %v652, %v650
        %v743 = vpack.c.b16 %v655, %v653
        %v744 = vpack.c.b16 %v656, %v654
        %v745 = vpack.c.b16 %v659, %v657
        %v746 = vpack.c.b16 %v660, %v658
        %v747 = vpack.c.b16 %v663, %v661
        %v748 = vpack.c.b16 %v664, %v662
        %v749 = vpack.c.b16 %v667, %v665
        %v750 = vpack.c.b16 %v668, %v666
        %v751 = vpack.c.b16 %v671, %v669
        %v752 = vpack.c.b16 %v672, %v670
        %v753 = vpack.c.b16 %v675, %v673
        %v754 = vpack.c.b16 %v676, %v674
        %v755 = vpack.c.b16 %v679, %v677
        %v756 = vpack.c.b16 %v680, %v678
        %v757 = vpack.c.b16 %v683, %v681
        %v758 = vpack.c.b16 %v684, %v682
        %v759 = vpack.c.b16 %v687, %v685
        %v760 = vpack.c.b16 %v688, %v686
        %v761 = vpack.c.b16 %v691, %v689
        %v762 = vpack.c.b16 %v692, %v690
        %v763 = vpack.c.b16 %v695, %v693
        %v764 = vpack.c.b16 %v696, %v694
        %v765 = vpack.c.b16 %v699, %v697
        %v766 = vpack.c.b16 %v700, %v698
        %v767 = vpack.c.b16 %v703, %v701
        %v768 = vpack.c.b16 %v704, %v702
        %833 = vmatpush.bf16.msra.mxu0 %v719
        %834 = vmatpush.bf16.msra.mxu0 %v717
        %835 = vmatpush.bf16.msra.mxu0 %v715
        %836 = vmatpush.bf16.msra.mxu0 %v713
        %837 = vmatpush.bf16.msra.mxu0 %v711
        %838 = vmatpush.bf16.msra.mxu0 %v709
        %839 = vmatpush.bf16.msra.mxu0 %v707
        %840 = vmatpush.bf16.msra.mxu0 %v705
        %841 = vmatmul.bf16.gmra.mxu0 %v497
        %v842 = vpop.f32.mrf.mxu0
        %v843 = vadd.f32 0.0, %v842
        %v844 = vpop.f32.mrf.mxu0
        %v845 = vadd.f32 0.0, %v844
        %846 = vmatmul.bf16.gmra.mxu0 %v501
        %v847 = vpop.f32.mrf.mxu0
        %v848 = vadd.f32 0.0, %v847
        %v849 = vpop.f32.mrf.mxu0
        %v850 = vadd.f32 0.0, %v849
        %851 = vdwg.mxu0
        %852 = vmatpush.bf16.msra.mxu0 %v735
        %853 = vmatpush.bf16.msra.mxu0 %v733
        %854 = vmatpush.bf16.msra.mxu0 %v731
        %855 = vmatpush.bf16.msra.mxu0 %v729
        %856 = vmatpush.bf16.msra.mxu0 %v727
        %857 = vmatpush.bf16.msra.mxu0 %v725
        %858 = vmatpush.bf16.msra.mxu0 %v723
        %859 = vmatpush.bf16.msra.mxu0 %v721
        %860 = vmatmul.bf16.gmra.mxu0 %v498
        %v861 = vpop.f32.mrf.mxu0
        %v862 = vadd.f32 %v843, %v861
        %v863 = vpop.f32.mrf.mxu0
        %v864 = vadd.f32 %v845, %v863
        %865 = vmatmul.bf16.gmra.mxu0 %v502
        %v866 = vpop.f32.mrf.mxu0
        %v867 = vadd.f32 %v848, %v866
        %v868 = vpop.f32.mrf.mxu0
        %v869 = vadd.f32 %v850, %v868
        %870 = vdwg.mxu0
        %871 = vmatpush.bf16.msra.mxu0 %v751
        %872 = vmatpush.bf16.msra.mxu0 %v749
        %873 = vmatpush.bf16.msra.mxu0 %v747
        %874 = vmatpush.bf16.msra.mxu0 %v745
        %875 = vmatpush.bf16.msra.mxu0 %v743
        %876 = vmatpush.bf16.msra.mxu0 %v741
        %877 = vmatpush.bf16.msra.mxu0 %v739
        %878 = vmatpush.bf16.msra.mxu0 %v737
        %879 = vmatmul.bf16.gmra.mxu0 %v499
        %v880 = vpop.f32.mrf.mxu0
        %v881 = vadd.f32 %v862, %v880
        %v882 = vpop.f32.mrf.mxu0
        %v883 = vadd.f32 %v864, %v882
        %884 = vmatmul.bf16.gmra.mxu0 %v503
        %v885 = vpop.f32.mrf.mxu0
        %v886 = vadd.f32 %v867, %v885
        %v887 = vpop.f32.mrf.mxu0
        %v888 = vadd.f32 %v869, %v887
        %889 = vdwg.mxu0
        %890 = vmatpush.bf16.msra.mxu0 %v767
        %891 = vmatpush.bf16.msra.mxu0 %v765
        %892 = vmatpush.bf16.msra.mxu0 %v763
        %893 = vmatpush.bf16.msra.mxu0 %v761
        %894 = vmatpush.bf16.msra.mxu0 %v759
        %895 = vmatpush.bf16.msra.mxu0 %v757
        %896 = vmatpush.bf16.msra.mxu0 %v755
        %897 = vmatpush.bf16.msra.mxu0 %v753
        %898 = vmatmul.bf16.gmra.mxu0 %v500
        %v899 = vpop.f32.mrf.mxu0
        %v900 = vadd.f32 %v881, %v899
        %v901 = vpop.f32.mrf.mxu0
        %v902 = vadd.f32 %v883, %v901
        %903 = vmatmul.bf16.gmra.mxu0 %v504
        %v904 = vpop.f32.mrf.mxu0
        %v905 = vadd.f32 %v886, %v904
        %v906 = vpop.f32.mrf.mxu0
        %v907 = vadd.f32 %v888, %v906
        %908 = vdwg.mxu0
        %909 = vmatpush.bf16.msra.mxu0 %v720
        %910 = vmatpush.bf16.msra.mxu0 %v718
        %911 = vmatpush.bf16.msra.mxu0 %v716
        %912 = vmatpush.bf16.msra.mxu0 %v714
        %913 = vmatpush.bf16.msra.mxu0 %v712
        %914 = vmatpush.bf16.msra.mxu0 %v710
        %915 = vmatpush.bf16.msra.mxu0 %v708
        %916 = vmatpush.bf16.msra.mxu0 %v706
        %917 = vmatmul.bf16.gmra.mxu0 %v497
        %v918 = vpop.f32.mrf.mxu0
        %v919 = vadd.f32 0.0, %v918
        %v920 = vpop.f32.mrf.mxu0
        %v921 = vadd.f32 0.0, %v920
        %922 = vmatmul.bf16.gmra.mxu0 %v501
        %v923 = vpop.f32.mrf.mxu0
        %v924 = vadd.f32 0.0, %v923
        %v925 = vpop.f32.mrf.mxu0
        %v926 = vadd.f32 0.0, %v925
        %927 = vdwg.mxu0
        %928 = vmatpush.bf16.msra.mxu0 %v736
        %929 = vmatpush.bf16.msra.mxu0 %v734
        %930 = vmatpush.bf16.msra.mxu0 %v732
        %931 = vmatpush.bf16.msra.mxu0 %v730
        %932 = vmatpush.bf16.msra.mxu0 %v728
        %933 = vmatpush.bf16.msra.mxu0 %v726
        %934 = vmatpush.bf16.msra.mxu0 %v724
        %935 = vmatpush.bf16.msra.mxu0 %v722
        %936 = vmatmul.bf16.gmra.mxu0 %v498
        %v937 = vpop.f32.mrf.mxu0
        %v938 = vadd.f32 %v919, %v937
        %v939 = vpop.f32.mrf.mxu0
        %v940 = vadd.f32 %v921, %v939
        %941 = vmatmul.bf16.gmra.mxu0 %v502
        %v942 = vpop.f32.mrf.mxu0
        %v943 = vadd.f32 %v924, %v942
        %v944 = vpop.f32.mrf.mxu0
        %v945 = vadd.f32 %v926, %v944
        %946 = vdwg.mxu0
        %947 = vmatpush.bf16.msra.mxu0 %v752
        %948 = vmatpush.bf16.msra.mxu0 %v750
        %949 = vmatpush.bf16.msra.mxu0 %v748
        %950 = vmatpush.bf16.msra.mxu0 %v746
        %951 = vmatpush.bf16.msra.mxu0 %v744
        %952 = vmatpush.bf16.msra.mxu0 %v742
        %953 = vmatpush.bf16.msra.mxu0 %v740
        %954 = vmatpush.bf16.msra.mxu0 %v738
        %955 = vmatmul.bf16.gmra.mxu0 %v499
        %v956 = vpop.f32.mrf.mxu0
        %v957 = vadd.f32 %v938, %v956
        %v958 = vpop.f32.mrf.mxu0
        %v959 = vadd.f32 %v940, %v958
        %960 = vmatmul.bf16.gmra.mxu0 %v503
        %v961 = vpop.f32.mrf.mxu0
        %v962 = vadd.f32 %v943, %v961
        %v963 = vpop.f32.mrf.mxu0
        %v964 = vadd.f32 %v945, %v963
        %965 = vdwg.mxu0
        %966 = vmatpush.bf16.msra.mxu0 %v768
        %967 = vmatpush.bf16.msra.mxu0 %v766
        %968 = vmatpush.bf16.msra.mxu0 %v764
        %969 = vmatpush.bf16.msra.mxu0 %v762
        %970 = vmatpush.bf16.msra.mxu0 %v760
        %971 = vmatpush.bf16.msra.mxu0 %v758
        %972 = vmatpush.bf16.msra.mxu0 %v756
        %973 = vmatpush.bf16.msra.mxu0 %v754
        %974 = vmatmul.bf16.gmra.mxu0 %v500
        %v975 = vpop.f32.mrf.mxu0
        %v976 = vadd.f32 %v957, %v975
        %v977 = vpop.f32.mrf.mxu0
        %v978 = vadd.f32 %v959, %v977
        %979 = vmatmul.bf16.gmra.mxu0 %v504
        %v980 = vpop.f32.mrf.mxu0
        %v981 = vadd.f32 %v962, %v980
        %v982 = vpop.f32.mrf.mxu0
        %v983 = vadd.f32 %v964, %v982
        %984 = vdwg.mxu0
        %v985 = vadd.f32 %v393, %v900
        %v986 = vadd.f32 %v394, %v976
        %v987 = vadd.f32 %v395, %v902
        %v988 = vadd.f32 %v396, %v978
        %v989 = vadd.f32 %v397, %v905
        %v990 = vadd.f32 %v398, %v981
        %v991 = vadd.f32 %v399, %v907
        %v992 = vadd.f32 %v400, %v983
        %993 = vst [vmem:[#allocation2] sm:$0xff] %v985
        %994 = vst [vmem:[#allocation2 + $0x8] sm:$0xff] %v986
        %995 = vst [vmem:[#allocation2 + $0x10] sm:$0xff] %v987
        %996 = vst [vmem:[#allocation2 + $0x18] sm:$0xff] %v988
        %997 = vst [vmem:[#allocation2 + $0x20] sm:$0xff] %v989
        %998 = vst [vmem:[#allocation2 + $0x28] sm:$0xff] %v990
        %999 = vst [vmem:[#allocation2 + $0x30] sm:$0xff] %v991
        %1000 = vst [vmem:[#allocation2 + $0x38] sm:$0xff] %v992
        %p1001 = scmp.eq.s32.totalorder %s25, 1
        // Predicated region
        $region68: #{tunable_whisper_audio_encoder.25} parent=54 // pred_check
          %p1002 = pneg %p1001
        $region69: #{tunable_whisper_audio_encoder.25} parent=54 // pred_check_branch
          %1004 = sbr.rel (%p1002) target = $region71
        $region70: #{tunable_whisper_audio_encoder.25} parent=54 // pred_region
          %v1005 = vld [vmem:[#allocation2] sm:$0xff]
          %v1006 = vld [vmem:[#allocation2 + $0x8] sm:$0xff]
          %v1007 = vld [vmem:[#allocation2 + $0x10] sm:$0xff]
          %v1008 = vld [vmem:[#allocation2 + $0x18] sm:$0xff]
          %v1009 = vld [vmem:[#allocation2 + $0x20] sm:$0xff]
          %v1010 = vld [vmem:[#allocation2 + $0x28] sm:$0xff]
          %v1011 = vld [vmem:[#allocation2 + $0x30] sm:$0xff]
          %v1012 = vld [vmem:[#allocation2 + $0x38] sm:$0xff]
          %v1013 = vld [vmem:[%s355] sm:$0x3]
          %v1015 = vperm.slane %v1013, 0
          %v1016 = vperm.slane %v1013, 1
          %v1019 = vadd.f32 %v1005, %v1015
          %v1020 = vadd.f32 %v1006, %v1016
          %v1021 = vadd.f32 %v1007, %v1015
          %v1022 = vadd.f32 %v1008, %v1016
          %v1023 = vadd.f32 %v1009, %v1015
          %v1024 = vadd.f32 %v1010, %v1016
          %v1025 = vadd.f32 %v1011, %v1015
          %v1026 = vadd.f32 %v1012, %v1016
          %v1027 = vld [vmem:[%s366] sm:$0xff]
          %v1028 = vld [vmem:[%s366 + $0x8] sm:$0xff]
          %v1029 = vld [vmem:[%s366 + $0x10] sm:$0xff]
          %v1030 = vld [vmem:[%s366 + $0x18] sm:$0xff]
          %v1031 = vunpack.c.l.bf16 %v1027
          %v1032 = vunpack.c.h.bf16 %v1027
          %v1033 = vunpack.c.l.bf16 %v1028
          %v1034 = vunpack.c.h.bf16 %v1028
          %v1035 = vunpack.c.l.bf16 %v1029
          %v1036 = vunpack.c.h.bf16 %v1029
          %v1037 = vunpack.c.l.bf16 %v1030
          %v1038 = vunpack.c.h.bf16 %v1030
          %v1039 = vadd.f32 %v1019, %v1031
          %v1040 = vadd.f32 %v1020, %v1032
          %v1041 = vadd.f32 %v1021, %v1033
          %v1042 = vadd.f32 %v1022, %v1034
          %v1043 = vadd.f32 %v1023, %v1035
          %v1044 = vadd.f32 %v1024, %v1036
          %v1045 = vadd.f32 %v1025, %v1037
          %v1046 = vadd.f32 %v1026, %v1038
          %v1047 = vpack.c.bf16 %v1040, %v1039
          %v1048 = vpack.c.bf16 %v1042, %v1041
          %v1049 = vpack.c.bf16 %v1044, %v1043
          %v1050 = vpack.c.bf16 %v1046, %v1045
          %1051 = vst [vmem:[%s378] sm:$0xff] %v1047
          %1052 = vst [vmem:[%s378 + $0x8] sm:$0xff] %v1048
          %1053 = vst [vmem:[%s378 + $0x10] sm:$0xff] %v1049
          %1054 = vst [vmem:[%s378 + $0x18] sm:$0xff] %v1050
        $region71: #{tunable_whisper_audio_encoder.25} parent=54 // pred_fallthru
          _
        %s1055 = smul.u32 4, %s23
        %s1056 = smul.u32 2, %s24
        %p1057 = scmp.lt.s32.totalorder %s1055, 3
        %s1058 = scalar_select %p1057, %s1055, 3
        %p1059 = scmp.lt.s32.totalorder %s1056, 1
        %s1060 = scalar_select %p1059, %s1056, 1
        %s1061 = smul.addr %s1058, 2
        %s1062 = sadd.s32 %s1060, %s1061
        %s1063 = smul.addr %s1062, 4
        %s1064 = scalar_lea.vmem %s4, %s1063
        // Predicated region
        $region72: #{tunable_whisper_audio_encoder.25} parent=54 // pred_check
          %p1065 = pneg %p167
        $region73: #{tunable_whisper_audio_encoder.25} parent=54 // pred_check_branch
          %1067 = sbr.rel (%p1065) target = $region75
        $region74: #{tunable_whisper_audio_encoder.25} parent=54 // pred_region
          %s1068 = smul.u32 4, %s23
          %s1069 = smul.u32 2, %s24
        $region75: #{tunable_whisper_audio_encoder.25} parent=54 // pred_fallthru
          _
        // Predicated region
        $region76: #{tunable_whisper_audio_encoder.25} parent=54 // pred_check
          %p1070 = pneg %p167
        $region77: #{tunable_whisper_audio_encoder.25} parent=54 // pred_check_branch
          %1072 = sbr.rel (%p1070) target = $region79
        $region78: #{tunable_whisper_audio_encoder.25} parent=54 // pred_region
          %s1073 = smul.u32 4, %s23
          %s1074 = smul.u32 2, %s24
          %p1075 = scmp.lt.s32.totalorder %s1073, 3
          %s1076 = scalar_select %p1075, %s1073, 3
          %p1077 = scmp.lt.s32.totalorder %s1074, 1
          %s1078 = scalar_select %p1077, %s1074, 1
          %s1079 = smul.addr %s1076, 2
          %s1080 = sadd.s32 %s1078, %s1079
          %s1081 = smul.addr %s1080, 4
          %s1082 = scalar_lea.vmem %s4, %s1081
        $region79: #{tunable_whisper_audio_encoder.25} parent=54 // pred_fallthru
          _
      $region55: #{tunable_whisper_audio_encoder.25} parent=5 // pred_fallthru
        _
      %p1083 = scmp.le.s32.totalorder 2, %s13
      // Predicated region
      $region80: #{tunable_whisper_audio_encoder.25} parent=5 // pred_check
        %p1084 = pneg %p1083
      $region81: #{tunable_whisper_audio_encoder.25} parent=5 // pred_check_branch
        %1086 = sbr.rel (%p1084) target = $region83
      $region82: #{tunable_whisper_audio_encoder.25} parent=5 // pred_region
        %s1087 = ssub.s32 %s13, 2
      $region83: #{tunable_whisper_audio_encoder.25} parent=5 // pred_fallthru
        _
    $region6: #{tunable_whisper_audio_encoder.25} parent=1 // loop_footer
      %s17 = sadd.s32 1, %s13
    $region7: #{tunable_whisper_audio_encoder.25} parent=1 // loop_footer_branch
      %12 = sbr.rel target = $region3
    $region8: #{tunable_whisper_audio_encoder.25} parent=1 // loop_exit
      _
    %1088 = vsyncpa [#allocation5], 1
    %s1089 = scalar_lea.sflag [#allocation5], 1
    %1090 = vsyncpa %s1089, 1

// kernel: tunable_whisper_audio_encoder.26
$region0: #{tunable_whisper_audio_encoder.26}
  #allocation0 [shape = 'u32[]', space=smem, size = 0x4, offset = 0x4, fixed_abs, tag = 'smem constant byte address 0x4 - core index']
  #allocation1 [shape = 'u32[72,128]{1,0:T(1,128)}', space=vmem, size = 0x9000, scoped, tag = 'internal scratch']
  %s0 = inlined_call_operand.vmem [shape: f32[1,256], index: 0, kind: input, shape index: {}]
  %s1 = inlined_call_operand.hbm [shape: f32[1,256], index: 1, kind: input, shape index: {}]
  %s2 = inlined_call_operand.vmem [shape: f32[8,16], index: 2, kind: input, shape index: {}]
  %s3 = inlined_call_operand.vmem [shape: bf16[2,16,256], index: 3, kind: input, shape index: {}]
  %s4 = inlined_call_operand.vmem [shape: bf16[2,8,256], index: 4, kind: output, shape index: {}]
  %s5 = sld [smem:[#allocation0]]
  $region53: #{tunable_whisper_audio_encoder.26} parent=0
    _
  %s7 = ssub.s32 1, %s5
  %s8 = scalar_select 0, %s7, %s5
  $region1: #{tunable_whisper_audio_encoder.26} parent=0
    #allocation2 [shape = 'u8[1024]{0}', space=vmem, size = 0x400, scoped, tag = 'input window, operand 1, single buffered']
    #allocation3 [shape = 's32[2]{0}', space=sflag, size = 0x8, scoped, tag = 'scoped memory for tunable_whisper_audio_encoder.26']
    %9 = vsyncpa [#allocation3], 0
    loop: start=0, step=1, limit=4
    $region2: #{tunable_whisper_audio_encoder.26} parent=1 // loop_pre_header
      _
    $region3: #{tunable_whisper_audio_encoder.26} parent=1 // loop_header
      %s11 = sphi 0, %s15
      %p12 = scmp.ge.s32.totalorder %s11, 4
      %s19 = sphi 0, %s19
      %s21 = sphi 0, %s19
      %s22 = sphi 0, %s21
      %s36 = sphi 0, %s22
      %s40 = sphi 0, %s40
      %s42 = sphi 0, %s40
      %s43 = sphi 0, %s42
      %s57 = sphi 0, %s43
      %s61 = sphi 0, %s61
      %s63 = sphi 0, %s61
      %s64 = sphi 0, %s63
      %s78 = sphi 0, %s64
      %s84 = sphi 0, %s86
      %s87 = sphi 0, %s84
      %s88 = sphi 0, %s87
      %s104 = sphi 0, %s88
      %s110 = sphi 0, %s112
      %s113 = sphi 0, %s110
      %s114 = sphi 0, %s113
      %s130 = sphi 0, %s114
    $region4: #{tunable_whisper_audio_encoder.26} parent=1 // loop_header_branch
      %14 = sbr.rel (%p12) target = $region8
    $region5: #{tunable_whisper_audio_encoder.26} parent=1 // loop_body
      %s16 = ssub.s32 %s11, 1
      %s17 = ssub.s32 %s11, 2
      %s18 = sadd.s32 %s11, 1
      %s20 = sadd.s32 %s19, 1
      %p23 = scmp.eq.s32.totalorder %s11, 1
      %p24 = scmp.ne.s32.totalorder %s19, %s21
      %p25 = scmp.eq.s32.totalorder %s11, 0
      %p26 = por %p24, %p25
      %p27 = scmp.ne.s32.totalorder %s19, %s21
      %p28 = scmp.eq.s32.totalorder %s16, 1
      %p29 = por %p27, %p28
      %p30 = scmp.ne.s32.totalorder %s21, %s22
      %p31 = scmp.eq.s32.totalorder %s16, 0
      %p32 = por %p30, %p31
      %p33 = scmp.ne.s32.totalorder %s21, %s22
      %p34 = scmp.eq.s32.totalorder %s17, 1
      %p35 = por %p33, %p34
      %p37 = scmp.ne.s32.totalorder %s22, %s36
      %p38 = scmp.eq.s32.totalorder %s17, 0
      %p39 = por %p37, %p38
      %s41 = sadd.s32 %s40, 1
      %p44 = scmp.eq.s32.totalorder %s11, 1
      %p45 = scmp.ne.s32.totalorder %s40, %s42
      %p46 = scmp.eq.s32.totalorder %s11, 0
      %p47 = por %p45, %p46
      %p48 = scmp.ne.s32.totalorder %s40, %s42
      %p49 = scmp.eq.s32.totalorder %s16, 1
      %p50 = por %p48, %p49
      %p51 = scmp.ne.s32.totalorder %s42, %s43
      %p52 = scmp.eq.s32.totalorder %s16, 0
      %p53 = por %p51, %p52
      %p54 = scmp.ne.s32.totalorder %s42, %s43
      %p55 = scmp.eq.s32.totalorder %s17, 1
      %p56 = por %p54, %p55
      %p58 = scmp.ne.s32.totalorder %s43, %s57
      %p59 = scmp.eq.s32.totalorder %s17, 0
      %p60 = por %p58, %p59
      %s62 = sadd.s32 %s61, 1
      %p65 = scmp.eq.s32.totalorder %s11, 1
      %p66 = scmp.ne.s32.totalorder %s61, %s63
      %p67 = scmp.eq.s32.totalorder %s11, 0
      %p68 = por %p66, %p67
      %p69 = scmp.ne.s32.totalorder %s61, %s63
      %p70 = scmp.eq.s32.totalorder %s16, 1
      %p71 = por %p69, %p70
      %p72 = scmp.ne.s32.totalorder %s63, %s64
      %p73 = scmp.eq.s32.totalorder %s16, 0
      %p74 = por %p72, %p73
      %p75 = scmp.ne.s32.totalorder %s63, %s64
      %p76 = scmp.eq.s32.totalorder %s17, 1
      %p77 = por %p75, %p76
      %p79 = scmp.ne.s32.totalorder %s64, %s78
      %p80 = scmp.eq.s32.totalorder %s17, 0
      %p81 = por %p79, %p80
      %s82 = ssub.s32 %s11, %s18
      %p83 = scmp.eq.s32.totalorder %s82, 0
      %s85 = sadd.s32 %s84, 1
      %s86 = scalar_select %p83, %s84, %s85
      %p89 = pneg %p83
      %p90 = scmp.eq.s32.totalorder %s11, 1
      %p91 = por %p89, %p90
      %p92 = scmp.ne.s32.totalorder %s84, %s87
      %p93 = scmp.eq.s32.totalorder %s11, 0
      %p94 = por %p92, %p93
      %p95 = scmp.ne.s32.totalorder %s84, %s87
      %p96 = scmp.eq.s32.totalorder %s16, 1
      %p97 = por %p95, %p96
      %p98 = scmp.ne.s32.totalorder %s87, %s88
      %p99 = scmp.eq.s32.totalorder %s16, 0
      %p100 = por %p98, %p99
      %p101 = scmp.ne.s32.totalorder %s87, %s88
      %p102 = scmp.eq.s32.totalorder %s17, 1
      %p103 = por %p101, %p102
      %p105 = scmp.ne.s32.totalorder %s88, %s104
      %p106 = scmp.eq.s32.totalorder %s17, 0
      %p107 = por %p105, %p106
      %s108 = ssub.s32 %s11, %s18
      %p109 = scmp.eq.s32.totalorder %s108, 0
      %s111 = sadd.s32 %s110, 1
      %s112 = scalar_select %p109, %s110, %s111
      %p115 = pneg %p109
      %p116 = scmp.eq.s32.totalorder %s11, 1
      %p117 = por %p115, %p116
      %p118 = scmp.ne.s32.totalorder %s110, %s113
      %p119 = scmp.eq.s32.totalorder %s11, 0
      %p120 = por %p118, %p119
      %p121 = scmp.ne.s32.totalorder %s110, %s113
      %p122 = scmp.eq.s32.totalorder %s16, 1
      %p123 = por %p121, %p122
      %p124 = scmp.ne.s32.totalorder %s113, %s114
      %p125 = scmp.eq.s32.totalorder %s16, 0
      %p126 = por %p124, %p125
      %p127 = scmp.ne.s32.totalorder %s113, %s114
      %p128 = scmp.eq.s32.totalorder %s17, 1
      %p129 = por %p127, %p128
      %p131 = scmp.ne.s32.totalorder %s114, %s130
      %p132 = scmp.eq.s32.totalorder %s17, 0
      %p133 = por %p131, %p132
      %p134 = scmp.le.s32.totalorder 1, %s11
      %p135 = scmp.lt.s32.totalorder %s11, 3
      %p136 = pnand %p134, %p135
      %p137 = pneg %p136
      // Predicated region
      $region9: #{tunable_whisper_audio_encoder.26} parent=5 // pred_check
        _
      $region10: #{tunable_whisper_audio_encoder.26} parent=5 // pred_check_branch
        %139 = sbr.rel (%p136) target = $region12
      $region11: #{tunable_whisper_audio_encoder.26} parent=5 // pred_region
        %s140 = ssub.s32 %s11, 1
        // Predicated region
        $region13: #{tunable_whisper_audio_encoder.26} parent=11 // pred_check
          %p141 = pneg %p32
        $region14: #{tunable_whisper_audio_encoder.26} parent=11 // pred_check_branch
          %143 = sbr.rel (%p141) target = $region16
        $region15: #{tunable_whisper_audio_encoder.26} parent=11 // pred_region
          _
        $region16: #{tunable_whisper_audio_encoder.26} parent=11 // pred_fallthru
          _
        // Predicated region
        $region17: #{tunable_whisper_audio_encoder.26} parent=11 // pred_check
          %p144 = pneg %p53
        $region18: #{tunable_whisper_audio_encoder.26} parent=11 // pred_check_branch
          %146 = sbr.rel (%p144) target = $region20
        $region19: #{tunable_whisper_audio_encoder.26} parent=11 // pred_region
          %148 = vsyncadd [#allocation3], 0
          %s150 = sshll.u32 %s1, 4
          %s151 = int_to_ptr.hbm [resolvable:$true] %s150
          %s152 = sshll.u32 [#allocation2], 4
          %s153 = int_to_ptr.vmem [resolvable:$true] %s152
          %155 = dma.hbm_to_vmem [thread:$0]  %s151, 32, %s153, [#allocation3]
        $region20: #{tunable_whisper_audio_encoder.26} parent=11 // pred_fallthru
          _
        // Predicated region
        $region21: #{tunable_whisper_audio_encoder.26} parent=11 // pred_check
          %p156 = pneg %p74
        $region22: #{tunable_whisper_audio_encoder.26} parent=11 // pred_check_branch
          %158 = sbr.rel (%p156) target = $region24
        $region23: #{tunable_whisper_audio_encoder.26} parent=11 // pred_region
          _
        $region24: #{tunable_whisper_audio_encoder.26} parent=11 // pred_fallthru
          _
      $region12: #{tunable_whisper_audio_encoder.26} parent=5 // pred_fallthru
        _
      %p159 = scmp.lt.s32.totalorder %s11, 2
      // Predicated region
      $region25: #{tunable_whisper_audio_encoder.26} parent=5 // pred_check
        %p160 = pneg %p159
      $region26: #{tunable_whisper_audio_encoder.26} parent=5 // pred_check_branch
        %162 = sbr.rel (%p160) target = $region28
      $region27: #{tunable_whisper_audio_encoder.26} parent=5 // pred_region
        // Predicated region
        $region29: #{tunable_whisper_audio_encoder.26} parent=27 // pred_check
          %p163 = pneg %p94
        $region30: #{tunable_whisper_audio_encoder.26} parent=27 // pred_check_branch
          %165 = sbr.rel (%p163) target = $region32
        $region31: #{tunable_whisper_audio_encoder.26} parent=27 // pred_region
          %p166 = scmp.lt.s32.totalorder %s11, 1
          %s167 = scalar_select %p166, %s11, 1
          %s168 = smul.addr %s167, 4
          %s169 = smul.addr %s168, 4
          %s170 = scalar_lea.vmem %s3, %s169
        $region32: #{tunable_whisper_audio_encoder.26} parent=27 // pred_fallthru
          _
      $region28: #{tunable_whisper_audio_encoder.26} parent=5 // pred_fallthru
        _
      %p171 = scmp.le.s32.totalorder 1, %s11
      %p172 = scmp.lt.s32.totalorder %s11, 3
      %p173 = pnand %p171, %p172
      %p174 = pneg %p173
      // Predicated region
      $region33: #{tunable_whisper_audio_encoder.26} parent=5 // pred_check
        _
      $region34: #{tunable_whisper_audio_encoder.26} parent=5 // pred_check_branch
        %176 = sbr.rel (%p173) target = $region36
      $region35: #{tunable_whisper_audio_encoder.26} parent=5 // pred_region
        %s177 = ssub.s32 %s11, 1
        // Predicated region
        $region37: #{tunable_whisper_audio_encoder.26} parent=35 // pred_check
          %p178 = pneg %p53
        $region38: #{tunable_whisper_audio_encoder.26} parent=35 // pred_check_branch
          %180 = sbr.rel (%p178) target = $region40
        $region39: #{tunable_whisper_audio_encoder.26} parent=35 // pred_region
          %182 = dma.done [#allocation3], 32
        $region40: #{tunable_whisper_audio_encoder.26} parent=35 // pred_fallthru
          _
        %p183 = pneg %p32
        %p184 = pneg %p29
        %p185 = pneg %p53
        %p186 = pneg %p50
        %p187 = pneg %p74
        %p188 = pneg %p71
        %p189 = scmp.lt.s32.totalorder %s16, 1
        %s190 = scalar_select %p189, %s16, 1
        %s191 = smul.addr %s190, 4
        %s192 = smul.addr %s191, 4
        %s193 = scalar_lea.vmem %s3, %s192
        %p194 = pneg %p100
        %p195 = pneg %p97
        %p196 = pneg %p126
        %p197 = pneg %p123
        %p198 = scmp.lt.s32.totalorder %s16, 1
        %s199 = scalar_select %p198, %s16, 1
        %s200 = smul.addr %s199, 2
        %s201 = smul.addr %s200, 4
        %s202 = scalar_lea.vmem %s4, %s201
        %p203 = scmp.lt.s32.totalorder %s16, 1
        %s204 = scalar_select %p203, %s16, 1
        %s205 = smul.addr %s204, 4
        %s206 = smul.addr %s205, 4
        %s207 = scalar_lea.vmem %s3, %s206
        %p208 = scmp.lt.s32.totalorder %s16, 1
        %s209 = scalar_select %p208, %s16, 1
        %s210 = smul.addr %s209, 2
        %s211 = smul.addr %s210, 4
        %s212 = scalar_lea.vmem %s4, %s211
        %v213 = vld [vmem:[%s207] sm:$0xff]
        %v214 = vld [vmem:[%s207 + $0x8] sm:$0xff]
        %v215 = vunpack.c.l.bf16 %v213
        %v216 = vunpack.c.h.bf16 %v213
        %v217 = vunpack.c.l.bf16 %v214
        %v218 = vunpack.c.h.bf16 %v214
        %v219 = vld [vmem:[%s0] sm:$0x3]
        %v220 = vld [vmem:[#allocation2] sm:$0x3]
        %v221 = vadd.f32 %v215, %v216
        %222 = vadd.xlane.f32.xlu0 %v221
        %v223 = vpop.xlane.xlu0 %222
        %v224 = vadd.f32 %v217, %v218
        %225 = vadd.xlane.f32.xlu0 %v224
        %v226 = vpop.xlane.xlu0 %225
        %v227 = vrcp.pop 256.0
        %v228 = vmul.f32 256.0, %v227
        %v229 = vsub.f32 1.0, %v228
        %v230 = vmul.f32 %v227, %v229
        %v231 = vadd.f32 %v227, %v230
        %vm232 = vweird.f32 %v227
        %v233 = vsel %vm232, %v227, %v231
        %v234 = vmul.f32 %v223, %v233
        %v235 = vmul.f32 %v226, %v233
        %v236 = vsub.f32 %v215, %v234
        %v237 = vsub.f32 %v216, %v234
        %v238 = vsub.f32 %v217, %v235
        %v239 = vsub.f32 %v218, %v235
        %v240 = vmul.f32 %v236, %v236
        %v241 = vmul.f32 %v237, %v237
        %v242 = vmul.f32 %v238, %v238
        %v243 = vmul.f32 %v239, %v239
        %v244 = vadd.f32 %v240, %v241
        %245 = vadd.xlane.f32.xlu0 %v244
        %v246 = vpop.xlane.xlu0 %245
        %v247 = vadd.f32 %v242, %v243
        %248 = vadd.xlane.f32.xlu0 %v247
        %v249 = vpop.xlane.xlu0 %248
        %v250 = vmul.f32 %v246, %v233
        %v251 = vmul.f32 %v249, %v233
        %v252 = vadd.f32 %v250, 1e-05
        %v253 = vadd.f32 %v251, 1e-05
        %v254 = vrsqrt.pop %v252
        %v255 = vmul.f32 %v254, %v252
        %v256 = vmul.f32 %v255, %v254
        %v257 = vmul.f32 0.5, %v256
        %v258 = vsub.f32 1.5, %v257
        %v259 = vmul.f32 %v254, %v258
        %vm260 = vweird.f32 %v252
        %vm261 = vweird.f32 %v254
        %vm262 = vmor %vm260, %vm261
        %v263 = vsel %vm262, %v254, %v259
        %v264 = vrsqrt.pop %v253
        %v265 = vmul.f32 %v264, %v253
        %v266 = vmul.f32 %v265, %v264
        %v267 = vmul.f32 0.5, %v266
        %v268 = vsub.f32 1.5, %v267
        %v269 = vmul.f32 %v264, %v268
        %vm270 = vweird.f32 %v253
        %vm271 = vweird.f32 %v264
        %vm272 = vmor %vm270, %vm271
        %v273 = vsel %vm272, %v264, %v269
        %v274 = vmul.f32 %v236, %v263
        %v275 = vmul.f32 %v237, %v263
        %v276 = vmul.f32 %v238, %v273
        %v277 = vmul.f32 %v239, %v273
        %v279 = vperm.slane %v219, 0
        %v280 = vperm.slane %v219, 1
        %v283 = vmul.f32 %v274, %v279
        %v284 = vmul.f32 %v275, %v280
        %v285 = vmul.f32 %v276, %v279
        %v286 = vmul.f32 %v277, %v280
        %v288 = vperm.slane %v220, 0
        %v289 = vperm.slane %v220, 1
        %v292 = vadd.f32 %v283, %v288
        %v293 = vadd.f32 %v284, %v289
        %v294 = vadd.f32 %v285, %v288
        %v295 = vadd.f32 %v286, %v289
        %v296 = vld [vmem:[%s2] sm:$0xff]
        %vm297 = vcmask 130048
        %v299 = vsel %vm297, %v296, 0
        %301 = vmatpush.msra.mxu0 0.0
        %302 = vmatpush.msra.mxu0 0.0
        %303 = vmatpush.msra.mxu0 0.0
        %304 = vmatpush.msra.mxu0 0.0
        %305 = vmatpush.msra.mxu0 0.0
        %306 = vmatpush.msra.mxu0 0.0
        %307 = vmatpush.msra.mxu0 0.0
        %308 = vmatpush.msra.mxu0 0.0
        %309 = vmatpush.msra.mxu0 0.0
        %310 = vmatpush.msra.mxu0 0.0
        %311 = vmatpush.msra.mxu0 0.0
        %312 = vmatpush.msra.mxu0 0.0
        %313 = vmatpush.msra.mxu0 0.0
        %314 = vmatpush.msra.mxu0 0.0
        %315 = vmatpush.msra.mxu0 %v294
        %316 = vmatpush.msra.mxu0 %v292
        %317 = vmatmul.f32.gmra.mxu0 %v299
        %v318 = vpop.f32.mrf.mxu0
        %v319 = vadd.f32 0.0, %v318
        %320 = vdwg.mxu0
        %321 = vmatpush.msra.mxu0 0.0
        %322 = vmatpush.msra.mxu0 0.0
        %323 = vmatpush.msra.mxu0 0.0
        %324 = vmatpush.msra.mxu0 0.0
        %325 = vmatpush.msra.mxu0 0.0
        %326 = vmatpush.msra.mxu0 0.0
        %327 = vmatpush.msra.mxu0 0.0
        %328 = vmatpush.msra.mxu0 0.0
        %329 = vmatpush.msra.mxu0 0.0
        %330 = vmatpush.msra.mxu0 0.0
        %331 = vmatpush.msra.mxu0 0.0
        %332 = vmatpush.msra.mxu0 0.0
        %333 = vmatpush.msra.mxu0 0.0
        %334 = vmatpush.msra.mxu0 0.0
        %335 = vmatpush.msra.mxu0 %v295
        %336 = vmatpush.msra.mxu0 %v293
        %337 = vmatmul.f32.gmra.mxu0 %v299
        %v338 = vpop.f32.mrf.mxu0
        %v339 = vadd.f32 0.0, %v338
        %340 = vdwg.mxu0
        %v341 = vpack.c.bf16 %v339, %v319
        %342 = vst [vmem:[%s212] sm:$0xff] %v341
        %p343 = scmp.lt.s32.totalorder %s16, 1
        %s344 = scalar_select %p343, %s16, 1
        %s345 = smul.addr %s344, 2
        %s346 = smul.addr %s345, 4
        %s347 = scalar_lea.vmem %s4, %s346
        // Predicated region
        $region41: #{tunable_whisper_audio_encoder.26} parent=35 // pred_check
          %p348 = pneg %p123
        $region42: #{tunable_whisper_audio_encoder.26} parent=35 // pred_check_branch
          %350 = sbr.rel (%p348) target = $region44
        $region43: #{tunable_whisper_audio_encoder.26} parent=35 // pred_region
          _
        $region44: #{tunable_whisper_audio_encoder.26} parent=35 // pred_fallthru
          _
      $region36: #{tunable_whisper_audio_encoder.26} parent=5 // pred_fallthru
        _
      %p351 = scmp.le.s32.totalorder 2, %s11
      // Predicated region
      $region45: #{tunable_whisper_audio_encoder.26} parent=5 // pred_check
        %p352 = pneg %p351
      $region46: #{tunable_whisper_audio_encoder.26} parent=5 // pred_check_branch
        %354 = sbr.rel (%p352) target = $region48
      $region47: #{tunable_whisper_audio_encoder.26} parent=5 // pred_region
        %s355 = ssub.s32 %s11, 2
        // Predicated region
        $region49: #{tunable_whisper_audio_encoder.26} parent=47 // pred_check
          %p356 = pneg %p129
        $region50: #{tunable_whisper_audio_encoder.26} parent=47 // pred_check_branch
          %358 = sbr.rel (%p356) target = $region52
        $region51: #{tunable_whisper_audio_encoder.26} parent=47 // pred_region
          %p359 = scmp.lt.s32.totalorder %s17, 1
          %s360 = scalar_select %p359, %s17, 1
          %s361 = smul.addr %s360, 2
          %s362 = smul.addr %s361, 4
          %s363 = scalar_lea.vmem %s4, %s362
        $region52: #{tunable_whisper_audio_encoder.26} parent=47 // pred_fallthru
          _
      $region48: #{tunable_whisper_audio_encoder.26} parent=5 // pred_fallthru
        _
    $region6: #{tunable_whisper_audio_encoder.26} parent=1 // loop_footer
      %s15 = sadd.s32 1, %s11
    $region7: #{tunable_whisper_audio_encoder.26} parent=1 // loop_footer_branch
      %10 = sbr.rel target = $region3
    $region8: #{tunable_whisper_audio_encoder.26} parent=1 // loop_exit
      _
    %364 = vsyncpa [#allocation3], 1
    %s365 = scalar_lea.sflag [#allocation3], 1
    %366 = vsyncpa %s365, 1

// kernel: tunable_whisper_audio_encoder.20
$region0: #{tunable_whisper_audio_encoder.20}
  #allocation0 [shape = 'u32[]', space=smem, size = 0x4, offset = 0x4, fixed_abs, tag = 'smem constant byte address 0x4 - core index']
  #allocation1 [shape = 'u32[72,128]{1,0:T(1,128)}', space=vmem, size = 0x9000, scoped, tag = 'internal scratch']
  #allocation2 [shape = 'f32[32,256]{1,0:T(8,128)}', space=vmem, size = 0x8000, scoped, tag = 'scratch operand']
  %s0 = inlined_call_operand.vmem [shape: bf16[32,1024], index: 0, kind: input, shape index: {}]
  %s1 = inlined_call_operand.hbm [shape: bf16[1024,256], index: 1, kind: input, shape index: {}]
  %s2 = inlined_call_operand.hbm [shape: f32[1,256], index: 2, kind: input, shape index: {}]
  %s3 = inlined_call_operand.vmem [shape: bf16[32,256], index: 3, kind: input, shape index: {}]
  %s4 = inlined_call_operand.vmem [shape: bf16[32,256], index: 4, kind: output, shape index: {}]
  %s5 = sld [smem:[#allocation0]]
  $region88: #{tunable_whisper_audio_encoder.20} parent=0
    _
  %s7 = ssub.s32 1, %s5
  %s8 = scalar_select 0, %s7, %s5
  $region1: #{tunable_whisper_audio_encoder.20} parent=0
    #allocation3 [shape = 'u8[65536]{0}', space=vmem, size = 0x10000, scoped, tag = 'input window, operand 0']
    #allocation4 [shape = 'u8[524288]{0}', space=vmem, size = 0x80000, scoped, tag = 'input window, operand 1']
    #allocation5 [shape = 's32[2]{0}', space=sflag, size = 0x8, scoped, tag = 'scoped memory for tunable_whisper_audio_encoder.20']
    #allocation6 [shape = 'u8[1024]{0}', space=vmem, size = 0x400, scoped, tag = 'input window, operand 2, single buffered']
    #allocation7 [shape = 's32[1]{0}', space=sflag, size = 0x4, scoped, tag = 'scoped memory for tunable_whisper_audio_encoder.20']
    %9 = vsyncpa [#allocation5], 0
    %s10 = scalar_lea.sflag [#allocation5], 1
    %11 = vsyncpa %s10, 0
    %12 = vsyncpa [#allocation7], 0
    loop: start=0, step=1, limit=4
    $region2: #{tunable_whisper_audio_encoder.20} parent=1 // loop_pre_header
      _
    $region3: #{tunable_whisper_audio_encoder.20} parent=1 // loop_header
      %s14 = sphi 0, %s18
      %p15 = scmp.ge.s32.totalorder %s14, 4
      %s21 = sphi 0, %s40
      %s22 = sphi 0, %s36
      %s23 = sphi 0, %s32
      %s24 = sphi 0, %s21
      %s25 = sphi 0, %s22
      %s26 = sphi 0, %s23
      %s27 = sphi 0, %s24
      %s28 = sphi 0, %s25
      %s29 = sphi 0, %s26
      %s45 = sphi 0, %s47
      %s48 = sphi 0, %s45
      %s49 = sphi 0, %s48
      %s65 = sphi 0, %s49
      %s73 = sphi 0, %s75
      %s76 = sphi 0, %s73
      %s77 = sphi 0, %s76
      %s93 = sphi 0, %s77
      %s99 = sphi 0, %s101
      %s102 = sphi 0, %s99
      %s103 = sphi 0, %s102
      %s119 = sphi 0, %s103
      %s127 = sphi 0, %s129
      %s130 = sphi 0, %s127
      %s131 = sphi 0, %s130
      %s147 = sphi 0, %s131
      %s155 = sphi 0, %s157
      %s158 = sphi 0, %s155
      %s159 = sphi 0, %s158
      %s175 = sphi 0, %s159
    $region4: #{tunable_whisper_audio_encoder.20} parent=1 // loop_header_branch
      %17 = sbr.rel (%p15) target = $region8
    $region5: #{tunable_whisper_audio_encoder.20} parent=1 // loop_body
      %s19 = ssub.s32 %s14, 1
      %s20 = ssub.s32 %s14, 2
      %s30 = sadd.s32 1, %s23
      %p31 = scmp.ge.s32.totalorder %s30, 2
      %s32 = scalar_select %p31, 0, %s30
      %s33 = sadd.s32 1, %s22
      %s34 = scalar_select %p31, %s33, %s22
      %p35 = scmp.ge.s32.totalorder %s34, 1
      %s36 = scalar_select %p35, 0, %s34
      %s37 = sadd.s32 1, %s21
      %s38 = scalar_select %p35, %s37, %s21
      %p39 = scmp.ge.s32.totalorder %s38, 1
      %s40 = scalar_select %p39, 0, %s38
      %s41 = ssub.s32 %s21, %s40
      %s42 = ssub.s32 %s23, %s32
      %s43 = sor.u32 %s41, %s42
      %p44 = scmp.eq.s32.totalorder %s43, 0
      %s46 = sadd.s32 %s45, 1
      %s47 = scalar_select %p44, %s45, %s46
      %p50 = pneg %p44
      %p51 = scmp.eq.s32.totalorder %s14, 1
      %p52 = por %p50, %p51
      %p53 = scmp.ne.s32.totalorder %s45, %s48
      %p54 = scmp.eq.s32.totalorder %s14, 0
      %p55 = por %p53, %p54
      %p56 = scmp.ne.s32.totalorder %s45, %s48
      %p57 = scmp.eq.s32.totalorder %s19, 1
      %p58 = por %p56, %p57
      %p59 = scmp.ne.s32.totalorder %s48, %s49
      %p60 = scmp.eq.s32.totalorder %s19, 0
      %p61 = por %p59, %p60
      %p62 = scmp.ne.s32.totalorder %s48, %s49
      %p63 = scmp.eq.s32.totalorder %s20, 1
      %p64 = por %p62, %p63
      %p66 = scmp.ne.s32.totalorder %s49, %s65
      %p67 = scmp.eq.s32.totalorder %s20, 0
      %p68 = por %p66, %p67
      %s69 = ssub.s32 %s23, %s32
      %s70 = ssub.s32 %s22, %s36
      %s71 = sor.u32 %s69, %s70
      %p72 = scmp.eq.s32.totalorder %s71, 0
      %s74 = sadd.s32 %s73, 1
      %s75 = scalar_select %p72, %s73, %s74
      %p78 = pneg %p72
      %p79 = scmp.eq.s32.totalorder %s14, 1
      %p80 = por %p78, %p79
      %p81 = scmp.ne.s32.totalorder %s73, %s76
      %p82 = scmp.eq.s32.totalorder %s14, 0
      %p83 = por %p81, %p82
      %p84 = scmp.ne.s32.totalorder %s73, %s76
      %p85 = scmp.eq.s32.totalorder %s19, 1
      %p86 = por %p84, %p85
      %p87 = scmp.ne.s32.totalorder %s76, %s77
      %p88 = scmp.eq.s32.totalorder %s19, 0
      %p89 = por %p87, %p88
      %p90 = scmp.ne.s32.totalorder %s76, %s77
      %p91 = scmp.eq.s32.totalorder %s20, 1
      %p92 = por %p90, %p91
      %p94 = scmp.ne.s32.totalorder %s77, %s93
      %p95 = scmp.eq.s32.totalorder %s20, 0
      %p96 = por %p94, %p95
      %s97 = ssub.s32 %s22, %s36
      %p98 = scmp.eq.s32.totalorder %s97, 0
      %s100 = sadd.s32 %s99, 1
      %s101 = scalar_select %p98, %s99, %s100
      %p104 = pneg %p98
      %p105 = scmp.eq.s32.totalorder %s14, 1
      %p106 = por %p104, %p105
      %p107 = scmp.ne.s32.totalorder %s99, %s102
      %p108 = scmp.eq.s32.totalorder %s14, 0
      %p109 = por %p107, %p108
      %p110 = scmp.ne.s32.totalorder %s99, %s102
      %p111 = scmp.eq.s32.totalorder %s19, 1
      %p112 = por %p110, %p111
      %p113 = scmp.ne.s32.totalorder %s102, %s103
      %p114 = scmp.eq.s32.totalorder %s19, 0
      %p115 = por %p113, %p114
      %p116 = scmp.ne.s32.totalorder %s102, %s103
      %p117 = scmp.eq.s32.totalorder %s20, 1
      %p118 = por %p116, %p117
      %p120 = scmp.ne.s32.totalorder %s103, %s119
      %p121 = scmp.eq.s32.totalorder %s20, 0
      %p122 = por %p120, %p121
      %s123 = ssub.s32 %s21, %s40
      %s124 = ssub.s32 %s22, %s36
      %s125 = sor.u32 %s123, %s124
      %p126 = scmp.eq.s32.totalorder %s125, 0
      %s128 = sadd.s32 %s127, 1
      %s129 = scalar_select %p126, %s127, %s128
      %p132 = pneg %p126
      %p133 = scmp.eq.s32.totalorder %s14, 1
      %p134 = por %p132, %p133
      %p135 = scmp.ne.s32.totalorder %s127, %s130
      %p136 = scmp.eq.s32.totalorder %s14, 0
      %p137 = por %p135, %p136
      %p138 = scmp.ne.s32.totalorder %s127, %s130
      %p139 = scmp.eq.s32.totalorder %s19, 1
      %p140 = por %p138, %p139
      %p141 = scmp.ne.s32.totalorder %s130, %s131
      %p142 = scmp.eq.s32.totalorder %s19, 0
      %p143 = por %p141, %p142
      %p144 = scmp.ne.s32.totalorder %s130, %s131
      %p145 = scmp.eq.s32.totalorder %s20, 1
      %p146 = por %p144, %p145
      %p148 = scmp.ne.s32.totalorder %s131, %s147
      %p149 = scmp.eq.s32.totalorder %s20, 0
      %p150 = por %p148, %p149
      %s151 = ssub.s32 %s21, %s40
      %s152 = ssub.s32 %s22, %s36
      %s153 = sor.u32 %s151, %s152
      %p154 = scmp.eq.s32.totalorder %s153, 0
      %s156 = sadd.s32 %s155, 1
      %s157 = scalar_select %p154, %s155, %s156
      %p160 = pneg %p154
      %p161 = scmp.eq.s32.totalorder %s14, 1
      %p162 = por %p160, %p161
      %p163 = scmp.ne.s32.totalorder %s155, %s158
      %p164 = scmp.eq.s32.totalorder %s14, 0
      %p165 = por %p163, %p164
      %p166 = scmp.ne.s32.totalorder %s155, %s158
      %p167 = scmp.eq.s32.totalorder %s19, 1
      %p168 = por %p166, %p167
      %p169 = scmp.ne.s32.totalorder %s158, %s159
      %p170 = scmp.eq.s32.totalorder %s19, 0
      %p171 = por %p169, %p170
      %p172 = scmp.ne.s32.totalorder %s158, %s159
      %p173 = scmp.eq.s32.totalorder %s20, 1
      %p174 = por %p172, %p173
      %p176 = scmp.ne.s32.totalorder %s159, %s175
      %p177 = scmp.eq.s32.totalorder %s20, 0
      %p178 = por %p176, %p177
      %p179 = scmp.le.s32.totalorder 1, %s14
      %p180 = scmp.lt.s32.totalorder %s14, 3
      %p181 = pnand %p179, %p180
      %p182 = pneg %p181
      // Predicated region
      $region9: #{tunable_whisper_audio_encoder.20} parent=5 // pred_check
        _
      $region10: #{tunable_whisper_audio_encoder.20} parent=5 // pred_check_branch
        %184 = sbr.rel (%p181) target = $region12
      $region11: #{tunable_whisper_audio_encoder.20} parent=5 // pred_region
        %s185 = ssub.s32 %s14, 1
        // Predicated region
        $region13: #{tunable_whisper_audio_encoder.20} parent=11 // pred_check
          %p186 = pneg %p115
        $region14: #{tunable_whisper_audio_encoder.20} parent=11 // pred_check_branch
          %188 = sbr.rel (%p186) target = $region16
        $region15: #{tunable_whisper_audio_encoder.20} parent=11 // pred_region
          %s189 = smul.u32 2, %s25
          %191 = vsyncadd [#allocation7], 0
          %s192 = scalar_lea.hbm %s2, %s189
          %s194 = sshll.u32 %s192, 4
          %s195 = int_to_ptr.hbm [resolvable:$true] %s194
          %s196 = sshll.u32 [#allocation6], 4
          %s197 = int_to_ptr.vmem [resolvable:$true] %s196
          %199 = dma.hbm_to_vmem [thread:$0]  %s195, 32, %s197, [#allocation7]
        $region16: #{tunable_whisper_audio_encoder.20} parent=11 // pred_fallthru
          _
        // Predicated region
        $region17: #{tunable_whisper_audio_encoder.20} parent=11 // pred_check
          %p200 = pneg %p143
        $region18: #{tunable_whisper_audio_encoder.20} parent=11 // pred_check_branch
          %202 = sbr.rel (%p200) target = $region20
        $region19: #{tunable_whisper_audio_encoder.20} parent=11 // pred_region
          %s203 = smul.u32 4, %s24
          %s204 = smul.u32 2, %s25
          %p205 = scmp.lt.s32.totalorder %s203, 3
          %s206 = scalar_select %p205, %s203, 3
          %p207 = scmp.lt.s32.totalorder %s204, 1
          %s208 = scalar_select %p207, %s204, 1
          %s209 = smul.addr %s206, 2
          %s210 = sadd.s32 %s208, %s209
          %s211 = smul.addr %s210, 4
          %s212 = scalar_lea.vmem %s3, %s211
          %s213 = smul.u32 4, %s24
          %s214 = smul.u32 2, %s25
        $region20: #{tunable_whisper_audio_encoder.20} parent=11 // pred_fallthru
          _
      $region12: #{tunable_whisper_audio_encoder.20} parent=5 // pred_fallthru
        _
      %p215 = scmp.lt.s32.totalorder %s14, 2
      // Predicated region
      $region21: #{tunable_whisper_audio_encoder.20} parent=5 // pred_check
        %p216 = pneg %p215
      $region22: #{tunable_whisper_audio_encoder.20} parent=5 // pred_check_branch
        %218 = sbr.rel (%p216) target = $region24
      $region23: #{tunable_whisper_audio_encoder.20} parent=5 // pred_region
        // Predicated region
        $region25: #{tunable_whisper_audio_encoder.20} parent=23 // pred_check
          %p219 = pneg %p55
        $region26: #{tunable_whisper_audio_encoder.20} parent=23 // pred_check_branch
          %221 = sbr.rel (%p219) target = $region28
        $region27: #{tunable_whisper_audio_encoder.20} parent=23 // pred_region
          %s222 = sand.u32 %s45, 1
          %s223 = sand.u32 %s45, 1
          %s224 = smul.addr %s223, 64
          %s225 = scalar_lea.vmem [#allocation3], %s224
          %s226 = smul.u32 4, %s21
          %s227 = smul.u32 4, %s23
          %s228 = smul.addr %s226, 8
          %s229 = sadd.s32 %s227, %s228
          %s230 = smul.addr %s229, 4
          %s231 = scalar_lea.vmem %s0, %s230
          // Predicated region
          $region29: #{tunable_whisper_audio_encoder.20} parent=27 // pred_check
            _
          $region30: #{tunable_whisper_audio_encoder.20} parent=27 // pred_check_branch
            %233 = sbr.rel (0) target = $region32
          $region31: #{tunable_whisper_audio_encoder.20} parent=27 // pred_region
            // Predicated region
            $region33: #{tunable_whisper_audio_encoder.20} parent=31 // pred_check
              _
            $region34: #{tunable_whisper_audio_encoder.20} parent=31 // pred_check_branch
              %235 = sbr.rel (0) target = $region36
            $region35: #{tunable_whisper_audio_encoder.20} parent=31 // pred_region
              loop: start=0, step=1, limit=1
              $region37: #{tunable_whisper_audio_encoder.20} parent=35 // loop_pre_header
                _
              $region38: #{tunable_whisper_audio_encoder.20} parent=35 // loop_header
                %s237 = sphi 0, %s241
                %p238 = scmp.ge.s32.totalorder %s237, 1
                %s242 = sphi %s231, %s231
                %s243 = sphi %s225, %s225
              $region39: #{tunable_whisper_audio_encoder.20} parent=35 // loop_header_branch
                %240 = sbr.rel (%p238) target = $region43
              $region40: #{tunable_whisper_audio_encoder.20} parent=35 // loop_body
                %v244 = vld [vmem:[%s242] sm:$0xff]
                %245 = vst [vmem:[%s243] sm:$0xff] %v244
                %v246 = vld [vmem:[%s242 + $0x8] sm:$0xff]
                %247 = vst [vmem:[%s243 + $0x8] sm:$0xff] %v246
                %v248 = vld [vmem:[%s242 + $0x20] sm:$0xff]
                %249 = vst [vmem:[%s243 + $0x10] sm:$0xff] %v248
                %v250 = vld [vmem:[%s242 + $0x28] sm:$0xff]
                %251 = vst [vmem:[%s243 + $0x18] sm:$0xff] %v250
                %v252 = vld [vmem:[%s242 + $0x40] sm:$0xff]
                %253 = vst [vmem:[%s243 + $0x20] sm:$0xff] %v252
                %v254 = vld [vmem:[%s242 + $0x48] sm:$0xff]
                %255 = vst [vmem:[%s243 + $0x28] sm:$0xff] %v254
                %v256 = vld [vmem:[%s242 + $0x60] sm:$0xff]
                %257 = vst [vmem:[%s243 + $0x30] sm:$0xff] %v256
                %v258 = vld [vmem:[%s242 + $0x68] sm:$0xff]
                %259 = vst [vmem:[%s243 + $0x38] sm:$0xff] %v258
              $region41: #{tunable_whisper_audio_encoder.20} parent=35 // loop_footer
                %s241 = sadd.s32 1, %s237
              $region42: #{tunable_whisper_audio_encoder.20} parent=35 // loop_footer_branch
                %236 = sbr.rel target = $region38
              $region43: #{tunable_whisper_audio_encoder.20} parent=35 // loop_exit
                _
            $region36: #{tunable_whisper_audio_encoder.20} parent=31 // pred_fallthru
              _
            // Predicated region
            $region44: #{tunable_whisper_audio_encoder.20} parent=31 // pred_check
              _
            $region45: #{tunable_whisper_audio_encoder.20} parent=31 // pred_check_branch
              %261 = sbr.rel target = $region47
            $region46: #{tunable_whisper_audio_encoder.20} parent=31 // pred_region
              _
            $region47: #{tunable_whisper_audio_encoder.20} parent=31 // pred_fallthru
              _
          $region32: #{tunable_whisper_audio_encoder.20} parent=27 // pred_fallthru
            _
          %262 = vnop
        $region28: #{tunable_whisper_audio_encoder.20} parent=23 // pred_fallthru
          _
        // Predicated region
        $region48: #{tunable_whisper_audio_encoder.20} parent=23 // pred_check
          %p263 = pneg %p83
        $region49: #{tunable_whisper_audio_encoder.20} parent=23 // pred_check_branch
          %265 = sbr.rel (%p263) target = $region51
        $region50: #{tunable_whisper_audio_encoder.20} parent=23 // pred_region
          %s266 = sand.u32 %s73, 1
          %s267 = scalar_lea.sflag [#allocation5], %s266
          %s268 = sand.u32 %s73, 1
          %s269 = smul.addr %s268, 512
          %s270 = scalar_lea.vmem [#allocation4], %s269
          %s271 = smul.u32 64, %s23
          %s272 = smul.u32 2, %s22
          %274 = vsyncadd %s267, 0
          %s275 = smul.addr %s271, 2
          %s276 = sadd.s32 %s272, %s275
          %s277 = smul.addr %s276, 4
          %s278 = scalar_lea.hbm %s1, %s277
          %s279 = sshll.u32 %s278, 4
          %s280 = int_to_ptr.hbm [resolvable:$true] %s279
          %s281 = sshll.u32 %s270, 4
          %s282 = int_to_ptr.vmem [resolvable:$true] %s281
          %287 = dma.hbm_to_vmem [thread:$0]  %s280, 8192, %s282, %s267, 128, 128, 8
        $region51: #{tunable_whisper_audio_encoder.20} parent=23 // pred_fallthru
          _
      $region24: #{tunable_whisper_audio_encoder.20} parent=5 // pred_fallthru
        _
      %p288 = scmp.le.s32.totalorder 1, %s14
      %p289 = scmp.lt.s32.totalorder %s14, 3
      %p290 = pnand %p288, %p289
      %p291 = pneg %p290
      // Predicated region
      $region52: #{tunable_whisper_audio_encoder.20} parent=5 // pred_check
        _
      $region53: #{tunable_whisper_audio_encoder.20} parent=5 // pred_check_branch
        %293 = sbr.rel (%p290) target = $region55
      $region54: #{tunable_whisper_audio_encoder.20} parent=5 // pred_region
        %s294 = ssub.s32 %s14, 1
        %s295 = sand.u32 %s48, 1
        %s296 = sand.u32 %s48, 1
        %s297 = smul.addr %s296, 64
        %s298 = scalar_lea.vmem [#allocation3], %s297
        // Predicated region
        $region56: #{tunable_whisper_audio_encoder.20} parent=54 // pred_check
          %p299 = pneg %p61
        $region57: #{tunable_whisper_audio_encoder.20} parent=54 // pred_check_branch
          %301 = sbr.rel (%p299) target = $region59
        $region58: #{tunable_whisper_audio_encoder.20} parent=54 // pred_region
          _
        $region59: #{tunable_whisper_audio_encoder.20} parent=54 // pred_fallthru
          _
        %s302 = sand.u32 %s76, 1
        %s303 = scalar_lea.sflag [#allocation5], %s302
        %s304 = sand.u32 %s76, 1
        %s305 = smul.addr %s304, 512
        %s306 = scalar_lea.vmem [#allocation4], %s305
        // Predicated region
        $region60: #{tunable_whisper_audio_encoder.20} parent=54 // pred_check
          %p307 = pneg %p89
        $region61: #{tunable_whisper_audio_encoder.20} parent=54 // pred_check_branch
          %309 = sbr.rel (%p307) target = $region63
        $region62: #{tunable_whisper_audio_encoder.20} parent=54 // pred_region
          %311 = dma.done %s303, 8192
        $region63: #{tunable_whisper_audio_encoder.20} parent=54 // pred_fallthru
          _
        // Predicated region
        $region64: #{tunable_whisper_audio_encoder.20} parent=54 // pred_check
          %p312 = pneg %p115
        $region65: #{tunable_whisper_audio_encoder.20} parent=54 // pred_check_branch
          %314 = sbr.rel (%p312) target = $region67
        $region66: #{tunable_whisper_audio_encoder.20} parent=54 // pred_region
          %316 = dma.done [#allocation7], 32
        $region67: #{tunable_whisper_audio_encoder.20} parent=54 // pred_fallthru
          _
        %s317 = sand.u32 %s48, 1
        %s318 = sand.u32 %s48, 1
        %s319 = smul.addr %s318, 64
        %s320 = scalar_lea.vmem [#allocation3], %s319
        %p321 = pneg %p61
        %p322 = pneg %p58
        %s323 = sand.u32 %s76, 1
        %s324 = scalar_lea.sflag [#allocation5], %s323
        %s325 = sand.u32 %s76, 1
        %s326 = smul.addr %s325, 512
        %s327 = scalar_lea.vmem [#allocation4], %s326
        %p328 = pneg %p89
        %p329 = pneg %p86
        %p330 = pneg %p115
        %p331 = pneg %p112
        %s332 = smul.u32 4, %s24
        %s333 = smul.u32 2, %s25
        %p334 = scmp.lt.s32.totalorder %s332, 3
        %s335 = scalar_select %p334, %s332, 3
        %p336 = scmp.lt.s32.totalorder %s333, 1
        %s337 = scalar_select %p336, %s333, 1
        %s338 = smul.addr %s335, 2
        %s339 = sadd.s32 %s337, %s338
        %s340 = smul.addr %s339, 4
        %s341 = scalar_lea.vmem %s3, %s340
        %p342 = pneg %p143
        %p343 = pneg %p140
        %p344 = pneg %p171
        %p345 = pneg %p168
        %s346 = smul.u32 4, %s24
        %s347 = smul.u32 2, %s25
        %p348 = scmp.lt.s32.totalorder %s346, 3
        %s349 = scalar_select %p348, %s346, 3
        %p350 = scmp.lt.s32.totalorder %s347, 1
        %s351 = scalar_select %p350, %s347, 1
        %s352 = smul.addr %s349, 2
        %s353 = sadd.s32 %s351, %s352
        %s354 = smul.addr %s353, 4
        %s355 = scalar_lea.vmem %s4, %s354
        %s356 = smul.u32 4, %s24
        %s357 = smul.u32 4, %s26
        %s358 = smul.u32 64, %s26
        %s359 = smul.u32 2, %s25
        %s360 = smul.u32 2, %s25
        %s361 = smul.u32 4, %s24
        %s362 = smul.u32 2, %s25
        %p363 = scmp.lt.s32.totalorder %s361, 3
        %s364 = scalar_select %p363, %s361, 3
        %p365 = scmp.lt.s32.totalorder %s362, 1
        %s366 = scalar_select %p365, %s362, 1
        %s367 = smul.addr %s364, 2
        %s368 = sadd.s32 %s366, %s367
        %s369 = smul.addr %s368, 4
        %s370 = scalar_lea.vmem %s3, %s369
        %s371 = smul.u32 4, %s24
        %s372 = smul.u32 2, %s25
        %s373 = smul.u32 4, %s24
        %s374 = smul.u32 2, %s25
        %p375 = scmp.lt.s32.totalorder %s373, 3
        %s376 = scalar_select %p375, %s373, 3
        %p377 = scmp.lt.s32.totalorder %s374, 1
        %s378 = scalar_select %p377, %s374, 1
        %s379 = smul.addr %s376, 2
        %s380 = sadd.s32 %s378, %s379
        %s381 = smul.addr %s380, 4
        %s382 = scalar_lea.vmem %s4, %s381
        %s383 = smul.u32 4, %s24
        %s384 = smul.u32 2, %s25
        %p385 = scmp.eq.s32.totalorder %s26, 0
        // Predicated region
        $region68: #{tunable_whisper_audio_encoder.20} parent=54 // pred_check
          %p386 = pneg %p385
        $region69: #{tunable_whisper_audio_encoder.20} parent=54 // pred_check_branch
          %388 = sbr.rel (%p386) target = $region71
        $region70: #{tunable_whisper_audio_encoder.20} parent=54 // pred_region
          %389 = vst [vmem:[#allocation2] sm:$0xff] 0.0
          %390 = vst [vmem:[#allocation2 + $0x8] sm:$0xff] 0.0
          %391 = vst [vmem:[#allocation2 + $0x10] sm:$0xff] 0.0
          %392 = vst [vmem:[#allocation2 + $0x18] sm:$0xff] 0.0
          %393 = vst [vmem:[#allocation2 + $0x20] sm:$0xff] 0.0
          %394 = vst [vmem:[#allocation2 + $0x28] sm:$0xff] 0.0
          %395 = vst [vmem:[#allocation2 + $0x30] sm:$0xff] 0.0
          %396 = vst [vmem:[#allocation2 + $0x38] sm:$0xff] 0.0
        $region71: #{tunable_whisper_audio_encoder.20} parent=54 // pred_fallthru
          _
        %v397 = vld [vmem:[#allocation2] sm:$0xff]
        %v398 = vld [vmem:[#allocation2 + $0x8] sm:$0xff]
        %v399 = vld [vmem:[#allocation2 + $0x10] sm:$0xff]
        %v400 = vld [vmem:[#allocation2 + $0x18] sm:$0xff]
        %v401 = vld [vmem:[#allocation2 + $0x20] sm:$0xff]
        %v402 = vld [vmem:[#allocation2 + $0x28] sm:$0xff]
        %v403 = vld [vmem:[#allocation2 + $0x30] sm:$0xff]
        %v404 = vld [vmem:[#allocation2 + $0x38] sm:$0xff]
        %v405 = vld [vmem:[%s298] sm:$0xff]
        %v406 = vld [vmem:[%s298 + $0x8] sm:$0xff]
        %v407 = vld [vmem:[%s298 + $0x10] sm:$0xff]
        %v408 = vld [vmem:[%s298 + $0x18] sm:$0xff]
        %v409 = vld [vmem:[%s298 + $0x20] sm:$0xff]
        %v410 = vld [vmem:[%s298 + $0x28] sm:$0xff]
        %v411 = vld [vmem:[%s298 + $0x30] sm:$0xff]
        %v412 = vld [vmem:[%s298 + $0x38] sm:$0xff]
        %v413 = vld [vmem:[%s306] sm:$0xff]
        %v414 = vld [vmem:[%s306 + $0x8] sm:$0xff]
        %v415 = vld [vmem:[%s306 + $0x10] sm:$0xff]
        %v416 = vld [vmem:[%s306 + $0x18] sm:$0xff]
        %v417 = vld [vmem:[%s306 + $0x20] sm:$0xff]
        %v418 = vld [vmem:[%s306 + $0x28] sm:$0xff]
        %v419 = vld [vmem:[%s306 + $0x30] sm:$0xff]
        %v420 = vld [vmem:[%s306 + $0x38] sm:$0xff]
        %v421 = vld [vmem:[%s306 + $0x40] sm:$0xff]
        %v422 = vld [vmem:[%s306 + $0x48] sm:$0xff]
        %v423 = vld [vmem:[%s306 + $0x50] sm:$0xff]
        %v424 = vld [vmem:[%s306 + $0x58] sm:$0xff]
        %v425 = vld [vmem:[%s306 + $0x60] sm:$0xff]
        %v426 = vld [vmem:[%s306 + $0x68] sm:$0xff]
        %v427 = vld [vmem:[%s306 + $0x70] sm:$0xff]
        %v428 = vld [vmem:[%s306 + $0x78] sm:$0xff]
        %v429 = vld [vmem:[%s306 + $0x80] sm:$0xff]
        %v430 = vld [vmem:[%s306 + $0x88] sm:$0xff]
        %v431 = vld [vmem:[%s306 + $0x90] sm:$0xff]
        %v432 = vld [vmem:[%s306 + $0x98] sm:$0xff]
        %v433 = vld [vmem:[%s306 + $0xa0] sm:$0xff]
        %v434 = vld [vmem:[%s306 + $0xa8] sm:$0xff]
        %v435 = vld [vmem:[%s306 + $0xb0] sm:$0xff]
        %v436 = vld [vmem:[%s306 + $0xb8] sm:$0xff]
        %v437 = vld [vmem:[%s306 + $0xc0] sm:$0xff]
        %v438 = vld [vmem:[%s306 + $0xc8] sm:$0xff]
        %v439 = vld [vmem:[%s306 + $0xd0] sm:$0xff]
        %v440 = vld [vmem:[%s306 + $0xd8] sm:$0xff]
        %v441 = vld [vmem:[%s306 + $0xe0] sm:$0xff]
        %v442 = vld [vmem:[%s306 + $0xe8] sm:$0xff]
        %v443 = vld [vmem:[%s306 + $0xf0] sm:$0xff]
        %v444 = vld [vmem:[%s306 + $0xf8] sm:$0xff]
        %v445 = vld [vmem:[%s306 + $0x100] sm:$0xff]
        %v446 = vld [vmem:[%s306 + $0x108] sm:$0xff]
        %v447 = vld [vmem:[%s306 + $0x110] sm:$0xff]
        %v448 = vld [vmem:[%s306 + $0x118] sm:$0xff]
        %v449 = vld [vmem:[%s306 + $0x120] sm:$0xff]
        %v450 = vld [vmem:[%s306 + $0x128] sm:$0xff]
        %v451 = vld [vmem:[%s306 + $0x130] sm:$0xff]
        %v452 = vld [vmem:[%s306 + $0x138] sm:$0xff]
        %v453 = vld [vmem:[%s306 + $0x140] sm:$0xff]
        %v454 = vld [vmem:[%s306 + $0x148] sm:$0xff]
        %v455 = vld [vmem:[%s306 + $0x150] sm:$0xff]
        %v456 = vld [vmem:[%s306 + $0x158] sm:$0xff]
        %v457 = vld [vmem:[%s306 + $0x160] sm:$0xff]
        %v458 = vld [vmem:[%s306 + $0x168] sm:$0xff]
        %v459 = vld [vmem:[%s306 + $0x170] sm:$0xff]
        %v460 = vld [vmem:[%s306 + $0x178] sm:$0xff]
        %v461 = vld [vmem:[%s306 + $0x180] sm:$0xff]
        %v462 = vld [vmem:[%s306 + $0x188] sm:$0xff]
        %v463 = vld [vmem:[%s306 + $0x190] sm:$0xff]
        %v464 = vld [vmem:[%s306 + $0x198] sm:$0xff]
        %v465 = vld [vmem:[%s306 + $0x1a0] sm:$0xff]
        %v466 = vld [vmem:[%s306 + $0x1a8] sm:$0xff]
        %v467 = vld [vmem:[%s306 + $0x1b0] sm:$0xff]
        %v468 = vld [vmem:[%s306 + $0x1b8] sm:$0xff]
        %v469 = vld [vmem:[%s306 + $0x1c0] sm:$0xff]
        %v470 = vld [vmem:[%s306 + $0x1c8] sm:$0xff]
        %v471 = vld [vmem:[%s306 + $0x1d0] sm:$0xff]
        %v472 = vld [vmem:[%s306 + $0x1d8] sm:$0xff]
        %v473 = vld [vmem:[%s306 + $0x1e0] sm:$0xff]
        %v474 = vld [vmem:[%s306 + $0x1e8] sm:$0xff]
        %v475 = vld [vmem:[%s306 + $0x1f0] sm:$0xff]
        %v476 = vld [vmem:[%s306 + $0x1f8] sm:$0xff]
        %v485 = vunpack.c.l.b16 %v405
        %v486 = vunpack.c.h.b16 %v405
        %v487 = vunpack.c.l.b16 %v406
        %v488 = vunpack.c.h.b16 %v406
        %v489 = vunpack.c.l.b16 %v407
        %v490 = vunpack.c.h.b16 %v407
        %v491 = vunpack.c.l.b16 %v408
        %v492 = vunpack.c.h.b16 %v408
        %v493 = vunpack.c.l.b16 %v409
        %v494 = vunpack.c.h.b16 %v409
        %v495 = vunpack.c.l.b16 %v410
        %v496 = vunpack.c.h.b16 %v410
        %v497 = vunpack.c.l.b16 %v411
        %v498 = vunpack.c.h.b16 %v411
        %v499 = vunpack.c.l.b16 %v412
        %v500 = vunpack.c.h.b16 %v412
        %v501 = vpack.c.b16 %v489, %v485
        %v502 = vpack.c.b16 %v490, %v486
        %v503 = vpack.c.b16 %v491, %v487
        %v504 = vpack.c.b16 %v492, %v488
        %v505 = vpack.c.b16 %v497, %v493
        %v506 = vpack.c.b16 %v498, %v494
        %v507 = vpack.c.b16 %v499, %v495
        %v508 = vpack.c.b16 %v500, %v496
        %v581 = vunpack.c.l.b16 %v413
        %v582 = vunpack.c.h.b16 %v413
        %v583 = vunpack.c.l.b16 %v414
        %v584 = vunpack.c.h.b16 %v414
        %v585 = vunpack.c.l.b16 %v415
        %v586 = vunpack.c.h.b16 %v415
        %v587 = vunpack.c.l.b16 %v416
        %v588 = vunpack.c.h.b16 %v416
        %v589 = vunpack.c.l.b16 %v417
        %v590 = vunpack.c.h.b16 %v417
        %v591 = vunpack.c.l.b16 %v418
        %v592 = vunpack.c.h.b16 %v418
        %v593 = vunpack.c.l.b16 %v419
        %v594 = vunpack.c.h.b16 %v419
        %v595 = vunpack.c.l.b16 %v420
        %v596 = vunpack.c.h.b16 %v420
        %v597 = vunpack.c.l.b16 %v421
        %v598 = vunpack.c.h.b16 %v421
        %v599 = vunpack.c.l.b16 %v422
        %v600 = vunpack.c.h.b16 %v422
        %v601 = vunpack.c.l.b16 %v423
        %v602 = vunpack.c.h.b16 %v423
        %v603 = vunpack.c.l.b16 %v424
        %v604 = vunpack.c.h.b16 %v424
        %v605 = vunpack.c.l.b16 %v425
        %v606 = vunpack.c.h.b16 %v425
        %v607 = vunpack.c.l.b16 %v426
        %v608 = vunpack.c.h.b16 %v426
        %v609 = vunpack.c.l.b16 %v427
        %v610 = vunpack.c.h.b16 %v427
        %v611 = vunpack.c.l.b16 %v428
        %v612 = vunpack.c.h.b16 %v428
        %v613 = vunpack.c.l.b16 %v429
        %v614 = vunpack.c.h.b16 %v429
        %v615 = vunpack.c.l.b16 %v430
        %v616 = vunpack.c.h.b16 %v430
        %v617 = vunpack.c.l.b16 %v431
        %v618 = vunpack.c.h.b16 %v431
        %v619 = vunpack.c.l.b16 %v432
        %v620 = vunpack.c.h.b16 %v432
        %v621 = vunpack.c.l.b16 %v433
        %v622 = vunpack.c.h.b16 %v433
        %v623 = vunpack.c.l.b16 %v434
        %v624 = vunpack.c.h.b16 %v434
        %v625 = vunpack.c.l.b16 %v435
        %v626 = vunpack.c.h.b16 %v435
        %v627 = vunpack.c.l.b16 %v436
        %v628 = vunpack.c.h.b16 %v436
        %v629 = vunpack.c.l.b16 %v437
        %v630 = vunpack.c.h.b16 %v437
        %v631 = vunpack.c.l.b16 %v438
        %v632 = vunpack.c.h.b16 %v438
        %v633 = vunpack.c.l.b16 %v439
        %v634 = vunpack.c.h.b16 %v439
        %v635 = vunpack.c.l.b16 %v440
        %v636 = vunpack.c.h.b16 %v440
        %v637 = vunpack.c.l.b16 %v441
        %v638 = vunpack.c.h.b16 %v441
        %v639 = vunpack.c.l.b16 %v442
        %v640 = vunpack.c.h.b16 %v442
        %v641 = vunpack.c.l.b16 %v443
        %v642 = vunpack.c.h.b16 %v443
        %v643 = vunpack.c.l.b16 %v444
        %v644 = vunpack.c.h.b16 %v444
        %v645 = vunpack.c.l.b16 %v445
        %v646 = vunpack.c.h.b16 %v445
        %v647 = vunpack.c.l.b16 %v446
        %v648 = vunpack.c.h.b16 %v446
        %v649 = vunpack.c.l.b16 %v447
        %v650 = vunpack.c.h.b16 %v447
        %v651 = vunpack.c.l.b16 %v448
        %v652 = vunpack.c.h.b16 %v448
        %v653 = vunpack.c.l.b16 %v449
        %v654 = vunpack.c.h.b16 %v449
        %v655 = vunpack.c.l.b16 %v450
        %v656 = vunpack.c.h.b16 %v450
        %v657 = vunpack.c.l.b16 %v451
        %v658 = vunpack.c.h.b16 %v451
        %v659 = vunpack.c.l.b16 %v452
        %v660 = vunpack.c.h.b16 %v452
        %v661 = vunpack.c.l.b16 %v453
        %v662 = vunpack.c.h.b16 %v453
        %v663 = vunpack.c.l.b16 %v454
        %v664 = vunpack.c.h.b16 %v454
        %v665 = vunpack.c.l.b16 %v455
        %v666 = vunpack.c.h.b16 %v455
        %v667 = vunpack.c.l.b16 %v456
        %v668 = vunpack.c.h.b16 %v456
        %v669 = vunpack.c.l.b16 %v457
        %v670 = vunpack.c.h.b16 %v457
        %v671 = vunpack.c.l.b16 %v458
        %v672 = vunpack.c.h.b16 %v458
        %v673 = vunpack.c.l.b16 %v459
        %v674 = vunpack.c.h.b16 %v459
        %v675 = vunpack.c.l.b16 %v460
        %v676 = vunpack.c.h.b16 %v460
        %v677 = vunpack.c.l.b16 %v461
        %v678 = vunpack.c.h.b16 %v461
        %v679 = vunpack.c.l.b16 %v462
        %v680 = vunpack.c.h.b16 %v462
        %v681 = vunpack.c.l.b16 %v463
        %v682 = vunpack.c.h.b16 %v463
        %v683 = vunpack.c.l.b16 %v464
        %v684 = vunpack.c.h.b16 %v464
        %v685 = vunpack.c.l.b16 %v465
        %v686 = vunpack.c.h.b16 %v465
        %v687 = vunpack.c.l.b16 %v466
        %v688 = vunpack.c.h.b16 %v466
        %v689 = vunpack.c.l.b16 %v467
        %v690 = vunpack.c.h.b16 %v467
        %v691 = vunpack.c.l.b16 %v468
        %v692 = vunpack.c.h.b16 %v468
        %v693 = vunpack.c.l.b16 %v469
        %v694 = vunpack.c.h.b16 %v469
        %v695 = vunpack.c.l.b16 %v470
        %v696 = vunpack.c.h.b16 %v470
        %v697 = vunpack.c.l.b16 %v471
        %v698 = vunpack.c.h.b16 %v471
        %v699 = vunpack.c.l.b16 %v472
        %v700 = vunpack.c.h.b16 %v472
        %v701 = vunpack.c.l.b16 %v473
        %v702 = vunpack.c.h.b16 %v473
        %v703 = vunpack.c.l.b16 %v474
        %v704 = vunpack.c.h.b16 %v474
        %v705 = vunpack.c.l.b16 %v475
        %v706 = vunpack.c.h.b16 %v475
        %v707 = vunpack.c.l.b16 %v476
        %v708 = vunpack.c.h.b16 %v476
        %v709 = vpack.c.b16 %v583, %v581
        %v710 = vpack.c.b16 %v584, %v582
        %v711 = vpack.c.b16 %v587, %v585
        %v712 = vpack.c.b16 %v588, %v586
        %v713 = vpack.c.b16 %v591, %v589
        %v714 = vpack.c.b16 %v592, %v590
        %v715 = vpack.c.b16 %v595, %v593
        %v716 = vpack.c.b16 %v596, %v594
        %v717 = vpack.c.b16 %v599, %v597
        %v718 = vpack.c.b16 %v600, %v598
        %v719 = vpack.c.b16 %v603, %v601
        %v720 = vpack.c.b16 %v604, %v602
        %v721 = vpack.c.b16 %v607, %v605
        %v722 = vpack.c.b16 %v608, %v606
        %v723 = vpack.c.b16 %v611, %v609
        %v724 = vpack.c.b16 %v612, %v610
        %v725 = vpack.c.b16 %v615, %v613
        %v726 = vpack.c.b16 %v616, %v614
        %v727 = vpack.c.b16 %v619, %v617
        %v728 = vpack.c.b16 %v620, %v618
        %v729 = vpack.c.b16 %v623, %v621
        %v730 = vpack.c.b16 %v624, %v622
        %v731 = vpack.c.b16 %v627, %v625
        %v732 = vpack.c.b16 %v628, %v626
        %v733 = vpack.c.b16 %v631, %v629
        %v734 = vpack.c.b16 %v632, %v630
        %v735 = vpack.c.b16 %v635, %v633
        %v736 = vpack.c.b16 %v636, %v634
        %v737 = vpack.c.b16 %v639, %v637
        %v738 = vpack.c.b16 %v640, %v638
        %v739 = vpack.c.b16 %v643, %v641
        %v740 = vpack.c.b16 %v644, %v642
        %v741 = vpack.c.b16 %v647, %v645
        %v742 = vpack.c.b16 %v648, %v646
        %v743 = vpack.c.b16 %v651, %v649
        %v744 = vpack.c.b16 %v652, %v650
        %v745 = vpack.c.b16 %v655, %v653
        %v746 = vpack.c.b16 %v656, %v654
        %v747 = vpack.c.b16 %v659, %v657
        %v748 = vpack.c.b16 %v660, %v658
        %v749 = vpack.c.b16 %v663, %v661
        %v750 = vpack.c.b16 %v664, %v662
        %v751 = vpack.c.b16 %v667, %v665
        %v752 = vpack.c.b16 %v668, %v666
        %v753 = vpack.c.b16 %v671, %v669
        %v754 = vpack.c.b16 %v672, %v670
        %v755 = vpack.c.b16 %v675, %v673
        %v756 = vpack.c.b16 %v676, %v674
        %v757 = vpack.c.b16 %v679, %v677
        %v758 = vpack.c.b16 %v680, %v678
        %v759 = vpack.c.b16 %v683, %v681
        %v760 = vpack.c.b16 %v684, %v682
        %v761 = vpack.c.b16 %v687, %v685
        %v762 = vpack.c.b16 %v688, %v686
        %v763 = vpack.c.b16 %v691, %v689
        %v764 = vpack.c.b16 %v692, %v690
        %v765 = vpack.c.b16 %v695, %v693
        %v766 = vpack.c.b16 %v696, %v694
        %v767 = vpack.c.b16 %v699, %v697
        %v768 = vpack.c.b16 %v700, %v698
        %v769 = vpack.c.b16 %v703, %v701
        %v770 = vpack.c.b16 %v704, %v702
        %v771 = vpack.c.b16 %v707, %v705
        %v772 = vpack.c.b16 %v708, %v706
        %837 = vmatpush.bf16.msra.mxu0 %v723
        %838 = vmatpush.bf16.msra.mxu0 %v721
        %839 = vmatpush.bf16.msra.mxu0 %v719
        %840 = vmatpush.bf16.msra.mxu0 %v717
        %841 = vmatpush.bf16.msra.mxu0 %v715
        %842 = vmatpush.bf16.msra.mxu0 %v713
        %843 = vmatpush.bf16.msra.mxu0 %v711
        %844 = vmatpush.bf16.msra.mxu0 %v709
        %845 = vmatmul.bf16.gmra.mxu0 %v501
        %v846 = vpop.f32.mrf.mxu0
        %v847 = vadd.f32 0.0, %v846
        %v848 = vpop.f32.mrf.mxu0
        %v849 = vadd.f32 0.0, %v848
        %850 = vmatmul.bf16.gmra.mxu0 %v505
        %v851 = vpop.f32.mrf.mxu0
        %v852 = vadd.f32 0.0, %v851
        %v853 = vpop.f32.mrf.mxu0
        %v854 = vadd.f32 0.0, %v853
        %855 = vdwg.mxu0
        %856 = vmatpush.bf16.msra.mxu0 %v739
        %857 = vmatpush.bf16.msra.mxu0 %v737
        %858 = vmatpush.bf16.msra.mxu0 %v735
        %859 = vmatpush.bf16.msra.mxu0 %v733
        %860 = vmatpush.bf16.msra.mxu0 %v731
        %861 = vmatpush.bf16.msra.mxu0 %v729
        %862 = vmatpush.bf16.msra.mxu0 %v727
        %863 = vmatpush.bf16.msra.mxu0 %v725
        %864 = vmatmul.bf16.gmra.mxu0 %v502
        %v865 = vpop.f32.mrf.mxu0
        %v866 = vadd.f32 %v847, %v865
        %v867 = vpop.f32.mrf.mxu0
        %v868 = vadd.f32 %v849, %v867
        %869 = vmatmul.bf16.gmra.mxu0 %v506
        %v870 = vpop.f32.mrf.mxu0
        %v871 = vadd.f32 %v852, %v870
        %v872 = vpop.f32.mrf.mxu0
        %v873 = vadd.f32 %v854, %v872
        %874 = vdwg.mxu0
        %875 = vmatpush.bf16.msra.mxu0 %v755
        %876 = vmatpush.bf16.msra.mxu0 %v753
        %877 = vmatpush.bf16.msra.mxu0 %v751
        %878 = vmatpush.bf16.msra.mxu0 %v749
        %879 = vmatpush.bf16.msra.mxu0 %v747
        %880 = vmatpush.bf16.msra.mxu0 %v745
        %881 = vmatpush.bf16.msra.mxu0 %v743
        %882 = vmatpush.bf16.msra.mxu0 %v741
        %883 = vmatmul.bf16.gmra.mxu0 %v503
        %v884 = vpop.f32.mrf.mxu0
        %v885 = vadd.f32 %v866, %v884
        %v886 = vpop.f32.mrf.mxu0
        %v887 = vadd.f32 %v868, %v886
        %888 = vmatmul.bf16.gmra.mxu0 %v507
        %v889 = vpop.f32.mrf.mxu0
        %v890 = vadd.f32 %v871, %v889
        %v891 = vpop.f32.mrf.mxu0
        %v892 = vadd.f32 %v873, %v891
        %893 = vdwg.mxu0
        %894 = vmatpush.bf16.msra.mxu0 %v771
        %895 = vmatpush.bf16.msra.mxu0 %v769
        %896 = vmatpush.bf16.msra.mxu0 %v767
        %897 = vmatpush.bf16.msra.mxu0 %v765
        %898 = vmatpush.bf16.msra.mxu0 %v763
        %899 = vmatpush.bf16.msra.mxu0 %v761
        %900 = vmatpush.bf16.msra.mxu0 %v759
        %901 = vmatpush.bf16.msra.mxu0 %v757
        %902 = vmatmul.bf16.gmra.mxu0 %v504
        %v903 = vpop.f32.mrf.mxu0
        %v904 = vadd.f32 %v885, %v903
        %v905 = vpop.f32.mrf.mxu0
        %v906 = vadd.f32 %v887, %v905
        %907 = vmatmul.bf16.gmra.mxu0 %v508
        %v908 = vpop.f32.mrf.mxu0
        %v909 = vadd.f32 %v890, %v908
        %v910 = vpop.f32.mrf.mxu0
        %v911 = vadd.f32 %v892, %v910
        %912 = vdwg.mxu0
        %913 = vmatpush.bf16.msra.mxu0 %v724
        %914 = vmatpush.bf16.msra.mxu0 %v722
        %915 = vmatpush.bf16.msra.mxu0 %v720
        %916 = vmatpush.bf16.msra.mxu0 %v718
        %917 = vmatpush.bf16.msra.mxu0 %v716
        %918 = vmatpush.bf16.msra.mxu0 %v714
        %919 = vmatpush.bf16.msra.mxu0 %v712
        %920 = vmatpush.bf16.msra.mxu0 %v710
        %921 = vmatmul.bf16.gmra.mxu0 %v501
        %v922 = vpop.f32.mrf.mxu0
        %v923 = vadd.f32 0.0, %v922
        %v924 = vpop.f32.mrf.mxu0
        %v925 = vadd.f32 0.0, %v924
        %926 = vmatmul.bf16.gmra.mxu0 %v505
        %v927 = vpop.f32.mrf.mxu0
        %v928 = vadd.f32 0.0, %v927
        %v929 = vpop.f32.mrf.mxu0
        %v930 = vadd.f32 0.0, %v929
        %931 = vdwg.mxu0
        %932 = vmatpush.bf16.msra.mxu0 %v740
        %933 = vmatpush.bf16.msra.mxu0 %v738
        %934 = vmatpush.bf16.msra.mxu0 %v736
        %935 = vmatpush.bf16.msra.mxu0 %v734
        %936 = vmatpush.bf16.msra.mxu0 %v732
        %937 = vmatpush.bf16.msra.mxu0 %v730
        %938 = vmatpush.bf16.msra.mxu0 %v728
        %939 = vmatpush.bf16.msra.mxu0 %v726
        %940 = vmatmul.bf16.gmra.mxu0 %v502
        %v941 = vpop.f32.mrf.mxu0
        %v942 = vadd.f32 %v923, %v941
        %v943 = vpop.f32.mrf.mxu0
        %v944 = vadd.f32 %v925, %v943
        %945 = vmatmul.bf16.gmra.mxu0 %v506
        %v946 = vpop.f32.mrf.mxu0
        %v947 = vadd.f32 %v928, %v946
        %v948 = vpop.f32.mrf.mxu0
        %v949 = vadd.f32 %v930, %v948
        %950 = vdwg.mxu0
        %951 = vmatpush.bf16.msra.mxu0 %v756
        %952 = vmatpush.bf16.msra.mxu0 %v754
        %953 = vmatpush.bf16.msra.mxu0 %v752
        %954 = vmatpush.bf16.msra.mxu0 %v750
        %955 = vmatpush.bf16.msra.mxu0 %v748
        %956 = vmatpush.bf16.msra.mxu0 %v746
        %957 = vmatpush.bf16.msra.mxu0 %v744
        %958 = vmatpush.bf16.msra.mxu0 %v742
        %959 = vmatmul.bf16.gmra.mxu0 %v503
        %v960 = vpop.f32.mrf.mxu0
        %v961 = vadd.f32 %v942, %v960
        %v962 = vpop.f32.mrf.mxu0
        %v963 = vadd.f32 %v944, %v962
        %964 = vmatmul.bf16.gmra.mxu0 %v507
        %v965 = vpop.f32.mrf.mxu0
        %v966 = vadd.f32 %v947, %v965
        %v967 = vpop.f32.mrf.mxu0
        %v968 = vadd.f32 %v949, %v967
        %969 = vdwg.mxu0
        %970 = vmatpush.bf16.msra.mxu0 %v772
        %971 = vmatpush.bf16.msra.mxu0 %v770
        %972 = vmatpush.bf16.msra.mxu0 %v768
        %973 = vmatpush.bf16.msra.mxu0 %v766
        %974 = vmatpush.bf16.msra.mxu0 %v764
        %975 = vmatpush.bf16.msra.mxu0 %v762
        %976 = vmatpush.bf16.msra.mxu0 %v760
        %977 = vmatpush.bf16.msra.mxu0 %v758
        %978 = vmatmul.bf16.gmra.mxu0 %v504
        %v979 = vpop.f32.mrf.mxu0
        %v980 = vadd.f32 %v961, %v979
        %v981 = vpop.f32.mrf.mxu0
        %v982 = vadd.f32 %v963, %v981
        %983 = vmatmul.bf16.gmra.mxu0 %v508
        %v984 = vpop.f32.mrf.mxu0
        %v985 = vadd.f32 %v966, %v984
        %v986 = vpop.f32.mrf.mxu0
        %v987 = vadd.f32 %v968, %v986
        %988 = vdwg.mxu0
        %v989 = vadd.f32 %v397, %v904
        %v990 = vadd.f32 %v398, %v980
        %v991 = vadd.f32 %v399, %v906
        %v992 = vadd.f32 %v400, %v982
        %v993 = vadd.f32 %v401, %v909
        %v994 = vadd.f32 %v402, %v985
        %v995 = vadd.f32 %v403, %v911
        %v996 = vadd.f32 %v404, %v987
        %997 = vst [vmem:[#allocation2] sm:$0xff] %v989
        %998 = vst [vmem:[#allocation2 + $0x8] sm:$0xff] %v990
        %999 = vst [vmem:[#allocation2 + $0x10] sm:$0xff] %v991
        %1000 = vst [vmem:[#allocation2 + $0x18] sm:$0xff] %v992
        %1001 = vst [vmem:[#allocation2 + $0x20] sm:$0xff] %v993
        %1002 = vst [vmem:[#allocation2 + $0x28] sm:$0xff] %v994
        %1003 = vst [vmem:[#allocation2 + $0x30] sm:$0xff] %v995
        %1004 = vst [vmem:[#allocation2 + $0x38] sm:$0xff] %v996
        %p1005 = scmp.eq.s32.totalorder %s26, 1
        // Predicated region
        $region72: #{tunable_whisper_audio_encoder.20} parent=54 // pred_check
          %p1006 = pneg %p1005
        $region73: #{tunable_whisper_audio_encoder.20} parent=54 // pred_check_branch
          %1008 = sbr.rel (%p1006) target = $region75
        $region74: #{tunable_whisper_audio_encoder.20} parent=54 // pred_region
          %v1009 = vld [vmem:[#allocation2] sm:$0xff]
          %v1010 = vld [vmem:[#allocation2 + $0x8] sm:$0xff]
          %v1011 = vld [vmem:[#allocation2 + $0x10] sm:$0xff]
          %v1012 = vld [vmem:[#allocation2 + $0x18] sm:$0xff]
          %v1013 = vld [vmem:[#allocation2 + $0x20] sm:$0xff]
          %v1014 = vld [vmem:[#allocation2 + $0x28] sm:$0xff]
          %v1015 = vld [vmem:[#allocation2 + $0x30] sm:$0xff]
          %v1016 = vld [vmem:[#allocation2 + $0x38] sm:$0xff]
          %v1017 = vld [vmem:[#allocation6] sm:$0x3]
          %v1019 = vperm.slane %v1017, 0
          %v1020 = vperm.slane %v1017, 1
          %v1023 = vadd.f32 %v1009, %v1019
          %v1024 = vadd.f32 %v1010, %v1020
          %v1025 = vadd.f32 %v1011, %v1019
          %v1026 = vadd.f32 %v1012, %v1020
          %v1027 = vadd.f32 %v1013, %v1019
          %v1028 = vadd.f32 %v1014, %v1020
          %v1029 = vadd.f32 %v1015, %v1019
          %v1030 = vadd.f32 %v1016, %v1020
          %v1031 = vld [vmem:[%s370] sm:$0xff]
          %v1032 = vld [vmem:[%s370 + $0x8] sm:$0xff]
          %v1033 = vld [vmem:[%s370 + $0x10] sm:$0xff]
          %v1034 = vld [vmem:[%s370 + $0x18] sm:$0xff]
          %v1035 = vunpack.c.l.bf16 %v1031
          %v1036 = vunpack.c.h.bf16 %v1031
          %v1037 = vunpack.c.l.bf16 %v1032
          %v1038 = vunpack.c.h.bf16 %v1032
          %v1039 = vunpack.c.l.bf16 %v1033
          %v1040 = vunpack.c.h.bf16 %v1033
          %v1041 = vunpack.c.l.bf16 %v1034
          %v1042 = vunpack.c.h.bf16 %v1034
          %v1043 = vadd.f32 %v1023, %v1035
          %v1044 = vadd.f32 %v1024, %v1036
          %v1045 = vadd.f32 %v1025, %v1037
          %v1046 = vadd.f32 %v1026, %v1038
          %v1047 = vadd.f32 %v1027, %v1039
          %v1048 = vadd.f32 %v1028, %v1040
          %v1049 = vadd.f32 %v1029, %v1041
          %v1050 = vadd.f32 %v1030, %v1042
          %v1051 = vpack.c.bf16 %v1044, %v1043
          %v1052 = vpack.c.bf16 %v1046, %v1045
          %v1053 = vpack.c.bf16 %v1048, %v1047
          %v1054 = vpack.c.bf16 %v1050, %v1049
          %1055 = vst [vmem:[%s382] sm:$0xff] %v1051
          %1056 = vst [vmem:[%s382 + $0x8] sm:$0xff] %v1052
          %1057 = vst [vmem:[%s382 + $0x10] sm:$0xff] %v1053
          %1058 = vst [vmem:[%s382 + $0x18] sm:$0xff] %v1054
        $region75: #{tunable_whisper_audio_encoder.20} parent=54 // pred_fallthru
          _
        %s1059 = smul.u32 4, %s24
        %s1060 = smul.u32 2, %s25
        %p1061 = scmp.lt.s32.totalorder %s1059, 3
        %s1062 = scalar_select %p1061, %s1059, 3
        %p1063 = scmp.lt.s32.totalorder %s1060, 1
        %s1064 = scalar_select %p1063, %s1060, 1
        %s1065 = smul.addr %s1062, 2
        %s1066 = sadd.s32 %s1064, %s1065
        %s1067 = smul.addr %s1066, 4
        %s1068 = scalar_lea.vmem %s4, %s1067
        // Predicated region
        $region76: #{tunable_whisper_audio_encoder.20} parent=54 // pred_check
          %p1069 = pneg %p168
        $region77: #{tunable_whisper_audio_encoder.20} parent=54 // pred_check_branch
          %1071 = sbr.rel (%p1069) target = $region79
        $region78: #{tunable_whisper_audio_encoder.20} parent=54 // pred_region
          %s1072 = smul.u32 4, %s24
          %s1073 = smul.u32 2, %s25
        $region79: #{tunable_whisper_audio_encoder.20} parent=54 // pred_fallthru
          _
        // Predicated region
        $region80: #{tunable_whisper_audio_encoder.20} parent=54 // pred_check
          %p1074 = pneg %p168
        $region81: #{tunable_whisper_audio_encoder.20} parent=54 // pred_check_branch
          %1076 = sbr.rel (%p1074) target = $region83
        $region82: #{tunable_whisper_audio_encoder.20} parent=54 // pred_region
          %s1077 = smul.u32 4, %s24
          %s1078 = smul.u32 2, %s25
          %p1079 = scmp.lt.s32.totalorder %s1077, 3
          %s1080 = scalar_select %p1079, %s1077, 3
          %p1081 = scmp.lt.s32.totalorder %s1078, 1
          %s1082 = scalar_select %p1081, %s1078, 1
          %s1083 = smul.addr %s1080, 2
          %s1084 = sadd.s32 %s1082, %s1083
          %s1085 = smul.addr %s1084, 4
          %s1086 = scalar_lea.vmem %s4, %s1085
        $region83: #{tunable_whisper_audio_encoder.20} parent=54 // pred_fallthru
          _
      $region55: #{tunable_whisper_audio_encoder.20} parent=5 // pred_fallthru
        _
      %p1087 = scmp.le.s32.totalorder 2, %s14
      // Predicated region
      $region84: #{tunable_whisper_audio_encoder.20} parent=5 // pred_check
        %p1088 = pneg %p1087
      $region85: #{tunable_whisper_audio_encoder.20} parent=5 // pred_check_branch
        %1090 = sbr.rel (%p1088) target = $region87
      $region86: #{tunable_whisper_audio_encoder.20} parent=5 // pred_region
        %s1091 = ssub.s32 %s14, 2
      $region87: #{tunable_whisper_audio_encoder.20} parent=5 // pred_fallthru
        _
    $region6: #{tunable_whisper_audio_encoder.20} parent=1 // loop_footer
      %s18 = sadd.s32 1, %s14
    $region7: #{tunable_whisper_audio_encoder.20} parent=1 // loop_footer_branch
      %13 = sbr.rel target = $region3
    $region8: #{tunable_whisper_audio_encoder.20} parent=1 // loop_exit
      _
    %1092 = vsyncpa [#allocation5], 1
    %s1093 = scalar_lea.sflag [#allocation5], 1
    %1094 = vsyncpa %s1093, 1
    %1095 = vsyncpa [#allocation7], 1

// kernel: tunable_whisper_audio_encoder.27
$region0: #{tunable_whisper_audio_encoder.27}
  #allocation0 [shape = 'u32[]', space=smem, size = 0x4, offset = 0x4, fixed_abs, tag = 'smem constant byte address 0x4 - core index']
  #allocation1 [shape = 'u32[72,128]{1,0:T(1,128)}', space=vmem, size = 0x9000, scoped, tag = 'internal scratch']
  #allocation2 [shape = 'bf16[16,256]{1,0:T(8,128)(2,1)}', space=vmem, size = 0x2000, scoped, tag = 'scratch operand']
  %s0 = inlined_call_operand.vmem [shape: bf16[16,256], index: 0, kind: input, shape index: {}]
  %s1 = inlined_call_operand.hbm [shape: bf16[256,128], index: 1, kind: input, shape index: {}]
  %s2 = inlined_call_operand.vmem [shape: f32[1,128], index: 2, kind: input, shape index: {}]
  %s3 = inlined_call_operand.vmem [shape: bf16[16,128], index: 3, kind: output, shape index: {}]
  %s4 = sld [smem:[#allocation0]]
  $region30: #{tunable_whisper_audio_encoder.27} parent=0
    _
  %s6 = ssub.s32 1, %s4
  %s7 = scalar_select 0, %s6, %s4
  $region1: #{tunable_whisper_audio_encoder.27} parent=0
    #allocation3 [shape = 'u8[65536]{0}', space=vmem, size = 0x10000, scoped, tag = 'input window, operand 1, single buffered']
    #allocation4 [shape = 's32[1]{0}', space=sflag, size = 0x4, scoped, tag = 'scoped memory for tunable_whisper_audio_encoder.27']
    %8 = vsyncpa [#allocation4], 0
    // Predicated region
    $region2: #{tunable_whisper_audio_encoder.27} parent=1 // pred_check
      _
    $region3: #{tunable_whisper_audio_encoder.27} parent=1 // pred_check_branch
      %10 = sbr.rel (0) target = $region5
    $region4: #{tunable_whisper_audio_encoder.27} parent=1 // pred_region
      _
    $region5: #{tunable_whisper_audio_encoder.27} parent=1 // pred_fallthru
      _
    // Predicated region
    $region6: #{tunable_whisper_audio_encoder.27} parent=1 // pred_check
      _
    $region7: #{tunable_whisper_audio_encoder.27} parent=1 // pred_check_branch
      %12 = sbr.rel (0) target = $region9
    $region8: #{tunable_whisper_audio_encoder.27} parent=1 // pred_region
      %14 = vsyncadd [#allocation4], 0
      %s15 = sshll.u32 %s1, 4
      %s16 = int_to_ptr.hbm [resolvable:$true] %s15
      %s17 = sshll.u32 [#allocation3], 4
      %s18 = int_to_ptr.vmem [resolvable:$true] %s17
      %23 = dma.hbm_to_vmem [thread:$0]  %s16, 2048, %s18, [#allocation4], 64, 64, 4
    $region9: #{tunable_whisper_audio_encoder.27} parent=1 // pred_fallthru
      _
    // Predicated region
    $region10: #{tunable_whisper_audio_encoder.27} parent=1 // pred_check
      _
    $region11: #{tunable_whisper_audio_encoder.27} parent=1 // pred_check_branch
      %25 = sbr.rel (0) target = $region13
    $region12: #{tunable_whisper_audio_encoder.27} parent=1 // pred_region
      _
    $region13: #{tunable_whisper_audio_encoder.27} parent=1 // pred_fallthru
      _
    // Predicated region
    $region14: #{tunable_whisper_audio_encoder.27} parent=1 // pred_check
      _
    $region15: #{tunable_whisper_audio_encoder.27} parent=1 // pred_check_branch
      %27 = sbr.rel (0) target = $region17
    $region16: #{tunable_whisper_audio_encoder.27} parent=1 // pred_region
      %29 = dma.done [#allocation4], 2048
    $region17: #{tunable_whisper_audio_encoder.27} parent=1 // pred_fallthru
      _
    %p30 = scmp.eq.s32.totalorder 0, 0
    // Predicated region
    $region18: #{tunable_whisper_audio_encoder.27} parent=1 // pred_check
      %p31 = pneg %p30
    $region19: #{tunable_whisper_audio_encoder.27} parent=1 // pred_check_branch
      %33 = sbr.rel (%p31) target = $region21
    $region20: #{tunable_whisper_audio_encoder.27} parent=1 // pred_region
      %v34 = vld [vmem:[%s0] sm:$0xff]
      %v35 = vld [vmem:[%s0 + $0x8] sm:$0xff]
      %v36 = vunpack.c.l.bf16 %v34
      %v37 = vunpack.c.h.bf16 %v34
      %v38 = vunpack.c.l.bf16 %v35
      %v39 = vunpack.c.h.bf16 %v35
      %v40 = vadd.f32 %v36, %v37
      %41 = vadd.xlane.f32.xlu0 %v40
      %v42 = vpop.xlane.xlu0 %41
      %v43 = vadd.f32 %v38, %v39
      %44 = vadd.xlane.f32.xlu0 %v43
      %v45 = vpop.xlane.xlu0 %44
      %v46 = vrcp.pop 256.0
      %v47 = vmul.f32 256.0, %v46
      %v48 = vsub.f32 1.0, %v47
      %v49 = vmul.f32 %v46, %v48
      %v50 = vadd.f32 %v46, %v49
      %vm51 = vweird.f32 %v46
      %v52 = vsel %vm51, %v46, %v50
      %v53 = vmul.f32 %v42, %v52
      %v54 = vmul.f32 %v45, %v52
      %v55 = vsub.f32 %v36, %v53
      %v56 = vsub.f32 %v37, %v53
      %v57 = vsub.f32 %v38, %v54
      %v58 = vsub.f32 %v39, %v54
      %v59 = vmul.f32 %v55, %v55
      %v60 = vmul.f32 %v56, %v56
      %v61 = vmul.f32 %v57, %v57
      %v62 = vmul.f32 %v58, %v58
      %v63 = vadd.f32 %v59, %v60
      %64 = vadd.xlane.f32.xlu0 %v63
      %v65 = vpop.xlane.xlu0 %64
      %v66 = vadd.f32 %v61, %v62
      %67 = vadd.xlane.f32.xlu0 %v66
      %v68 = vpop.xlane.xlu0 %67
      %v69 = vmul.f32 %v65, %v52
      %v70 = vmul.f32 %v68, %v52
      %v71 = vadd.f32 %v69, 1e-05
      %v72 = vadd.f32 %v70, 1e-05
      %v73 = vrsqrt.pop %v71
      %v74 = vmul.f32 %v73, %v71
      %v75 = vmul.f32 %v74, %v73
      %v76 = vmul.f32 0.5, %v75
      %v77 = vsub.f32 1.5, %v76
      %v78 = vmul.f32 %v73, %v77
      %vm79 = vweird.f32 %v71
      %vm80 = vweird.f32 %v73
      %vm81 = vmor %vm79, %vm80
      %v82 = vsel %vm81, %v73, %v78
      %v83 = vrsqrt.pop %v72
      %v84 = vmul.f32 %v83, %v72
      %v85 = vmul.f32 %v84, %v83
      %v86 = vmul.f32 0.5, %v85
      %v87 = vsub.f32 1.5, %v86
      %v88 = vmul.f32 %v83, %v87
      %vm89 = vweird.f32 %v72
      %vm90 = vweird.f32 %v83
      %vm91 = vmor %vm89, %vm90
      %v92 = vsel %vm91, %v83, %v88
      %v93 = vmul.f32 %v55, %v82
      %v94 = vmul.f32 %v56, %v82
      %v95 = vmul.f32 %v57, %v92
      %v96 = vmul.f32 %v58, %v92
      %v97 = vpack.c.bf16 %v94, %v93
      %v98 = vpack.c.bf16 %v96, %v95
      %99 = vst [vmem:[#allocation2] sm:$0xff] %v97
      %100 = vst [vmem:[#allocation2 + $0x8] sm:$0xff] %v98
    $region21: #{tunable_whisper_audio_encoder.27} parent=1 // pred_fallthru
      _
    %v101 = vld [vmem:[#allocation2] sm:$0xff]
    %v102 = vld [vmem:[#allocation2 + $0x8] sm:$0xff]
    %v103 = vld [vmem:[#allocation3] sm:$0xf]
    %v104 = vld [vmem:[#allocation3 + $0x4] sm:$0xf]
    %v105 = vld [vmem:[#allocation3 + $0x8] sm:$0xf]
    %v106 = vld [vmem:[#allocation3 + $0xc] sm:$0xf]
    %v107 = vld [vmem:[#allocation3 + $0x10] sm:$0xf]
    %v108 = vld [vmem:[#allocation3 + $0x14] sm:$0xf]
    %v109 = vld [vmem:[#allocation3 + $0x18] sm:$0xf]
    %v110 = vld [vmem:[#allocation3 + $0x1c] sm:$0xf]
    %v111 = vld [vmem:[#allocation3 + $0x20] sm:$0xf]
    %v112 = vld [vmem:[#allocation3 + $0x24] sm:$0xf]
    %v113 = vld [vmem:[#allocation3 + $0x28] sm:$0xf]
    %v114 = vld [vmem:[#allocation3 + $0x2c] sm:$0xf]
    %v115 = vld [vmem:[#allocation3 + $0x30] sm:$0xf]
    %v116 = vld [vmem:[#allocation3 + $0x34] sm:$0xf]
    %v117 = vld [vmem:[#allocation3 + $0x38] sm:$0xf]
    %v118 = vld [vmem:[#allocation3 + $0x3c] sm:$0xf]
    %v119 = vld [vmem:[#allocation3 + $0x40] sm:$0xf]
    %v120 = vld [vmem:[#allocation3 + $0x44] sm:$0xf]
    %v121 = vld [vmem:[#allocation3 + $0x48] sm:$0xf]
    %v122 = vld [vmem:[#allocation3 + $0x4c] sm:$0xf]
    %v123 = vld [vmem:[#allocation3 + $0x50] sm:$0xf]
    %v124 = vld [vmem:[#allocation3 + $0x54] sm:$0xf]
    %v125 = vld [vmem:[#allocation3 + $0x58] sm:$0xf]
    %v126 = vld [vmem:[#allocation3 + $0x5c] sm:$0xf]
    %v127 = vld [vmem:[#allocation3 + $0x60] sm:$0xf]
    %v128 = vld [vmem:[#allocation3 + $0x64] sm:$0xf]
    %v129 = vld [vmem:[#allocation3 + $0x68] sm:$0xf]
    %v130 = vld [vmem:[#allocation3 + $0x6c] sm:$0xf]
    %v131 = vld [vmem:[#allocation3 + $0x70] sm:$0xf]
    %v132 = vld [vmem:[#allocation3 + $0x74] sm:$0xf]
    %v133 = vld [vmem:[#allocation3 + $0x78] sm:$0xf]
    %v134 = vld [vmem:[#allocation3 + $0x7c] sm:$0xf]
    %v135 = vld [vmem:[%s2] sm:$0x1]
    %v137 = vperm.slane %v135, 0
    %v141 = vunpack.c.l.b16 %v101
    %v142 = vunpack.c.h.b16 %v101
    %v143 = vunpack.c.l.b16 %v102
    %v144 = vunpack.c.h.b16 %v102
    %v145 = vpack.c.b16 %v143, %v141
    %v146 = vpack.c.b16 %v144, %v142
    %v181 = vunpack.c.l.b16 %v103
    %v182 = vunpack.c.l.b16 %v104
    %v183 = vunpack.c.l.b16 %v105
    %v184 = vunpack.c.l.b16 %v106
    %v185 = vunpack.c.l.b16 %v107
    %v186 = vunpack.c.l.b16 %v108
    %v187 = vunpack.c.l.b16 %v109
    %v188 = vunpack.c.l.b16 %v110
    %v189 = vunpack.c.l.b16 %v111
    %v190 = vunpack.c.l.b16 %v112
    %v191 = vunpack.c.l.b16 %v113
    %v192 = vunpack.c.l.b16 %v114
    %v193 = vunpack.c.l.b16 %v115
    %v194 = vunpack.c.l.b16 %v116
    %v195 = vunpack.c.l.b16 %v117
    %v196 = vunpack.c.l.b16 %v118
    %v197 = vunpack.c.l.b16 %v119
    %v198 = vunpack.c.l.b16 %v120
    %v199 = vunpack.c.l.b16 %v121
    %v200 = vunpack.c.l.b16 %v122
    %v201 = vunpack.c.l.b16 %v123
    %v202 = vunpack.c.l.b16 %v124
    %v203 = vunpack.c.l.b16 %v125
    %v204 = vunpack.c.l.b16 %v126
    %v205 = vunpack.c.l.b16 %v127
    %v206 = vunpack.c.l.b16 %v128
    %v207 = vunpack.c.l.b16 %v129
    %v208 = vunpack.c.l.b16 %v130
    %v209 = vunpack.c.l.b16 %v131
    %v210 = vunpack.c.l.b16 %v132
    %v211 = vunpack.c.l.b16 %v133
    %v212 = vunpack.c.l.b16 %v134
    %v213 = vpack.c.b16 %v182, %v181
    %v214 = vpack.c.b16 %v184, %v183
    %v215 = vpack.c.b16 %v186, %v185
    %v216 = vpack.c.b16 %v188, %v187
    %v217 = vpack.c.b16 %v190, %v189
    %v218 = vpack.c.b16 %v192, %v191
    %v219 = vpack.c.b16 %v194, %v193
    %v220 = vpack.c.b16 %v196, %v195
    %v221 = vpack.c.b16 %v198, %v197
    %v222 = vpack.c.b16 %v200, %v199
    %v223 = vpack.c.b16 %v202, %v201
    %v224 = vpack.c.b16 %v204, %v203
    %v225 = vpack.c.b16 %v206, %v205
    %v226 = vpack.c.b16 %v208, %v207
    %v227 = vpack.c.b16 %v210, %v209
    %v228 = vpack.c.b16 %v212, %v211
    %245 = vmatpush.bf16.msra.mxu0 %v220
    %246 = vmatpush.bf16.msra.mxu0 %v219
    %247 = vmatpush.bf16.msra.mxu0 %v218
    %248 = vmatpush.bf16.msra.mxu0 %v217
    %249 = vmatpush.bf16.msra.mxu0 %v216
    %250 = vmatpush.bf16.msra.mxu0 %v215
    %251 = vmatpush.bf16.msra.mxu0 %v214
    %252 = vmatpush.bf16.msra.mxu0 %v213
    %253 = vmatmul.bf16.gmra.mxu0 %v145
    %v254 = vpop.f32.mrf.mxu0
    %v255 = vadd.f32 %v137, %v254
    %v256 = vpop.f32.mrf.mxu0
    %v257 = vadd.f32 %v137, %v256
    %258 = vdwg.mxu0
    %259 = vmatpush.bf16.msra.mxu0 %v228
    %260 = vmatpush.bf16.msra.mxu0 %v227
    %261 = vmatpush.bf16.msra.mxu0 %v226
    %262 = vmatpush.bf16.msra.mxu0 %v225
    %263 = vmatpush.bf16.msra.mxu0 %v224
    %264 = vmatpush.bf16.msra.mxu0 %v223
    %265 = vmatpush.bf16.msra.mxu0 %v222
    %266 = vmatpush.bf16.msra.mxu0 %v221
    %267 = vmatmul.bf16.gmra.mxu0 %v146
    %v268 = vpop.f32.mrf.mxu0
    %v269 = vadd.f32 %v255, %v268
    %v270 = vpop.f32.mrf.mxu0
    %v271 = vadd.f32 %v257, %v270
    %272 = vdwg.mxu0
    %v273 = vpack.c.bf16 %v269, %v269
    %v274 = vpack.c.bf16 %v271, %v271
    %275 = vst [vmem:[%s3] sm:$0xf] %v273
    %276 = vst [vmem:[%s3 + $0x4] sm:$0xf] %v274
    // Predicated region
    $region22: #{tunable_whisper_audio_encoder.27} parent=1 // pred_check
      _
    $region23: #{tunable_whisper_audio_encoder.27} parent=1 // pred_check_branch
      %278 = sbr.rel (0) target = $region25
    $region24: #{tunable_whisper_audio_encoder.27} parent=1 // pred_region
      _
    $region25: #{tunable_whisper_audio_encoder.27} parent=1 // pred_fallthru
      _
    // Predicated region
    $region26: #{tunable_whisper_audio_encoder.27} parent=1 // pred_check
      _
    $region27: #{tunable_whisper_audio_encoder.27} parent=1 // pred_check_branch
      %280 = sbr.rel (0) target = $region29
    $region28: #{tunable_whisper_audio_encoder.27} parent=1 // pred_region
      _
    $region29: #{tunable_whisper_audio_encoder.27} parent=1 // pred_fallthru
      _
    %281 = vsyncpa [#allocation4], 1

</llo_original>
